<compile_context>
chip_gen: v6e
topology: v6e:2x2x1
jax: 0.10.0
libtpu: 0.0.40
codegen_flags: <defaults>
</compile_context>

<pallas_src>
import jax
import jax.numpy as jnp
import numpy as np
from jax import lax
from jax.experimental import pallas as pl
from jax.experimental.pallas import tpu as pltpu

# ----------------------------- model constants -----------------------------
SEQ_LEN = 128
FILTERS = 64
NUM_FEATURES = 1
HORIZON = 1

L1 = SEQ_LEN - 2            # 126 after conv1 (k=3, valid)
P1 = (L1 - 2) // 2 + 1      # 63  after pool1 (k=2, s=2)
L2 = P1 - 2                 # 61  after conv2
P2 = (L2 - 2) // 2 + 1      # 30  after pool2
FLAT = FILTERS * P2         # 1920 == 60 * (SEQ_LEN // 4)
FC1_OUT = 128
OUT_DIM = HORIZON * NUM_FEATURES   # 1 (fc3 handled as scalar mul; only valid for 1)

TB = 8                      # batch elements per grid step (live on lanes)
LANES = TB * SEQ_LEN        # 1024


def _shift_left(x, s):
    """out[..., g] = x[..., g + s]; the last s lanes become zero (never read)."""
    if s == 0:
        return x
    pad = jnp.zeros(x.shape[:-1] + (s,), x.dtype)
    return jnp.concatenate([x[..., s:], pad], axis=-1)


# --------------------------------------------------------------------------
# Fused kernel: conv1 -> pool1 -> conv2 -> pool2 -> fc1 -> fc2 -> relu -> fc3
# for a block of TB batch elements per grid step.  Lane coord: g = t*TB + bi.
# --------------------------------------------------------------------------
def cnn_fused_kernel(x_ref, w1_ref, b1_ref, w2_ref, b2_ref,
                     fc1w_ref, fc1b_ref, fc2w_ref, fc2b_ref,
                     fc3w_ref, fc3b_ref, o_ref):
    x = x_ref[0]                                        # (1, LANES)
    w1 = w1_ref[...]                                    # (64, 3)

    # --- conv1 (1 -> 64 ch, k=3): whole-block VPU broadcast ---
    h1 = (w1[:, 0:1] * x
          + w1[:, 1:2] * _shift_left(x, TB)
          + w1[:, 2:3] * _shift_left(x, 2 * TB)
          + b1_ref[...])                                # (64, LANES), valid t<=125

    # --- pool1 (k=2, s=2): pool1[j] lives at lane 2*TB*j + bi ---
    pm1 = jnp.maximum(h1, _shift_left(h1, TB))          # (64, LANES)

    # --- conv2 (64 -> 64 ch, k=3): one channel-mix matmul per tap ---
    h2 = b2_ref[...]                                    # (64, 1) broadcasts below
    for k in range(3):
        h2 = h2 + jnp.dot(w2_ref[k], _shift_left(pm1, 2 * TB * k),
                          preferred_element_type=jnp.float32)     # (64, LANES)
    # conv2 output time u lives at lane 2*TB*u + bi, valid u<=60

    # --- pool2: pool2[v] lives at lane 4*TB*v + bi, valid v<=29 ---
    pm2 = jnp.maximum(h2, _shift_left(h2, 2 * TB))      # (64, LANES)

    # --- fc1 folded over (channel, pool2-time); batch stays on lanes ---
    z1 = None
    for v in range(P2):
        a_v = pm2[:, 4 * TB * v: 4 * TB * v + TB]       # (64, TB) aligned lane slice
        t_v = jnp.dot(fc1w_ref[v], a_v,
                      preferred_element_type=jnp.float32)          # (128, TB)
        z1 = t_v if z1 is None else z1 + t_v
    z1 = z1 + fc1b_ref[...]                             # (128, TB)

    # --- fc2 -> relu -> fc3 (1x1 linear as scalar affine) ---
    z2 = jnp.dot(fc2w_ref[...], z1,
                 preferred_element_type=jnp.float32) + fc2b_ref[...]  # (1, TB)
    z2 = jnp.maximum(z2, 0.0)
    o_ref[0] = z2 * fc3w_ref[...] + fc3b_ref[...]       # (1, TB)


# --------------------------------------------------------------------------
# Wrapper: pad batch to a multiple of TB, repack input lanes (g = t*TB + bi),
# one fused pallas_call, then reshape back to (B, 1, 1).
# --------------------------------------------------------------------------
def cnn_forward(src, kp):
    B = src.shape[0]
    assert src.shape[1] == SEQ_LEN and src.shape[2] == NUM_FEATURES
    x2d = src[:, :, 0]                                  # (B, 128)
    Bp = ((B + TB - 1) // TB) * TB
    if Bp != B:
        x2d = jnp.pad(x2d, ((0, Bp - B), (0, 0)))
    nblk = Bp // TB
    # lane layout per block: g = t*TB + bi  (cheap host-side repack, outside kernel)
    x_lanes = x2d.reshape(nblk, TB, SEQ_LEN).transpose(0, 2, 1).reshape(nblk, 1, LANES)

    const2 = lambda i: (0, 0)
    const3 = lambda i: (0, 0, 0)
    out = pl.pallas_call(
        cnn_fused_kernel,
        out_shape=jax.ShapeDtypeStruct((nblk, 1, TB), jnp.float32),
        grid=(nblk,),
        in_specs=[
            pl.BlockSpec((1, 1, LANES), lambda i: (i, 0, 0)),    # x block
            pl.BlockSpec((FILTERS, 3), const2),                  # conv1 w [c, k]
            pl.BlockSpec((FILTERS, 1), const2),                  # conv1 b (column)
            pl.BlockSpec((3, FILTERS, FILTERS), const3),         # conv2 w [k, co, ci]
            pl.BlockSpec((FILTERS, 1), const2),                  # conv2 b (column)
            pl.BlockSpec((P2, FC1_OUT, FILTERS), const3),        # fc1 w  [v, o, c]
            pl.BlockSpec((FC1_OUT, 1), const2),                  # fc1 b (column)
            pl.BlockSpec((1, FC1_OUT), const2),                  # fc2 w (row)
            pl.BlockSpec((1, 1), const2),                        # fc2 b
            pl.BlockSpec((1, 1), const2),                        # fc3 w
            pl.BlockSpec((1, 1), const2),                        # fc3 b
        ],
        out_specs=pl.BlockSpec((1, 1, TB), lambda i: (i, 0, 0)),
        compiler_params=pltpu.CompilerParams(dimension_semantics=("parallel",)),
    )(x_lanes, kp["w1"], kp["b1_col"], kp["w2_taps"], kp["b2_col"],
      kp["fc1_w3d"], kp["fc1_b_col"], kp["fc2_w"], kp["fc2_b"],
      kp["fc3_w"], kp["fc3_b"])

    return out.reshape(Bp)[:B].reshape(B, 1, OUT_DIM)   # unsqueeze(1) -> (B, 1, 1)


# --------------------------------------------------------------------------
# Deterministic parameter init (torch-style uniform(-1/sqrt(fan_in), +)) and
# host-side repacking into kernel-friendly layouts.
# --------------------------------------------------------------------------
def init_params(key):
    ks = jax.random.split(key, 10)

    def u(k, shape, fan_in):
        bound = 1.0 / np.sqrt(fan_in)
        return jax.random.uniform(k, shape, jnp.float32, -bound, bound)

    conv1_w = u(ks[0], (FILTERS, NUM_FEATURES, 3), NUM_FEATURES * 3)
    conv1_b = u(ks[1], (FILTERS,), NUM_FEATURES * 3)
    conv2_w = u(ks[2], (FILTERS, FILTERS, 3), FILTERS * 3)
    conv2_b = u(ks[3], (FILTERS,), FILTERS * 3)
    fc1_w = u(ks[4], (FC1_OUT, FLAT), FLAT)
    fc1_b = u(ks[5], (FC1_OUT,), FLAT)
    fc2_w = u(ks[6], (OUT_DIM, FC1_OUT), FC1_OUT)
    fc2_b = u(ks[7], (OUT_DIM,), FC1_OUT)
    fc3_w = u(ks[8], (OUT_DIM, OUT_DIM), OUT_DIM)
    fc3_b = u(ks[9], (OUT_DIM,), OUT_DIM)

    torch_p = dict(conv1_w=conv1_w, conv1_b=conv1_b,
                   conv2_w=conv2_w, conv2_b=conv2_b,
                   fc1_w=fc1_w, fc1_b=fc1_b,
                   fc2_w=fc2_w, fc2_b=fc2_b,
                   fc3_w=fc3_w, fc3_b=fc3_b)

    kernel_p = dict(
        w1=conv1_w[:, 0, :],                                         # (64, 3)
        b1_col=conv1_b.reshape(FILTERS, 1),                          # (64, 1)
        w2_taps=jnp.transpose(conv2_w, (2, 0, 1)),                   # (3, 64, 64)
        b2_col=conv2_b.reshape(FILTERS, 1),                          # (64, 1)
        # fc1 weight split by pool2-time v: fc1_w3d[v, o, c] = fc1_w[o, c*30 + v]
        fc1_w3d=jnp.transpose(fc1_w.reshape(FC1_OUT, FILTERS, P2), (2, 0, 1)),
        fc1_b_col=fc1_b.reshape(FC1_OUT, 1),                         # (128, 1)
        fc2_w=fc2_w,                                                 # (1, 128)
        fc2_b=fc2_b.reshape(1, 1),                                   # (1, 1)
        fc3_w=fc3_w.reshape(1, 1),                                   # (1, 1)
        fc3_b=fc3_b.reshape(1, 1),                                   # (1, 1)
    )
    return {"torch": torch_p, "kernel": kernel_p}


# --------------------------------------------------------------------------
# Pure-JAX reference (mirrors the PyTorch forward exactly) for validation
# --------------------------------------------------------------------------
def reference_forward(src, tp):
    x = jnp.transpose(src, (0, 2, 1))                            # (B, C_in, L)
    dn = ("NCH", "OIH", "NCH")
    x = lax.conv_general_dilated(x, tp["conv1_w"], (1,), "VALID",
                                 dimension_numbers=dn) + tp["conv1_b"][None, :, None]
    x = lax.reduce_window(x, -jnp.inf, lax.max, (1, 1, 2), (1, 1, 2), "VALID")
    x = lax.conv_general_dilated(x, tp["conv2_w"], (1,), "VALID",
                                 dimension_numbers=dn) + tp["conv2_b"][None, :, None]
    x = lax.reduce_window(x, -jnp.inf, lax.max, (1, 1, 2), (1, 1, 2), "VALID")
    x = x.reshape(x.shape[0], -1)                                # (B, 1920)
    x = x @ tp["fc1_w"].T + tp["fc1_b"]
    x = x @ tp["fc2_w"].T + tp["fc2_b"]
    x = jnp.maximum(x, 0.0)
    x = x @ tp["fc3_w"].T + tp["fc3_b"]
    return x[:, None, :]


if __name__ == "__main__":
    key = jax.random.PRNGKey(0)
    k_param, k_x = jax.random.split(key)
    params = init_params(k_param)

    B = 10                                            # exercises padding + a 2-step grid
    src = jax.random.normal(k_x, (B, SEQ_LEN, NUM_FEATURES), jnp.float32)

    fwd = jax.jit(cnn_forward)
    out = jax.block_until_ready(fwd(src, params["kernel"]))
    assert out.shape == (B, 1, 1), out.shape

    ref = jax.block_until_ready(reference_forward(src, params["torch"]))
    np.testing.assert_allclose(np.asarray(out), np.asarray(ref), rtol=2e-4, atol=2e-4)

    print("KERNEL_OK")
</pallas_src>

<mosaic_0001>
module attributes {stable_mosaic.version = 11 : i64} {
  func.func @cnn_fused_kernel(%arg0: i32, %arg1: memref<1x1x1024xf32, #tpu.memory_space<vmem>>, %arg2: memref<64x3xf32, #tpu.memory_space<vmem>>, %arg3: memref<64x1xf32, #tpu.memory_space<vmem>>, %arg4: memref<3x64x64xf32, #tpu.memory_space<vmem>>, %arg5: memref<64x1xf32, #tpu.memory_space<vmem>>, %arg6: memref<30x128x64xf32, #tpu.memory_space<vmem>>, %arg7: memref<128x1xf32, #tpu.memory_space<vmem>>, %arg8: memref<1x128xf32, #tpu.memory_space<vmem>>, %arg9: memref<1x1xf32, #tpu.memory_space<vmem>>, %arg10: memref<1x1xf32, #tpu.memory_space<vmem>>, %arg11: memref<1x1xf32, #tpu.memory_space<vmem>>, %arg12: memref<1x1x8xf32, #tpu.memory_space<vmem>>) attributes {dimension_semantics = [#tpu.dimension_semantics<parallel>], iteration_bounds = array<i64: 2>, scalar_prefetch = 0 : i64, scratch_operands = 0 : i64, tpu.core_type = #tpu.core_type<tc>, window_params = [{transform_indices = @transform_0, window_bounds = array<i64: 1, 1, 1024>}, {pipeline_mode = #tpu.pipeline_mode<synchronous>, transform_indices = @transform_1, window_bounds = array<i64: 64, 3>}, {pipeline_mode = #tpu.pipeline_mode<synchronous>, transform_indices = @transform_2, window_bounds = array<i64: 64, 1>}, {pipeline_mode = #tpu.pipeline_mode<synchronous>, transform_indices = @transform_3, window_bounds = array<i64: 3, 64, 64>}, {pipeline_mode = #tpu.pipeline_mode<synchronous>, transform_indices = @transform_4, window_bounds = array<i64: 64, 1>}, {pipeline_mode = #tpu.pipeline_mode<synchronous>, transform_indices = @transform_5, window_bounds = array<i64: 30, 128, 64>}, {pipeline_mode = #tpu.pipeline_mode<synchronous>, transform_indices = @transform_6, window_bounds = array<i64: 128, 1>}, {pipeline_mode = #tpu.pipeline_mode<synchronous>, transform_indices = @transform_7, window_bounds = array<i64: 1, 128>}, {pipeline_mode = #tpu.pipeline_mode<synchronous>, transform_indices = @transform_8, window_bounds = array<i64: 1, 1>}, {pipeline_mode = #tpu.pipeline_mode<synchronous>, transform_indices = @transform_9, window_bounds = array<i64: 1, 1>}, {pipeline_mode = #tpu.pipeline_mode<synchronous>, transform_indices = @transform_10, window_bounds = array<i64: 1, 1>}, {transform_indices = @transform_11, window_bounds = array<i64: 1, 1, 8>}]} {
    %c0 = arith.constant 0 : index
    %c0_0 = arith.constant 0 : index
    %c0_1 = arith.constant 0 : index
    %0 = vector.load %arg1[%c0, %c0_0, %c0_1] : memref<1x1x1024xf32, #tpu.memory_space<vmem>>, vector<1x1x1024xf32>
    %1 = vector.shape_cast %0 : vector<1x1x1024xf32> to vector<1x1024xf32>
    %c0_2 = arith.constant 0 : index
    %c0_3 = arith.constant 0 : index
    %2 = vector.load %arg2[%c0_2, %c0_3] : memref<64x3xf32, #tpu.memory_space<vmem>>, vector<64x3xf32>
    %3 = vector.extract_strided_slice %2 {offsets = [0, 0], sizes = [64, 1], strides = [1, 1]} : vector<64x3xf32> to vector<64x1xf32>
    %4 = vector.broadcast %3 : vector<64x1xf32> to vector<64x1024xf32>
    %5 = vector.broadcast %1 : vector<1x1024xf32> to vector<64x1024xf32>
    %6 = arith.mulf %4, %5 : vector<64x1024xf32>
    %7 = vector.extract_strided_slice %2 {offsets = [0, 1], sizes = [64, 1], strides = [1, 1]} : vector<64x3xf32> to vector<64x1xf32>
    %cst = arith.constant 0.000000e+00 : f32
    %8 = vector.broadcast %cst : f32 to vector<1x8xf32>
    %9 = vector.extract_strided_slice %1 {offsets = [0, 8], sizes = [1, 1016], strides = [1, 1]} : vector<1x1024xf32> to vector<1x1016xf32>
    %10 = tpu.concatenate %9, %8 in 1 : vector<1x1016xf32>, vector<1x8xf32> -> vector<1x1024xf32>
    %11 = vector.broadcast %7 : vector<64x1xf32> to vector<64x1024xf32>
    %12 = vector.broadcast %10 : vector<1x1024xf32> to vector<64x1024xf32>
    %13 = arith.mulf %11, %12 : vector<64x1024xf32>
    %14 = arith.addf %6, %13 : vector<64x1024xf32>
    %15 = vector.extract_strided_slice %2 {offsets = [0, 2], sizes = [64, 1], strides = [1, 1]} : vector<64x3xf32> to vector<64x1xf32>
    %cst_4 = arith.constant 0.000000e+00 : f32
    %16 = vector.broadcast %cst_4 : f32 to vector<1x16xf32>
    %17 = vector.extract_strided_slice %1 {offsets = [0, 16], sizes = [1, 1008], strides = [1, 1]} : vector<1x1024xf32> to vector<1x1008xf32>
    %18 = tpu.concatenate %17, %16 in 1 : vector<1x1008xf32>, vector<1x16xf32> -> vector<1x1024xf32>
    %19 = vector.broadcast %15 : vector<64x1xf32> to vector<64x1024xf32>
    %20 = vector.broadcast %18 : vector<1x1024xf32> to vector<64x1024xf32>
    %21 = arith.mulf %19, %20 : vector<64x1024xf32>
    %22 = arith.addf %14, %21 : vector<64x1024xf32>
    %c0_5 = arith.constant 0 : index
    %c0_6 = arith.constant 0 : index
    %23 = vector.load %arg3[%c0_5, %c0_6] : memref<64x1xf32, #tpu.memory_space<vmem>>, vector<64x1xf32>
    %24 = vector.broadcast %23 : vector<64x1xf32> to vector<64x1024xf32>
    %25 = arith.addf %22, %24 : vector<64x1024xf32>
    %cst_7 = arith.constant 0.000000e+00 : f32
    %26 = vector.broadcast %cst_7 : f32 to vector<64x8xf32>
    %27 = vector.extract_strided_slice %25 {offsets = [0, 8], sizes = [64, 1016], strides = [1, 1]} : vector<64x1024xf32> to vector<64x1016xf32>
    %28 = tpu.concatenate %27, %26 in 1 : vector<64x1016xf32>, vector<64x8xf32> -> vector<64x1024xf32>
    %29 = arith.maximumf %25, %28 : vector<64x1024xf32>
    %c0_8 = arith.constant 0 : index
    %c0_9 = arith.constant 0 : index
    %30 = vector.load %arg5[%c0_8, %c0_9] : memref<64x1xf32, #tpu.memory_space<vmem>>, vector<64x1xf32>
    %c0_10 = arith.constant 0 : index
    %c0_11 = arith.constant 0 : index
    %c0_12 = arith.constant 0 : index
    %31 = vector.load %arg4[%c0_10, %c0_11, %c0_12] : memref<3x64x64xf32, #tpu.memory_space<vmem>>, vector<1x64x64xf32>
    %32 = vector.shape_cast %31 : vector<1x64x64xf32> to vector<64x64xf32>
    %cst_13 = arith.constant dense<0.000000e+00> : vector<64x1024xf32>
    %33 = tpu.matmul %32, %29, %cst_13 {dimension_numbers = #tpu.dot_dimension_numbers<[1], [0], [0], [1], [0, 0, 1, 1], [], []>} : vector<64x64xf32>, vector<64x1024xf32>, vector<64x1024xf32> -> vector<64x1024xf32>
    %34 = vector.broadcast %30 : vector<64x1xf32> to vector<64x1024xf32>
    %35 = arith.addf %34, %33 : vector<64x1024xf32>
    %c1 = arith.constant 1 : index
    %c0_14 = arith.constant 0 : index
    %c0_15 = arith.constant 0 : index
    %36 = vector.load %arg4[%c1, %c0_14, %c0_15] : memref<3x64x64xf32, #tpu.memory_space<vmem>>, vector<1x64x64xf32>
    %37 = vector.shape_cast %36 : vector<1x64x64xf32> to vector<64x64xf32>
    %cst_16 = arith.constant 0.000000e+00 : f32
    %38 = vector.broadcast %cst_16 : f32 to vector<64x16xf32>
    %39 = vector.extract_strided_slice %29 {offsets = [0, 16], sizes = [64, 1008], strides = [1, 1]} : vector<64x1024xf32> to vector<64x1008xf32>
    %40 = tpu.concatenate %39, %38 in 1 : vector<64x1008xf32>, vector<64x16xf32> -> vector<64x1024xf32>
    %cst_17 = arith.constant dense<0.000000e+00> : vector<64x1024xf32>
    %41 = tpu.matmul %37, %40, %cst_17 {dimension_numbers = #tpu.dot_dimension_numbers<[1], [0], [0], [1], [0, 0, 1, 1], [], []>} : vector<64x64xf32>, vector<64x1024xf32>, vector<64x1024xf32> -> vector<64x1024xf32>
    %42 = arith.addf %35, %41 : vector<64x1024xf32>
    %c2 = arith.constant 2 : index
    %c0_18 = arith.constant 0 : index
    %c0_19 = arith.constant 0 : index
    %43 = vector.load %arg4[%c2, %c0_18, %c0_19] : memref<3x64x64xf32, #tpu.memory_space<vmem>>, vector<1x64x64xf32>
    %44 = vector.shape_cast %43 : vector<1x64x64xf32> to vector<64x64xf32>
    %cst_20 = arith.constant 0.000000e+00 : f32
    %45 = vector.broadcast %cst_20 : f32 to vector<64x32xf32>
    %46 = vector.extract_strided_slice %29 {offsets = [0, 32], sizes = [64, 992], strides = [1, 1]} : vector<64x1024xf32> to vector<64x992xf32>
    %47 = tpu.concatenate %46, %45 in 1 : vector<64x992xf32>, vector<64x32xf32> -> vector<64x1024xf32>
    %cst_21 = arith.constant dense<0.000000e+00> : vector<64x1024xf32>
    %48 = tpu.matmul %44, %47, %cst_21 {dimension_numbers = #tpu.dot_dimension_numbers<[1], [0], [0], [1], [0, 0, 1, 1], [], []>} : vector<64x64xf32>, vector<64x1024xf32>, vector<64x1024xf32> -> vector<64x1024xf32>
    %49 = arith.addf %42, %48 : vector<64x1024xf32>
    %cst_22 = arith.constant 0.000000e+00 : f32
    %50 = vector.broadcast %cst_22 : f32 to vector<64x16xf32>
    %51 = vector.extract_strided_slice %49 {offsets = [0, 16], sizes = [64, 1008], strides = [1, 1]} : vector<64x1024xf32> to vector<64x1008xf32>
    %52 = tpu.concatenate %51, %50 in 1 : vector<64x1008xf32>, vector<64x16xf32> -> vector<64x1024xf32>
    %53 = arith.maximumf %49, %52 : vector<64x1024xf32>
    %54 = vector.extract_strided_slice %53 {offsets = [0, 0], sizes = [64, 8], strides = [1, 1]} : vector<64x1024xf32> to vector<64x8xf32>
    %c0_23 = arith.constant 0 : index
    %c0_24 = arith.constant 0 : index
    %c0_25 = arith.constant 0 : index
    %55 = vector.load %arg6[%c0_23, %c0_24, %c0_25] : memref<30x128x64xf32, #tpu.memory_space<vmem>>, vector<1x128x64xf32>
    %56 = vector.shape_cast %55 : vector<1x128x64xf32> to vector<128x64xf32>
    %cst_26 = arith.constant dense<0.000000e+00> : vector<128x8xf32>
    %57 = tpu.matmul %56, %54, %cst_26 {dimension_numbers = #tpu.dot_dimension_numbers<[1], [0], [0], [1], [0, 0, 1, 1], [], []>} : vector<128x64xf32>, vector<64x8xf32>, vector<128x8xf32> -> vector<128x8xf32>
    %58 = vector.extract_strided_slice %53 {offsets = [0, 32], sizes = [64, 8], strides = [1, 1]} : vector<64x1024xf32> to vector<64x8xf32>
    %c1_27 = arith.constant 1 : index
    %c0_28 = arith.constant 0 : index
    %c0_29 = arith.constant 0 : index
    %59 = vector.load %arg6[%c1_27, %c0_28, %c0_29] : memref<30x128x64xf32, #tpu.memory_space<vmem>>, vector<1x128x64xf32>
    %60 = vector.shape_cast %59 : vector<1x128x64xf32> to vector<128x64xf32>
    %cst_30 = arith.constant dense<0.000000e+00> : vector<128x8xf32>
    %61 = tpu.matmul %60, %58, %cst_30 {dimension_numbers = #tpu.dot_dimension_numbers<[1], [0], [0], [1], [0, 0, 1, 1], [], []>} : vector<128x64xf32>, vector<64x8xf32>, vector<128x8xf32> -> vector<128x8xf32>
    %62 = arith.addf %57, %61 : vector<128x8xf32>
    %63 = vector.extract_strided_slice %53 {offsets = [0, 64], sizes = [64, 8], strides = [1, 1]} : vector<64x1024xf32> to vector<64x8xf32>
    %c2_31 = arith.constant 2 : index
    %c0_32 = arith.constant 0 : index
    %c0_33 = arith.constant 0 : index
    %64 = vector.load %arg6[%c2_31, %c0_32, %c0_33] : memref<30x128x64xf32, #tpu.memory_space<vmem>>, vector<1x128x64xf32>
    %65 = vector.shape_cast %64 : vector<1x128x64xf32> to vector<128x64xf32>
    %cst_34 = arith.constant dense<0.000000e+00> : vector<128x8xf32>
    %66 = tpu.matmul %65, %63, %cst_34 {dimension_numbers = #tpu.dot_dimension_numbers<[1], [0], [0], [1], [0, 0, 1, 1], [], []>} : vector<128x64xf32>, vector<64x8xf32>, vector<128x8xf32> -> vector<128x8xf32>
    %67 = arith.addf %62, %66 : vector<128x8xf32>
    %68 = vector.extract_strided_slice %53 {offsets = [0, 96], sizes = [64, 8], strides = [1, 1]} : vector<64x1024xf32> to vector<64x8xf32>
    %c3 = arith.constant 3 : index
    %c0_35 = arith.constant 0 : index
    %c0_36 = arith.constant 0 : index
    %69 = vector.load %arg6[%c3, %c0_35, %c0_36] : memref<30x128x64xf32, #tpu.memory_space<vmem>>, vector<1x128x64xf32>
    %70 = vector.shape_cast %69 : vector<1x128x64xf32> to vector<128x64xf32>
    %cst_37 = arith.constant dense<0.000000e+00> : vector<128x8xf32>
    %71 = tpu.matmul %70, %68, %cst_37 {dimension_numbers = #tpu.dot_dimension_numbers<[1], [0], [0], [1], [0, 0, 1, 1], [], []>} : vector<128x64xf32>, vector<64x8xf32>, vector<128x8xf32> -> vector<128x8xf32>
    %72 = arith.addf %67, %71 : vector<128x8xf32>
    %73 = vector.extract_strided_slice %53 {offsets = [0, 128], sizes = [64, 8], strides = [1, 1]} : vector<64x1024xf32> to vector<64x8xf32>
    %c4 = arith.constant 4 : index
    %c0_38 = arith.constant 0 : index
    %c0_39 = arith.constant 0 : index
    %74 = vector.load %arg6[%c4, %c0_38, %c0_39] : memref<30x128x64xf32, #tpu.memory_space<vmem>>, vector<1x128x64xf32>
    %75 = vector.shape_cast %74 : vector<1x128x64xf32> to vector<128x64xf32>
    %cst_40 = arith.constant dense<0.000000e+00> : vector<128x8xf32>
    %76 = tpu.matmul %75, %73, %cst_40 {dimension_numbers = #tpu.dot_dimension_numbers<[1], [0], [0], [1], [0, 0, 1, 1], [], []>} : vector<128x64xf32>, vector<64x8xf32>, vector<128x8xf32> -> vector<128x8xf32>
    %77 = arith.addf %72, %76 : vector<128x8xf32>
    %78 = vector.extract_strided_slice %53 {offsets = [0, 160], sizes = [64, 8], strides = [1, 1]} : vector<64x1024xf32> to vector<64x8xf32>
    %c5 = arith.constant 5 : index
    %c0_41 = arith.constant 0 : index
    %c0_42 = arith.constant 0 : index
    %79 = vector.load %arg6[%c5, %c0_41, %c0_42] : memref<30x128x64xf32, #tpu.memory_space<vmem>>, vector<1x128x64xf32>
    %80 = vector.shape_cast %79 : vector<1x128x64xf32> to vector<128x64xf32>
    %cst_43 = arith.constant dense<0.000000e+00> : vector<128x8xf32>
    %81 = tpu.matmul %80, %78, %cst_43 {dimension_numbers = #tpu.dot_dimension_numbers<[1], [0], [0], [1], [0, 0, 1, 1], [], []>} : vector<128x64xf32>, vector<64x8xf32>, vector<128x8xf32> -> vector<128x8xf32>
    %82 = arith.addf %77, %81 : vector<128x8xf32>
    %83 = vector.extract_strided_slice %53 {offsets = [0, 192], sizes = [64, 8], strides = [1, 1]} : vector<64x1024xf32> to vector<64x8xf32>
    %c6 = arith.constant 6 : index
    %c0_44 = arith.constant 0 : index
    %c0_45 = arith.constant 0 : index
    %84 = vector.load %arg6[%c6, %c0_44, %c0_45] : memref<30x128x64xf32, #tpu.memory_space<vmem>>, vector<1x128x64xf32>
    %85 = vector.shape_cast %84 : vector<1x128x64xf32> to vector<128x64xf32>
    %cst_46 = arith.constant dense<0.000000e+00> : vector<128x8xf32>
    %86 = tpu.matmul %85, %83, %cst_46 {dimension_numbers = #tpu.dot_dimension_numbers<[1], [0], [0], [1], [0, 0, 1, 1], [], []>} : vector<128x64xf32>, vector<64x8xf32>, vector<128x8xf32> -> vector<128x8xf32>
    %87 = arith.addf %82, %86 : vector<128x8xf32>
    %88 = vector.extract_strided_slice %53 {offsets = [0, 224], sizes = [64, 8], strides = [1, 1]} : vector<64x1024xf32> to vector<64x8xf32>
    %c7 = arith.constant 7 : index
    %c0_47 = arith.constant 0 : index
    %c0_48 = arith.constant 0 : index
    %89 = vector.load %arg6[%c7, %c0_47, %c0_48] : memref<30x128x64xf32, #tpu.memory_space<vmem>>, vector<1x128x64xf32>
    %90 = vector.shape_cast %89 : vector<1x128x64xf32> to vector<128x64xf32>
    %cst_49 = arith.constant dense<0.000000e+00> : vector<128x8xf32>
    %91 = tpu.matmul %90, %88, %cst_49 {dimension_numbers = #tpu.dot_dimension_numbers<[1], [0], [0], [1], [0, 0, 1, 1], [], []>} : vector<128x64xf32>, vector<64x8xf32>, vector<128x8xf32> -> vector<128x8xf32>
    %92 = arith.addf %87, %91 : vector<128x8xf32>
    %93 = vector.extract_strided_slice %53 {offsets = [0, 256], sizes = [64, 8], strides = [1, 1]} : vector<64x1024xf32> to vector<64x8xf32>
    %c8 = arith.constant 8 : index
    %c0_50 = arith.constant 0 : index
    %c0_51 = arith.constant 0 : index
    %94 = vector.load %arg6[%c8, %c0_50, %c0_51] : memref<30x128x64xf32, #tpu.memory_space<vmem>>, vector<1x128x64xf32>
    %95 = vector.shape_cast %94 : vector<1x128x64xf32> to vector<128x64xf32>
    %cst_52 = arith.constant dense<0.000000e+00> : vector<128x8xf32>
    %96 = tpu.matmul %95, %93, %cst_52 {dimension_numbers = #tpu.dot_dimension_numbers<[1], [0], [0], [1], [0, 0, 1, 1], [], []>} : vector<128x64xf32>, vector<64x8xf32>, vector<128x8xf32> -> vector<128x8xf32>
    %97 = arith.addf %92, %96 : vector<128x8xf32>
    %98 = vector.extract_strided_slice %53 {offsets = [0, 288], sizes = [64, 8], strides = [1, 1]} : vector<64x1024xf32> to vector<64x8xf32>
    %c9 = arith.constant 9 : index
    %c0_53 = arith.constant 0 : index
    %c0_54 = arith.constant 0 : index
    %99 = vector.load %arg6[%c9, %c0_53, %c0_54] : memref<30x128x64xf32, #tpu.memory_space<vmem>>, vector<1x128x64xf32>
    %100 = vector.shape_cast %99 : vector<1x128x64xf32> to vector<128x64xf32>
    %cst_55 = arith.constant dense<0.000000e+00> : vector<128x8xf32>
    %101 = tpu.matmul %100, %98, %cst_55 {dimension_numbers = #tpu.dot_dimension_numbers<[1], [0], [0], [1], [0, 0, 1, 1], [], []>} : vector<128x64xf32>, vector<64x8xf32>, vector<128x8xf32> -> vector<128x8xf32>
    %102 = arith.addf %97, %101 : vector<128x8xf32>
    %103 = vector.extract_strided_slice %53 {offsets = [0, 320], sizes = [64, 8], strides = [1, 1]} : vector<64x1024xf32> to vector<64x8xf32>
    %c10 = arith.constant 10 : index
    %c0_56 = arith.constant 0 : index
    %c0_57 = arith.constant 0 : index
    %104 = vector.load %arg6[%c10, %c0_56, %c0_57] : memref<30x128x64xf32, #tpu.memory_space<vmem>>, vector<1x128x64xf32>
    %105 = vector.shape_cast %104 : vector<1x128x64xf32> to vector<128x64xf32>
    %cst_58 = arith.constant dense<0.000000e+00> : vector<128x8xf32>
    %106 = tpu.matmul %105, %103, %cst_58 {dimension_numbers = #tpu.dot_dimension_numbers<[1], [0], [0], [1], [0, 0, 1, 1], [], []>} : vector<128x64xf32>, vector<64x8xf32>, vector<128x8xf32> -> vector<128x8xf32>
    %107 = arith.addf %102, %106 : vector<128x8xf32>
    %108 = vector.extract_strided_slice %53 {offsets = [0, 352], sizes = [64, 8], strides = [1, 1]} : vector<64x1024xf32> to vector<64x8xf32>
    %c11 = arith.constant 11 : index
    %c0_59 = arith.constant 0 : index
    %c0_60 = arith.constant 0 : index
    %109 = vector.load %arg6[%c11, %c0_59, %c0_60] : memref<30x128x64xf32, #tpu.memory_space<vmem>>, vector<1x128x64xf32>
    %110 = vector.shape_cast %109 : vector<1x128x64xf32> to vector<128x64xf32>
    %cst_61 = arith.constant dense<0.000000e+00> : vector<128x8xf32>
    %111 = tpu.matmul %110, %108, %cst_61 {dimension_numbers = #tpu.dot_dimension_numbers<[1], [0], [0], [1], [0, 0, 1, 1], [], []>} : vector<128x64xf32>, vector<64x8xf32>, vector<128x8xf32> -> vector<128x8xf32>
    %112 = arith.addf %107, %111 : vector<128x8xf32>
    %113 = vector.extract_strided_slice %53 {offsets = [0, 384], sizes = [64, 8], strides = [1, 1]} : vector<64x1024xf32> to vector<64x8xf32>
    %c12 = arith.constant 12 : index
    %c0_62 = arith.constant 0 : index
    %c0_63 = arith.constant 0 : index
    %114 = vector.load %arg6[%c12, %c0_62, %c0_63] : memref<30x128x64xf32, #tpu.memory_space<vmem>>, vector<1x128x64xf32>
    %115 = vector.shape_cast %114 : vector<1x128x64xf32> to vector<128x64xf32>
    %cst_64 = arith.constant dense<0.000000e+00> : vector<128x8xf32>
    %116 = tpu.matmul %115, %113, %cst_64 {dimension_numbers = #tpu.dot_dimension_numbers<[1], [0], [0], [1], [0, 0, 1, 1], [], []>} : vector<128x64xf32>, vector<64x8xf32>, vector<128x8xf32> -> vector<128x8xf32>
    %117 = arith.addf %112, %116 : vector<128x8xf32>
    %118 = vector.extract_strided_slice %53 {offsets = [0, 416], sizes = [64, 8], strides = [1, 1]} : vector<64x1024xf32> to vector<64x8xf32>
    %c13 = arith.constant 13 : index
    %c0_65 = arith.constant 0 : index
    %c0_66 = arith.constant 0 : index
    %119 = vector.load %arg6[%c13, %c0_65, %c0_66] : memref<30x128x64xf32, #tpu.memory_space<vmem>>, vector<1x128x64xf32>
    %120 = vector.shape_cast %119 : vector<1x128x64xf32> to vector<128x64xf32>
    %cst_67 = arith.constant dense<0.000000e+00> : vector<128x8xf32>
    %121 = tpu.matmul %120, %118, %cst_67 {dimension_numbers = #tpu.dot_dimension_numbers<[1], [0], [0], [1], [0, 0, 1, 1], [], []>} : vector<128x64xf32>, vector<64x8xf32>, vector<128x8xf32> -> vector<128x8xf32>
    %122 = arith.addf %117, %121 : vector<128x8xf32>
    %123 = vector.extract_strided_slice %53 {offsets = [0, 448], sizes = [64, 8], strides = [1, 1]} : vector<64x1024xf32> to vector<64x8xf32>
    %c14 = arith.constant 14 : index
    %c0_68 = arith.constant 0 : index
    %c0_69 = arith.constant 0 : index
    %124 = vector.load %arg6[%c14, %c0_68, %c0_69] : memref<30x128x64xf32, #tpu.memory_space<vmem>>, vector<1x128x64xf32>
    %125 = vector.shape_cast %124 : vector<1x128x64xf32> to vector<128x64xf32>
    %cst_70 = arith.constant dense<0.000000e+00> : vector<128x8xf32>
    %126 = tpu.matmul %125, %123, %cst_70 {dimension_numbers = #tpu.dot_dimension_numbers<[1], [0], [0], [1], [0, 0, 1, 1], [], []>} : vector<128x64xf32>, vector<64x8xf32>, vector<128x8xf32> -> vector<128x8xf32>
    %127 = arith.addf %122, %126 : vector<128x8xf32>
    %128 = vector.extract_strided_slice %53 {offsets = [0, 480], sizes = [64, 8], strides = [1, 1]} : vector<64x1024xf32> to vector<64x8xf32>
    %c15 = arith.constant 15 : index
    %c0_71 = arith.constant 0 : index
    %c0_72 = arith.constant 0 : index
    %129 = vector.load %arg6[%c15, %c0_71, %c0_72] : memref<30x128x64xf32, #tpu.memory_space<vmem>>, vector<1x128x64xf32>
    %130 = vector.shape_cast %129 : vector<1x128x64xf32> to vector<128x64xf32>
    %cst_73 = arith.constant dense<0.000000e+00> : vector<128x8xf32>
    %131 = tpu.matmul %130, %128, %cst_73 {dimension_numbers = #tpu.dot_dimension_numbers<[1], [0], [0], [1], [0, 0, 1, 1], [], []>} : vector<128x64xf32>, vector<64x8xf32>, vector<128x8xf32> -> vector<128x8xf32>
    %132 = arith.addf %127, %131 : vector<128x8xf32>
    %133 = vector.extract_strided_slice %53 {offsets = [0, 512], sizes = [64, 8], strides = [1, 1]} : vector<64x1024xf32> to vector<64x8xf32>
    %c16 = arith.constant 16 : index
    %c0_74 = arith.constant 0 : index
    %c0_75 = arith.constant 0 : index
    %134 = vector.load %arg6[%c16, %c0_74, %c0_75] : memref<30x128x64xf32, #tpu.memory_space<vmem>>, vector<1x128x64xf32>
    %135 = vector.shape_cast %134 : vector<1x128x64xf32> to vector<128x64xf32>
    %cst_76 = arith.constant dense<0.000000e+00> : vector<128x8xf32>
    %136 = tpu.matmul %135, %133, %cst_76 {dimension_numbers = #tpu.dot_dimension_numbers<[1], [0], [0], [1], [0, 0, 1, 1], [], []>} : vector<128x64xf32>, vector<64x8xf32>, vector<128x8xf32> -> vector<128x8xf32>
    %137 = arith.addf %132, %136 : vector<128x8xf32>
    %138 = vector.extract_strided_slice %53 {offsets = [0, 544], sizes = [64, 8], strides = [1, 1]} : vector<64x1024xf32> to vector<64x8xf32>
    %c17 = arith.constant 17 : index
    %c0_77 = arith.constant 0 : index
    %c0_78 = arith.constant 0 : index
    %139 = vector.load %arg6[%c17, %c0_77, %c0_78] : memref<30x128x64xf32, #tpu.memory_space<vmem>>, vector<1x128x64xf32>
    %140 = vector.shape_cast %139 : vector<1x128x64xf32> to vector<128x64xf32>
    %cst_79 = arith.constant dense<0.000000e+00> : vector<128x8xf32>
    %141 = tpu.matmul %140, %138, %cst_79 {dimension_numbers = #tpu.dot_dimension_numbers<[1], [0], [0], [1], [0, 0, 1, 1], [], []>} : vector<128x64xf32>, vector<64x8xf32>, vector<128x8xf32> -> vector<128x8xf32>
    %142 = arith.addf %137, %141 : vector<128x8xf32>
    %143 = vector.extract_strided_slice %53 {offsets = [0, 576], sizes = [64, 8], strides = [1, 1]} : vector<64x1024xf32> to vector<64x8xf32>
    %c18 = arith.constant 18 : index
    %c0_80 = arith.constant 0 : index
    %c0_81 = arith.constant 0 : index
    %144 = vector.load %arg6[%c18, %c0_80, %c0_81] : memref<30x128x64xf32, #tpu.memory_space<vmem>>, vector<1x128x64xf32>
    %145 = vector.shape_cast %144 : vector<1x128x64xf32> to vector<128x64xf32>
    %cst_82 = arith.constant dense<0.000000e+00> : vector<128x8xf32>
    %146 = tpu.matmul %145, %143, %cst_82 {dimension_numbers = #tpu.dot_dimension_numbers<[1], [0], [0], [1], [0, 0, 1, 1], [], []>} : vector<128x64xf32>, vector<64x8xf32>, vector<128x8xf32> -> vector<128x8xf32>
    %147 = arith.addf %142, %146 : vector<128x8xf32>
    %148 = vector.extract_strided_slice %53 {offsets = [0, 608], sizes = [64, 8], strides = [1, 1]} : vector<64x1024xf32> to vector<64x8xf32>
    %c19 = arith.constant 19 : index
    %c0_83 = arith.constant 0 : index
    %c0_84 = arith.constant 0 : index
    %149 = vector.load %arg6[%c19, %c0_83, %c0_84] : memref<30x128x64xf32, #tpu.memory_space<vmem>>, vector<1x128x64xf32>
    %150 = vector.shape_cast %149 : vector<1x128x64xf32> to vector<128x64xf32>
    %cst_85 = arith.constant dense<0.000000e+00> : vector<128x8xf32>
    %151 = tpu.matmul %150, %148, %cst_85 {dimension_numbers = #tpu.dot_dimension_numbers<[1], [0], [0], [1], [0, 0, 1, 1], [], []>} : vector<128x64xf32>, vector<64x8xf32>, vector<128x8xf32> -> vector<128x8xf32>
    %152 = arith.addf %147, %151 : vector<128x8xf32>
    %153 = vector.extract_strided_slice %53 {offsets = [0, 640], sizes = [64, 8], strides = [1, 1]} : vector<64x1024xf32> to vector<64x8xf32>
    %c20 = arith.constant 20 : index
    %c0_86 = arith.constant 0 : index
    %c0_87 = arith.constant 0 : index
    %154 = vector.load %arg6[%c20, %c0_86, %c0_87] : memref<30x128x64xf32, #tpu.memory_space<vmem>>, vector<1x128x64xf32>
    %155 = vector.shape_cast %154 : vector<1x128x64xf32> to vector<128x64xf32>
    %cst_88 = arith.constant dense<0.000000e+00> : vector<128x8xf32>
    %156 = tpu.matmul %155, %153, %cst_88 {dimension_numbers = #tpu.dot_dimension_numbers<[1], [0], [0], [1], [0, 0, 1, 1], [], []>} : vector<128x64xf32>, vector<64x8xf32>, vector<128x8xf32> -> vector<128x8xf32>
    %157 = arith.addf %152, %156 : vector<128x8xf32>
    %158 = vector.extract_strided_slice %53 {offsets = [0, 672], sizes = [64, 8], strides = [1, 1]} : vector<64x1024xf32> to vector<64x8xf32>
    %c21 = arith.constant 21 : index
    %c0_89 = arith.constant 0 : index
    %c0_90 = arith.constant 0 : index
    %159 = vector.load %arg6[%c21, %c0_89, %c0_90] : memref<30x128x64xf32, #tpu.memory_space<vmem>>, vector<1x128x64xf32>
    %160 = vector.shape_cast %159 : vector<1x128x64xf32> to vector<128x64xf32>
    %cst_91 = arith.constant dense<0.000000e+00> : vector<128x8xf32>
    %161 = tpu.matmul %160, %158, %cst_91 {dimension_numbers = #tpu.dot_dimension_numbers<[1], [0], [0], [1], [0, 0, 1, 1], [], []>} : vector<128x64xf32>, vector<64x8xf32>, vector<128x8xf32> -> vector<128x8xf32>
    %162 = arith.addf %157, %161 : vector<128x8xf32>
    %163 = vector.extract_strided_slice %53 {offsets = [0, 704], sizes = [64, 8], strides = [1, 1]} : vector<64x1024xf32> to vector<64x8xf32>
    %c22 = arith.constant 22 : index
    %c0_92 = arith.constant 0 : index
    %c0_93 = arith.constant 0 : index
    %164 = vector.load %arg6[%c22, %c0_92, %c0_93] : memref<30x128x64xf32, #tpu.memory_space<vmem>>, vector<1x128x64xf32>
    %165 = vector.shape_cast %164 : vector<1x128x64xf32> to vector<128x64xf32>
    %cst_94 = arith.constant dense<0.000000e+00> : vector<128x8xf32>
    %166 = tpu.matmul %165, %163, %cst_94 {dimension_numbers = #tpu.dot_dimension_numbers<[1], [0], [0], [1], [0, 0, 1, 1], [], []>} : vector<128x64xf32>, vector<64x8xf32>, vector<128x8xf32> -> vector<128x8xf32>
    %167 = arith.addf %162, %166 : vector<128x8xf32>
    %168 = vector.extract_strided_slice %53 {offsets = [0, 736], sizes = [64, 8], strides = [1, 1]} : vector<64x1024xf32> to vector<64x8xf32>
    %c23 = arith.constant 23 : index
    %c0_95 = arith.constant 0 : index
    %c0_96 = arith.constant 0 : index
    %169 = vector.load %arg6[%c23, %c0_95, %c0_96] : memref<30x128x64xf32, #tpu.memory_space<vmem>>, vector<1x128x64xf32>
    %170 = vector.shape_cast %169 : vector<1x128x64xf32> to vector<128x64xf32>
    %cst_97 = arith.constant dense<0.000000e+00> : vector<128x8xf32>
    %171 = tpu.matmul %170, %168, %cst_97 {dimension_numbers = #tpu.dot_dimension_numbers<[1], [0], [0], [1], [0, 0, 1, 1], [], []>} : vector<128x64xf32>, vector<64x8xf32>, vector<128x8xf32> -> vector<128x8xf32>
    %172 = arith.addf %167, %171 : vector<128x8xf32>
    %173 = vector.extract_strided_slice %53 {offsets = [0, 768], sizes = [64, 8], strides = [1, 1]} : vector<64x1024xf32> to vector<64x8xf32>
    %c24 = arith.constant 24 : index
    %c0_98 = arith.constant 0 : index
    %c0_99 = arith.constant 0 : index
    %174 = vector.load %arg6[%c24, %c0_98, %c0_99] : memref<30x128x64xf32, #tpu.memory_space<vmem>>, vector<1x128x64xf32>
    %175 = vector.shape_cast %174 : vector<1x128x64xf32> to vector<128x64xf32>
    %cst_100 = arith.constant dense<0.000000e+00> : vector<128x8xf32>
    %176 = tpu.matmul %175, %173, %cst_100 {dimension_numbers = #tpu.dot_dimension_numbers<[1], [0], [0], [1], [0, 0, 1, 1], [], []>} : vector<128x64xf32>, vector<64x8xf32>, vector<128x8xf32> -> vector<128x8xf32>
    %177 = arith.addf %172, %176 : vector<128x8xf32>
    %178 = vector.extract_strided_slice %53 {offsets = [0, 800], sizes = [64, 8], strides = [1, 1]} : vector<64x1024xf32> to vector<64x8xf32>
    %c25 = arith.constant 25 : index
    %c0_101 = arith.constant 0 : index
    %c0_102 = arith.constant 0 : index
    %179 = vector.load %arg6[%c25, %c0_101, %c0_102] : memref<30x128x64xf32, #tpu.memory_space<vmem>>, vector<1x128x64xf32>
    %180 = vector.shape_cast %179 : vector<1x128x64xf32> to vector<128x64xf32>
    %cst_103 = arith.constant dense<0.000000e+00> : vector<128x8xf32>
    %181 = tpu.matmul %180, %178, %cst_103 {dimension_numbers = #tpu.dot_dimension_numbers<[1], [0], [0], [1], [0, 0, 1, 1], [], []>} : vector<128x64xf32>, vector<64x8xf32>, vector<128x8xf32> -> vector<128x8xf32>
    %182 = arith.addf %177, %181 : vector<128x8xf32>
    %183 = vector.extract_strided_slice %53 {offsets = [0, 832], sizes = [64, 8], strides = [1, 1]} : vector<64x1024xf32> to vector<64x8xf32>
    %c26 = arith.constant 26 : index
    %c0_104 = arith.constant 0 : index
    %c0_105 = arith.constant 0 : index
    %184 = vector.load %arg6[%c26, %c0_104, %c0_105] : memref<30x128x64xf32, #tpu.memory_space<vmem>>, vector<1x128x64xf32>
    %185 = vector.shape_cast %184 : vector<1x128x64xf32> to vector<128x64xf32>
    %cst_106 = arith.constant dense<0.000000e+00> : vector<128x8xf32>
    %186 = tpu.matmul %185, %183, %cst_106 {dimension_numbers = #tpu.dot_dimension_numbers<[1], [0], [0], [1], [0, 0, 1, 1], [], []>} : vector<128x64xf32>, vector<64x8xf32>, vector<128x8xf32> -> vector<128x8xf32>
    %187 = arith.addf %182, %186 : vector<128x8xf32>
    %188 = vector.extract_strided_slice %53 {offsets = [0, 864], sizes = [64, 8], strides = [1, 1]} : vector<64x1024xf32> to vector<64x8xf32>
    %c27 = arith.constant 27 : index
    %c0_107 = arith.constant 0 : index
    %c0_108 = arith.constant 0 : index
    %189 = vector.load %arg6[%c27, %c0_107, %c0_108] : memref<30x128x64xf32, #tpu.memory_space<vmem>>, vector<1x128x64xf32>
    %190 = vector.shape_cast %189 : vector<1x128x64xf32> to vector<128x64xf32>
    %cst_109 = arith.constant dense<0.000000e+00> : vector<128x8xf32>
    %191 = tpu.matmul %190, %188, %cst_109 {dimension_numbers = #tpu.dot_dimension_numbers<[1], [0], [0], [1], [0, 0, 1, 1], [], []>} : vector<128x64xf32>, vector<64x8xf32>, vector<128x8xf32> -> vector<128x8xf32>
    %192 = arith.addf %187, %191 : vector<128x8xf32>
    %193 = vector.extract_strided_slice %53 {offsets = [0, 896], sizes = [64, 8], strides = [1, 1]} : vector<64x1024xf32> to vector<64x8xf32>
    %c28 = arith.constant 28 : index
    %c0_110 = arith.constant 0 : index
    %c0_111 = arith.constant 0 : index
    %194 = vector.load %arg6[%c28, %c0_110, %c0_111] : memref<30x128x64xf32, #tpu.memory_space<vmem>>, vector<1x128x64xf32>
    %195 = vector.shape_cast %194 : vector<1x128x64xf32> to vector<128x64xf32>
    %cst_112 = arith.constant dense<0.000000e+00> : vector<128x8xf32>
    %196 = tpu.matmul %195, %193, %cst_112 {dimension_numbers = #tpu.dot_dimension_numbers<[1], [0], [0], [1], [0, 0, 1, 1], [], []>} : vector<128x64xf32>, vector<64x8xf32>, vector<128x8xf32> -> vector<128x8xf32>
    %197 = arith.addf %192, %196 : vector<128x8xf32>
    %198 = vector.extract_strided_slice %53 {offsets = [0, 928], sizes = [64, 8], strides = [1, 1]} : vector<64x1024xf32> to vector<64x8xf32>
    %c29 = arith.constant 29 : index
    %c0_113 = arith.constant 0 : index
    %c0_114 = arith.constant 0 : index
    %199 = vector.load %arg6[%c29, %c0_113, %c0_114] : memref<30x128x64xf32, #tpu.memory_space<vmem>>, vector<1x128x64xf32>
    %200 = vector.shape_cast %199 : vector<1x128x64xf32> to vector<128x64xf32>
    %cst_115 = arith.constant dense<0.000000e+00> : vector<128x8xf32>
    %201 = tpu.matmul %200, %198, %cst_115 {dimension_numbers = #tpu.dot_dimension_numbers<[1], [0], [0], [1], [0, 0, 1, 1], [], []>} : vector<128x64xf32>, vector<64x8xf32>, vector<128x8xf32> -> vector<128x8xf32>
    %202 = arith.addf %197, %201 : vector<128x8xf32>
    %c0_116 = arith.constant 0 : index
    %c0_117 = arith.constant 0 : index
    %203 = vector.load %arg7[%c0_116, %c0_117] : memref<128x1xf32, #tpu.memory_space<vmem>>, vector<128x1xf32>
    %204 = vector.broadcast %203 : vector<128x1xf32> to vector<128x8xf32>
    %205 = arith.addf %202, %204 : vector<128x8xf32>
    %c0_118 = arith.constant 0 : index
    %c0_119 = arith.constant 0 : index
    %206 = vector.load %arg8[%c0_118, %c0_119] : memref<1x128xf32, #tpu.memory_space<vmem>>, vector<1x128xf32>
    %cst_120 = arith.constant dense<0.000000e+00> : vector<1x8xf32>
    %207 = tpu.matmul %206, %205, %cst_120 {dimension_numbers = #tpu.dot_dimension_numbers<[1], [0], [0], [1], [0, 0, 1, 1], [], []>} : vector<1x128xf32>, vector<128x8xf32>, vector<1x8xf32> -> vector<1x8xf32>
    %c0_121 = arith.constant 0 : index
    %c0_122 = arith.constant 0 : index
    %208 = vector.load %arg9[%c0_121, %c0_122] : memref<1x1xf32, #tpu.memory_space<vmem>>, vector<1x1xf32>
    %209 = vector.broadcast %208 : vector<1x1xf32> to vector<1x8xf32>
    %210 = arith.addf %207, %209 : vector<1x8xf32>
    %cst_123 = arith.constant 0.000000e+00 : f32
    %211 = vector.broadcast %cst_123 : f32 to vector<1x8xf32>
    %212 = arith.maximumf %210, %211 : vector<1x8xf32>
    %c0_124 = arith.constant 0 : index
    %c0_125 = arith.constant 0 : index
    %213 = vector.load %arg10[%c0_124, %c0_125] : memref<1x1xf32, #tpu.memory_space<vmem>>, vector<1x1xf32>
    %214 = vector.broadcast %213 : vector<1x1xf32> to vector<1x8xf32>
    %215 = arith.mulf %212, %214 : vector<1x8xf32>
    %c0_126 = arith.constant 0 : index
    %c0_127 = arith.constant 0 : index
    %216 = vector.load %arg11[%c0_126, %c0_127] : memref<1x1xf32, #tpu.memory_space<vmem>>, vector<1x1xf32>
    %217 = vector.broadcast %216 : vector<1x1xf32> to vector<1x8xf32>
    %218 = arith.addf %215, %217 : vector<1x8xf32>
    %c0_128 = arith.constant 0 : index
    %c0_129 = arith.constant 0 : index
    %c0_130 = arith.constant 0 : index
    %219 = vector.load %arg12[%c0_128, %c0_129, %c0_130] : memref<1x1x8xf32, #tpu.memory_space<vmem>>, vector<1x1x8xf32>
    %220 = vector.shape_cast %219 : vector<1x1x8xf32> to vector<1x8xf32>
    %221 = vector.shape_cast %218 : vector<1x8xf32> to vector<1x1x8xf32>
    tpu.vector_store %arg12[%c0_128, %c0_129, %c0_130], %221 {strides = array<i32>} : memref<1x1x8xf32, #tpu.memory_space<vmem>>, vector<1x1x8xf32>,
    return
  }
  func.func @transform_0(%arg0: i32) -> (i32, i32, i32) {
    %c0_i32 = arith.constant 0 : i32
    %c0_i32_0 = arith.constant 0 : i32
    %c0_i32_1 = arith.constant 0 : i32
    return %arg0, %c0_i32, %c0_i32_0 : i32, i32, i32
  }
  func.func @transform_1(%arg0: i32) -> (i32, i32) {
    %c0_i32 = arith.constant 0 : i32
    %c0_i32_0 = arith.constant 0 : i32
    %c0_i32_1 = arith.constant 0 : i32
    return %c0_i32, %c0_i32_0 : i32, i32
  }
  func.func @transform_2(%arg0: i32) -> (i32, i32) {
    %c0_i32 = arith.constant 0 : i32
    %c0_i32_0 = arith.constant 0 : i32
    %c0_i32_1 = arith.constant 0 : i32
    return %c0_i32, %c0_i32_0 : i32, i32
  }
  func.func @transform_3(%arg0: i32) -> (i32, i32, i32) {
    %c0_i32 = arith.constant 0 : i32
    %c0_i32_0 = arith.constant 0 : i32
    %c0_i32_1 = arith.constant 0 : i32
    %c0_i32_2 = arith.constant 0 : i32
    return %c0_i32, %c0_i32_0, %c0_i32_1 : i32, i32, i32
  }
  func.func @transform_4(%arg0: i32) -> (i32, i32) {
    %c0_i32 = arith.constant 0 : i32
    %c0_i32_0 = arith.constant 0 : i32
    %c0_i32_1 = arith.constant 0 : i32
    return %c0_i32, %c0_i32_0 : i32, i32
  }
  func.func @transform_5(%arg0: i32) -> (i32, i32, i32) {
    %c0_i32 = arith.constant 0 : i32
    %c0_i32_0 = arith.constant 0 : i32
    %c0_i32_1 = arith.constant 0 : i32
    %c0_i32_2 = arith.constant 0 : i32
    return %c0_i32, %c0_i32_0, %c0_i32_1 : i32, i32, i32
  }
  func.func @transform_6(%arg0: i32) -> (i32, i32) {
    %c0_i32 = arith.constant 0 : i32
    %c0_i32_0 = arith.constant 0 : i32
    %c0_i32_1 = arith.constant 0 : i32
    return %c0_i32, %c0_i32_0 : i32, i32
  }
  func.func @transform_7(%arg0: i32) -> (i32, i32) {
    %c0_i32 = arith.constant 0 : i32
    %c0_i32_0 = arith.constant 0 : i32
    %c0_i32_1 = arith.constant 0 : i32
    return %c0_i32, %c0_i32_0 : i32, i32
  }
  func.func @transform_8(%arg0: i32) -> (i32, i32) {
    %c0_i32 = arith.constant 0 : i32
    %c0_i32_0 = arith.constant 0 : i32
    %c0_i32_1 = arith.constant 0 : i32
    return %c0_i32, %c0_i32_0 : i32, i32
  }
  func.func @transform_9(%arg0: i32) -> (i32, i32) {
    %c0_i32 = arith.constant 0 : i32
    %c0_i32_0 = arith.constant 0 : i32
    %c0_i32_1 = arith.constant 0 : i32
    return %c0_i32, %c0_i32_0 : i32, i32
  }
  func.func @transform_10(%arg0: i32) -> (i32, i32) {
    %c0_i32 = arith.constant 0 : i32
    %c0_i32_0 = arith.constant 0 : i32
    %c0_i32_1 = arith.constant 0 : i32
    return %c0_i32, %c0_i32_0 : i32, i32
  }
  func.func @transform_11(%arg0: i32) -> (i32, i32, i32) {
    %c0_i32 = arith.constant 0 : i32
    %c0_i32_0 = arith.constant 0 : i32
    %c0_i32_1 = arith.constant 0 : i32
    return %arg0, %c0_i32, %c0_i32_0 : i32, i32, i32
  }
}

</mosaic_0001>

<llo_original>
// kernel: cnn_forward.1
$region0: #{cnn_forward.1}
  #allocation0 [shape = 'u32[]', space=smem, size = 0x4, offset = 0x4, fixed_abs, tag = 'smem constant byte address 0x4 - core index']
  #allocation1 [shape = 'u32[144,128]{1,0:T(1,128)}', space=vmem, size = 0x12000, scoped, tag = 'internal scratch']
  #allocation2 [shape = 'f32[1,1]{1,0:T(1,128)S(1)}', space=vmem, size = 0x200, scoped, tag = 'scoped memory for cnn_forward.1']
  #allocation3 [shape = 'f32[1,1]{1,0:T(1,128)S(1)}', space=vmem, size = 0x200, scoped, tag = 'scoped memory for cnn_forward.1']
  #allocation4 [shape = 'f32[1,1]{1,0:T(1,128)S(1)}', space=vmem, size = 0x200, scoped, tag = 'scoped memory for cnn_forward.1']
  %s0 = inlined_call_operand.vmem [shape: f32[2,1,1024], index: 0, kind: input, shape index: {}]
  %s1 = inlined_call_operand.vmem [shape: f32[64,3], index: 1, kind: input, shape index: {}]
  %s2 = inlined_call_operand.vmem [shape: f32[64,1], index: 2, kind: input, shape index: {}]
  %s3 = inlined_call_operand.vmem [shape: f32[3,64,64], index: 3, kind: input, shape index: {}]
  %s4 = inlined_call_operand.vmem [shape: f32[64,1], index: 4, kind: input, shape index: {}]
  %s5 = inlined_call_operand.vmem [shape: f32[30,128,64], index: 5, kind: input, shape index: {}]
  %s6 = inlined_call_operand.vmem [shape: f32[128,1], index: 6, kind: input, shape index: {}]
  %s7 = inlined_call_operand.vmem [shape: f32[1,128], index: 7, kind: input, shape index: {}]
  %s8 = inlined_call_operand.<no memory space> [shape: f32[1,1], index: 8, kind: input, shape index: {}]
  %s9 = inlined_call_operand.<no memory space> [shape: f32[1,1], index: 9, kind: input, shape index: {}]
  %s10 = inlined_call_operand.<no memory space> [shape: f32[1,1], index: 10, kind: input, shape index: {}]
  %s11 = inlined_call_operand.vmem [shape: f32[2,1,8], index: 11, kind: output, shape index: {}]
  %s12 = sld [smem:[#allocation0]]
  $region77: #{cnn_forward.1} parent=0
    _
  %s14 = ssub.s32 1, %s12
  %s15 = scalar_select 0, %s14, %s12
  %v16 = vstv %s8
  %17 = vst [vmem:[#allocation2] sm:$0x1] %v16
  %v18 = vstv %s9
  %19 = vst [vmem:[#allocation3] sm:$0x1] %v18
  %v20 = vstv %s10
  %21 = vst [vmem:[#allocation4] sm:$0x1] %v20
  loop: start=0, step=1, limit=4
  $region2: #{cnn_forward.1} parent=0 // loop_pre_header
    _
  $region3: #{cnn_forward.1} parent=0 // loop_header
    %s23 = sphi 0, %s27
    %p24 = scmp.ge.s32.totalorder %s23, 4
    %s33 = sphi 0, %s35
    %s36 = sphi 0, %s33
    %s37 = sphi 0, %s36
    %s53 = sphi 0, %s37
    %s57 = sphi 0, %s57
    %s59 = sphi 0, %s57
    %s60 = sphi 0, %s59
    %s74 = sphi 0, %s60
    %s78 = sphi 0, %s78
    %s80 = sphi 0, %s78
    %s81 = sphi 0, %s80
    %s95 = sphi 0, %s81
    %s99 = sphi 0, %s99
    %s101 = sphi 0, %s99
    %s102 = sphi 0, %s101
    %s116 = sphi 0, %s102
    %s120 = sphi 0, %s120
    %s122 = sphi 0, %s120
    %s123 = sphi 0, %s122
    %s137 = sphi 0, %s123
    %s141 = sphi 0, %s141
    %s143 = sphi 0, %s141
    %s144 = sphi 0, %s143
    %s158 = sphi 0, %s144
    %s162 = sphi 0, %s162
    %s164 = sphi 0, %s162
    %s165 = sphi 0, %s164
    %s179 = sphi 0, %s165
    %s183 = sphi 0, %s183
    %s185 = sphi 0, %s183
    %s186 = sphi 0, %s185
    %s200 = sphi 0, %s186
    %s204 = sphi 0, %s204
    %s206 = sphi 0, %s204
    %s207 = sphi 0, %s206
    %s221 = sphi 0, %s207
    %s225 = sphi 0, %s225
    %s227 = sphi 0, %s225
    %s228 = sphi 0, %s227
    %s242 = sphi 0, %s228
    %s246 = sphi 0, %s246
    %s248 = sphi 0, %s246
    %s249 = sphi 0, %s248
    %s263 = sphi 0, %s249
    %s269 = sphi 0, %s271
    %s272 = sphi 0, %s269
    %s273 = sphi 0, %s272
    %s289 = sphi 0, %s273
  $region4: #{cnn_forward.1} parent=0 // loop_header_branch
    %26 = sbr.rel (%p24) target = $region8
  $region5: #{cnn_forward.1} parent=0 // loop_body
    %s28 = ssub.s32 %s23, 1
    %s29 = ssub.s32 %s23, 2
    %s30 = sadd.s32 %s23, 1
    %s31 = ssub.s32 %s23, %s30
    %p32 = scmp.eq.s32.totalorder %s31, 0
    %s34 = sadd.s32 %s33, 1
    %s35 = scalar_select %p32, %s33, %s34
    %p38 = pneg %p32
    %p39 = scmp.eq.s32.totalorder %s23, 1
    %p40 = por %p38, %p39
    %p41 = scmp.ne.s32.totalorder %s33, %s36
    %p42 = scmp.eq.s32.totalorder %s23, 0
    %p43 = por %p41, %p42
    %p44 = scmp.ne.s32.totalorder %s33, %s36
    %p45 = scmp.eq.s32.totalorder %s28, 1
    %p46 = por %p44, %p45
    %p47 = scmp.ne.s32.totalorder %s36, %s37
    %p48 = scmp.eq.s32.totalorder %s28, 0
    %p49 = por %p47, %p48
    %p50 = scmp.ne.s32.totalorder %s36, %s37
    %p51 = scmp.eq.s32.totalorder %s29, 1
    %p52 = por %p50, %p51
    %p54 = scmp.ne.s32.totalorder %s37, %s53
    %p55 = scmp.eq.s32.totalorder %s29, 0
    %p56 = por %p54, %p55
    %s58 = sadd.s32 %s57, 1
    %p61 = scmp.eq.s32.totalorder %s23, 1
    %p62 = scmp.ne.s32.totalorder %s57, %s59
    %p63 = scmp.eq.s32.totalorder %s23, 0
    %p64 = por %p62, %p63
    %p65 = scmp.ne.s32.totalorder %s57, %s59
    %p66 = scmp.eq.s32.totalorder %s28, 1
    %p67 = por %p65, %p66
    %p68 = scmp.ne.s32.totalorder %s59, %s60
    %p69 = scmp.eq.s32.totalorder %s28, 0
    %p70 = por %p68, %p69
    %p71 = scmp.ne.s32.totalorder %s59, %s60
    %p72 = scmp.eq.s32.totalorder %s29, 1
    %p73 = por %p71, %p72
    %p75 = scmp.ne.s32.totalorder %s60, %s74
    %p76 = scmp.eq.s32.totalorder %s29, 0
    %p77 = por %p75, %p76
    %s79 = sadd.s32 %s78, 1
    %p82 = scmp.eq.s32.totalorder %s23, 1
    %p83 = scmp.ne.s32.totalorder %s78, %s80
    %p84 = scmp.eq.s32.totalorder %s23, 0
    %p85 = por %p83, %p84
    %p86 = scmp.ne.s32.totalorder %s78, %s80
    %p87 = scmp.eq.s32.totalorder %s28, 1
    %p88 = por %p86, %p87
    %p89 = scmp.ne.s32.totalorder %s80, %s81
    %p90 = scmp.eq.s32.totalorder %s28, 0
    %p91 = por %p89, %p90
    %p92 = scmp.ne.s32.totalorder %s80, %s81
    %p93 = scmp.eq.s32.totalorder %s29, 1
    %p94 = por %p92, %p93
    %p96 = scmp.ne.s32.totalorder %s81, %s95
    %p97 = scmp.eq.s32.totalorder %s29, 0
    %p98 = por %p96, %p97
    %s100 = sadd.s32 %s99, 1
    %p103 = scmp.eq.s32.totalorder %s23, 1
    %p104 = scmp.ne.s32.totalorder %s99, %s101
    %p105 = scmp.eq.s32.totalorder %s23, 0
    %p106 = por %p104, %p105
    %p107 = scmp.ne.s32.totalorder %s99, %s101
    %p108 = scmp.eq.s32.totalorder %s28, 1
    %p109 = por %p107, %p108
    %p110 = scmp.ne.s32.totalorder %s101, %s102
    %p111 = scmp.eq.s32.totalorder %s28, 0
    %p112 = por %p110, %p111
    %p113 = scmp.ne.s32.totalorder %s101, %s102
    %p114 = scmp.eq.s32.totalorder %s29, 1
    %p115 = por %p113, %p114
    %p117 = scmp.ne.s32.totalorder %s102, %s116
    %p118 = scmp.eq.s32.totalorder %s29, 0
    %p119 = por %p117, %p118
    %s121 = sadd.s32 %s120, 1
    %p124 = scmp.eq.s32.totalorder %s23, 1
    %p125 = scmp.ne.s32.totalorder %s120, %s122
    %p126 = scmp.eq.s32.totalorder %s23, 0
    %p127 = por %p125, %p126
    %p128 = scmp.ne.s32.totalorder %s120, %s122
    %p129 = scmp.eq.s32.totalorder %s28, 1
    %p130 = por %p128, %p129
    %p131 = scmp.ne.s32.totalorder %s122, %s123
    %p132 = scmp.eq.s32.totalorder %s28, 0
    %p133 = por %p131, %p132
    %p134 = scmp.ne.s32.totalorder %s122, %s123
    %p135 = scmp.eq.s32.totalorder %s29, 1
    %p136 = por %p134, %p135
    %p138 = scmp.ne.s32.totalorder %s123, %s137
    %p139 = scmp.eq.s32.totalorder %s29, 0
    %p140 = por %p138, %p139
    %s142 = sadd.s32 %s141, 1
    %p145 = scmp.eq.s32.totalorder %s23, 1
    %p146 = scmp.ne.s32.totalorder %s141, %s143
    %p147 = scmp.eq.s32.totalorder %s23, 0
    %p148 = por %p146, %p147
    %p149 = scmp.ne.s32.totalorder %s141, %s143
    %p150 = scmp.eq.s32.totalorder %s28, 1
    %p151 = por %p149, %p150
    %p152 = scmp.ne.s32.totalorder %s143, %s144
    %p153 = scmp.eq.s32.totalorder %s28, 0
    %p154 = por %p152, %p153
    %p155 = scmp.ne.s32.totalorder %s143, %s144
    %p156 = scmp.eq.s32.totalorder %s29, 1
    %p157 = por %p155, %p156
    %p159 = scmp.ne.s32.totalorder %s144, %s158
    %p160 = scmp.eq.s32.totalorder %s29, 0
    %p161 = por %p159, %p160
    %s163 = sadd.s32 %s162, 1
    %p166 = scmp.eq.s32.totalorder %s23, 1
    %p167 = scmp.ne.s32.totalorder %s162, %s164
    %p168 = scmp.eq.s32.totalorder %s23, 0
    %p169 = por %p167, %p168
    %p170 = scmp.ne.s32.totalorder %s162, %s164
    %p171 = scmp.eq.s32.totalorder %s28, 1
    %p172 = por %p170, %p171
    %p173 = scmp.ne.s32.totalorder %s164, %s165
    %p174 = scmp.eq.s32.totalorder %s28, 0
    %p175 = por %p173, %p174
    %p176 = scmp.ne.s32.totalorder %s164, %s165
    %p177 = scmp.eq.s32.totalorder %s29, 1
    %p178 = por %p176, %p177
    %p180 = scmp.ne.s32.totalorder %s165, %s179
    %p181 = scmp.eq.s32.totalorder %s29, 0
    %p182 = por %p180, %p181
    %s184 = sadd.s32 %s183, 1
    %p187 = scmp.eq.s32.totalorder %s23, 1
    %p188 = scmp.ne.s32.totalorder %s183, %s185
    %p189 = scmp.eq.s32.totalorder %s23, 0
    %p190 = por %p188, %p189
    %p191 = scmp.ne.s32.totalorder %s183, %s185
    %p192 = scmp.eq.s32.totalorder %s28, 1
    %p193 = por %p191, %p192
    %p194 = scmp.ne.s32.totalorder %s185, %s186
    %p195 = scmp.eq.s32.totalorder %s28, 0
    %p196 = por %p194, %p195
    %p197 = scmp.ne.s32.totalorder %s185, %s186
    %p198 = scmp.eq.s32.totalorder %s29, 1
    %p199 = por %p197, %p198
    %p201 = scmp.ne.s32.totalorder %s186, %s200
    %p202 = scmp.eq.s32.totalorder %s29, 0
    %p203 = por %p201, %p202
    %s205 = sadd.s32 %s204, 1
    %p208 = scmp.eq.s32.totalorder %s23, 1
    %p209 = scmp.ne.s32.totalorder %s204, %s206
    %p210 = scmp.eq.s32.totalorder %s23, 0
    %p211 = por %p209, %p210
    %p212 = scmp.ne.s32.totalorder %s204, %s206
    %p213 = scmp.eq.s32.totalorder %s28, 1
    %p214 = por %p212, %p213
    %p215 = scmp.ne.s32.totalorder %s206, %s207
    %p216 = scmp.eq.s32.totalorder %s28, 0
    %p217 = por %p215, %p216
    %p218 = scmp.ne.s32.totalorder %s206, %s207
    %p219 = scmp.eq.s32.totalorder %s29, 1
    %p220 = por %p218, %p219
    %p222 = scmp.ne.s32.totalorder %s207, %s221
    %p223 = scmp.eq.s32.totalorder %s29, 0
    %p224 = por %p222, %p223
    %s226 = sadd.s32 %s225, 1
    %p229 = scmp.eq.s32.totalorder %s23, 1
    %p230 = scmp.ne.s32.totalorder %s225, %s227
    %p231 = scmp.eq.s32.totalorder %s23, 0
    %p232 = por %p230, %p231
    %p233 = scmp.ne.s32.totalorder %s225, %s227
    %p234 = scmp.eq.s32.totalorder %s28, 1
    %p235 = por %p233, %p234
    %p236 = scmp.ne.s32.totalorder %s227, %s228
    %p237 = scmp.eq.s32.totalorder %s28, 0
    %p238 = por %p236, %p237
    %p239 = scmp.ne.s32.totalorder %s227, %s228
    %p240 = scmp.eq.s32.totalorder %s29, 1
    %p241 = por %p239, %p240
    %p243 = scmp.ne.s32.totalorder %s228, %s242
    %p244 = scmp.eq.s32.totalorder %s29, 0
    %p245 = por %p243, %p244
    %s247 = sadd.s32 %s246, 1
    %p250 = scmp.eq.s32.totalorder %s23, 1
    %p251 = scmp.ne.s32.totalorder %s246, %s248
    %p252 = scmp.eq.s32.totalorder %s23, 0
    %p253 = por %p251, %p252
    %p254 = scmp.ne.s32.totalorder %s246, %s248
    %p255 = scmp.eq.s32.totalorder %s28, 1
    %p256 = por %p254, %p255
    %p257 = scmp.ne.s32.totalorder %s248, %s249
    %p258 = scmp.eq.s32.totalorder %s28, 0
    %p259 = por %p257, %p258
    %p260 = scmp.ne.s32.totalorder %s248, %s249
    %p261 = scmp.eq.s32.totalorder %s29, 1
    %p262 = por %p260, %p261
    %p264 = scmp.ne.s32.totalorder %s249, %s263
    %p265 = scmp.eq.s32.totalorder %s29, 0
    %p266 = por %p264, %p265
    %s267 = ssub.s32 %s23, %s30
    %p268 = scmp.eq.s32.totalorder %s267, 0
    %s270 = sadd.s32 %s269, 1
    %s271 = scalar_select %p268, %s269, %s270
    %p274 = pneg %p268
    %p275 = scmp.eq.s32.totalorder %s23, 1
    %p276 = por %p274, %p275
    %p277 = scmp.ne.s32.totalorder %s269, %s272
    %p278 = scmp.eq.s32.totalorder %s23, 0
    %p279 = por %p277, %p278
    %p280 = scmp.ne.s32.totalorder %s269, %s272
    %p281 = scmp.eq.s32.totalorder %s28, 1
    %p282 = por %p280, %p281
    %p283 = scmp.ne.s32.totalorder %s272, %s273
    %p284 = scmp.eq.s32.totalorder %s28, 0
    %p285 = por %p283, %p284
    %p286 = scmp.ne.s32.totalorder %s272, %s273
    %p287 = scmp.eq.s32.totalorder %s29, 1
    %p288 = por %p286, %p287
    %p290 = scmp.ne.s32.totalorder %s273, %s289
    %p291 = scmp.eq.s32.totalorder %s29, 0
    %p292 = por %p290, %p291
    %p293 = scmp.le.s32.totalorder 1, %s23
    %p294 = scmp.lt.s32.totalorder %s23, 3
    %p295 = pnand %p293, %p294
    %p296 = pneg %p295
    // Predicated region
    $region9: #{cnn_forward.1} parent=5 // pred_check
      _
    $region10: #{cnn_forward.1} parent=5 // pred_check_branch
      %298 = sbr.rel (%p295) target = $region12
    $region11: #{cnn_forward.1} parent=5 // pred_region
      %s299 = ssub.s32 %s23, 1
      // Predicated region
      $region13: #{cnn_forward.1} parent=11 // pred_check
        %p300 = pneg %p70
      $region14: #{cnn_forward.1} parent=11 // pred_check_branch
        %302 = sbr.rel (%p300) target = $region16
      $region15: #{cnn_forward.1} parent=11 // pred_region
        _
      $region16: #{cnn_forward.1} parent=11 // pred_fallthru
        _
      // Predicated region
      $region17: #{cnn_forward.1} parent=11 // pred_check
        %p303 = pneg %p91
      $region18: #{cnn_forward.1} parent=11 // pred_check_branch
        %305 = sbr.rel (%p303) target = $region20
      $region19: #{cnn_forward.1} parent=11 // pred_region
        _
      $region20: #{cnn_forward.1} parent=11 // pred_fallthru
        _
      // Predicated region
      $region21: #{cnn_forward.1} parent=11 // pred_check
        %p306 = pneg %p112
      $region22: #{cnn_forward.1} parent=11 // pred_check_branch
        %308 = sbr.rel (%p306) target = $region24
      $region23: #{cnn_forward.1} parent=11 // pred_region
        _
      $region24: #{cnn_forward.1} parent=11 // pred_fallthru
        _
      // Predicated region
      $region25: #{cnn_forward.1} parent=11 // pred_check
        %p309 = pneg %p133
      $region26: #{cnn_forward.1} parent=11 // pred_check_branch
        %311 = sbr.rel (%p309) target = $region28
      $region27: #{cnn_forward.1} parent=11 // pred_region
        _
      $region28: #{cnn_forward.1} parent=11 // pred_fallthru
        _
      // Predicated region
      $region29: #{cnn_forward.1} parent=11 // pred_check
        %p312 = pneg %p154
      $region30: #{cnn_forward.1} parent=11 // pred_check_branch
        %314 = sbr.rel (%p312) target = $region32
      $region31: #{cnn_forward.1} parent=11 // pred_region
        _
      $region32: #{cnn_forward.1} parent=11 // pred_fallthru
        _
      // Predicated region
      $region33: #{cnn_forward.1} parent=11 // pred_check
        %p315 = pneg %p175
      $region34: #{cnn_forward.1} parent=11 // pred_check_branch
        %317 = sbr.rel (%p315) target = $region36
      $region35: #{cnn_forward.1} parent=11 // pred_region
        _
      $region36: #{cnn_forward.1} parent=11 // pred_fallthru
        _
      // Predicated region
      $region37: #{cnn_forward.1} parent=11 // pred_check
        %p318 = pneg %p196
      $region38: #{cnn_forward.1} parent=11 // pred_check_branch
        %320 = sbr.rel (%p318) target = $region40
      $region39: #{cnn_forward.1} parent=11 // pred_region
        _
      $region40: #{cnn_forward.1} parent=11 // pred_fallthru
        _
      // Predicated region
      $region41: #{cnn_forward.1} parent=11 // pred_check
        %p321 = pneg %p217
      $region42: #{cnn_forward.1} parent=11 // pred_check_branch
        %323 = sbr.rel (%p321) target = $region44
      $region43: #{cnn_forward.1} parent=11 // pred_region
        _
      $region44: #{cnn_forward.1} parent=11 // pred_fallthru
        _
      // Predicated region
      $region45: #{cnn_forward.1} parent=11 // pred_check
        %p324 = pneg %p238
      $region46: #{cnn_forward.1} parent=11 // pred_check_branch
        %326 = sbr.rel (%p324) target = $region48
      $region47: #{cnn_forward.1} parent=11 // pred_region
        _
      $region48: #{cnn_forward.1} parent=11 // pred_fallthru
        _
      // Predicated region
      $region49: #{cnn_forward.1} parent=11 // pred_check
        %p327 = pneg %p259
      $region50: #{cnn_forward.1} parent=11 // pred_check_branch
        %329 = sbr.rel (%p327) target = $region52
      $region51: #{cnn_forward.1} parent=11 // pred_region
        _
      $region52: #{cnn_forward.1} parent=11 // pred_fallthru
        _
    $region12: #{cnn_forward.1} parent=5 // pred_fallthru
      _
    %p330 = scmp.lt.s32.totalorder %s23, 2
    // Predicated region
    $region53: #{cnn_forward.1} parent=5 // pred_check
      %p331 = pneg %p330
    $region54: #{cnn_forward.1} parent=5 // pred_check_branch
      %333 = sbr.rel (%p331) target = $region56
    $region55: #{cnn_forward.1} parent=5 // pred_region
      // Predicated region
      $region57: #{cnn_forward.1} parent=55 // pred_check
        %p334 = pneg %p43
      $region58: #{cnn_forward.1} parent=55 // pred_check_branch
        %336 = sbr.rel (%p334) target = $region60
      $region59: #{cnn_forward.1} parent=55 // pred_region
        %p337 = scmp.lt.s32.totalorder %s23, 1
        %s338 = scalar_select %p337, %s23, 1
        %s339 = smul.addr %s338, 8
        %s340 = scalar_lea.vmem %s0, %s339
      $region60: #{cnn_forward.1} parent=55 // pred_fallthru
        _
    $region56: #{cnn_forward.1} parent=5 // pred_fallthru
      _
    %p341 = scmp.le.s32.totalorder 1, %s23
    %p342 = scmp.lt.s32.totalorder %s23, 3
    %p343 = pnand %p341, %p342
    %p344 = pneg %p343
    // Predicated region
    $region61: #{cnn_forward.1} parent=5 // pred_check
      _
    $region62: #{cnn_forward.1} parent=5 // pred_check_branch
      %346 = sbr.rel (%p343) target = $region64
    $region63: #{cnn_forward.1} parent=5 // pred_region
      %s347 = ssub.s32 %s23, 1
      %p348 = scmp.lt.s32.totalorder %s28, 1
      %s349 = scalar_select %p348, %s28, 1
      %s350 = smul.addr %s349, 8
      %s351 = scalar_lea.vmem %s0, %s350
      %p352 = pneg %p49
      %p353 = pneg %p46
      %p354 = pneg %p70
      %p355 = pneg %p67
      %p356 = pneg %p91
      %p357 = pneg %p88
      %p358 = pneg %p112
      %p359 = pneg %p109
      %p360 = pneg %p133
      %p361 = pneg %p130
      %p362 = pneg %p154
      %p363 = pneg %p151
      %p364 = pneg %p175
      %p365 = pneg %p172
      %p366 = pneg %p196
      %p367 = pneg %p193
      %p368 = pneg %p217
      %p369 = pneg %p214
      %p370 = pneg %p238
      %p371 = pneg %p235
      %p372 = pneg %p259
      %p373 = pneg %p256
      %p374 = pneg %p285
      %p375 = pneg %p282
      %p376 = scmp.lt.s32.totalorder %s28, 1
      %s377 = scalar_select %p376, %s28, 1
      %s378 = scalar_lea.vmem %s11, %s377
      %p379 = scmp.lt.s32.totalorder %s28, 1
      %s380 = scalar_select %p379, %s28, 1
      %s381 = smul.addr %s380, 8
      %s382 = scalar_lea.vmem %s0, %s381
      %p383 = scmp.lt.s32.totalorder %s28, 1
      %s384 = scalar_select %p383, %s28, 1
      %s385 = scalar_lea.vmem %s11, %s384
      %v386 = vld [vmem:[%s382] sm:$0xff]
      %v387 = vld [vmem:[%s1] sm:$0xff]
      %v388 = vld [vmem:[%s1 + $0x8] sm:$0xff]
      %v389 = vld [vmem:[%s1 + $0x10] sm:$0xff]
      %v390 = vld [vmem:[%s1 + $0x18] sm:$0xff]
      %v391 = vld [vmem:[%s1 + $0x20] sm:$0xff]
      %v392 = vld [vmem:[%s1 + $0x28] sm:$0xff]
      %v393 = vld [vmem:[%s1 + $0x30] sm:$0xff]
      %v394 = vld [vmem:[%s1 + $0x38] sm:$0xff]
      %396 = vset.pattern.permute.xlu0 0
      %397 = vperm.xlu0 %396, %v387
      %v398 = vpop.permute.xlu0 %397
      %401 = vset.pattern.permute.xlu0 0
      %402 = vperm.xlu0 %401, %v388
      %v403 = vpop.permute.xlu0 %402
      %406 = vset.pattern.permute.xlu0 0
      %407 = vperm.xlu0 %406, %v389
      %v408 = vpop.permute.xlu0 %407
      %411 = vset.pattern.permute.xlu0 0
      %412 = vperm.xlu0 %411, %v390
      %v413 = vpop.permute.xlu0 %412
      %416 = vset.pattern.permute.xlu0 0
      %417 = vperm.xlu0 %416, %v391
      %v418 = vpop.permute.xlu0 %417
      %421 = vset.pattern.permute.xlu0 0
      %422 = vperm.xlu0 %421, %v392
      %v423 = vpop.permute.xlu0 %422
      %426 = vset.pattern.permute.xlu0 0
      %427 = vperm.xlu0 %426, %v393
      %v428 = vpop.permute.xlu0 %427
      %431 = vset.pattern.permute.xlu0 0
      %432 = vperm.xlu0 %431, %v394
      %v433 = vpop.permute.xlu0 %432
      %v436 = vlaneseq
      %v437 = vshrl.u32 %v436, 7
      %v438 = vsub.s32 0, %v437
      %v439 = vrot.slane %v386, %v438
      %v440 = vlaneseq
      %v441 = vshrl.u32 %v440, 7
      %v442 = vsub.s32 1, %v441
      %v443 = vrot.slane %v386, %v442
      %v444 = vlaneseq
      %v445 = vshrl.u32 %v444, 7
      %v446 = vsub.s32 2, %v445
      %v447 = vrot.slane %v386, %v446
      %v448 = vlaneseq
      %v449 = vshrl.u32 %v448, 7
      %v450 = vsub.s32 3, %v449
      %v451 = vrot.slane %v386, %v450
      %v452 = vlaneseq
      %v453 = vshrl.u32 %v452, 7
      %v454 = vsub.s32 4, %v453
      %v455 = vrot.slane %v386, %v454
      %v456 = vlaneseq
      %v457 = vshrl.u32 %v456, 7
      %v458 = vsub.s32 5, %v457
      %v459 = vrot.slane %v386, %v458
      %v460 = vlaneseq
      %v461 = vshrl.u32 %v460, 7
      %v462 = vsub.s32 6, %v461
      %v463 = vrot.slane %v386, %v462
      %v464 = vlaneseq
      %v465 = vshrl.u32 %v464, 7
      %v466 = vsub.s32 7, %v465
      %v467 = vrot.slane %v386, %v466
      %v476 = vmul.f32 %v398, %v439
      %v477 = vmul.f32 %v398, %v443
      %v478 = vmul.f32 %v398, %v447
      %v479 = vmul.f32 %v398, %v451
      %v480 = vmul.f32 %v398, %v455
      %v481 = vmul.f32 %v398, %v459
      %v482 = vmul.f32 %v398, %v463
      %v483 = vmul.f32 %v398, %v467
      %v484 = vmul.f32 %v403, %v439
      %v485 = vmul.f32 %v403, %v443
      %v486 = vmul.f32 %v403, %v447
      %v487 = vmul.f32 %v403, %v451
      %v488 = vmul.f32 %v403, %v455
      %v489 = vmul.f32 %v403, %v459
      %v490 = vmul.f32 %v403, %v463
      %v491 = vmul.f32 %v403, %v467
      %v492 = vmul.f32 %v408, %v439
      %v493 = vmul.f32 %v408, %v443
      %v494 = vmul.f32 %v408, %v447
      %v495 = vmul.f32 %v408, %v451
      %v496 = vmul.f32 %v408, %v455
      %v497 = vmul.f32 %v408, %v459
      %v498 = vmul.f32 %v408, %v463
      %v499 = vmul.f32 %v408, %v467
      %v500 = vmul.f32 %v413, %v439
      %v501 = vmul.f32 %v413, %v443
      %v502 = vmul.f32 %v413, %v447
      %v503 = vmul.f32 %v413, %v451
      %v504 = vmul.f32 %v413, %v455
      %v505 = vmul.f32 %v413, %v459
      %v506 = vmul.f32 %v413, %v463
      %v507 = vmul.f32 %v413, %v467
      %v508 = vmul.f32 %v418, %v439
      %v509 = vmul.f32 %v418, %v443
      %v510 = vmul.f32 %v418, %v447
      %v511 = vmul.f32 %v418, %v451
      %v512 = vmul.f32 %v418, %v455
      %v513 = vmul.f32 %v418, %v459
      %v514 = vmul.f32 %v418, %v463
      %v515 = vmul.f32 %v418, %v467
      %v516 = vmul.f32 %v423, %v439
      %v517 = vmul.f32 %v423, %v443
      %v518 = vmul.f32 %v423, %v447
      %v519 = vmul.f32 %v423, %v451
      %v520 = vmul.f32 %v423, %v455
      %v521 = vmul.f32 %v423, %v459
      %v522 = vmul.f32 %v423, %v463
      %v523 = vmul.f32 %v423, %v467
      %v524 = vmul.f32 %v428, %v439
      %v525 = vmul.f32 %v428, %v443
      %v526 = vmul.f32 %v428, %v447
      %v527 = vmul.f32 %v428, %v451
      %v528 = vmul.f32 %v428, %v455
      %v529 = vmul.f32 %v428, %v459
      %v530 = vmul.f32 %v428, %v463
      %v531 = vmul.f32 %v428, %v467
      %v532 = vmul.f32 %v433, %v439
      %v533 = vmul.f32 %v433, %v443
      %v534 = vmul.f32 %v433, %v447
      %v535 = vmul.f32 %v433, %v451
      %v536 = vmul.f32 %v433, %v455
      %v537 = vmul.f32 %v433, %v459
      %v538 = vmul.f32 %v433, %v463
      %v539 = vmul.f32 %v433, %v467
      %540 = vrot.lane.b32.xlu0 %v439, 120
      %v541 = vpop.permute.xlu0 %540
      %542 = vrot.lane.b32.xlu0 %v443, 120
      %v543 = vpop.permute.xlu0 %542
      %544 = vrot.lane.b32.xlu0 %v447, 120
      %v545 = vpop.permute.xlu0 %544
      %546 = vrot.lane.b32.xlu0 %v451, 120
      %v547 = vpop.permute.xlu0 %546
      %548 = vrot.lane.b32.xlu0 %v455, 120
      %v549 = vpop.permute.xlu0 %548
      %550 = vrot.lane.b32.xlu0 %v459, 120
      %v551 = vpop.permute.xlu0 %550
      %552 = vrot.lane.b32.xlu0 %v463, 120
      %v553 = vpop.permute.xlu0 %552
      %554 = vrot.lane.b32.xlu0 %v467, 120
      %v555 = vpop.permute.xlu0 %554
      %vm556 = vcmask 982016
      %v557 = vsel %vm556, %v541, %v543
      %v558 = vsel %vm556, %v543, %v545
      %v559 = vsel %vm556, %v545, %v547
      %v560 = vsel %vm556, %v547, %v549
      %v561 = vsel %vm556, %v549, %v551
      %v562 = vsel %vm556, %v551, %v553
      %v563 = vsel %vm556, %v553, %v555
      %v572 = vsel %vm556, %v555, 0.0
      %573 = vset.pattern.permute.xlu0 1
      %574 = vperm.xlu0 %573, %v387
      %v575 = vpop.permute.xlu0 %574
      %577 = vset.pattern.permute.xlu0 1
      %578 = vperm.xlu0 %577, %v388
      %v579 = vpop.permute.xlu0 %578
      %581 = vset.pattern.permute.xlu0 1
      %582 = vperm.xlu0 %581, %v389
      %v583 = vpop.permute.xlu0 %582
      %585 = vset.pattern.permute.xlu0 1
      %586 = vperm.xlu0 %585, %v390
      %v587 = vpop.permute.xlu0 %586
      %589 = vset.pattern.permute.xlu0 1
      %590 = vperm.xlu0 %589, %v391
      %v591 = vpop.permute.xlu0 %590
      %593 = vset.pattern.permute.xlu0 1
      %594 = vperm.xlu0 %593, %v392
      %v595 = vpop.permute.xlu0 %594
      %597 = vset.pattern.permute.xlu0 1
      %598 = vperm.xlu0 %597, %v393
      %v599 = vpop.permute.xlu0 %598
      %601 = vset.pattern.permute.xlu0 1
      %602 = vperm.xlu0 %601, %v394
      %v603 = vpop.permute.xlu0 %602
      %v605 = vlaneseq
      %v606 = vshrl.u32 %v605, 7
      %v607 = vsub.s32 0, %v606
      %v608 = vrot.slane %v557, %v607
      %v609 = vlaneseq
      %v610 = vshrl.u32 %v609, 7
      %v611 = vsub.s32 0, %v610
      %v612 = vrot.slane %v558, %v611
      %v613 = vlaneseq
      %v614 = vshrl.u32 %v613, 7
      %v615 = vsub.s32 0, %v614
      %v616 = vrot.slane %v559, %v615
      %v617 = vlaneseq
      %v618 = vshrl.u32 %v617, 7
      %v619 = vsub.s32 0, %v618
      %v620 = vrot.slane %v560, %v619
      %v621 = vlaneseq
      %v622 = vshrl.u32 %v621, 7
      %v623 = vsub.s32 0, %v622
      %v624 = vrot.slane %v561, %v623
      %v625 = vlaneseq
      %v626 = vshrl.u32 %v625, 7
      %v627 = vsub.s32 0, %v626
      %v628 = vrot.slane %v562, %v627
      %v629 = vlaneseq
      %v630 = vshrl.u32 %v629, 7
      %v631 = vsub.s32 0, %v630
      %v632 = vrot.slane %v563, %v631
      %v633 = vlaneseq
      %v634 = vshrl.u32 %v633, 7
      %v635 = vsub.s32 0, %v634
      %v636 = vrot.slane %v572, %v635
      %v637 = vmul.f32 %v575, %v608
      %v638 = vmul.f32 %v575, %v612
      %v639 = vmul.f32 %v575, %v616
      %v640 = vmul.f32 %v575, %v620
      %v641 = vmul.f32 %v575, %v624
      %v642 = vmul.f32 %v575, %v628
      %v643 = vmul.f32 %v575, %v632
      %v644 = vmul.f32 %v575, %v636
      %v645 = vmul.f32 %v579, %v608
      %v646 = vmul.f32 %v579, %v612
      %v647 = vmul.f32 %v579, %v616
      %v648 = vmul.f32 %v579, %v620
      %v649 = vmul.f32 %v579, %v624
      %v650 = vmul.f32 %v579, %v628
      %v651 = vmul.f32 %v579, %v632
      %v652 = vmul.f32 %v579, %v636
      %v653 = vmul.f32 %v583, %v608
      %v654 = vmul.f32 %v583, %v612
      %v655 = vmul.f32 %v583, %v616
      %v656 = vmul.f32 %v583, %v620
      %v657 = vmul.f32 %v583, %v624
      %v658 = vmul.f32 %v583, %v628
      %v659 = vmul.f32 %v583, %v632
      %v660 = vmul.f32 %v583, %v636
      %v661 = vmul.f32 %v587, %v608
      %v662 = vmul.f32 %v587, %v612
      %v663 = vmul.f32 %v587, %v616
      %v664 = vmul.f32 %v587, %v620
      %v665 = vmul.f32 %v587, %v624
      %v666 = vmul.f32 %v587, %v628
      %v667 = vmul.f32 %v587, %v632
      %v668 = vmul.f32 %v587, %v636
      %v669 = vmul.f32 %v591, %v608
      %v670 = vmul.f32 %v591, %v612
      %v671 = vmul.f32 %v591, %v616
      %v672 = vmul.f32 %v591, %v620
      %v673 = vmul.f32 %v591, %v624
      %v674 = vmul.f32 %v591, %v628
      %v675 = vmul.f32 %v591, %v632
      %v676 = vmul.f32 %v591, %v636
      %v677 = vmul.f32 %v595, %v608
      %v678 = vmul.f32 %v595, %v612
      %v679 = vmul.f32 %v595, %v616
      %v680 = vmul.f32 %v595, %v620
      %v681 = vmul.f32 %v595, %v624
      %v682 = vmul.f32 %v595, %v628
      %v683 = vmul.f32 %v595, %v632
      %v684 = vmul.f32 %v595, %v636
      %v685 = vmul.f32 %v599, %v608
      %v686 = vmul.f32 %v599, %v612
      %v687 = vmul.f32 %v599, %v616
      %v688 = vmul.f32 %v599, %v620
      %v689 = vmul.f32 %v599, %v624
      %v690 = vmul.f32 %v599, %v628
      %v691 = vmul.f32 %v599, %v632
      %v692 = vmul.f32 %v599, %v636
      %v693 = vmul.f32 %v603, %v608
      %v694 = vmul.f32 %v603, %v612
      %v695 = vmul.f32 %v603, %v616
      %v696 = vmul.f32 %v603, %v620
      %v697 = vmul.f32 %v603, %v624
      %v698 = vmul.f32 %v603, %v628
      %v699 = vmul.f32 %v603, %v632
      %v700 = vmul.f32 %v603, %v636
      %v701 = vadd.f32 %v476, %v637
      %v702 = vadd.f32 %v477, %v638
      %v703 = vadd.f32 %v478, %v639
      %v704 = vadd.f32 %v479, %v640
      %v705 = vadd.f32 %v480, %v641
      %v706 = vadd.f32 %v481, %v642
      %v707 = vadd.f32 %v482, %v643
      %v708 = vadd.f32 %v483, %v644
      %v709 = vadd.f32 %v484, %v645
      %v710 = vadd.f32 %v485, %v646
      %v711 = vadd.f32 %v486, %v647
      %v712 = vadd.f32 %v487, %v648
      %v713 = vadd.f32 %v488, %v649
      %v714 = vadd.f32 %v489, %v650
      %v715 = vadd.f32 %v490, %v651
      %v716 = vadd.f32 %v491, %v652
      %v717 = vadd.f32 %v492, %v653
      %v718 = vadd.f32 %v493, %v654
      %v719 = vadd.f32 %v494, %v655
      %v720 = vadd.f32 %v495, %v656
      %v721 = vadd.f32 %v496, %v657
      %v722 = vadd.f32 %v497, %v658
      %v723 = vadd.f32 %v498, %v659
      %v724 = vadd.f32 %v499, %v660
      %v725 = vadd.f32 %v500, %v661
      %v726 = vadd.f32 %v501, %v662
      %v727 = vadd.f32 %v502, %v663
      %v728 = vadd.f32 %v503, %v664
      %v729 = vadd.f32 %v504, %v665
      %v730 = vadd.f32 %v505, %v666
      %v731 = vadd.f32 %v506, %v667
      %v732 = vadd.f32 %v507, %v668
      %v733 = vadd.f32 %v508, %v669
      %v734 = vadd.f32 %v509, %v670
      %v735 = vadd.f32 %v510, %v671
      %v736 = vadd.f32 %v511, %v672
      %v737 = vadd.f32 %v512, %v673
      %v738 = vadd.f32 %v513, %v674
      %v739 = vadd.f32 %v514, %v675
      %v740 = vadd.f32 %v515, %v676
      %v741 = vadd.f32 %v516, %v677
      %v742 = vadd.f32 %v517, %v678
      %v743 = vadd.f32 %v518, %v679
      %v744 = vadd.f32 %v519, %v680
      %v745 = vadd.f32 %v520, %v681
      %v746 = vadd.f32 %v521, %v682
      %v747 = vadd.f32 %v522, %v683
      %v748 = vadd.f32 %v523, %v684
      %v749 = vadd.f32 %v524, %v685
      %v750 = vadd.f32 %v525, %v686
      %v751 = vadd.f32 %v526, %v687
      %v752 = vadd.f32 %v527, %v688
      %v753 = vadd.f32 %v528, %v689
      %v754 = vadd.f32 %v529, %v690
      %v755 = vadd.f32 %v530, %v691
      %v756 = vadd.f32 %v531, %v692
      %v757 = vadd.f32 %v532, %v693
      %v758 = vadd.f32 %v533, %v694
      %v759 = vadd.f32 %v534, %v695
      %v760 = vadd.f32 %v535, %v696
      %v761 = vadd.f32 %v536, %v697
      %v762 = vadd.f32 %v537, %v698
      %v763 = vadd.f32 %v538, %v699
      %v764 = vadd.f32 %v539, %v700
      %765 = vrot.lane.b32.xlu0 %v439, 112
      %v766 = vpop.permute.xlu0 %765
      %767 = vrot.lane.b32.xlu0 %v443, 112
      %v768 = vpop.permute.xlu0 %767
      %769 = vrot.lane.b32.xlu0 %v447, 112
      %v770 = vpop.permute.xlu0 %769
      %771 = vrot.lane.b32.xlu0 %v451, 112
      %v772 = vpop.permute.xlu0 %771
      %773 = vrot.lane.b32.xlu0 %v455, 112
      %v774 = vpop.permute.xlu0 %773
      %775 = vrot.lane.b32.xlu0 %v459, 112
      %v776 = vpop.permute.xlu0 %775
      %777 = vrot.lane.b32.xlu0 %v463, 112
      %v778 = vpop.permute.xlu0 %777
      %779 = vrot.lane.b32.xlu0 %v467, 112
      %v780 = vpop.permute.xlu0 %779
      %vm781 = vcmask 916480
      %v782 = vsel %vm781, %v766, %v768
      %v783 = vsel %vm781, %v768, %v770
      %v784 = vsel %vm781, %v770, %v772
      %v785 = vsel %vm781, %v772, %v774
      %v786 = vsel %vm781, %v774, %v776
      %v787 = vsel %vm781, %v776, %v778
      %v788 = vsel %vm781, %v778, %v780
      %v797 = vsel %vm781, %v780, 0.0
      %798 = vset.pattern.permute.xlu0 2
      %799 = vperm.xlu0 %798, %v387
      %v800 = vpop.permute.xlu0 %799
      %802 = vset.pattern.permute.xlu0 2
      %803 = vperm.xlu0 %802, %v388
      %v804 = vpop.permute.xlu0 %803
      %806 = vset.pattern.permute.xlu0 2
      %807 = vperm.xlu0 %806, %v389
      %v808 = vpop.permute.xlu0 %807
      %810 = vset.pattern.permute.xlu0 2
      %811 = vperm.xlu0 %810, %v390
      %v812 = vpop.permute.xlu0 %811
      %814 = vset.pattern.permute.xlu0 2
      %815 = vperm.xlu0 %814, %v391
      %v816 = vpop.permute.xlu0 %815
      %818 = vset.pattern.permute.xlu0 2
      %819 = vperm.xlu0 %818, %v392
      %v820 = vpop.permute.xlu0 %819
      %822 = vset.pattern.permute.xlu0 2
      %823 = vperm.xlu0 %822, %v393
      %v824 = vpop.permute.xlu0 %823
      %826 = vset.pattern.permute.xlu0 2
      %827 = vperm.xlu0 %826, %v394
      %v828 = vpop.permute.xlu0 %827
      %v830 = vlaneseq
      %v831 = vshrl.u32 %v830, 7
      %v832 = vsub.s32 0, %v831
      %v833 = vrot.slane %v782, %v832
      %v834 = vlaneseq
      %v835 = vshrl.u32 %v834, 7
      %v836 = vsub.s32 0, %v835
      %v837 = vrot.slane %v783, %v836
      %v838 = vlaneseq
      %v839 = vshrl.u32 %v838, 7
      %v840 = vsub.s32 0, %v839
      %v841 = vrot.slane %v784, %v840
      %v842 = vlaneseq
      %v843 = vshrl.u32 %v842, 7
      %v844 = vsub.s32 0, %v843
      %v845 = vrot.slane %v785, %v844
      %v846 = vlaneseq
      %v847 = vshrl.u32 %v846, 7
      %v848 = vsub.s32 0, %v847
      %v849 = vrot.slane %v786, %v848
      %v850 = vlaneseq
      %v851 = vshrl.u32 %v850, 7
      %v852 = vsub.s32 0, %v851
      %v853 = vrot.slane %v787, %v852
      %v854 = vlaneseq
      %v855 = vshrl.u32 %v854, 7
      %v856 = vsub.s32 0, %v855
      %v857 = vrot.slane %v788, %v856
      %v858 = vlaneseq
      %v859 = vshrl.u32 %v858, 7
      %v860 = vsub.s32 0, %v859
      %v861 = vrot.slane %v797, %v860
      %v862 = vmul.f32 %v800, %v833
      %v863 = vmul.f32 %v800, %v837
      %v864 = vmul.f32 %v800, %v841
      %v865 = vmul.f32 %v800, %v845
      %v866 = vmul.f32 %v800, %v849
      %v867 = vmul.f32 %v800, %v853
      %v868 = vmul.f32 %v800, %v857
      %v869 = vmul.f32 %v800, %v861
      %v870 = vmul.f32 %v804, %v833
      %v871 = vmul.f32 %v804, %v837
      %v872 = vmul.f32 %v804, %v841
      %v873 = vmul.f32 %v804, %v845
      %v874 = vmul.f32 %v804, %v849
      %v875 = vmul.f32 %v804, %v853
      %v876 = vmul.f32 %v804, %v857
      %v877 = vmul.f32 %v804, %v861
      %v878 = vmul.f32 %v808, %v833
      %v879 = vmul.f32 %v808, %v837
      %v880 = vmul.f32 %v808, %v841
      %v881 = vmul.f32 %v808, %v845
      %v882 = vmul.f32 %v808, %v849
      %v883 = vmul.f32 %v808, %v853
      %v884 = vmul.f32 %v808, %v857
      %v885 = vmul.f32 %v808, %v861
      %v886 = vmul.f32 %v812, %v833
      %v887 = vmul.f32 %v812, %v837
      %v888 = vmul.f32 %v812, %v841
      %v889 = vmul.f32 %v812, %v845
      %v890 = vmul.f32 %v812, %v849
      %v891 = vmul.f32 %v812, %v853
      %v892 = vmul.f32 %v812, %v857
      %v893 = vmul.f32 %v812, %v861
      %v894 = vmul.f32 %v816, %v833
      %v895 = vmul.f32 %v816, %v837
      %v896 = vmul.f32 %v816, %v841
      %v897 = vmul.f32 %v816, %v845
      %v898 = vmul.f32 %v816, %v849
      %v899 = vmul.f32 %v816, %v853
      %v900 = vmul.f32 %v816, %v857
      %v901 = vmul.f32 %v816, %v861
      %v902 = vmul.f32 %v820, %v833
      %v903 = vmul.f32 %v820, %v837
      %v904 = vmul.f32 %v820, %v841
      %v905 = vmul.f32 %v820, %v845
      %v906 = vmul.f32 %v820, %v849
      %v907 = vmul.f32 %v820, %v853
      %v908 = vmul.f32 %v820, %v857
      %v909 = vmul.f32 %v820, %v861
      %v910 = vmul.f32 %v824, %v833
      %v911 = vmul.f32 %v824, %v837
      %v912 = vmul.f32 %v824, %v841
      %v913 = vmul.f32 %v824, %v845
      %v914 = vmul.f32 %v824, %v849
      %v915 = vmul.f32 %v824, %v853
      %v916 = vmul.f32 %v824, %v857
      %v917 = vmul.f32 %v824, %v861
      %v918 = vmul.f32 %v828, %v833
      %v919 = vmul.f32 %v828, %v837
      %v920 = vmul.f32 %v828, %v841
      %v921 = vmul.f32 %v828, %v845
      %v922 = vmul.f32 %v828, %v849
      %v923 = vmul.f32 %v828, %v853
      %v924 = vmul.f32 %v828, %v857
      %v925 = vmul.f32 %v828, %v861
      %v926 = vadd.f32 %v701, %v862
      %v927 = vadd.f32 %v702, %v863
      %v928 = vadd.f32 %v703, %v864
      %v929 = vadd.f32 %v704, %v865
      %v930 = vadd.f32 %v705, %v866
      %v931 = vadd.f32 %v706, %v867
      %v932 = vadd.f32 %v707, %v868
      %v933 = vadd.f32 %v708, %v869
      %v934 = vadd.f32 %v709, %v870
      %v935 = vadd.f32 %v710, %v871
      %v936 = vadd.f32 %v711, %v872
      %v937 = vadd.f32 %v712, %v873
      %v938 = vadd.f32 %v713, %v874
      %v939 = vadd.f32 %v714, %v875
      %v940 = vadd.f32 %v715, %v876
      %v941 = vadd.f32 %v716, %v877
      %v942 = vadd.f32 %v717, %v878
      %v943 = vadd.f32 %v718, %v879
      %v944 = vadd.f32 %v719, %v880
      %v945 = vadd.f32 %v720, %v881
      %v946 = vadd.f32 %v721, %v882
      %v947 = vadd.f32 %v722, %v883
      %v948 = vadd.f32 %v723, %v884
      %v949 = vadd.f32 %v724, %v885
      %v950 = vadd.f32 %v725, %v886
      %v951 = vadd.f32 %v726, %v887
      %v952 = vadd.f32 %v727, %v888
      %v953 = vadd.f32 %v728, %v889
      %v954 = vadd.f32 %v729, %v890
      %v955 = vadd.f32 %v730, %v891
      %v956 = vadd.f32 %v731, %v892
      %v957 = vadd.f32 %v732, %v893
      %v958 = vadd.f32 %v733, %v894
      %v959 = vadd.f32 %v734, %v895
      %v960 = vadd.f32 %v735, %v896
      %v961 = vadd.f32 %v736, %v897
      %v962 = vadd.f32 %v737, %v898
      %v963 = vadd.f32 %v738, %v899
      %v964 = vadd.f32 %v739, %v900
      %v965 = vadd.f32 %v740, %v901
      %v966 = vadd.f32 %v741, %v902
      %v967 = vadd.f32 %v742, %v903
      %v968 = vadd.f32 %v743, %v904
      %v969 = vadd.f32 %v744, %v905
      %v970 = vadd.f32 %v745, %v906
      %v971 = vadd.f32 %v746, %v907
      %v972 = vadd.f32 %v747, %v908
      %v973 = vadd.f32 %v748, %v909
      %v974 = vadd.f32 %v749, %v910
      %v975 = vadd.f32 %v750, %v911
      %v976 = vadd.f32 %v751, %v912
      %v977 = vadd.f32 %v752, %v913
      %v978 = vadd.f32 %v753, %v914
      %v979 = vadd.f32 %v754, %v915
      %v980 = vadd.f32 %v755, %v916
      %v981 = vadd.f32 %v756, %v917
      %v982 = vadd.f32 %v757, %v918
      %v983 = vadd.f32 %v758, %v919
      %v984 = vadd.f32 %v759, %v920
      %v985 = vadd.f32 %v760, %v921
      %v986 = vadd.f32 %v761, %v922
      %v987 = vadd.f32 %v762, %v923
      %v988 = vadd.f32 %v763, %v924
      %v989 = vadd.f32 %v764, %v925
      %v990 = vld [vmem:[%s2] sm:$0xff]
      %v991 = vld [vmem:[%s2 + $0x8] sm:$0xff]
      %v992 = vld [vmem:[%s2 + $0x10] sm:$0xff]
      %v993 = vld [vmem:[%s2 + $0x18] sm:$0xff]
      %v994 = vld [vmem:[%s2 + $0x20] sm:$0xff]
      %v995 = vld [vmem:[%s2 + $0x28] sm:$0xff]
      %v996 = vld [vmem:[%s2 + $0x30] sm:$0xff]
      %v997 = vld [vmem:[%s2 + $0x38] sm:$0xff]
      %999 = vset.pattern.permute.xlu0 0
      %1000 = vperm.xlu0 %999, %v990
      %v1001 = vpop.permute.xlu0 %1000
      %1004 = vset.pattern.permute.xlu0 0
      %1005 = vperm.xlu0 %1004, %v991
      %v1006 = vpop.permute.xlu0 %1005
      %1009 = vset.pattern.permute.xlu0 0
      %1010 = vperm.xlu0 %1009, %v992
      %v1011 = vpop.permute.xlu0 %1010
      %1014 = vset.pattern.permute.xlu0 0
      %1015 = vperm.xlu0 %1014, %v993
      %v1016 = vpop.permute.xlu0 %1015
      %1019 = vset.pattern.permute.xlu0 0
      %1020 = vperm.xlu0 %1019, %v994
      %v1021 = vpop.permute.xlu0 %1020
      %1024 = vset.pattern.permute.xlu0 0
      %1025 = vperm.xlu0 %1024, %v995
      %v1026 = vpop.permute.xlu0 %1025
      %1029 = vset.pattern.permute.xlu0 0
      %1030 = vperm.xlu0 %1029, %v996
      %v1031 = vpop.permute.xlu0 %1030
      %1034 = vset.pattern.permute.xlu0 0
      %1035 = vperm.xlu0 %1034, %v997
      %v1036 = vpop.permute.xlu0 %1035
      %v1038 = vadd.f32 %v926, %v1001
      %v1039 = vadd.f32 %v927, %v1001
      %v1040 = vadd.f32 %v928, %v1001
      %v1041 = vadd.f32 %v929, %v1001
      %v1042 = vadd.f32 %v930, %v1001
      %v1043 = vadd.f32 %v931, %v1001
      %v1044 = vadd.f32 %v932, %v1001
      %v1045 = vadd.f32 %v933, %v1001
      %v1046 = vadd.f32 %v934, %v1006
      %v1047 = vadd.f32 %v935, %v1006
      %v1048 = vadd.f32 %v936, %v1006
      %v1049 = vadd.f32 %v937, %v1006
      %v1050 = vadd.f32 %v938, %v1006
      %v1051 = vadd.f32 %v939, %v1006
      %v1052 = vadd.f32 %v940, %v1006
      %v1053 = vadd.f32 %v941, %v1006
      %v1054 = vadd.f32 %v942, %v1011
      %v1055 = vadd.f32 %v943, %v1011
      %v1056 = vadd.f32 %v944, %v1011
      %v1057 = vadd.f32 %v945, %v1011
      %v1058 = vadd.f32 %v946, %v1011
      %v1059 = vadd.f32 %v947, %v1011
      %v1060 = vadd.f32 %v948, %v1011
      %v1061 = vadd.f32 %v949, %v1011
      %v1062 = vadd.f32 %v950, %v1016
      %v1063 = vadd.f32 %v951, %v1016
      %v1064 = vadd.f32 %v952, %v1016
      %v1065 = vadd.f32 %v953, %v1016
      %v1066 = vadd.f32 %v954, %v1016
      %v1067 = vadd.f32 %v955, %v1016
      %v1068 = vadd.f32 %v956, %v1016
      %v1069 = vadd.f32 %v957, %v1016
      %v1070 = vadd.f32 %v958, %v1021
      %v1071 = vadd.f32 %v959, %v1021
      %v1072 = vadd.f32 %v960, %v1021
      %v1073 = vadd.f32 %v961, %v1021
      %v1074 = vadd.f32 %v962, %v1021
      %v1075 = vadd.f32 %v963, %v1021
      %v1076 = vadd.f32 %v964, %v1021
      %v1077 = vadd.f32 %v965, %v1021
      %v1078 = vadd.f32 %v966, %v1026
      %v1079 = vadd.f32 %v967, %v1026
      %v1080 = vadd.f32 %v968, %v1026
      %v1081 = vadd.f32 %v969, %v1026
      %v1082 = vadd.f32 %v970, %v1026
      %v1083 = vadd.f32 %v971, %v1026
      %v1084 = vadd.f32 %v972, %v1026
      %v1085 = vadd.f32 %v973, %v1026
      %v1086 = vadd.f32 %v974, %v1031
      %v1087 = vadd.f32 %v975, %v1031
      %v1088 = vadd.f32 %v976, %v1031
      %v1089 = vadd.f32 %v977, %v1031
      %v1090 = vadd.f32 %v978, %v1031
      %v1091 = vadd.f32 %v979, %v1031
      %v1092 = vadd.f32 %v980, %v1031
      %v1093 = vadd.f32 %v981, %v1031
      %v1094 = vadd.f32 %v982, %v1036
      %v1095 = vadd.f32 %v983, %v1036
      %v1096 = vadd.f32 %v984, %v1036
      %v1097 = vadd.f32 %v985, %v1036
      %v1098 = vadd.f32 %v986, %v1036
      %v1099 = vadd.f32 %v987, %v1036
      %v1100 = vadd.f32 %v988, %v1036
      %v1101 = vadd.f32 %v989, %v1036
      %1166 = vrot.lane.b32.xlu0 %v1038, 120
      %v1167 = vpop.permute.xlu0 %1166
      %1168 = vrot.lane.b32.xlu0 %v1039, 120
      %v1169 = vpop.permute.xlu0 %1168
      %1170 = vrot.lane.b32.xlu0 %v1040, 120
      %v1171 = vpop.permute.xlu0 %1170
      %1172 = vrot.lane.b32.xlu0 %v1041, 120
      %v1173 = vpop.permute.xlu0 %1172
      %1174 = vrot.lane.b32.xlu0 %v1042, 120
      %v1175 = vpop.permute.xlu0 %1174
      %1176 = vrot.lane.b32.xlu0 %v1043, 120
      %v1177 = vpop.permute.xlu0 %1176
      %1178 = vrot.lane.b32.xlu0 %v1044, 120
      %v1179 = vpop.permute.xlu0 %1178
      %1180 = vrot.lane.b32.xlu0 %v1045, 120
      %v1181 = vpop.permute.xlu0 %1180
      %1182 = vrot.lane.b32.xlu0 %v1046, 120
      %v1183 = vpop.permute.xlu0 %1182
      %1184 = vrot.lane.b32.xlu0 %v1047, 120
      %v1185 = vpop.permute.xlu0 %1184
      %1186 = vrot.lane.b32.xlu0 %v1048, 120
      %v1187 = vpop.permute.xlu0 %1186
      %1188 = vrot.lane.b32.xlu0 %v1049, 120
      %v1189 = vpop.permute.xlu0 %1188
      %1190 = vrot.lane.b32.xlu0 %v1050, 120
      %v1191 = vpop.permute.xlu0 %1190
      %1192 = vrot.lane.b32.xlu0 %v1051, 120
      %v1193 = vpop.permute.xlu0 %1192
      %1194 = vrot.lane.b32.xlu0 %v1052, 120
      %v1195 = vpop.permute.xlu0 %1194
      %1196 = vrot.lane.b32.xlu0 %v1053, 120
      %v1197 = vpop.permute.xlu0 %1196
      %1198 = vrot.lane.b32.xlu0 %v1054, 120
      %v1199 = vpop.permute.xlu0 %1198
      %1200 = vrot.lane.b32.xlu0 %v1055, 120
      %v1201 = vpop.permute.xlu0 %1200
      %1202 = vrot.lane.b32.xlu0 %v1056, 120
      %v1203 = vpop.permute.xlu0 %1202
      %1204 = vrot.lane.b32.xlu0 %v1057, 120
      %v1205 = vpop.permute.xlu0 %1204
      %1206 = vrot.lane.b32.xlu0 %v1058, 120
      %v1207 = vpop.permute.xlu0 %1206
      %1208 = vrot.lane.b32.xlu0 %v1059, 120
      %v1209 = vpop.permute.xlu0 %1208
      %1210 = vrot.lane.b32.xlu0 %v1060, 120
      %v1211 = vpop.permute.xlu0 %1210
      %1212 = vrot.lane.b32.xlu0 %v1061, 120
      %v1213 = vpop.permute.xlu0 %1212
      %1214 = vrot.lane.b32.xlu0 %v1062, 120
      %v1215 = vpop.permute.xlu0 %1214
      %1216 = vrot.lane.b32.xlu0 %v1063, 120
      %v1217 = vpop.permute.xlu0 %1216
      %1218 = vrot.lane.b32.xlu0 %v1064, 120
      %v1219 = vpop.permute.xlu0 %1218
      %1220 = vrot.lane.b32.xlu0 %v1065, 120
      %v1221 = vpop.permute.xlu0 %1220
      %1222 = vrot.lane.b32.xlu0 %v1066, 120
      %v1223 = vpop.permute.xlu0 %1222
      %1224 = vrot.lane.b32.xlu0 %v1067, 120
      %v1225 = vpop.permute.xlu0 %1224
      %1226 = vrot.lane.b32.xlu0 %v1068, 120
      %v1227 = vpop.permute.xlu0 %1226
      %1228 = vrot.lane.b32.xlu0 %v1069, 120
      %v1229 = vpop.permute.xlu0 %1228
      %1230 = vrot.lane.b32.xlu0 %v1070, 120
      %v1231 = vpop.permute.xlu0 %1230
      %1232 = vrot.lane.b32.xlu0 %v1071, 120
      %v1233 = vpop.permute.xlu0 %1232
      %1234 = vrot.lane.b32.xlu0 %v1072, 120
      %v1235 = vpop.permute.xlu0 %1234
      %1236 = vrot.lane.b32.xlu0 %v1073, 120
      %v1237 = vpop.permute.xlu0 %1236
      %1238 = vrot.lane.b32.xlu0 %v1074, 120
      %v1239 = vpop.permute.xlu0 %1238
      %1240 = vrot.lane.b32.xlu0 %v1075, 120
      %v1241 = vpop.permute.xlu0 %1240
      %1242 = vrot.lane.b32.xlu0 %v1076, 120
      %v1243 = vpop.permute.xlu0 %1242
      %1244 = vrot.lane.b32.xlu0 %v1077, 120
      %v1245 = vpop.permute.xlu0 %1244
      %1246 = vrot.lane.b32.xlu0 %v1078, 120
      %v1247 = vpop.permute.xlu0 %1246
      %1248 = vrot.lane.b32.xlu0 %v1079, 120
      %v1249 = vpop.permute.xlu0 %1248
      %1250 = vrot.lane.b32.xlu0 %v1080, 120
      %v1251 = vpop.permute.xlu0 %1250
      %1252 = vrot.lane.b32.xlu0 %v1081, 120
      %v1253 = vpop.permute.xlu0 %1252
      %1254 = vrot.lane.b32.xlu0 %v1082, 120
      %v1255 = vpop.permute.xlu0 %1254
      %1256 = vrot.lane.b32.xlu0 %v1083, 120
      %v1257 = vpop.permute.xlu0 %1256
      %1258 = vrot.lane.b32.xlu0 %v1084, 120
      %v1259 = vpop.permute.xlu0 %1258
      %1260 = vrot.lane.b32.xlu0 %v1085, 120
      %v1261 = vpop.permute.xlu0 %1260
      %1262 = vrot.lane.b32.xlu0 %v1086, 120
      %v1263 = vpop.permute.xlu0 %1262
      %1264 = vrot.lane.b32.xlu0 %v1087, 120
      %v1265 = vpop.permute.xlu0 %1264
      %1266 = vrot.lane.b32.xlu0 %v1088, 120
      %v1267 = vpop.permute.xlu0 %1266
      %1268 = vrot.lane.b32.xlu0 %v1089, 120
      %v1269 = vpop.permute.xlu0 %1268
      %1270 = vrot.lane.b32.xlu0 %v1090, 120
      %v1271 = vpop.permute.xlu0 %1270
      %1272 = vrot.lane.b32.xlu0 %v1091, 120
      %v1273 = vpop.permute.xlu0 %1272
      %1274 = vrot.lane.b32.xlu0 %v1092, 120
      %v1275 = vpop.permute.xlu0 %1274
      %1276 = vrot.lane.b32.xlu0 %v1093, 120
      %v1277 = vpop.permute.xlu0 %1276
      %1278 = vrot.lane.b32.xlu0 %v1094, 120
      %v1279 = vpop.permute.xlu0 %1278
      %1280 = vrot.lane.b32.xlu0 %v1095, 120
      %v1281 = vpop.permute.xlu0 %1280
      %1282 = vrot.lane.b32.xlu0 %v1096, 120
      %v1283 = vpop.permute.xlu0 %1282
      %1284 = vrot.lane.b32.xlu0 %v1097, 120
      %v1285 = vpop.permute.xlu0 %1284
      %1286 = vrot.lane.b32.xlu0 %v1098, 120
      %v1287 = vpop.permute.xlu0 %1286
      %1288 = vrot.lane.b32.xlu0 %v1099, 120
      %v1289 = vpop.permute.xlu0 %1288
      %1290 = vrot.lane.b32.xlu0 %v1100, 120
      %v1291 = vpop.permute.xlu0 %1290
      %1292 = vrot.lane.b32.xlu0 %v1101, 120
      %v1293 = vpop.permute.xlu0 %1292
      %v1294 = vsel %vm556, %v1167, %v1169
      %v1295 = vsel %vm556, %v1169, %v1171
      %v1296 = vsel %vm556, %v1171, %v1173
      %v1297 = vsel %vm556, %v1173, %v1175
      %v1298 = vsel %vm556, %v1175, %v1177
      %v1299 = vsel %vm556, %v1177, %v1179
      %v1300 = vsel %vm556, %v1179, %v1181
      %v1301 = vsel %vm556, %v1183, %v1185
      %v1302 = vsel %vm556, %v1185, %v1187
      %v1303 = vsel %vm556, %v1187, %v1189
      %v1304 = vsel %vm556, %v1189, %v1191
      %v1305 = vsel %vm556, %v1191, %v1193
      %v1306 = vsel %vm556, %v1193, %v1195
      %v1307 = vsel %vm556, %v1195, %v1197
      %v1308 = vsel %vm556, %v1199, %v1201
      %v1309 = vsel %vm556, %v1201, %v1203
      %v1310 = vsel %vm556, %v1203, %v1205
      %v1311 = vsel %vm556, %v1205, %v1207
      %v1312 = vsel %vm556, %v1207, %v1209
      %v1313 = vsel %vm556, %v1209, %v1211
      %v1314 = vsel %vm556, %v1211, %v1213
      %v1315 = vsel %vm556, %v1215, %v1217
      %v1316 = vsel %vm556, %v1217, %v1219
      %v1317 = vsel %vm556, %v1219, %v1221
      %v1318 = vsel %vm556, %v1221, %v1223
      %v1319 = vsel %vm556, %v1223, %v1225
      %v1320 = vsel %vm556, %v1225, %v1227
      %v1321 = vsel %vm556, %v1227, %v1229
      %v1322 = vsel %vm556, %v1231, %v1233
      %v1323 = vsel %vm556, %v1233, %v1235
      %v1324 = vsel %vm556, %v1235, %v1237
      %v1325 = vsel %vm556, %v1237, %v1239
      %v1326 = vsel %vm556, %v1239, %v1241
      %v1327 = vsel %vm556, %v1241, %v1243
      %v1328 = vsel %vm556, %v1243, %v1245
      %v1329 = vsel %vm556, %v1247, %v1249
      %v1330 = vsel %vm556, %v1249, %v1251
      %v1331 = vsel %vm556, %v1251, %v1253
      %v1332 = vsel %vm556, %v1253, %v1255
      %v1333 = vsel %vm556, %v1255, %v1257
      %v1334 = vsel %vm556, %v1257, %v1259
      %v1335 = vsel %vm556, %v1259, %v1261
      %v1336 = vsel %vm556, %v1263, %v1265
      %v1337 = vsel %vm556, %v1265, %v1267
      %v1338 = vsel %vm556, %v1267, %v1269
      %v1339 = vsel %vm556, %v1269, %v1271
      %v1340 = vsel %vm556, %v1271, %v1273
      %v1341 = vsel %vm556, %v1273, %v1275
      %v1342 = vsel %vm556, %v1275, %v1277
      %v1343 = vsel %vm556, %v1279, %v1281
      %v1344 = vsel %vm556, %v1281, %v1283
      %v1345 = vsel %vm556, %v1283, %v1285
      %v1346 = vsel %vm556, %v1285, %v1287
      %v1347 = vsel %vm556, %v1287, %v1289
      %v1348 = vsel %vm556, %v1289, %v1291
      %v1349 = vsel %vm556, %v1291, %v1293
      %v1414 = vsel %vm556, %v1181, 0.0
      %v1415 = vsel %vm556, %v1197, 0.0
      %v1416 = vsel %vm556, %v1213, 0.0
      %v1417 = vsel %vm556, %v1229, 0.0
      %v1418 = vsel %vm556, %v1245, 0.0
      %v1419 = vsel %vm556, %v1261, 0.0
      %v1420 = vsel %vm556, %v1277, 0.0
      %v1421 = vsel %vm556, %v1293, 0.0
      %v1422 = vmax.f32 %v1038, %v1294
      %v1423 = vmax.f32 %v1039, %v1295
      %v1424 = vmax.f32 %v1040, %v1296
      %v1425 = vmax.f32 %v1041, %v1297
      %v1426 = vmax.f32 %v1042, %v1298
      %v1427 = vmax.f32 %v1043, %v1299
      %v1428 = vmax.f32 %v1044, %v1300
      %v1429 = vmax.f32 %v1045, %v1414
      %v1430 = vmax.f32 %v1046, %v1301
      %v1431 = vmax.f32 %v1047, %v1302
      %v1432 = vmax.f32 %v1048, %v1303
      %v1433 = vmax.f32 %v1049, %v1304
      %v1434 = vmax.f32 %v1050, %v1305
      %v1435 = vmax.f32 %v1051, %v1306
      %v1436 = vmax.f32 %v1052, %v1307
      %v1437 = vmax.f32 %v1053, %v1415
      %v1438 = vmax.f32 %v1054, %v1308
      %v1439 = vmax.f32 %v1055, %v1309
      %v1440 = vmax.f32 %v1056, %v1310
      %v1441 = vmax.f32 %v1057, %v1311
      %v1442 = vmax.f32 %v1058, %v1312
      %v1443 = vmax.f32 %v1059, %v1313
      %v1444 = vmax.f32 %v1060, %v1314
      %v1445 = vmax.f32 %v1061, %v1416
      %v1446 = vmax.f32 %v1062, %v1315
      %v1447 = vmax.f32 %v1063, %v1316
      %v1448 = vmax.f32 %v1064, %v1317
      %v1449 = vmax.f32 %v1065, %v1318
      %v1450 = vmax.f32 %v1066, %v1319
      %v1451 = vmax.f32 %v1067, %v1320
      %v1452 = vmax.f32 %v1068, %v1321
      %v1453 = vmax.f32 %v1069, %v1417
      %v1454 = vmax.f32 %v1070, %v1322
      %v1455 = vmax.f32 %v1071, %v1323
      %v1456 = vmax.f32 %v1072, %v1324
      %v1457 = vmax.f32 %v1073, %v1325
      %v1458 = vmax.f32 %v1074, %v1326
      %v1459 = vmax.f32 %v1075, %v1327
      %v1460 = vmax.f32 %v1076, %v1328
      %v1461 = vmax.f32 %v1077, %v1418
      %v1462 = vmax.f32 %v1078, %v1329
      %v1463 = vmax.f32 %v1079, %v1330
      %v1464 = vmax.f32 %v1080, %v1331
      %v1465 = vmax.f32 %v1081, %v1332
      %v1466 = vmax.f32 %v1082, %v1333
      %v1467 = vmax.f32 %v1083, %v1334
      %v1468 = vmax.f32 %v1084, %v1335
      %v1469 = vmax.f32 %v1085, %v1419
      %v1470 = vmax.f32 %v1086, %v1336
      %v1471 = vmax.f32 %v1087, %v1337
      %v1472 = vmax.f32 %v1088, %v1338
      %v1473 = vmax.f32 %v1089, %v1339
      %v1474 = vmax.f32 %v1090, %v1340
      %v1475 = vmax.f32 %v1091, %v1341
      %v1476 = vmax.f32 %v1092, %v1342
      %v1477 = vmax.f32 %v1093, %v1420
      %v1478 = vmax.f32 %v1094, %v1343
      %v1479 = vmax.f32 %v1095, %v1344
      %v1480 = vmax.f32 %v1096, %v1345
      %v1481 = vmax.f32 %v1097, %v1346
      %v1482 = vmax.f32 %v1098, %v1347
      %v1483 = vmax.f32 %v1099, %v1348
      %v1484 = vmax.f32 %v1100, %v1349
      %v1485 = vmax.f32 %v1101, %v1421
      %v1486 = vld [vmem:[%s4] sm:$0xff]
      %v1487 = vld [vmem:[%s4 + $0x8] sm:$0xff]
      %v1488 = vld [vmem:[%s4 + $0x10] sm:$0xff]
      %v1489 = vld [vmem:[%s4 + $0x18] sm:$0xff]
      %v1490 = vld [vmem:[%s4 + $0x20] sm:$0xff]
      %v1491 = vld [vmem:[%s4 + $0x28] sm:$0xff]
      %v1492 = vld [vmem:[%s4 + $0x30] sm:$0xff]
      %v1493 = vld [vmem:[%s4 + $0x38] sm:$0xff]
      %v1494 = vld [vmem:[%s3] sm:$0xff]
      %v1495 = vld [vmem:[%s3 + $0x8] sm:$0xff]
      %v1496 = vld [vmem:[%s3 + $0x10] sm:$0xff]
      %v1497 = vld [vmem:[%s3 + $0x18] sm:$0xff]
      %v1498 = vld [vmem:[%s3 + $0x20] sm:$0xff]
      %v1499 = vld [vmem:[%s3 + $0x28] sm:$0xff]
      %v1500 = vld [vmem:[%s3 + $0x30] sm:$0xff]
      %v1501 = vld [vmem:[%s3 + $0x38] sm:$0xff]
      %vm1502 = vcmask 523264
      %v1504 = vsel %vm1502, %v1494, 0
      %v1507 = vsel %vm1502, %v1495, 0
      %v1510 = vsel %vm1502, %v1496, 0
      %v1513 = vsel %vm1502, %v1497, 0
      %v1516 = vsel %vm1502, %v1498, 0
      %v1519 = vsel %vm1502, %v1499, 0
      %v1522 = vsel %vm1502, %v1500, 0
      %v1525 = vsel %vm1502, %v1501, 0
      %1527 = vmatprep.subr.mxu0 0.0
      %1528 = vmatpush1.msra.mxu0 0.0
      %1529 = vmatprep.subr.mxu0 0.0
      %1530 = vmatpush1.msra.mxu0 0.0
      %1531 = vmatprep.subr.mxu0 0.0
      %1532 = vmatpush1.msra.mxu0 0.0
      %1533 = vmatprep.subr.mxu0 0.0
      %1534 = vmatpush1.msra.mxu0 0.0
      %1535 = vmatprep.subr.mxu0 0.0
      %1536 = vmatpush1.msra.mxu0 0.0
      %1537 = vmatprep.subr.mxu0 0.0
      %1538 = vmatpush1.msra.mxu0 0.0
      %1539 = vmatprep.subr.mxu0 0.0
      %1540 = vmatpush1.msra.mxu0 0.0
      %1541 = vmatprep.subr.mxu0 0.0
      %1542 = vmatpush1.msra.mxu0 0.0
      %1543 = vmatprep.subr.mxu0 %v1479
      %1544 = vmatpush1.msra.mxu0 %v1478
      %1545 = vmatprep.subr.mxu0 %v1471
      %1546 = vmatpush1.msra.mxu0 %v1470
      %1547 = vmatprep.subr.mxu0 %v1463
      %1548 = vmatpush1.msra.mxu0 %v1462
      %1549 = vmatprep.subr.mxu0 %v1455
      %1550 = vmatpush1.msra.mxu0 %v1454
      %1551 = vmatprep.subr.mxu0 %v1447
      %1552 = vmatpush1.msra.mxu0 %v1446
      %1553 = vmatprep.subr.mxu0 %v1439
      %1554 = vmatpush1.msra.mxu0 %v1438
      %1555 = vmatprep.subr.mxu0 %v1431
      %1556 = vmatpush1.msra.mxu0 %v1430
      %1557 = vmatprep.subr.mxu0 %v1423
      %1558 = vmatpush1.msra.mxu0 %v1422
      %1559 = vmatprep.subr.mxu0 0.0
      %1560 = vmatpush2.msra.mxu0 0.0
      %1561 = vmatprep.subr.mxu0 0.0
      %1562 = vmatpush2.msra.mxu0 0.0
      %1563 = vmatprep.subr.mxu0 0.0
      %1564 = vmatpush2.msra.mxu0 0.0
      %1565 = vmatprep.subr.mxu0 0.0
      %1566 = vmatpush2.msra.mxu0 0.0
      %1567 = vmatprep.subr.mxu0 0.0
      %1568 = vmatpush2.msra.mxu0 0.0
      %1569 = vmatprep.subr.mxu0 0.0
      %1570 = vmatpush2.msra.mxu0 0.0
      %1571 = vmatprep.subr.mxu0 0.0
      %1572 = vmatpush2.msra.mxu0 0.0
      %1573 = vmatprep.subr.mxu0 0.0
      %1574 = vmatpush2.msra.mxu0 0.0
      %1575 = vmatprep.subr.mxu0 0.0
      %1576 = vmatpush2.msra.mxu0 0.0
      %1577 = vmatprep.subr.mxu0 0.0
      %1578 = vmatpush2.msra.mxu0 0.0
      %1579 = vmatprep.subr.mxu0 0.0
      %1580 = vmatpush2.msra.mxu0 0.0
      %1581 = vmatprep.subr.mxu0 0.0
      %1582 = vmatpush2.msra.mxu0 0.0
      %1583 = vmatprep.subr.mxu0 0.0
      %1584 = vmatpush2.msra.mxu0 0.0
      %1585 = vmatprep.subr.mxu0 0.0
      %1586 = vmatpush2.msra.mxu0 0.0
      %1587 = vmatprep.subr.mxu0 0.0
      %1588 = vmatpush2.msra.mxu0 0.0
      %1589 = vmatprep.subr.mxu0 0.0
      %1590 = vmatpush2.msra.mxu0 0.0
      %1591 = vmatprep.mubr.f32.mxu0 0.0
      %1592 = vmatmul.mubr.f32.gmra.mxu0 %v1504
      %v1593 = vpop.f32.mrf.mxu0
      %v1594 = vadd.f32 0.0, %v1593
      %v1595 = vpop.f32.mrf.mxu0
      %v1596 = vadd.f32 0.0, %v1595
      %1597 = vmatprep.mubr.f32.mxu0 0.0
      %1598 = vmatmul.mubr.f32.gmra.mxu0 %v1507
      %v1599 = vpop.f32.mrf.mxu0
      %v1600 = vadd.f32 0.0, %v1599
      %v1601 = vpop.f32.mrf.mxu0
      %v1602 = vadd.f32 0.0, %v1601
      %1603 = vmatprep.mubr.f32.mxu0 0.0
      %1604 = vmatmul.mubr.f32.gmra.mxu0 %v1510
      %v1605 = vpop.f32.mrf.mxu0
      %v1606 = vadd.f32 0.0, %v1605
      %v1607 = vpop.f32.mrf.mxu0
      %v1608 = vadd.f32 0.0, %v1607
      %1609 = vmatprep.mubr.f32.mxu0 0.0
      %1610 = vmatmul.mubr.f32.gmra.mxu0 %v1513
      %v1611 = vpop.f32.mrf.mxu0
      %v1612 = vadd.f32 0.0, %v1611
      %v1613 = vpop.f32.mrf.mxu0
      %v1614 = vadd.f32 0.0, %v1613
      %1615 = vmatprep.mubr.f32.mxu0 0.0
      %1616 = vmatmul.mubr.f32.gmra.mxu0 %v1516
      %v1617 = vpop.f32.mrf.mxu0
      %v1618 = vadd.f32 0.0, %v1617
      %v1619 = vpop.f32.mrf.mxu0
      %v1620 = vadd.f32 0.0, %v1619
      %1621 = vmatprep.mubr.f32.mxu0 0.0
      %1622 = vmatmul.mubr.f32.gmra.mxu0 %v1519
      %v1623 = vpop.f32.mrf.mxu0
      %v1624 = vadd.f32 0.0, %v1623
      %v1625 = vpop.f32.mrf.mxu0
      %v1626 = vadd.f32 0.0, %v1625
      %1627 = vmatprep.mubr.f32.mxu0 0.0
      %1628 = vmatmul.mubr.f32.gmra.mxu0 %v1522
      %v1629 = vpop.f32.mrf.mxu0
      %v1630 = vadd.f32 0.0, %v1629
      %v1631 = vpop.f32.mrf.mxu0
      %v1632 = vadd.f32 0.0, %v1631
      %1633 = vmatprep.mubr.f32.mxu0 0.0
      %1634 = vmatmul.mubr.f32.gmra.mxu0 %v1525
      %v1635 = vpop.f32.mrf.mxu0
      %v1636 = vadd.f32 0.0, %v1635
      %v1637 = vpop.f32.mrf.mxu0
      %v1638 = vadd.f32 0.0, %v1637
      %1639 = vdwg.mxu0
      %1640 = vmatprep.subr.mxu0 0.0
      %1641 = vmatpush1.msra.mxu0 0.0
      %1642 = vmatprep.subr.mxu0 0.0
      %1643 = vmatpush1.msra.mxu0 0.0
      %1644 = vmatprep.subr.mxu0 0.0
      %1645 = vmatpush1.msra.mxu0 0.0
      %1646 = vmatprep.subr.mxu0 0.0
      %1647 = vmatpush1.msra.mxu0 0.0
      %1648 = vmatprep.subr.mxu0 0.0
      %1649 = vmatpush1.msra.mxu0 0.0
      %1650 = vmatprep.subr.mxu0 0.0
      %1651 = vmatpush1.msra.mxu0 0.0
      %1652 = vmatprep.subr.mxu0 0.0
      %1653 = vmatpush1.msra.mxu0 0.0
      %1654 = vmatprep.subr.mxu0 0.0
      %1655 = vmatpush1.msra.mxu0 0.0
      %1656 = vmatprep.subr.mxu0 %v1481
      %1657 = vmatpush1.msra.mxu0 %v1480
      %1658 = vmatprep.subr.mxu0 %v1473
      %1659 = vmatpush1.msra.mxu0 %v1472
      %1660 = vmatprep.subr.mxu0 %v1465
      %1661 = vmatpush1.msra.mxu0 %v1464
      %1662 = vmatprep.subr.mxu0 %v1457
      %1663 = vmatpush1.msra.mxu0 %v1456
      %1664 = vmatprep.subr.mxu0 %v1449
      %1665 = vmatpush1.msra.mxu0 %v1448
      %1666 = vmatprep.subr.mxu0 %v1441
      %1667 = vmatpush1.msra.mxu0 %v1440
      %1668 = vmatprep.subr.mxu0 %v1433
      %1669 = vmatpush1.msra.mxu0 %v1432
      %1670 = vmatprep.subr.mxu0 %v1425
      %1671 = vmatpush1.msra.mxu0 %v1424
      %1672 = vmatprep.subr.mxu0 0.0
      %1673 = vmatpush2.msra.mxu0 0.0
      %1674 = vmatprep.subr.mxu0 0.0
      %1675 = vmatpush2.msra.mxu0 0.0
      %1676 = vmatprep.subr.mxu0 0.0
      %1677 = vmatpush2.msra.mxu0 0.0
      %1678 = vmatprep.subr.mxu0 0.0
      %1679 = vmatpush2.msra.mxu0 0.0
      %1680 = vmatprep.subr.mxu0 0.0
      %1681 = vmatpush2.msra.mxu0 0.0
      %1682 = vmatprep.subr.mxu0 0.0
      %1683 = vmatpush2.msra.mxu0 0.0
      %1684 = vmatprep.subr.mxu0 0.0
      %1685 = vmatpush2.msra.mxu0 0.0
      %1686 = vmatprep.subr.mxu0 0.0
      %1687 = vmatpush2.msra.mxu0 0.0
      %1688 = vmatprep.subr.mxu0 0.0
      %1689 = vmatpush2.msra.mxu0 0.0
      %1690 = vmatprep.subr.mxu0 0.0
      %1691 = vmatpush2.msra.mxu0 0.0
      %1692 = vmatprep.subr.mxu0 0.0
      %1693 = vmatpush2.msra.mxu0 0.0
      %1694 = vmatprep.subr.mxu0 0.0
      %1695 = vmatpush2.msra.mxu0 0.0
      %1696 = vmatprep.subr.mxu0 0.0
      %1697 = vmatpush2.msra.mxu0 0.0
      %1698 = vmatprep.subr.mxu0 0.0
      %1699 = vmatpush2.msra.mxu0 0.0
      %1700 = vmatprep.subr.mxu0 0.0
      %1701 = vmatpush2.msra.mxu0 0.0
      %1702 = vmatprep.subr.mxu0 0.0
      %1703 = vmatpush2.msra.mxu0 0.0
      %1704 = vmatprep.mubr.f32.mxu0 0.0
      %1705 = vmatmul.mubr.f32.gmra.mxu0 %v1504
      %v1706 = vpop.f32.mrf.mxu0
      %v1707 = vadd.f32 0.0, %v1706
      %v1708 = vpop.f32.mrf.mxu0
      %v1709 = vadd.f32 0.0, %v1708
      %1710 = vmatprep.mubr.f32.mxu0 0.0
      %1711 = vmatmul.mubr.f32.gmra.mxu0 %v1507
      %v1712 = vpop.f32.mrf.mxu0
      %v1713 = vadd.f32 0.0, %v1712
      %v1714 = vpop.f32.mrf.mxu0
      %v1715 = vadd.f32 0.0, %v1714
      %1716 = vmatprep.mubr.f32.mxu0 0.0
      %1717 = vmatmul.mubr.f32.gmra.mxu0 %v1510
      %v1718 = vpop.f32.mrf.mxu0
      %v1719 = vadd.f32 0.0, %v1718
      %v1720 = vpop.f32.mrf.mxu0
      %v1721 = vadd.f32 0.0, %v1720
      %1722 = vmatprep.mubr.f32.mxu0 0.0
      %1723 = vmatmul.mubr.f32.gmra.mxu0 %v1513
      %v1724 = vpop.f32.mrf.mxu0
      %v1725 = vadd.f32 0.0, %v1724
      %v1726 = vpop.f32.mrf.mxu0
      %v1727 = vadd.f32 0.0, %v1726
      %1728 = vmatprep.mubr.f32.mxu0 0.0
      %1729 = vmatmul.mubr.f32.gmra.mxu0 %v1516
      %v1730 = vpop.f32.mrf.mxu0
      %v1731 = vadd.f32 0.0, %v1730
      %v1732 = vpop.f32.mrf.mxu0
      %v1733 = vadd.f32 0.0, %v1732
      %1734 = vmatprep.mubr.f32.mxu0 0.0
      %1735 = vmatmul.mubr.f32.gmra.mxu0 %v1519
      %v1736 = vpop.f32.mrf.mxu0
      %v1737 = vadd.f32 0.0, %v1736
      %v1738 = vpop.f32.mrf.mxu0
      %v1739 = vadd.f32 0.0, %v1738
      %1740 = vmatprep.mubr.f32.mxu0 0.0
      %1741 = vmatmul.mubr.f32.gmra.mxu0 %v1522
      %v1742 = vpop.f32.mrf.mxu0
      %v1743 = vadd.f32 0.0, %v1742
      %v1744 = vpop.f32.mrf.mxu0
      %v1745 = vadd.f32 0.0, %v1744
      %1746 = vmatprep.mubr.f32.mxu0 0.0
      %1747 = vmatmul.mubr.f32.gmra.mxu0 %v1525
      %v1748 = vpop.f32.mrf.mxu0
      %v1749 = vadd.f32 0.0, %v1748
      %v1750 = vpop.f32.mrf.mxu0
      %v1751 = vadd.f32 0.0, %v1750
      %1752 = vdwg.mxu0
      %1753 = vmatprep.subr.mxu0 0.0
      %1754 = vmatpush1.msra.mxu0 0.0
      %1755 = vmatprep.subr.mxu0 0.0
      %1756 = vmatpush1.msra.mxu0 0.0
      %1757 = vmatprep.subr.mxu0 0.0
      %1758 = vmatpush1.msra.mxu0 0.0
      %1759 = vmatprep.subr.mxu0 0.0
      %1760 = vmatpush1.msra.mxu0 0.0
      %1761 = vmatprep.subr.mxu0 0.0
      %1762 = vmatpush1.msra.mxu0 0.0
      %1763 = vmatprep.subr.mxu0 0.0
      %1764 = vmatpush1.msra.mxu0 0.0
      %1765 = vmatprep.subr.mxu0 0.0
      %1766 = vmatpush1.msra.mxu0 0.0
      %1767 = vmatprep.subr.mxu0 0.0
      %1768 = vmatpush1.msra.mxu0 0.0
      %1769 = vmatprep.subr.mxu0 %v1483
      %1770 = vmatpush1.msra.mxu0 %v1482
      %1771 = vmatprep.subr.mxu0 %v1475
      %1772 = vmatpush1.msra.mxu0 %v1474
      %1773 = vmatprep.subr.mxu0 %v1467
      %1774 = vmatpush1.msra.mxu0 %v1466
      %1775 = vmatprep.subr.mxu0 %v1459
      %1776 = vmatpush1.msra.mxu0 %v1458
      %1777 = vmatprep.subr.mxu0 %v1451
      %1778 = vmatpush1.msra.mxu0 %v1450
      %1779 = vmatprep.subr.mxu0 %v1443
      %1780 = vmatpush1.msra.mxu0 %v1442
      %1781 = vmatprep.subr.mxu0 %v1435
      %1782 = vmatpush1.msra.mxu0 %v1434
      %1783 = vmatprep.subr.mxu0 %v1427
      %1784 = vmatpush1.msra.mxu0 %v1426
      %1785 = vmatprep.subr.mxu0 0.0
      %1786 = vmatpush2.msra.mxu0 0.0
      %1787 = vmatprep.subr.mxu0 0.0
      %1788 = vmatpush2.msra.mxu0 0.0
      %1789 = vmatprep.subr.mxu0 0.0
      %1790 = vmatpush2.msra.mxu0 0.0
      %1791 = vmatprep.subr.mxu0 0.0
      %1792 = vmatpush2.msra.mxu0 0.0
      %1793 = vmatprep.subr.mxu0 0.0
      %1794 = vmatpush2.msra.mxu0 0.0
      %1795 = vmatprep.subr.mxu0 0.0
      %1796 = vmatpush2.msra.mxu0 0.0
      %1797 = vmatprep.subr.mxu0 0.0
      %1798 = vmatpush2.msra.mxu0 0.0
      %1799 = vmatprep.subr.mxu0 0.0
      %1800 = vmatpush2.msra.mxu0 0.0
      %1801 = vmatprep.subr.mxu0 0.0
      %1802 = vmatpush2.msra.mxu0 0.0
      %1803 = vmatprep.subr.mxu0 0.0
      %1804 = vmatpush2.msra.mxu0 0.0
      %1805 = vmatprep.subr.mxu0 0.0
      %1806 = vmatpush2.msra.mxu0 0.0
      %1807 = vmatprep.subr.mxu0 0.0
      %1808 = vmatpush2.msra.mxu0 0.0
      %1809 = vmatprep.subr.mxu0 0.0
      %1810 = vmatpush2.msra.mxu0 0.0
      %1811 = vmatprep.subr.mxu0 0.0
      %1812 = vmatpush2.msra.mxu0 0.0
      %1813 = vmatprep.subr.mxu0 0.0
      %1814 = vmatpush2.msra.mxu0 0.0
      %1815 = vmatprep.subr.mxu0 0.0
      %1816 = vmatpush2.msra.mxu0 0.0
      %1817 = vmatprep.mubr.f32.mxu0 0.0
      %1818 = vmatmul.mubr.f32.gmra.mxu0 %v1504
      %v1819 = vpop.f32.mrf.mxu0
      %v1820 = vadd.f32 0.0, %v1819
      %v1821 = vpop.f32.mrf.mxu0
      %v1822 = vadd.f32 0.0, %v1821
      %1823 = vmatprep.mubr.f32.mxu0 0.0
      %1824 = vmatmul.mubr.f32.gmra.mxu0 %v1507
      %v1825 = vpop.f32.mrf.mxu0
      %v1826 = vadd.f32 0.0, %v1825
      %v1827 = vpop.f32.mrf.mxu0
      %v1828 = vadd.f32 0.0, %v1827
      %1829 = vmatprep.mubr.f32.mxu0 0.0
      %1830 = vmatmul.mubr.f32.gmra.mxu0 %v1510
      %v1831 = vpop.f32.mrf.mxu0
      %v1832 = vadd.f32 0.0, %v1831
      %v1833 = vpop.f32.mrf.mxu0
      %v1834 = vadd.f32 0.0, %v1833
      %1835 = vmatprep.mubr.f32.mxu0 0.0
      %1836 = vmatmul.mubr.f32.gmra.mxu0 %v1513
      %v1837 = vpop.f32.mrf.mxu0
      %v1838 = vadd.f32 0.0, %v1837
      %v1839 = vpop.f32.mrf.mxu0
      %v1840 = vadd.f32 0.0, %v1839
      %1841 = vmatprep.mubr.f32.mxu0 0.0
      %1842 = vmatmul.mubr.f32.gmra.mxu0 %v1516
      %v1843 = vpop.f32.mrf.mxu0
      %v1844 = vadd.f32 0.0, %v1843
      %v1845 = vpop.f32.mrf.mxu0
      %v1846 = vadd.f32 0.0, %v1845
      %1847 = vmatprep.mubr.f32.mxu0 0.0
      %1848 = vmatmul.mubr.f32.gmra.mxu0 %v1519
      %v1849 = vpop.f32.mrf.mxu0
      %v1850 = vadd.f32 0.0, %v1849
      %v1851 = vpop.f32.mrf.mxu0
      %v1852 = vadd.f32 0.0, %v1851
      %1853 = vmatprep.mubr.f32.mxu0 0.0
      %1854 = vmatmul.mubr.f32.gmra.mxu0 %v1522
      %v1855 = vpop.f32.mrf.mxu0
      %v1856 = vadd.f32 0.0, %v1855
      %v1857 = vpop.f32.mrf.mxu0
      %v1858 = vadd.f32 0.0, %v1857
      %1859 = vmatprep.mubr.f32.mxu0 0.0
      %1860 = vmatmul.mubr.f32.gmra.mxu0 %v1525
      %v1861 = vpop.f32.mrf.mxu0
      %v1862 = vadd.f32 0.0, %v1861
      %v1863 = vpop.f32.mrf.mxu0
      %v1864 = vadd.f32 0.0, %v1863
      %1865 = vdwg.mxu0
      %1866 = vmatprep.subr.mxu0 0.0
      %1867 = vmatpush1.msra.mxu0 0.0
      %1868 = vmatprep.subr.mxu0 0.0
      %1869 = vmatpush1.msra.mxu0 0.0
      %1870 = vmatprep.subr.mxu0 0.0
      %1871 = vmatpush1.msra.mxu0 0.0
      %1872 = vmatprep.subr.mxu0 0.0
      %1873 = vmatpush1.msra.mxu0 0.0
      %1874 = vmatprep.subr.mxu0 0.0
      %1875 = vmatpush1.msra.mxu0 0.0
      %1876 = vmatprep.subr.mxu0 0.0
      %1877 = vmatpush1.msra.mxu0 0.0
      %1878 = vmatprep.subr.mxu0 0.0
      %1879 = vmatpush1.msra.mxu0 0.0
      %1880 = vmatprep.subr.mxu0 0.0
      %1881 = vmatpush1.msra.mxu0 0.0
      %1882 = vmatprep.subr.mxu0 %v1485
      %1883 = vmatpush1.msra.mxu0 %v1484
      %1884 = vmatprep.subr.mxu0 %v1477
      %1885 = vmatpush1.msra.mxu0 %v1476
      %1886 = vmatprep.subr.mxu0 %v1469
      %1887 = vmatpush1.msra.mxu0 %v1468
      %1888 = vmatprep.subr.mxu0 %v1461
      %1889 = vmatpush1.msra.mxu0 %v1460
      %1890 = vmatprep.subr.mxu0 %v1453
      %1891 = vmatpush1.msra.mxu0 %v1452
      %1892 = vmatprep.subr.mxu0 %v1445
      %1893 = vmatpush1.msra.mxu0 %v1444
      %1894 = vmatprep.subr.mxu0 %v1437
      %1895 = vmatpush1.msra.mxu0 %v1436
      %1896 = vmatprep.subr.mxu0 %v1429
      %1897 = vmatpush1.msra.mxu0 %v1428
      %1898 = vmatprep.subr.mxu0 0.0
      %1899 = vmatpush2.msra.mxu0 0.0
      %1900 = vmatprep.subr.mxu0 0.0
      %1901 = vmatpush2.msra.mxu0 0.0
      %1902 = vmatprep.subr.mxu0 0.0
      %1903 = vmatpush2.msra.mxu0 0.0
      %1904 = vmatprep.subr.mxu0 0.0
      %1905 = vmatpush2.msra.mxu0 0.0
      %1906 = vmatprep.subr.mxu0 0.0
      %1907 = vmatpush2.msra.mxu0 0.0
      %1908 = vmatprep.subr.mxu0 0.0
      %1909 = vmatpush2.msra.mxu0 0.0
      %1910 = vmatprep.subr.mxu0 0.0
      %1911 = vmatpush2.msra.mxu0 0.0
      %1912 = vmatprep.subr.mxu0 0.0
      %1913 = vmatpush2.msra.mxu0 0.0
      %1914 = vmatprep.subr.mxu0 0.0
      %1915 = vmatpush2.msra.mxu0 0.0
      %1916 = vmatprep.subr.mxu0 0.0
      %1917 = vmatpush2.msra.mxu0 0.0
      %1918 = vmatprep.subr.mxu0 0.0
      %1919 = vmatpush2.msra.mxu0 0.0
      %1920 = vmatprep.subr.mxu0 0.0
      %1921 = vmatpush2.msra.mxu0 0.0
      %1922 = vmatprep.subr.mxu0 0.0
      %1923 = vmatpush2.msra.mxu0 0.0
      %1924 = vmatprep.subr.mxu0 0.0
      %1925 = vmatpush2.msra.mxu0 0.0
      %1926 = vmatprep.subr.mxu0 0.0
      %1927 = vmatpush2.msra.mxu0 0.0
      %1928 = vmatprep.subr.mxu0 0.0
      %1929 = vmatpush2.msra.mxu0 0.0
      %1930 = vmatprep.mubr.f32.mxu0 0.0
      %1931 = vmatmul.mubr.f32.gmra.mxu0 %v1504
      %v1932 = vpop.f32.mrf.mxu0
      %v1933 = vadd.f32 0.0, %v1932
      %v1934 = vpop.f32.mrf.mxu0
      %v1935 = vadd.f32 0.0, %v1934
      %1936 = vmatprep.mubr.f32.mxu0 0.0
      %1937 = vmatmul.mubr.f32.gmra.mxu0 %v1507
      %v1938 = vpop.f32.mrf.mxu0
      %v1939 = vadd.f32 0.0, %v1938
      %v1940 = vpop.f32.mrf.mxu0
      %v1941 = vadd.f32 0.0, %v1940
      %1942 = vmatprep.mubr.f32.mxu0 0.0
      %1943 = vmatmul.mubr.f32.gmra.mxu0 %v1510
      %v1944 = vpop.f32.mrf.mxu0
      %v1945 = vadd.f32 0.0, %v1944
      %v1946 = vpop.f32.mrf.mxu0
      %v1947 = vadd.f32 0.0, %v1946
      %1948 = vmatprep.mubr.f32.mxu0 0.0
      %1949 = vmatmul.mubr.f32.gmra.mxu0 %v1513
      %v1950 = vpop.f32.mrf.mxu0
      %v1951 = vadd.f32 0.0, %v1950
      %v1952 = vpop.f32.mrf.mxu0
      %v1953 = vadd.f32 0.0, %v1952
      %1954 = vmatprep.mubr.f32.mxu0 0.0
      %1955 = vmatmul.mubr.f32.gmra.mxu0 %v1516
      %v1956 = vpop.f32.mrf.mxu0
      %v1957 = vadd.f32 0.0, %v1956
      %v1958 = vpop.f32.mrf.mxu0
      %v1959 = vadd.f32 0.0, %v1958
      %1960 = vmatprep.mubr.f32.mxu0 0.0
      %1961 = vmatmul.mubr.f32.gmra.mxu0 %v1519
      %v1962 = vpop.f32.mrf.mxu0
      %v1963 = vadd.f32 0.0, %v1962
      %v1964 = vpop.f32.mrf.mxu0
      %v1965 = vadd.f32 0.0, %v1964
      %1966 = vmatprep.mubr.f32.mxu0 0.0
      %1967 = vmatmul.mubr.f32.gmra.mxu0 %v1522
      %v1968 = vpop.f32.mrf.mxu0
      %v1969 = vadd.f32 0.0, %v1968
      %v1970 = vpop.f32.mrf.mxu0
      %v1971 = vadd.f32 0.0, %v1970
      %1972 = vmatprep.mubr.f32.mxu0 0.0
      %1973 = vmatmul.mubr.f32.gmra.mxu0 %v1525
      %v1974 = vpop.f32.mrf.mxu0
      %v1975 = vadd.f32 0.0, %v1974
      %v1976 = vpop.f32.mrf.mxu0
      %v1977 = vadd.f32 0.0, %v1976
      %1978 = vdwg.mxu0
      %1980 = vset.pattern.permute.xlu0 0
      %1981 = vperm.xlu0 %1980, %v1486
      %v1982 = vpop.permute.xlu0 %1981
      %1985 = vset.pattern.permute.xlu0 0
      %1986 = vperm.xlu0 %1985, %v1487
      %v1987 = vpop.permute.xlu0 %1986
      %1990 = vset.pattern.permute.xlu0 0
      %1991 = vperm.xlu0 %1990, %v1488
      %v1992 = vpop.permute.xlu0 %1991
      %1995 = vset.pattern.permute.xlu0 0
      %1996 = vperm.xlu0 %1995, %v1489
      %v1997 = vpop.permute.xlu0 %1996
      %2000 = vset.pattern.permute.xlu0 0
      %2001 = vperm.xlu0 %2000, %v1490
      %v2002 = vpop.permute.xlu0 %2001
      %2005 = vset.pattern.permute.xlu0 0
      %2006 = vperm.xlu0 %2005, %v1491
      %v2007 = vpop.permute.xlu0 %2006
      %2010 = vset.pattern.permute.xlu0 0
      %2011 = vperm.xlu0 %2010, %v1492
      %v2012 = vpop.permute.xlu0 %2011
      %2015 = vset.pattern.permute.xlu0 0
      %2016 = vperm.xlu0 %2015, %v1493
      %v2017 = vpop.permute.xlu0 %2016
      %v2019 = vadd.f32 %v1982, %v1594
      %v2020 = vadd.f32 %v1982, %v1596
      %v2021 = vadd.f32 %v1982, %v1707
      %v2022 = vadd.f32 %v1982, %v1709
      %v2023 = vadd.f32 %v1982, %v1820
      %v2024 = vadd.f32 %v1982, %v1822
      %v2025 = vadd.f32 %v1982, %v1933
      %v2026 = vadd.f32 %v1982, %v1935
      %v2027 = vadd.f32 %v1987, %v1600
      %v2028 = vadd.f32 %v1987, %v1602
      %v2029 = vadd.f32 %v1987, %v1713
      %v2030 = vadd.f32 %v1987, %v1715
      %v2031 = vadd.f32 %v1987, %v1826
      %v2032 = vadd.f32 %v1987, %v1828
      %v2033 = vadd.f32 %v1987, %v1939
      %v2034 = vadd.f32 %v1987, %v1941
      %v2035 = vadd.f32 %v1992, %v1606
      %v2036 = vadd.f32 %v1992, %v1608
      %v2037 = vadd.f32 %v1992, %v1719
      %v2038 = vadd.f32 %v1992, %v1721
      %v2039 = vadd.f32 %v1992, %v1832
      %v2040 = vadd.f32 %v1992, %v1834
      %v2041 = vadd.f32 %v1992, %v1945
      %v2042 = vadd.f32 %v1992, %v1947
      %v2043 = vadd.f32 %v1997, %v1612
      %v2044 = vadd.f32 %v1997, %v1614
      %v2045 = vadd.f32 %v1997, %v1725
      %v2046 = vadd.f32 %v1997, %v1727
      %v2047 = vadd.f32 %v1997, %v1838
      %v2048 = vadd.f32 %v1997, %v1840
      %v2049 = vadd.f32 %v1997, %v1951
      %v2050 = vadd.f32 %v1997, %v1953
      %v2051 = vadd.f32 %v2002, %v1618
      %v2052 = vadd.f32 %v2002, %v1620
      %v2053 = vadd.f32 %v2002, %v1731
      %v2054 = vadd.f32 %v2002, %v1733
      %v2055 = vadd.f32 %v2002, %v1844
      %v2056 = vadd.f32 %v2002, %v1846
      %v2057 = vadd.f32 %v2002, %v1957
      %v2058 = vadd.f32 %v2002, %v1959
      %v2059 = vadd.f32 %v2007, %v1624
      %v2060 = vadd.f32 %v2007, %v1626
      %v2061 = vadd.f32 %v2007, %v1737
      %v2062 = vadd.f32 %v2007, %v1739
      %v2063 = vadd.f32 %v2007, %v1850
      %v2064 = vadd.f32 %v2007, %v1852
      %v2065 = vadd.f32 %v2007, %v1963
      %v2066 = vadd.f32 %v2007, %v1965
      %v2067 = vadd.f32 %v2012, %v1630
      %v2068 = vadd.f32 %v2012, %v1632
      %v2069 = vadd.f32 %v2012, %v1743
      %v2070 = vadd.f32 %v2012, %v1745
      %v2071 = vadd.f32 %v2012, %v1856
      %v2072 = vadd.f32 %v2012, %v1858
      %v2073 = vadd.f32 %v2012, %v1969
      %v2074 = vadd.f32 %v2012, %v1971
      %v2075 = vadd.f32 %v2017, %v1636
      %v2076 = vadd.f32 %v2017, %v1638
      %v2077 = vadd.f32 %v2017, %v1749
      %v2078 = vadd.f32 %v2017, %v1751
      %v2079 = vadd.f32 %v2017, %v1862
      %v2080 = vadd.f32 %v2017, %v1864
      %v2081 = vadd.f32 %v2017, %v1975
      %v2082 = vadd.f32 %v2017, %v1977
      %s2083 = scalar_lea.vmem %s3, 64
      %v2084 = vld [vmem:[%s2083] sm:$0xff]
      %v2085 = vld [vmem:[%s2083 + $0x8] sm:$0xff]
      %v2086 = vld [vmem:[%s2083 + $0x10] sm:$0xff]
      %v2087 = vld [vmem:[%s2083 + $0x18] sm:$0xff]
      %v2088 = vld [vmem:[%s2083 + $0x20] sm:$0xff]
      %v2089 = vld [vmem:[%s2083 + $0x28] sm:$0xff]
      %v2090 = vld [vmem:[%s2083 + $0x30] sm:$0xff]
      %v2091 = vld [vmem:[%s2083 + $0x38] sm:$0xff]
      %2156 = vrot.lane.b32.xlu0 %v1422, 112
      %v2157 = vpop.permute.xlu0 %2156
      %2158 = vrot.lane.b32.xlu0 %v1423, 112
      %v2159 = vpop.permute.xlu0 %2158
      %2160 = vrot.lane.b32.xlu0 %v1424, 112
      %v2161 = vpop.permute.xlu0 %2160
      %2162 = vrot.lane.b32.xlu0 %v1425, 112
      %v2163 = vpop.permute.xlu0 %2162
      %2164 = vrot.lane.b32.xlu0 %v1426, 112
      %v2165 = vpop.permute.xlu0 %2164
      %2166 = vrot.lane.b32.xlu0 %v1427, 112
      %v2167 = vpop.permute.xlu0 %2166
      %2168 = vrot.lane.b32.xlu0 %v1428, 112
      %v2169 = vpop.permute.xlu0 %2168
      %2170 = vrot.lane.b32.xlu0 %v1429, 112
      %v2171 = vpop.permute.xlu0 %2170
      %2172 = vrot.lane.b32.xlu0 %v1430, 112
      %v2173 = vpop.permute.xlu0 %2172
      %2174 = vrot.lane.b32.xlu0 %v1431, 112
      %v2175 = vpop.permute.xlu0 %2174
      %2176 = vrot.lane.b32.xlu0 %v1432, 112
      %v2177 = vpop.permute.xlu0 %2176
      %2178 = vrot.lane.b32.xlu0 %v1433, 112
      %v2179 = vpop.permute.xlu0 %2178
      %2180 = vrot.lane.b32.xlu0 %v1434, 112
      %v2181 = vpop.permute.xlu0 %2180
      %2182 = vrot.lane.b32.xlu0 %v1435, 112
      %v2183 = vpop.permute.xlu0 %2182
      %2184 = vrot.lane.b32.xlu0 %v1436, 112
      %v2185 = vpop.permute.xlu0 %2184
      %2186 = vrot.lane.b32.xlu0 %v1437, 112
      %v2187 = vpop.permute.xlu0 %2186
      %2188 = vrot.lane.b32.xlu0 %v1438, 112
      %v2189 = vpop.permute.xlu0 %2188
      %2190 = vrot.lane.b32.xlu0 %v1439, 112
      %v2191 = vpop.permute.xlu0 %2190
      %2192 = vrot.lane.b32.xlu0 %v1440, 112
      %v2193 = vpop.permute.xlu0 %2192
      %2194 = vrot.lane.b32.xlu0 %v1441, 112
      %v2195 = vpop.permute.xlu0 %2194
      %2196 = vrot.lane.b32.xlu0 %v1442, 112
      %v2197 = vpop.permute.xlu0 %2196
      %2198 = vrot.lane.b32.xlu0 %v1443, 112
      %v2199 = vpop.permute.xlu0 %2198
      %2200 = vrot.lane.b32.xlu0 %v1444, 112
      %v2201 = vpop.permute.xlu0 %2200
      %2202 = vrot.lane.b32.xlu0 %v1445, 112
      %v2203 = vpop.permute.xlu0 %2202
      %2204 = vrot.lane.b32.xlu0 %v1446, 112
      %v2205 = vpop.permute.xlu0 %2204
      %2206 = vrot.lane.b32.xlu0 %v1447, 112
      %v2207 = vpop.permute.xlu0 %2206
      %2208 = vrot.lane.b32.xlu0 %v1448, 112
      %v2209 = vpop.permute.xlu0 %2208
      %2210 = vrot.lane.b32.xlu0 %v1449, 112
      %v2211 = vpop.permute.xlu0 %2210
      %2212 = vrot.lane.b32.xlu0 %v1450, 112
      %v2213 = vpop.permute.xlu0 %2212
      %2214 = vrot.lane.b32.xlu0 %v1451, 112
      %v2215 = vpop.permute.xlu0 %2214
      %2216 = vrot.lane.b32.xlu0 %v1452, 112
      %v2217 = vpop.permute.xlu0 %2216
      %2218 = vrot.lane.b32.xlu0 %v1453, 112
      %v2219 = vpop.permute.xlu0 %2218
      %2220 = vrot.lane.b32.xlu0 %v1454, 112
      %v2221 = vpop.permute.xlu0 %2220
      %2222 = vrot.lane.b32.xlu0 %v1455, 112
      %v2223 = vpop.permute.xlu0 %2222
      %2224 = vrot.lane.b32.xlu0 %v1456, 112
      %v2225 = vpop.permute.xlu0 %2224
      %2226 = vrot.lane.b32.xlu0 %v1457, 112
      %v2227 = vpop.permute.xlu0 %2226
      %2228 = vrot.lane.b32.xlu0 %v1458, 112
      %v2229 = vpop.permute.xlu0 %2228
      %2230 = vrot.lane.b32.xlu0 %v1459, 112
      %v2231 = vpop.permute.xlu0 %2230
      %2232 = vrot.lane.b32.xlu0 %v1460, 112
      %v2233 = vpop.permute.xlu0 %2232
      %2234 = vrot.lane.b32.xlu0 %v1461, 112
      %v2235 = vpop.permute.xlu0 %2234
      %2236 = vrot.lane.b32.xlu0 %v1462, 112
      %v2237 = vpop.permute.xlu0 %2236
      %2238 = vrot.lane.b32.xlu0 %v1463, 112
      %v2239 = vpop.permute.xlu0 %2238
      %2240 = vrot.lane.b32.xlu0 %v1464, 112
      %v2241 = vpop.permute.xlu0 %2240
      %2242 = vrot.lane.b32.xlu0 %v1465, 112
      %v2243 = vpop.permute.xlu0 %2242
      %2244 = vrot.lane.b32.xlu0 %v1466, 112
      %v2245 = vpop.permute.xlu0 %2244
      %2246 = vrot.lane.b32.xlu0 %v1467, 112
      %v2247 = vpop.permute.xlu0 %2246
      %2248 = vrot.lane.b32.xlu0 %v1468, 112
      %v2249 = vpop.permute.xlu0 %2248
      %2250 = vrot.lane.b32.xlu0 %v1469, 112
      %v2251 = vpop.permute.xlu0 %2250
      %2252 = vrot.lane.b32.xlu0 %v1470, 112
      %v2253 = vpop.permute.xlu0 %2252
      %2254 = vrot.lane.b32.xlu0 %v1471, 112
      %v2255 = vpop.permute.xlu0 %2254
      %2256 = vrot.lane.b32.xlu0 %v1472, 112
      %v2257 = vpop.permute.xlu0 %2256
      %2258 = vrot.lane.b32.xlu0 %v1473, 112
      %v2259 = vpop.permute.xlu0 %2258
      %2260 = vrot.lane.b32.xlu0 %v1474, 112
      %v2261 = vpop.permute.xlu0 %2260
      %2262 = vrot.lane.b32.xlu0 %v1475, 112
      %v2263 = vpop.permute.xlu0 %2262
      %2264 = vrot.lane.b32.xlu0 %v1476, 112
      %v2265 = vpop.permute.xlu0 %2264
      %2266 = vrot.lane.b32.xlu0 %v1477, 112
      %v2267 = vpop.permute.xlu0 %2266
      %2268 = vrot.lane.b32.xlu0 %v1478, 112
      %v2269 = vpop.permute.xlu0 %2268
      %2270 = vrot.lane.b32.xlu0 %v1479, 112
      %v2271 = vpop.permute.xlu0 %2270
      %2272 = vrot.lane.b32.xlu0 %v1480, 112
      %v2273 = vpop.permute.xlu0 %2272
      %2274 = vrot.lane.b32.xlu0 %v1481, 112
      %v2275 = vpop.permute.xlu0 %2274
      %2276 = vrot.lane.b32.xlu0 %v1482, 112
      %v2277 = vpop.permute.xlu0 %2276
      %2278 = vrot.lane.b32.xlu0 %v1483, 112
      %v2279 = vpop.permute.xlu0 %2278
      %2280 = vrot.lane.b32.xlu0 %v1484, 112
      %v2281 = vpop.permute.xlu0 %2280
      %2282 = vrot.lane.b32.xlu0 %v1485, 112
      %v2283 = vpop.permute.xlu0 %2282
      %v2284 = vsel %vm781, %v2157, %v2159
      %v2285 = vsel %vm781, %v2159, %v2161
      %v2286 = vsel %vm781, %v2161, %v2163
      %v2287 = vsel %vm781, %v2163, %v2165
      %v2288 = vsel %vm781, %v2165, %v2167
      %v2289 = vsel %vm781, %v2167, %v2169
      %v2290 = vsel %vm781, %v2169, %v2171
      %v2291 = vsel %vm781, %v2173, %v2175
      %v2292 = vsel %vm781, %v2175, %v2177
      %v2293 = vsel %vm781, %v2177, %v2179
      %v2294 = vsel %vm781, %v2179, %v2181
      %v2295 = vsel %vm781, %v2181, %v2183
      %v2296 = vsel %vm781, %v2183, %v2185
      %v2297 = vsel %vm781, %v2185, %v2187
      %v2298 = vsel %vm781, %v2189, %v2191
      %v2299 = vsel %vm781, %v2191, %v2193
      %v2300 = vsel %vm781, %v2193, %v2195
      %v2301 = vsel %vm781, %v2195, %v2197
      %v2302 = vsel %vm781, %v2197, %v2199
      %v2303 = vsel %vm781, %v2199, %v2201
      %v2304 = vsel %vm781, %v2201, %v2203
      %v2305 = vsel %vm781, %v2205, %v2207
      %v2306 = vsel %vm781, %v2207, %v2209
      %v2307 = vsel %vm781, %v2209, %v2211
      %v2308 = vsel %vm781, %v2211, %v2213
      %v2309 = vsel %vm781, %v2213, %v2215
      %v2310 = vsel %vm781, %v2215, %v2217
      %v2311 = vsel %vm781, %v2217, %v2219
      %v2312 = vsel %vm781, %v2221, %v2223
      %v2313 = vsel %vm781, %v2223, %v2225
      %v2314 = vsel %vm781, %v2225, %v2227
      %v2315 = vsel %vm781, %v2227, %v2229
      %v2316 = vsel %vm781, %v2229, %v2231
      %v2317 = vsel %vm781, %v2231, %v2233
      %v2318 = vsel %vm781, %v2233, %v2235
      %v2319 = vsel %vm781, %v2237, %v2239
      %v2320 = vsel %vm781, %v2239, %v2241
      %v2321 = vsel %vm781, %v2241, %v2243
      %v2322 = vsel %vm781, %v2243, %v2245
      %v2323 = vsel %vm781, %v2245, %v2247
      %v2324 = vsel %vm781, %v2247, %v2249
      %v2325 = vsel %vm781, %v2249, %v2251
      %v2326 = vsel %vm781, %v2253, %v2255
      %v2327 = vsel %vm781, %v2255, %v2257
      %v2328 = vsel %vm781, %v2257, %v2259
      %v2329 = vsel %vm781, %v2259, %v2261
      %v2330 = vsel %vm781, %v2261, %v2263
      %v2331 = vsel %vm781, %v2263, %v2265
      %v2332 = vsel %vm781, %v2265, %v2267
      %v2333 = vsel %vm781, %v2269, %v2271
      %v2334 = vsel %vm781, %v2271, %v2273
      %v2335 = vsel %vm781, %v2273, %v2275
      %v2336 = vsel %vm781, %v2275, %v2277
      %v2337 = vsel %vm781, %v2277, %v2279
      %v2338 = vsel %vm781, %v2279, %v2281
      %v2339 = vsel %vm781, %v2281, %v2283
      %v2404 = vsel %vm781, %v2171, 0.0
      %v2405 = vsel %vm781, %v2187, 0.0
      %v2406 = vsel %vm781, %v2203, 0.0
      %v2407 = vsel %vm781, %v2219, 0.0
      %v2408 = vsel %vm781, %v2235, 0.0
      %v2409 = vsel %vm781, %v2251, 0.0
      %v2410 = vsel %vm781, %v2267, 0.0
      %v2411 = vsel %vm781, %v2283, 0.0
      %v2413 = vsel %vm1502, %v2084, 0
      %v2416 = vsel %vm1502, %v2085, 0
      %v2419 = vsel %vm1502, %v2086, 0
      %v2422 = vsel %vm1502, %v2087, 0
      %v2425 = vsel %vm1502, %v2088, 0
      %v2428 = vsel %vm1502, %v2089, 0
      %v2431 = vsel %vm1502, %v2090, 0
      %v2434 = vsel %vm1502, %v2091, 0
      %2436 = vmatprep.subr.mxu0 0.0
      %2437 = vmatpush1.msra.mxu0 0.0
      %2438 = vmatprep.subr.mxu0 0.0
      %2439 = vmatpush1.msra.mxu0 0.0
      %2440 = vmatprep.subr.mxu0 0.0
      %2441 = vmatpush1.msra.mxu0 0.0
      %2442 = vmatprep.subr.mxu0 0.0
      %2443 = vmatpush1.msra.mxu0 0.0
      %2444 = vmatprep.subr.mxu0 0.0
      %2445 = vmatpush1.msra.mxu0 0.0
      %2446 = vmatprep.subr.mxu0 0.0
      %2447 = vmatpush1.msra.mxu0 0.0
      %2448 = vmatprep.subr.mxu0 0.0
      %2449 = vmatpush1.msra.mxu0 0.0
      %2450 = vmatprep.subr.mxu0 0.0
      %2451 = vmatpush1.msra.mxu0 0.0
      %2452 = vmatprep.subr.mxu0 %v2334
      %2453 = vmatpush1.msra.mxu0 %v2333
      %2454 = vmatprep.subr.mxu0 %v2327
      %2455 = vmatpush1.msra.mxu0 %v2326
      %2456 = vmatprep.subr.mxu0 %v2320
      %2457 = vmatpush1.msra.mxu0 %v2319
      %2458 = vmatprep.subr.mxu0 %v2313
      %2459 = vmatpush1.msra.mxu0 %v2312
      %2460 = vmatprep.subr.mxu0 %v2306
      %2461 = vmatpush1.msra.mxu0 %v2305
      %2462 = vmatprep.subr.mxu0 %v2299
      %2463 = vmatpush1.msra.mxu0 %v2298
      %2464 = vmatprep.subr.mxu0 %v2292
      %2465 = vmatpush1.msra.mxu0 %v2291
      %2466 = vmatprep.subr.mxu0 %v2285
      %2467 = vmatpush1.msra.mxu0 %v2284
      %2468 = vmatprep.subr.mxu0 0.0
      %2469 = vmatpush2.msra.mxu0 0.0
      %2470 = vmatprep.subr.mxu0 0.0
      %2471 = vmatpush2.msra.mxu0 0.0
      %2472 = vmatprep.subr.mxu0 0.0
      %2473 = vmatpush2.msra.mxu0 0.0
      %2474 = vmatprep.subr.mxu0 0.0
      %2475 = vmatpush2.msra.mxu0 0.0
      %2476 = vmatprep.subr.mxu0 0.0
      %2477 = vmatpush2.msra.mxu0 0.0
      %2478 = vmatprep.subr.mxu0 0.0
      %2479 = vmatpush2.msra.mxu0 0.0
      %2480 = vmatprep.subr.mxu0 0.0
      %2481 = vmatpush2.msra.mxu0 0.0
      %2482 = vmatprep.subr.mxu0 0.0
      %2483 = vmatpush2.msra.mxu0 0.0
      %2484 = vmatprep.subr.mxu0 0.0
      %2485 = vmatpush2.msra.mxu0 0.0
      %2486 = vmatprep.subr.mxu0 0.0
      %2487 = vmatpush2.msra.mxu0 0.0
      %2488 = vmatprep.subr.mxu0 0.0
      %2489 = vmatpush2.msra.mxu0 0.0
      %2490 = vmatprep.subr.mxu0 0.0
      %2491 = vmatpush2.msra.mxu0 0.0
      %2492 = vmatprep.subr.mxu0 0.0
      %2493 = vmatpush2.msra.mxu0 0.0
      %2494 = vmatprep.subr.mxu0 0.0
      %2495 = vmatpush2.msra.mxu0 0.0
      %2496 = vmatprep.subr.mxu0 0.0
      %2497 = vmatpush2.msra.mxu0 0.0
      %2498 = vmatprep.subr.mxu0 0.0
      %2499 = vmatpush2.msra.mxu0 0.0
      %2500 = vmatprep.mubr.f32.mxu0 0.0
      %2501 = vmatmul.mubr.f32.gmra.mxu0 %v2413
      %v2502 = vpop.f32.mrf.mxu0
      %v2503 = vadd.f32 0.0, %v2502
      %v2504 = vpop.f32.mrf.mxu0
      %v2505 = vadd.f32 0.0, %v2504
      %2506 = vmatprep.mubr.f32.mxu0 0.0
      %2507 = vmatmul.mubr.f32.gmra.mxu0 %v2416
      %v2508 = vpop.f32.mrf.mxu0
      %v2509 = vadd.f32 0.0, %v2508
      %v2510 = vpop.f32.mrf.mxu0
      %v2511 = vadd.f32 0.0, %v2510
      %2512 = vmatprep.mubr.f32.mxu0 0.0
      %2513 = vmatmul.mubr.f32.gmra.mxu0 %v2419
      %v2514 = vpop.f32.mrf.mxu0
      %v2515 = vadd.f32 0.0, %v2514
      %v2516 = vpop.f32.mrf.mxu0
      %v2517 = vadd.f32 0.0, %v2516
      %2518 = vmatprep.mubr.f32.mxu0 0.0
      %2519 = vmatmul.mubr.f32.gmra.mxu0 %v2422
      %v2520 = vpop.f32.mrf.mxu0
      %v2521 = vadd.f32 0.0, %v2520
      %v2522 = vpop.f32.mrf.mxu0
      %v2523 = vadd.f32 0.0, %v2522
      %2524 = vmatprep.mubr.f32.mxu0 0.0
      %2525 = vmatmul.mubr.f32.gmra.mxu0 %v2425
      %v2526 = vpop.f32.mrf.mxu0
      %v2527 = vadd.f32 0.0, %v2526
      %v2528 = vpop.f32.mrf.mxu0
      %v2529 = vadd.f32 0.0, %v2528
      %2530 = vmatprep.mubr.f32.mxu0 0.0
      %2531 = vmatmul.mubr.f32.gmra.mxu0 %v2428
      %v2532 = vpop.f32.mrf.mxu0
      %v2533 = vadd.f32 0.0, %v2532
      %v2534 = vpop.f32.mrf.mxu0
      %v2535 = vadd.f32 0.0, %v2534
      %2536 = vmatprep.mubr.f32.mxu0 0.0
      %2537 = vmatmul.mubr.f32.gmra.mxu0 %v2431
      %v2538 = vpop.f32.mrf.mxu0
      %v2539 = vadd.f32 0.0, %v2538
      %v2540 = vpop.f32.mrf.mxu0
      %v2541 = vadd.f32 0.0, %v2540
      %2542 = vmatprep.mubr.f32.mxu0 0.0
      %2543 = vmatmul.mubr.f32.gmra.mxu0 %v2434
      %v2544 = vpop.f32.mrf.mxu0
      %v2545 = vadd.f32 0.0, %v2544
      %v2546 = vpop.f32.mrf.mxu0
      %v2547 = vadd.f32 0.0, %v2546
      %2548 = vdwg.mxu0
      %2549 = vmatprep.subr.mxu0 0.0
      %2550 = vmatpush1.msra.mxu0 0.0
      %2551 = vmatprep.subr.mxu0 0.0
      %2552 = vmatpush1.msra.mxu0 0.0
      %2553 = vmatprep.subr.mxu0 0.0
      %2554 = vmatpush1.msra.mxu0 0.0
      %2555 = vmatprep.subr.mxu0 0.0
      %2556 = vmatpush1.msra.mxu0 0.0
      %2557 = vmatprep.subr.mxu0 0.0
      %2558 = vmatpush1.msra.mxu0 0.0
      %2559 = vmatprep.subr.mxu0 0.0
      %2560 = vmatpush1.msra.mxu0 0.0
      %2561 = vmatprep.subr.mxu0 0.0
      %2562 = vmatpush1.msra.mxu0 0.0
      %2563 = vmatprep.subr.mxu0 0.0
      %2564 = vmatpush1.msra.mxu0 0.0
      %2565 = vmatprep.subr.mxu0 %v2336
      %2566 = vmatpush1.msra.mxu0 %v2335
      %2567 = vmatprep.subr.mxu0 %v2329
      %2568 = vmatpush1.msra.mxu0 %v2328
      %2569 = vmatprep.subr.mxu0 %v2322
      %2570 = vmatpush1.msra.mxu0 %v2321
      %2571 = vmatprep.subr.mxu0 %v2315
      %2572 = vmatpush1.msra.mxu0 %v2314
      %2573 = vmatprep.subr.mxu0 %v2308
      %2574 = vmatpush1.msra.mxu0 %v2307
      %2575 = vmatprep.subr.mxu0 %v2301
      %2576 = vmatpush1.msra.mxu0 %v2300
      %2577 = vmatprep.subr.mxu0 %v2294
      %2578 = vmatpush1.msra.mxu0 %v2293
      %2579 = vmatprep.subr.mxu0 %v2287
      %2580 = vmatpush1.msra.mxu0 %v2286
      %2581 = vmatprep.subr.mxu0 0.0
      %2582 = vmatpush2.msra.mxu0 0.0
      %2583 = vmatprep.subr.mxu0 0.0
      %2584 = vmatpush2.msra.mxu0 0.0
      %2585 = vmatprep.subr.mxu0 0.0
      %2586 = vmatpush2.msra.mxu0 0.0
      %2587 = vmatprep.subr.mxu0 0.0
      %2588 = vmatpush2.msra.mxu0 0.0
      %2589 = vmatprep.subr.mxu0 0.0
      %2590 = vmatpush2.msra.mxu0 0.0
      %2591 = vmatprep.subr.mxu0 0.0
      %2592 = vmatpush2.msra.mxu0 0.0
      %2593 = vmatprep.subr.mxu0 0.0
      %2594 = vmatpush2.msra.mxu0 0.0
      %2595 = vmatprep.subr.mxu0 0.0
      %2596 = vmatpush2.msra.mxu0 0.0
      %2597 = vmatprep.subr.mxu0 0.0
      %2598 = vmatpush2.msra.mxu0 0.0
      %2599 = vmatprep.subr.mxu0 0.0
      %2600 = vmatpush2.msra.mxu0 0.0
      %2601 = vmatprep.subr.mxu0 0.0
      %2602 = vmatpush2.msra.mxu0 0.0
      %2603 = vmatprep.subr.mxu0 0.0
      %2604 = vmatpush2.msra.mxu0 0.0
      %2605 = vmatprep.subr.mxu0 0.0
      %2606 = vmatpush2.msra.mxu0 0.0
      %2607 = vmatprep.subr.mxu0 0.0
      %2608 = vmatpush2.msra.mxu0 0.0
      %2609 = vmatprep.subr.mxu0 0.0
      %2610 = vmatpush2.msra.mxu0 0.0
      %2611 = vmatprep.subr.mxu0 0.0
      %2612 = vmatpush2.msra.mxu0 0.0
      %2613 = vmatprep.mubr.f32.mxu0 0.0
      %2614 = vmatmul.mubr.f32.gmra.mxu0 %v2413
      %v2615 = vpop.f32.mrf.mxu0
      %v2616 = vadd.f32 0.0, %v2615
      %v2617 = vpop.f32.mrf.mxu0
      %v2618 = vadd.f32 0.0, %v2617
      %2619 = vmatprep.mubr.f32.mxu0 0.0
      %2620 = vmatmul.mubr.f32.gmra.mxu0 %v2416
      %v2621 = vpop.f32.mrf.mxu0
      %v2622 = vadd.f32 0.0, %v2621
      %v2623 = vpop.f32.mrf.mxu0
      %v2624 = vadd.f32 0.0, %v2623
      %2625 = vmatprep.mubr.f32.mxu0 0.0
      %2626 = vmatmul.mubr.f32.gmra.mxu0 %v2419
      %v2627 = vpop.f32.mrf.mxu0
      %v2628 = vadd.f32 0.0, %v2627
      %v2629 = vpop.f32.mrf.mxu0
      %v2630 = vadd.f32 0.0, %v2629
      %2631 = vmatprep.mubr.f32.mxu0 0.0
      %2632 = vmatmul.mubr.f32.gmra.mxu0 %v2422
      %v2633 = vpop.f32.mrf.mxu0
      %v2634 = vadd.f32 0.0, %v2633
      %v2635 = vpop.f32.mrf.mxu0
      %v2636 = vadd.f32 0.0, %v2635
      %2637 = vmatprep.mubr.f32.mxu0 0.0
      %2638 = vmatmul.mubr.f32.gmra.mxu0 %v2425
      %v2639 = vpop.f32.mrf.mxu0
      %v2640 = vadd.f32 0.0, %v2639
      %v2641 = vpop.f32.mrf.mxu0
      %v2642 = vadd.f32 0.0, %v2641
      %2643 = vmatprep.mubr.f32.mxu0 0.0
      %2644 = vmatmul.mubr.f32.gmra.mxu0 %v2428
      %v2645 = vpop.f32.mrf.mxu0
      %v2646 = vadd.f32 0.0, %v2645
      %v2647 = vpop.f32.mrf.mxu0
      %v2648 = vadd.f32 0.0, %v2647
      %2649 = vmatprep.mubr.f32.mxu0 0.0
      %2650 = vmatmul.mubr.f32.gmra.mxu0 %v2431
      %v2651 = vpop.f32.mrf.mxu0
      %v2652 = vadd.f32 0.0, %v2651
      %v2653 = vpop.f32.mrf.mxu0
      %v2654 = vadd.f32 0.0, %v2653
      %2655 = vmatprep.mubr.f32.mxu0 0.0
      %2656 = vmatmul.mubr.f32.gmra.mxu0 %v2434
      %v2657 = vpop.f32.mrf.mxu0
      %v2658 = vadd.f32 0.0, %v2657
      %v2659 = vpop.f32.mrf.mxu0
      %v2660 = vadd.f32 0.0, %v2659
      %2661 = vdwg.mxu0
      %2662 = vmatprep.subr.mxu0 0.0
      %2663 = vmatpush1.msra.mxu0 0.0
      %2664 = vmatprep.subr.mxu0 0.0
      %2665 = vmatpush1.msra.mxu0 0.0
      %2666 = vmatprep.subr.mxu0 0.0
      %2667 = vmatpush1.msra.mxu0 0.0
      %2668 = vmatprep.subr.mxu0 0.0
      %2669 = vmatpush1.msra.mxu0 0.0
      %2670 = vmatprep.subr.mxu0 0.0
      %2671 = vmatpush1.msra.mxu0 0.0
      %2672 = vmatprep.subr.mxu0 0.0
      %2673 = vmatpush1.msra.mxu0 0.0
      %2674 = vmatprep.subr.mxu0 0.0
      %2675 = vmatpush1.msra.mxu0 0.0
      %2676 = vmatprep.subr.mxu0 0.0
      %2677 = vmatpush1.msra.mxu0 0.0
      %2678 = vmatprep.subr.mxu0 %v2338
      %2679 = vmatpush1.msra.mxu0 %v2337
      %2680 = vmatprep.subr.mxu0 %v2331
      %2681 = vmatpush1.msra.mxu0 %v2330
      %2682 = vmatprep.subr.mxu0 %v2324
      %2683 = vmatpush1.msra.mxu0 %v2323
      %2684 = vmatprep.subr.mxu0 %v2317
      %2685 = vmatpush1.msra.mxu0 %v2316
      %2686 = vmatprep.subr.mxu0 %v2310
      %2687 = vmatpush1.msra.mxu0 %v2309
      %2688 = vmatprep.subr.mxu0 %v2303
      %2689 = vmatpush1.msra.mxu0 %v2302
      %2690 = vmatprep.subr.mxu0 %v2296
      %2691 = vmatpush1.msra.mxu0 %v2295
      %2692 = vmatprep.subr.mxu0 %v2289
      %2693 = vmatpush1.msra.mxu0 %v2288
      %2694 = vmatprep.subr.mxu0 0.0
      %2695 = vmatpush2.msra.mxu0 0.0
      %2696 = vmatprep.subr.mxu0 0.0
      %2697 = vmatpush2.msra.mxu0 0.0
      %2698 = vmatprep.subr.mxu0 0.0
      %2699 = vmatpush2.msra.mxu0 0.0
      %2700 = vmatprep.subr.mxu0 0.0
      %2701 = vmatpush2.msra.mxu0 0.0
      %2702 = vmatprep.subr.mxu0 0.0
      %2703 = vmatpush2.msra.mxu0 0.0
      %2704 = vmatprep.subr.mxu0 0.0
      %2705 = vmatpush2.msra.mxu0 0.0
      %2706 = vmatprep.subr.mxu0 0.0
      %2707 = vmatpush2.msra.mxu0 0.0
      %2708 = vmatprep.subr.mxu0 0.0
      %2709 = vmatpush2.msra.mxu0 0.0
      %2710 = vmatprep.subr.mxu0 0.0
      %2711 = vmatpush2.msra.mxu0 0.0
      %2712 = vmatprep.subr.mxu0 0.0
      %2713 = vmatpush2.msra.mxu0 0.0
      %2714 = vmatprep.subr.mxu0 0.0
      %2715 = vmatpush2.msra.mxu0 0.0
      %2716 = vmatprep.subr.mxu0 0.0
      %2717 = vmatpush2.msra.mxu0 0.0
      %2718 = vmatprep.subr.mxu0 0.0
      %2719 = vmatpush2.msra.mxu0 0.0
      %2720 = vmatprep.subr.mxu0 0.0
      %2721 = vmatpush2.msra.mxu0 0.0
      %2722 = vmatprep.subr.mxu0 0.0
      %2723 = vmatpush2.msra.mxu0 0.0
      %2724 = vmatprep.subr.mxu0 0.0
      %2725 = vmatpush2.msra.mxu0 0.0
      %2726 = vmatprep.mubr.f32.mxu0 0.0
      %2727 = vmatmul.mubr.f32.gmra.mxu0 %v2413
      %v2728 = vpop.f32.mrf.mxu0
      %v2729 = vadd.f32 0.0, %v2728
      %v2730 = vpop.f32.mrf.mxu0
      %v2731 = vadd.f32 0.0, %v2730
      %2732 = vmatprep.mubr.f32.mxu0 0.0
      %2733 = vmatmul.mubr.f32.gmra.mxu0 %v2416
      %v2734 = vpop.f32.mrf.mxu0
      %v2735 = vadd.f32 0.0, %v2734
      %v2736 = vpop.f32.mrf.mxu0
      %v2737 = vadd.f32 0.0, %v2736
      %2738 = vmatprep.mubr.f32.mxu0 0.0
      %2739 = vmatmul.mubr.f32.gmra.mxu0 %v2419
      %v2740 = vpop.f32.mrf.mxu0
      %v2741 = vadd.f32 0.0, %v2740
      %v2742 = vpop.f32.mrf.mxu0
      %v2743 = vadd.f32 0.0, %v2742
      %2744 = vmatprep.mubr.f32.mxu0 0.0
      %2745 = vmatmul.mubr.f32.gmra.mxu0 %v2422
      %v2746 = vpop.f32.mrf.mxu0
      %v2747 = vadd.f32 0.0, %v2746
      %v2748 = vpop.f32.mrf.mxu0
      %v2749 = vadd.f32 0.0, %v2748
      %2750 = vmatprep.mubr.f32.mxu0 0.0
      %2751 = vmatmul.mubr.f32.gmra.mxu0 %v2425
      %v2752 = vpop.f32.mrf.mxu0
      %v2753 = vadd.f32 0.0, %v2752
      %v2754 = vpop.f32.mrf.mxu0
      %v2755 = vadd.f32 0.0, %v2754
      %2756 = vmatprep.mubr.f32.mxu0 0.0
      %2757 = vmatmul.mubr.f32.gmra.mxu0 %v2428
      %v2758 = vpop.f32.mrf.mxu0
      %v2759 = vadd.f32 0.0, %v2758
      %v2760 = vpop.f32.mrf.mxu0
      %v2761 = vadd.f32 0.0, %v2760
      %2762 = vmatprep.mubr.f32.mxu0 0.0
      %2763 = vmatmul.mubr.f32.gmra.mxu0 %v2431
      %v2764 = vpop.f32.mrf.mxu0
      %v2765 = vadd.f32 0.0, %v2764
      %v2766 = vpop.f32.mrf.mxu0
      %v2767 = vadd.f32 0.0, %v2766
      %2768 = vmatprep.mubr.f32.mxu0 0.0
      %2769 = vmatmul.mubr.f32.gmra.mxu0 %v2434
      %v2770 = vpop.f32.mrf.mxu0
      %v2771 = vadd.f32 0.0, %v2770
      %v2772 = vpop.f32.mrf.mxu0
      %v2773 = vadd.f32 0.0, %v2772
      %2774 = vdwg.mxu0
      %2775 = vmatprep.subr.mxu0 0.0
      %2776 = vmatpush1.msra.mxu0 0.0
      %2777 = vmatprep.subr.mxu0 0.0
      %2778 = vmatpush1.msra.mxu0 0.0
      %2779 = vmatprep.subr.mxu0 0.0
      %2780 = vmatpush1.msra.mxu0 0.0
      %2781 = vmatprep.subr.mxu0 0.0
      %2782 = vmatpush1.msra.mxu0 0.0
      %2783 = vmatprep.subr.mxu0 0.0
      %2784 = vmatpush1.msra.mxu0 0.0
      %2785 = vmatprep.subr.mxu0 0.0
      %2786 = vmatpush1.msra.mxu0 0.0
      %2787 = vmatprep.subr.mxu0 0.0
      %2788 = vmatpush1.msra.mxu0 0.0
      %2789 = vmatprep.subr.mxu0 0.0
      %2790 = vmatpush1.msra.mxu0 0.0
      %2791 = vmatprep.subr.mxu0 %v2411
      %2792 = vmatpush1.msra.mxu0 %v2339
      %2793 = vmatprep.subr.mxu0 %v2410
      %2794 = vmatpush1.msra.mxu0 %v2332
      %2795 = vmatprep.subr.mxu0 %v2409
      %2796 = vmatpush1.msra.mxu0 %v2325
      %2797 = vmatprep.subr.mxu0 %v2408
      %2798 = vmatpush1.msra.mxu0 %v2318
      %2799 = vmatprep.subr.mxu0 %v2407
      %2800 = vmatpush1.msra.mxu0 %v2311
      %2801 = vmatprep.subr.mxu0 %v2406
      %2802 = vmatpush1.msra.mxu0 %v2304
      %2803 = vmatprep.subr.mxu0 %v2405
      %2804 = vmatpush1.msra.mxu0 %v2297
      %2805 = vmatprep.subr.mxu0 %v2404
      %2806 = vmatpush1.msra.mxu0 %v2290
      %2807 = vmatprep.subr.mxu0 0.0
      %2808 = vmatpush2.msra.mxu0 0.0
      %2809 = vmatprep.subr.mxu0 0.0
      %2810 = vmatpush2.msra.mxu0 0.0
      %2811 = vmatprep.subr.mxu0 0.0
      %2812 = vmatpush2.msra.mxu0 0.0
      %2813 = vmatprep.subr.mxu0 0.0
      %2814 = vmatpush2.msra.mxu0 0.0
      %2815 = vmatprep.subr.mxu0 0.0
      %2816 = vmatpush2.msra.mxu0 0.0
      %2817 = vmatprep.subr.mxu0 0.0
      %2818 = vmatpush2.msra.mxu0 0.0
      %2819 = vmatprep.subr.mxu0 0.0
      %2820 = vmatpush2.msra.mxu0 0.0
      %2821 = vmatprep.subr.mxu0 0.0
      %2822 = vmatpush2.msra.mxu0 0.0
      %2823 = vmatprep.subr.mxu0 0.0
      %2824 = vmatpush2.msra.mxu0 0.0
      %2825 = vmatprep.subr.mxu0 0.0
      %2826 = vmatpush2.msra.mxu0 0.0
      %2827 = vmatprep.subr.mxu0 0.0
      %2828 = vmatpush2.msra.mxu0 0.0
      %2829 = vmatprep.subr.mxu0 0.0
      %2830 = vmatpush2.msra.mxu0 0.0
      %2831 = vmatprep.subr.mxu0 0.0
      %2832 = vmatpush2.msra.mxu0 0.0
      %2833 = vmatprep.subr.mxu0 0.0
      %2834 = vmatpush2.msra.mxu0 0.0
      %2835 = vmatprep.subr.mxu0 0.0
      %2836 = vmatpush2.msra.mxu0 0.0
      %2837 = vmatprep.subr.mxu0 0.0
      %2838 = vmatpush2.msra.mxu0 0.0
      %2839 = vmatprep.mubr.f32.mxu0 0.0
      %2840 = vmatmul.mubr.f32.gmra.mxu0 %v2413
      %v2841 = vpop.f32.mrf.mxu0
      %v2842 = vadd.f32 0.0, %v2841
      %v2843 = vpop.f32.mrf.mxu0
      %v2844 = vadd.f32 0.0, %v2843
      %2845 = vmatprep.mubr.f32.mxu0 0.0
      %2846 = vmatmul.mubr.f32.gmra.mxu0 %v2416
      %v2847 = vpop.f32.mrf.mxu0
      %v2848 = vadd.f32 0.0, %v2847
      %v2849 = vpop.f32.mrf.mxu0
      %v2850 = vadd.f32 0.0, %v2849
      %2851 = vmatprep.mubr.f32.mxu0 0.0
      %2852 = vmatmul.mubr.f32.gmra.mxu0 %v2419
      %v2853 = vpop.f32.mrf.mxu0
      %v2854 = vadd.f32 0.0, %v2853
      %v2855 = vpop.f32.mrf.mxu0
      %v2856 = vadd.f32 0.0, %v2855
      %2857 = vmatprep.mubr.f32.mxu0 0.0
      %2858 = vmatmul.mubr.f32.gmra.mxu0 %v2422
      %v2859 = vpop.f32.mrf.mxu0
      %v2860 = vadd.f32 0.0, %v2859
      %v2861 = vpop.f32.mrf.mxu0
      %v2862 = vadd.f32 0.0, %v2861
      %2863 = vmatprep.mubr.f32.mxu0 0.0
      %2864 = vmatmul.mubr.f32.gmra.mxu0 %v2425
      %v2865 = vpop.f32.mrf.mxu0
      %v2866 = vadd.f32 0.0, %v2865
      %v2867 = vpop.f32.mrf.mxu0
      %v2868 = vadd.f32 0.0, %v2867
      %2869 = vmatprep.mubr.f32.mxu0 0.0
      %2870 = vmatmul.mubr.f32.gmra.mxu0 %v2428
      %v2871 = vpop.f32.mrf.mxu0
      %v2872 = vadd.f32 0.0, %v2871
      %v2873 = vpop.f32.mrf.mxu0
      %v2874 = vadd.f32 0.0, %v2873
      %2875 = vmatprep.mubr.f32.mxu0 0.0
      %2876 = vmatmul.mubr.f32.gmra.mxu0 %v2431
      %v2877 = vpop.f32.mrf.mxu0
      %v2878 = vadd.f32 0.0, %v2877
      %v2879 = vpop.f32.mrf.mxu0
      %v2880 = vadd.f32 0.0, %v2879
      %2881 = vmatprep.mubr.f32.mxu0 0.0
      %2882 = vmatmul.mubr.f32.gmra.mxu0 %v2434
      %v2883 = vpop.f32.mrf.mxu0
      %v2884 = vadd.f32 0.0, %v2883
      %v2885 = vpop.f32.mrf.mxu0
      %v2886 = vadd.f32 0.0, %v2885
      %2887 = vdwg.mxu0
      %v2888 = vadd.f32 %v2019, %v2503
      %v2889 = vadd.f32 %v2020, %v2505
      %v2890 = vadd.f32 %v2021, %v2616
      %v2891 = vadd.f32 %v2022, %v2618
      %v2892 = vadd.f32 %v2023, %v2729
      %v2893 = vadd.f32 %v2024, %v2731
      %v2894 = vadd.f32 %v2025, %v2842
      %v2895 = vadd.f32 %v2026, %v2844
      %v2896 = vadd.f32 %v2027, %v2509
      %v2897 = vadd.f32 %v2028, %v2511
      %v2898 = vadd.f32 %v2029, %v2622
      %v2899 = vadd.f32 %v2030, %v2624
      %v2900 = vadd.f32 %v2031, %v2735
      %v2901 = vadd.f32 %v2032, %v2737
      %v2902 = vadd.f32 %v2033, %v2848
      %v2903 = vadd.f32 %v2034, %v2850
      %v2904 = vadd.f32 %v2035, %v2515
      %v2905 = vadd.f32 %v2036, %v2517
      %v2906 = vadd.f32 %v2037, %v2628
      %v2907 = vadd.f32 %v2038, %v2630
      %v2908 = vadd.f32 %v2039, %v2741
      %v2909 = vadd.f32 %v2040, %v2743
      %v2910 = vadd.f32 %v2041, %v2854
      %v2911 = vadd.f32 %v2042, %v2856
      %v2912 = vadd.f32 %v2043, %v2521
      %v2913 = vadd.f32 %v2044, %v2523
      %v2914 = vadd.f32 %v2045, %v2634
      %v2915 = vadd.f32 %v2046, %v2636
      %v2916 = vadd.f32 %v2047, %v2747
      %v2917 = vadd.f32 %v2048, %v2749
      %v2918 = vadd.f32 %v2049, %v2860
      %v2919 = vadd.f32 %v2050, %v2862
      %v2920 = vadd.f32 %v2051, %v2527
      %v2921 = vadd.f32 %v2052, %v2529
      %v2922 = vadd.f32 %v2053, %v2640
      %v2923 = vadd.f32 %v2054, %v2642
      %v2924 = vadd.f32 %v2055, %v2753
      %v2925 = vadd.f32 %v2056, %v2755
      %v2926 = vadd.f32 %v2057, %v2866
      %v2927 = vadd.f32 %v2058, %v2868
      %v2928 = vadd.f32 %v2059, %v2533
      %v2929 = vadd.f32 %v2060, %v2535
      %v2930 = vadd.f32 %v2061, %v2646
      %v2931 = vadd.f32 %v2062, %v2648
      %v2932 = vadd.f32 %v2063, %v2759
      %v2933 = vadd.f32 %v2064, %v2761
      %v2934 = vadd.f32 %v2065, %v2872
      %v2935 = vadd.f32 %v2066, %v2874
      %v2936 = vadd.f32 %v2067, %v2539
      %v2937 = vadd.f32 %v2068, %v2541
      %v2938 = vadd.f32 %v2069, %v2652
      %v2939 = vadd.f32 %v2070, %v2654
      %v2940 = vadd.f32 %v2071, %v2765
      %v2941 = vadd.f32 %v2072, %v2767
      %v2942 = vadd.f32 %v2073, %v2878
      %v2943 = vadd.f32 %v2074, %v2880
      %v2944 = vadd.f32 %v2075, %v2545
      %v2945 = vadd.f32 %v2076, %v2547
      %v2946 = vadd.f32 %v2077, %v2658
      %v2947 = vadd.f32 %v2078, %v2660
      %v2948 = vadd.f32 %v2079, %v2771
      %v2949 = vadd.f32 %v2080, %v2773
      %v2950 = vadd.f32 %v2081, %v2884
      %v2951 = vadd.f32 %v2082, %v2886
      %s2952 = scalar_lea.vmem %s3, 128
      %v2953 = vld [vmem:[%s2952] sm:$0xff]
      %v2954 = vld [vmem:[%s2952 + $0x8] sm:$0xff]
      %v2955 = vld [vmem:[%s2952 + $0x10] sm:$0xff]
      %v2956 = vld [vmem:[%s2952 + $0x18] sm:$0xff]
      %v2957 = vld [vmem:[%s2952 + $0x20] sm:$0xff]
      %v2958 = vld [vmem:[%s2952 + $0x28] sm:$0xff]
      %v2959 = vld [vmem:[%s2952 + $0x30] sm:$0xff]
      %v2960 = vld [vmem:[%s2952 + $0x38] sm:$0xff]
      %2961 = vrot.lane.b32.xlu0 %v1422, 96
      %v2962 = vpop.permute.xlu0 %2961
      %2963 = vrot.lane.b32.xlu0 %v1423, 96
      %v2964 = vpop.permute.xlu0 %2963
      %2965 = vrot.lane.b32.xlu0 %v1424, 96
      %v2966 = vpop.permute.xlu0 %2965
      %2967 = vrot.lane.b32.xlu0 %v1425, 96
      %v2968 = vpop.permute.xlu0 %2967
      %2969 = vrot.lane.b32.xlu0 %v1426, 96
      %v2970 = vpop.permute.xlu0 %2969
      %2971 = vrot.lane.b32.xlu0 %v1427, 96
      %v2972 = vpop.permute.xlu0 %2971
      %2973 = vrot.lane.b32.xlu0 %v1428, 96
      %v2974 = vpop.permute.xlu0 %2973
      %2975 = vrot.lane.b32.xlu0 %v1429, 96
      %v2976 = vpop.permute.xlu0 %2975
      %2977 = vrot.lane.b32.xlu0 %v1430, 96
      %v2978 = vpop.permute.xlu0 %2977
      %2979 = vrot.lane.b32.xlu0 %v1431, 96
      %v2980 = vpop.permute.xlu0 %2979
      %2981 = vrot.lane.b32.xlu0 %v1432, 96
      %v2982 = vpop.permute.xlu0 %2981
      %2983 = vrot.lane.b32.xlu0 %v1433, 96
      %v2984 = vpop.permute.xlu0 %2983
      %2985 = vrot.lane.b32.xlu0 %v1434, 96
      %v2986 = vpop.permute.xlu0 %2985
      %2987 = vrot.lane.b32.xlu0 %v1435, 96
      %v2988 = vpop.permute.xlu0 %2987
      %2989 = vrot.lane.b32.xlu0 %v1436, 96
      %v2990 = vpop.permute.xlu0 %2989
      %2991 = vrot.lane.b32.xlu0 %v1437, 96
      %v2992 = vpop.permute.xlu0 %2991
      %2993 = vrot.lane.b32.xlu0 %v1438, 96
      %v2994 = vpop.permute.xlu0 %2993
      %2995 = vrot.lane.b32.xlu0 %v1439, 96
      %v2996 = vpop.permute.xlu0 %2995
      %2997 = vrot.lane.b32.xlu0 %v1440, 96
      %v2998 = vpop.permute.xlu0 %2997
      %2999 = vrot.lane.b32.xlu0 %v1441, 96
      %v3000 = vpop.permute.xlu0 %2999
      %3001 = vrot.lane.b32.xlu0 %v1442, 96
      %v3002 = vpop.permute.xlu0 %3001
      %3003 = vrot.lane.b32.xlu0 %v1443, 96
      %v3004 = vpop.permute.xlu0 %3003
      %3005 = vrot.lane.b32.xlu0 %v1444, 96
      %v3006 = vpop.permute.xlu0 %3005
      %3007 = vrot.lane.b32.xlu0 %v1445, 96
      %v3008 = vpop.permute.xlu0 %3007
      %3009 = vrot.lane.b32.xlu0 %v1446, 96
      %v3010 = vpop.permute.xlu0 %3009
      %3011 = vrot.lane.b32.xlu0 %v1447, 96
      %v3012 = vpop.permute.xlu0 %3011
      %3013 = vrot.lane.b32.xlu0 %v1448, 96
      %v3014 = vpop.permute.xlu0 %3013
      %3015 = vrot.lane.b32.xlu0 %v1449, 96
      %v3016 = vpop.permute.xlu0 %3015
      %3017 = vrot.lane.b32.xlu0 %v1450, 96
      %v3018 = vpop.permute.xlu0 %3017
      %3019 = vrot.lane.b32.xlu0 %v1451, 96
      %v3020 = vpop.permute.xlu0 %3019
      %3021 = vrot.lane.b32.xlu0 %v1452, 96
      %v3022 = vpop.permute.xlu0 %3021
      %3023 = vrot.lane.b32.xlu0 %v1453, 96
      %v3024 = vpop.permute.xlu0 %3023
      %3025 = vrot.lane.b32.xlu0 %v1454, 96
      %v3026 = vpop.permute.xlu0 %3025
      %3027 = vrot.lane.b32.xlu0 %v1455, 96
      %v3028 = vpop.permute.xlu0 %3027
      %3029 = vrot.lane.b32.xlu0 %v1456, 96
      %v3030 = vpop.permute.xlu0 %3029
      %3031 = vrot.lane.b32.xlu0 %v1457, 96
      %v3032 = vpop.permute.xlu0 %3031
      %3033 = vrot.lane.b32.xlu0 %v1458, 96
      %v3034 = vpop.permute.xlu0 %3033
      %3035 = vrot.lane.b32.xlu0 %v1459, 96
      %v3036 = vpop.permute.xlu0 %3035
      %3037 = vrot.lane.b32.xlu0 %v1460, 96
      %v3038 = vpop.permute.xlu0 %3037
      %3039 = vrot.lane.b32.xlu0 %v1461, 96
      %v3040 = vpop.permute.xlu0 %3039
      %3041 = vrot.lane.b32.xlu0 %v1462, 96
      %v3042 = vpop.permute.xlu0 %3041
      %3043 = vrot.lane.b32.xlu0 %v1463, 96
      %v3044 = vpop.permute.xlu0 %3043
      %3045 = vrot.lane.b32.xlu0 %v1464, 96
      %v3046 = vpop.permute.xlu0 %3045
      %3047 = vrot.lane.b32.xlu0 %v1465, 96
      %v3048 = vpop.permute.xlu0 %3047
      %3049 = vrot.lane.b32.xlu0 %v1466, 96
      %v3050 = vpop.permute.xlu0 %3049
      %3051 = vrot.lane.b32.xlu0 %v1467, 96
      %v3052 = vpop.permute.xlu0 %3051
      %3053 = vrot.lane.b32.xlu0 %v1468, 96
      %v3054 = vpop.permute.xlu0 %3053
      %3055 = vrot.lane.b32.xlu0 %v1469, 96
      %v3056 = vpop.permute.xlu0 %3055
      %3057 = vrot.lane.b32.xlu0 %v1470, 96
      %v3058 = vpop.permute.xlu0 %3057
      %3059 = vrot.lane.b32.xlu0 %v1471, 96
      %v3060 = vpop.permute.xlu0 %3059
      %3061 = vrot.lane.b32.xlu0 %v1472, 96
      %v3062 = vpop.permute.xlu0 %3061
      %3063 = vrot.lane.b32.xlu0 %v1473, 96
      %v3064 = vpop.permute.xlu0 %3063
      %3065 = vrot.lane.b32.xlu0 %v1474, 96
      %v3066 = vpop.permute.xlu0 %3065
      %3067 = vrot.lane.b32.xlu0 %v1475, 96
      %v3068 = vpop.permute.xlu0 %3067
      %3069 = vrot.lane.b32.xlu0 %v1476, 96
      %v3070 = vpop.permute.xlu0 %3069
      %3071 = vrot.lane.b32.xlu0 %v1477, 96
      %v3072 = vpop.permute.xlu0 %3071
      %3073 = vrot.lane.b32.xlu0 %v1478, 96
      %v3074 = vpop.permute.xlu0 %3073
      %3075 = vrot.lane.b32.xlu0 %v1479, 96
      %v3076 = vpop.permute.xlu0 %3075
      %3077 = vrot.lane.b32.xlu0 %v1480, 96
      %v3078 = vpop.permute.xlu0 %3077
      %3079 = vrot.lane.b32.xlu0 %v1481, 96
      %v3080 = vpop.permute.xlu0 %3079
      %3081 = vrot.lane.b32.xlu0 %v1482, 96
      %v3082 = vpop.permute.xlu0 %3081
      %3083 = vrot.lane.b32.xlu0 %v1483, 96
      %v3084 = vpop.permute.xlu0 %3083
      %3085 = vrot.lane.b32.xlu0 %v1484, 96
      %v3086 = vpop.permute.xlu0 %3085
      %3087 = vrot.lane.b32.xlu0 %v1485, 96
      %v3088 = vpop.permute.xlu0 %3087
      %vm3089 = vcmask 785408
      %v3090 = vsel %vm3089, %v2962, %v2964
      %v3091 = vsel %vm3089, %v2964, %v2966
      %v3092 = vsel %vm3089, %v2966, %v2968
      %v3093 = vsel %vm3089, %v2968, %v2970
      %v3094 = vsel %vm3089, %v2970, %v2972
      %v3095 = vsel %vm3089, %v2972, %v2974
      %v3096 = vsel %vm3089, %v2974, %v2976
      %v3097 = vsel %vm3089, %v2978, %v2980
      %v3098 = vsel %vm3089, %v2980, %v2982
      %v3099 = vsel %vm3089, %v2982, %v2984
      %v3100 = vsel %vm3089, %v2984, %v2986
      %v3101 = vsel %vm3089, %v2986, %v2988
      %v3102 = vsel %vm3089, %v2988, %v2990
      %v3103 = vsel %vm3089, %v2990, %v2992
      %v3104 = vsel %vm3089, %v2994, %v2996
      %v3105 = vsel %vm3089, %v2996, %v2998
      %v3106 = vsel %vm3089, %v2998, %v3000
      %v3107 = vsel %vm3089, %v3000, %v3002
      %v3108 = vsel %vm3089, %v3002, %v3004
      %v3109 = vsel %vm3089, %v3004, %v3006
      %v3110 = vsel %vm3089, %v3006, %v3008
      %v3111 = vsel %vm3089, %v3010, %v3012
      %v3112 = vsel %vm3089, %v3012, %v3014
      %v3113 = vsel %vm3089, %v3014, %v3016
      %v3114 = vsel %vm3089, %v3016, %v3018
      %v3115 = vsel %vm3089, %v3018, %v3020
      %v3116 = vsel %vm3089, %v3020, %v3022
      %v3117 = vsel %vm3089, %v3022, %v3024
      %v3118 = vsel %vm3089, %v3026, %v3028
      %v3119 = vsel %vm3089, %v3028, %v3030
      %v3120 = vsel %vm3089, %v3030, %v3032
      %v3121 = vsel %vm3089, %v3032, %v3034
      %v3122 = vsel %vm3089, %v3034, %v3036
      %v3123 = vsel %vm3089, %v3036, %v3038
      %v3124 = vsel %vm3089, %v3038, %v3040
      %v3125 = vsel %vm3089, %v3042, %v3044
      %v3126 = vsel %vm3089, %v3044, %v3046
      %v3127 = vsel %vm3089, %v3046, %v3048
      %v3128 = vsel %vm3089, %v3048, %v3050
      %v3129 = vsel %vm3089, %v3050, %v3052
      %v3130 = vsel %vm3089, %v3052, %v3054
      %v3131 = vsel %vm3089, %v3054, %v3056
      %v3132 = vsel %vm3089, %v3058, %v3060
      %v3133 = vsel %vm3089, %v3060, %v3062
      %v3134 = vsel %vm3089, %v3062, %v3064
      %v3135 = vsel %vm3089, %v3064, %v3066
      %v3136 = vsel %vm3089, %v3066, %v3068
      %v3137 = vsel %vm3089, %v3068, %v3070
      %v3138 = vsel %vm3089, %v3070, %v3072
      %v3139 = vsel %vm3089, %v3074, %v3076
      %v3140 = vsel %vm3089, %v3076, %v3078
      %v3141 = vsel %vm3089, %v3078, %v3080
      %v3142 = vsel %vm3089, %v3080, %v3082
      %v3143 = vsel %vm3089, %v3082, %v3084
      %v3144 = vsel %vm3089, %v3084, %v3086
      %v3145 = vsel %vm3089, %v3086, %v3088
      %v3210 = vsel %vm3089, %v2976, 0.0
      %v3211 = vsel %vm3089, %v2992, 0.0
      %v3212 = vsel %vm3089, %v3008, 0.0
      %v3213 = vsel %vm3089, %v3024, 0.0
      %v3214 = vsel %vm3089, %v3040, 0.0
      %v3215 = vsel %vm3089, %v3056, 0.0
      %v3216 = vsel %vm3089, %v3072, 0.0
      %v3217 = vsel %vm3089, %v3088, 0.0
      %v3219 = vsel %vm1502, %v2953, 0
      %v3222 = vsel %vm1502, %v2954, 0
      %v3225 = vsel %vm1502, %v2955, 0
      %v3228 = vsel %vm1502, %v2956, 0
      %v3231 = vsel %vm1502, %v2957, 0
      %v3234 = vsel %vm1502, %v2958, 0
      %v3237 = vsel %vm1502, %v2959, 0
      %v3240 = vsel %vm1502, %v2960, 0
      %3242 = vmatprep.subr.mxu0 0.0
      %3243 = vmatpush1.msra.mxu0 0.0
      %3244 = vmatprep.subr.mxu0 0.0
      %3245 = vmatpush1.msra.mxu0 0.0
      %3246 = vmatprep.subr.mxu0 0.0
      %3247 = vmatpush1.msra.mxu0 0.0
      %3248 = vmatprep.subr.mxu0 0.0
      %3249 = vmatpush1.msra.mxu0 0.0
      %3250 = vmatprep.subr.mxu0 0.0
      %3251 = vmatpush1.msra.mxu0 0.0
      %3252 = vmatprep.subr.mxu0 0.0
      %3253 = vmatpush1.msra.mxu0 0.0
      %3254 = vmatprep.subr.mxu0 0.0
      %3255 = vmatpush1.msra.mxu0 0.0
      %3256 = vmatprep.subr.mxu0 0.0
      %3257 = vmatpush1.msra.mxu0 0.0
      %3258 = vmatprep.subr.mxu0 %v3140
      %3259 = vmatpush1.msra.mxu0 %v3139
      %3260 = vmatprep.subr.mxu0 %v3133
      %3261 = vmatpush1.msra.mxu0 %v3132
      %3262 = vmatprep.subr.mxu0 %v3126
      %3263 = vmatpush1.msra.mxu0 %v3125
      %3264 = vmatprep.subr.mxu0 %v3119
      %3265 = vmatpush1.msra.mxu0 %v3118
      %3266 = vmatprep.subr.mxu0 %v3112
      %3267 = vmatpush1.msra.mxu0 %v3111
      %3268 = vmatprep.subr.mxu0 %v3105
      %3269 = vmatpush1.msra.mxu0 %v3104
      %3270 = vmatprep.subr.mxu0 %v3098
      %3271 = vmatpush1.msra.mxu0 %v3097
      %3272 = vmatprep.subr.mxu0 %v3091
      %3273 = vmatpush1.msra.mxu0 %v3090
      %3274 = vmatprep.subr.mxu0 0.0
      %3275 = vmatpush2.msra.mxu0 0.0
      %3276 = vmatprep.subr.mxu0 0.0
      %3277 = vmatpush2.msra.mxu0 0.0
      %3278 = vmatprep.subr.mxu0 0.0
      %3279 = vmatpush2.msra.mxu0 0.0
      %3280 = vmatprep.subr.mxu0 0.0
      %3281 = vmatpush2.msra.mxu0 0.0
      %3282 = vmatprep.subr.mxu0 0.0
      %3283 = vmatpush2.msra.mxu0 0.0
      %3284 = vmatprep.subr.mxu0 0.0
      %3285 = vmatpush2.msra.mxu0 0.0
      %3286 = vmatprep.subr.mxu0 0.0
      %3287 = vmatpush2.msra.mxu0 0.0
      %3288 = vmatprep.subr.mxu0 0.0
      %3289 = vmatpush2.msra.mxu0 0.0
      %3290 = vmatprep.subr.mxu0 0.0
      %3291 = vmatpush2.msra.mxu0 0.0
      %3292 = vmatprep.subr.mxu0 0.0
      %3293 = vmatpush2.msra.mxu0 0.0
      %3294 = vmatprep.subr.mxu0 0.0
      %3295 = vmatpush2.msra.mxu0 0.0
      %3296 = vmatprep.subr.mxu0 0.0
      %3297 = vmatpush2.msra.mxu0 0.0
      %3298 = vmatprep.subr.mxu0 0.0
      %3299 = vmatpush2.msra.mxu0 0.0
      %3300 = vmatprep.subr.mxu0 0.0
      %3301 = vmatpush2.msra.mxu0 0.0
      %3302 = vmatprep.subr.mxu0 0.0
      %3303 = vmatpush2.msra.mxu0 0.0
      %3304 = vmatprep.subr.mxu0 0.0
      %3305 = vmatpush2.msra.mxu0 0.0
      %3306 = vmatprep.mubr.f32.mxu0 0.0
      %3307 = vmatmul.mubr.f32.gmra.mxu0 %v3219
      %v3308 = vpop.f32.mrf.mxu0
      %v3309 = vadd.f32 0.0, %v3308
      %v3310 = vpop.f32.mrf.mxu0
      %v3311 = vadd.f32 0.0, %v3310
      %3312 = vmatprep.mubr.f32.mxu0 0.0
      %3313 = vmatmul.mubr.f32.gmra.mxu0 %v3222
      %v3314 = vpop.f32.mrf.mxu0
      %v3315 = vadd.f32 0.0, %v3314
      %v3316 = vpop.f32.mrf.mxu0
      %v3317 = vadd.f32 0.0, %v3316
      %3318 = vmatprep.mubr.f32.mxu0 0.0
      %3319 = vmatmul.mubr.f32.gmra.mxu0 %v3225
      %v3320 = vpop.f32.mrf.mxu0
      %v3321 = vadd.f32 0.0, %v3320
      %v3322 = vpop.f32.mrf.mxu0
      %v3323 = vadd.f32 0.0, %v3322
      %3324 = vmatprep.mubr.f32.mxu0 0.0
      %3325 = vmatmul.mubr.f32.gmra.mxu0 %v3228
      %v3326 = vpop.f32.mrf.mxu0
      %v3327 = vadd.f32 0.0, %v3326
      %v3328 = vpop.f32.mrf.mxu0
      %v3329 = vadd.f32 0.0, %v3328
      %3330 = vmatprep.mubr.f32.mxu0 0.0
      %3331 = vmatmul.mubr.f32.gmra.mxu0 %v3231
      %v3332 = vpop.f32.mrf.mxu0
      %v3333 = vadd.f32 0.0, %v3332
      %v3334 = vpop.f32.mrf.mxu0
      %v3335 = vadd.f32 0.0, %v3334
      %3336 = vmatprep.mubr.f32.mxu0 0.0
      %3337 = vmatmul.mubr.f32.gmra.mxu0 %v3234
      %v3338 = vpop.f32.mrf.mxu0
      %v3339 = vadd.f32 0.0, %v3338
      %v3340 = vpop.f32.mrf.mxu0
      %v3341 = vadd.f32 0.0, %v3340
      %3342 = vmatprep.mubr.f32.mxu0 0.0
      %3343 = vmatmul.mubr.f32.gmra.mxu0 %v3237
      %v3344 = vpop.f32.mrf.mxu0
      %v3345 = vadd.f32 0.0, %v3344
      %v3346 = vpop.f32.mrf.mxu0
      %v3347 = vadd.f32 0.0, %v3346
      %3348 = vmatprep.mubr.f32.mxu0 0.0
      %3349 = vmatmul.mubr.f32.gmra.mxu0 %v3240
      %v3350 = vpop.f32.mrf.mxu0
      %v3351 = vadd.f32 0.0, %v3350
      %v3352 = vpop.f32.mrf.mxu0
      %v3353 = vadd.f32 0.0, %v3352
      %3354 = vdwg.mxu0
      %3355 = vmatprep.subr.mxu0 0.0
      %3356 = vmatpush1.msra.mxu0 0.0
      %3357 = vmatprep.subr.mxu0 0.0
      %3358 = vmatpush1.msra.mxu0 0.0
      %3359 = vmatprep.subr.mxu0 0.0
      %3360 = vmatpush1.msra.mxu0 0.0
      %3361 = vmatprep.subr.mxu0 0.0
      %3362 = vmatpush1.msra.mxu0 0.0
      %3363 = vmatprep.subr.mxu0 0.0
      %3364 = vmatpush1.msra.mxu0 0.0
      %3365 = vmatprep.subr.mxu0 0.0
      %3366 = vmatpush1.msra.mxu0 0.0
      %3367 = vmatprep.subr.mxu0 0.0
      %3368 = vmatpush1.msra.mxu0 0.0
      %3369 = vmatprep.subr.mxu0 0.0
      %3370 = vmatpush1.msra.mxu0 0.0
      %3371 = vmatprep.subr.mxu0 %v3142
      %3372 = vmatpush1.msra.mxu0 %v3141
      %3373 = vmatprep.subr.mxu0 %v3135
      %3374 = vmatpush1.msra.mxu0 %v3134
      %3375 = vmatprep.subr.mxu0 %v3128
      %3376 = vmatpush1.msra.mxu0 %v3127
      %3377 = vmatprep.subr.mxu0 %v3121
      %3378 = vmatpush1.msra.mxu0 %v3120
      %3379 = vmatprep.subr.mxu0 %v3114
      %3380 = vmatpush1.msra.mxu0 %v3113
      %3381 = vmatprep.subr.mxu0 %v3107
      %3382 = vmatpush1.msra.mxu0 %v3106
      %3383 = vmatprep.subr.mxu0 %v3100
      %3384 = vmatpush1.msra.mxu0 %v3099
      %3385 = vmatprep.subr.mxu0 %v3093
      %3386 = vmatpush1.msra.mxu0 %v3092
      %3387 = vmatprep.subr.mxu0 0.0
      %3388 = vmatpush2.msra.mxu0 0.0
      %3389 = vmatprep.subr.mxu0 0.0
      %3390 = vmatpush2.msra.mxu0 0.0
      %3391 = vmatprep.subr.mxu0 0.0
      %3392 = vmatpush2.msra.mxu0 0.0
      %3393 = vmatprep.subr.mxu0 0.0
      %3394 = vmatpush2.msra.mxu0 0.0
      %3395 = vmatprep.subr.mxu0 0.0
      %3396 = vmatpush2.msra.mxu0 0.0
      %3397 = vmatprep.subr.mxu0 0.0
      %3398 = vmatpush2.msra.mxu0 0.0
      %3399 = vmatprep.subr.mxu0 0.0
      %3400 = vmatpush2.msra.mxu0 0.0
      %3401 = vmatprep.subr.mxu0 0.0
      %3402 = vmatpush2.msra.mxu0 0.0
      %3403 = vmatprep.subr.mxu0 0.0
      %3404 = vmatpush2.msra.mxu0 0.0
      %3405 = vmatprep.subr.mxu0 0.0
      %3406 = vmatpush2.msra.mxu0 0.0
      %3407 = vmatprep.subr.mxu0 0.0
      %3408 = vmatpush2.msra.mxu0 0.0
      %3409 = vmatprep.subr.mxu0 0.0
      %3410 = vmatpush2.msra.mxu0 0.0
      %3411 = vmatprep.subr.mxu0 0.0
      %3412 = vmatpush2.msra.mxu0 0.0
      %3413 = vmatprep.subr.mxu0 0.0
      %3414 = vmatpush2.msra.mxu0 0.0
      %3415 = vmatprep.subr.mxu0 0.0
      %3416 = vmatpush2.msra.mxu0 0.0
      %3417 = vmatprep.subr.mxu0 0.0
      %3418 = vmatpush2.msra.mxu0 0.0
      %3419 = vmatprep.mubr.f32.mxu0 0.0
      %3420 = vmatmul.mubr.f32.gmra.mxu0 %v3219
      %v3421 = vpop.f32.mrf.mxu0
      %v3422 = vadd.f32 0.0, %v3421
      %v3423 = vpop.f32.mrf.mxu0
      %v3424 = vadd.f32 0.0, %v3423
      %3425 = vmatprep.mubr.f32.mxu0 0.0
      %3426 = vmatmul.mubr.f32.gmra.mxu0 %v3222
      %v3427 = vpop.f32.mrf.mxu0
      %v3428 = vadd.f32 0.0, %v3427
      %v3429 = vpop.f32.mrf.mxu0
      %v3430 = vadd.f32 0.0, %v3429
      %3431 = vmatprep.mubr.f32.mxu0 0.0
      %3432 = vmatmul.mubr.f32.gmra.mxu0 %v3225
      %v3433 = vpop.f32.mrf.mxu0
      %v3434 = vadd.f32 0.0, %v3433
      %v3435 = vpop.f32.mrf.mxu0
      %v3436 = vadd.f32 0.0, %v3435
      %3437 = vmatprep.mubr.f32.mxu0 0.0
      %3438 = vmatmul.mubr.f32.gmra.mxu0 %v3228
      %v3439 = vpop.f32.mrf.mxu0
      %v3440 = vadd.f32 0.0, %v3439
      %v3441 = vpop.f32.mrf.mxu0
      %v3442 = vadd.f32 0.0, %v3441
      %3443 = vmatprep.mubr.f32.mxu0 0.0
      %3444 = vmatmul.mubr.f32.gmra.mxu0 %v3231
      %v3445 = vpop.f32.mrf.mxu0
      %v3446 = vadd.f32 0.0, %v3445
      %v3447 = vpop.f32.mrf.mxu0
      %v3448 = vadd.f32 0.0, %v3447
      %3449 = vmatprep.mubr.f32.mxu0 0.0
      %3450 = vmatmul.mubr.f32.gmra.mxu0 %v3234
      %v3451 = vpop.f32.mrf.mxu0
      %v3452 = vadd.f32 0.0, %v3451
      %v3453 = vpop.f32.mrf.mxu0
      %v3454 = vadd.f32 0.0, %v3453
      %3455 = vmatprep.mubr.f32.mxu0 0.0
      %3456 = vmatmul.mubr.f32.gmra.mxu0 %v3237
      %v3457 = vpop.f32.mrf.mxu0
      %v3458 = vadd.f32 0.0, %v3457
      %v3459 = vpop.f32.mrf.mxu0
      %v3460 = vadd.f32 0.0, %v3459
      %3461 = vmatprep.mubr.f32.mxu0 0.0
      %3462 = vmatmul.mubr.f32.gmra.mxu0 %v3240
      %v3463 = vpop.f32.mrf.mxu0
      %v3464 = vadd.f32 0.0, %v3463
      %v3465 = vpop.f32.mrf.mxu0
      %v3466 = vadd.f32 0.0, %v3465
      %3467 = vdwg.mxu0
      %3468 = vmatprep.subr.mxu0 0.0
      %3469 = vmatpush1.msra.mxu0 0.0
      %3470 = vmatprep.subr.mxu0 0.0
      %3471 = vmatpush1.msra.mxu0 0.0
      %3472 = vmatprep.subr.mxu0 0.0
      %3473 = vmatpush1.msra.mxu0 0.0
      %3474 = vmatprep.subr.mxu0 0.0
      %3475 = vmatpush1.msra.mxu0 0.0
      %3476 = vmatprep.subr.mxu0 0.0
      %3477 = vmatpush1.msra.mxu0 0.0
      %3478 = vmatprep.subr.mxu0 0.0
      %3479 = vmatpush1.msra.mxu0 0.0
      %3480 = vmatprep.subr.mxu0 0.0
      %3481 = vmatpush1.msra.mxu0 0.0
      %3482 = vmatprep.subr.mxu0 0.0
      %3483 = vmatpush1.msra.mxu0 0.0
      %3484 = vmatprep.subr.mxu0 %v3144
      %3485 = vmatpush1.msra.mxu0 %v3143
      %3486 = vmatprep.subr.mxu0 %v3137
      %3487 = vmatpush1.msra.mxu0 %v3136
      %3488 = vmatprep.subr.mxu0 %v3130
      %3489 = vmatpush1.msra.mxu0 %v3129
      %3490 = vmatprep.subr.mxu0 %v3123
      %3491 = vmatpush1.msra.mxu0 %v3122
      %3492 = vmatprep.subr.mxu0 %v3116
      %3493 = vmatpush1.msra.mxu0 %v3115
      %3494 = vmatprep.subr.mxu0 %v3109
      %3495 = vmatpush1.msra.mxu0 %v3108
      %3496 = vmatprep.subr.mxu0 %v3102
      %3497 = vmatpush1.msra.mxu0 %v3101
      %3498 = vmatprep.subr.mxu0 %v3095
      %3499 = vmatpush1.msra.mxu0 %v3094
      %3500 = vmatprep.subr.mxu0 0.0
      %3501 = vmatpush2.msra.mxu0 0.0
      %3502 = vmatprep.subr.mxu0 0.0
      %3503 = vmatpush2.msra.mxu0 0.0
      %3504 = vmatprep.subr.mxu0 0.0
      %3505 = vmatpush2.msra.mxu0 0.0
      %3506 = vmatprep.subr.mxu0 0.0
      %3507 = vmatpush2.msra.mxu0 0.0
      %3508 = vmatprep.subr.mxu0 0.0
      %3509 = vmatpush2.msra.mxu0 0.0
      %3510 = vmatprep.subr.mxu0 0.0
      %3511 = vmatpush2.msra.mxu0 0.0
      %3512 = vmatprep.subr.mxu0 0.0
      %3513 = vmatpush2.msra.mxu0 0.0
      %3514 = vmatprep.subr.mxu0 0.0
      %3515 = vmatpush2.msra.mxu0 0.0
      %3516 = vmatprep.subr.mxu0 0.0
      %3517 = vmatpush2.msra.mxu0 0.0
      %3518 = vmatprep.subr.mxu0 0.0
      %3519 = vmatpush2.msra.mxu0 0.0
      %3520 = vmatprep.subr.mxu0 0.0
      %3521 = vmatpush2.msra.mxu0 0.0
      %3522 = vmatprep.subr.mxu0 0.0
      %3523 = vmatpush2.msra.mxu0 0.0
      %3524 = vmatprep.subr.mxu0 0.0
      %3525 = vmatpush2.msra.mxu0 0.0
      %3526 = vmatprep.subr.mxu0 0.0
      %3527 = vmatpush2.msra.mxu0 0.0
      %3528 = vmatprep.subr.mxu0 0.0
      %3529 = vmatpush2.msra.mxu0 0.0
      %3530 = vmatprep.subr.mxu0 0.0
      %3531 = vmatpush2.msra.mxu0 0.0
      %3532 = vmatprep.mubr.f32.mxu0 0.0
      %3533 = vmatmul.mubr.f32.gmra.mxu0 %v3219
      %v3534 = vpop.f32.mrf.mxu0
      %v3535 = vadd.f32 0.0, %v3534
      %v3536 = vpop.f32.mrf.mxu0
      %v3537 = vadd.f32 0.0, %v3536
      %3538 = vmatprep.mubr.f32.mxu0 0.0
      %3539 = vmatmul.mubr.f32.gmra.mxu0 %v3222
      %v3540 = vpop.f32.mrf.mxu0
      %v3541 = vadd.f32 0.0, %v3540
      %v3542 = vpop.f32.mrf.mxu0
      %v3543 = vadd.f32 0.0, %v3542
      %3544 = vmatprep.mubr.f32.mxu0 0.0
      %3545 = vmatmul.mubr.f32.gmra.mxu0 %v3225
      %v3546 = vpop.f32.mrf.mxu0
      %v3547 = vadd.f32 0.0, %v3546
      %v3548 = vpop.f32.mrf.mxu0
      %v3549 = vadd.f32 0.0, %v3548
      %3550 = vmatprep.mubr.f32.mxu0 0.0
      %3551 = vmatmul.mubr.f32.gmra.mxu0 %v3228
      %v3552 = vpop.f32.mrf.mxu0
      %v3553 = vadd.f32 0.0, %v3552
      %v3554 = vpop.f32.mrf.mxu0
      %v3555 = vadd.f32 0.0, %v3554
      %3556 = vmatprep.mubr.f32.mxu0 0.0
      %3557 = vmatmul.mubr.f32.gmra.mxu0 %v3231
      %v3558 = vpop.f32.mrf.mxu0
      %v3559 = vadd.f32 0.0, %v3558
      %v3560 = vpop.f32.mrf.mxu0
      %v3561 = vadd.f32 0.0, %v3560
      %3562 = vmatprep.mubr.f32.mxu0 0.0
      %3563 = vmatmul.mubr.f32.gmra.mxu0 %v3234
      %v3564 = vpop.f32.mrf.mxu0
      %v3565 = vadd.f32 0.0, %v3564
      %v3566 = vpop.f32.mrf.mxu0
      %v3567 = vadd.f32 0.0, %v3566
      %3568 = vmatprep.mubr.f32.mxu0 0.0
      %3569 = vmatmul.mubr.f32.gmra.mxu0 %v3237
      %v3570 = vpop.f32.mrf.mxu0
      %v3571 = vadd.f32 0.0, %v3570
      %v3572 = vpop.f32.mrf.mxu0
      %v3573 = vadd.f32 0.0, %v3572
      %3574 = vmatprep.mubr.f32.mxu0 0.0
      %3575 = vmatmul.mubr.f32.gmra.mxu0 %v3240
      %v3576 = vpop.f32.mrf.mxu0
      %v3577 = vadd.f32 0.0, %v3576
      %v3578 = vpop.f32.mrf.mxu0
      %v3579 = vadd.f32 0.0, %v3578
      %3580 = vdwg.mxu0
      %3581 = vmatprep.subr.mxu0 0.0
      %3582 = vmatpush1.msra.mxu0 0.0
      %3583 = vmatprep.subr.mxu0 0.0
      %3584 = vmatpush1.msra.mxu0 0.0
      %3585 = vmatprep.subr.mxu0 0.0
      %3586 = vmatpush1.msra.mxu0 0.0
      %3587 = vmatprep.subr.mxu0 0.0
      %3588 = vmatpush1.msra.mxu0 0.0
      %3589 = vmatprep.subr.mxu0 0.0
      %3590 = vmatpush1.msra.mxu0 0.0
      %3591 = vmatprep.subr.mxu0 0.0
      %3592 = vmatpush1.msra.mxu0 0.0
      %3593 = vmatprep.subr.mxu0 0.0
      %3594 = vmatpush1.msra.mxu0 0.0
      %3595 = vmatprep.subr.mxu0 0.0
      %3596 = vmatpush1.msra.mxu0 0.0
      %3597 = vmatprep.subr.mxu0 %v3217
      %3598 = vmatpush1.msra.mxu0 %v3145
      %3599 = vmatprep.subr.mxu0 %v3216
      %3600 = vmatpush1.msra.mxu0 %v3138
      %3601 = vmatprep.subr.mxu0 %v3215
      %3602 = vmatpush1.msra.mxu0 %v3131
      %3603 = vmatprep.subr.mxu0 %v3214
      %3604 = vmatpush1.msra.mxu0 %v3124
      %3605 = vmatprep.subr.mxu0 %v3213
      %3606 = vmatpush1.msra.mxu0 %v3117
      %3607 = vmatprep.subr.mxu0 %v3212
      %3608 = vmatpush1.msra.mxu0 %v3110
      %3609 = vmatprep.subr.mxu0 %v3211
      %3610 = vmatpush1.msra.mxu0 %v3103
      %3611 = vmatprep.subr.mxu0 %v3210
      %3612 = vmatpush1.msra.mxu0 %v3096
      %3613 = vmatprep.subr.mxu0 0.0
      %3614 = vmatpush2.msra.mxu0 0.0
      %3615 = vmatprep.subr.mxu0 0.0
      %3616 = vmatpush2.msra.mxu0 0.0
      %3617 = vmatprep.subr.mxu0 0.0
      %3618 = vmatpush2.msra.mxu0 0.0
      %3619 = vmatprep.subr.mxu0 0.0
      %3620 = vmatpush2.msra.mxu0 0.0
      %3621 = vmatprep.subr.mxu0 0.0
      %3622 = vmatpush2.msra.mxu0 0.0
      %3623 = vmatprep.subr.mxu0 0.0
      %3624 = vmatpush2.msra.mxu0 0.0
      %3625 = vmatprep.subr.mxu0 0.0
      %3626 = vmatpush2.msra.mxu0 0.0
      %3627 = vmatprep.subr.mxu0 0.0
      %3628 = vmatpush2.msra.mxu0 0.0
      %3629 = vmatprep.subr.mxu0 0.0
      %3630 = vmatpush2.msra.mxu0 0.0
      %3631 = vmatprep.subr.mxu0 0.0
      %3632 = vmatpush2.msra.mxu0 0.0
      %3633 = vmatprep.subr.mxu0 0.0
      %3634 = vmatpush2.msra.mxu0 0.0
      %3635 = vmatprep.subr.mxu0 0.0
      %3636 = vmatpush2.msra.mxu0 0.0
      %3637 = vmatprep.subr.mxu0 0.0
      %3638 = vmatpush2.msra.mxu0 0.0
      %3639 = vmatprep.subr.mxu0 0.0
      %3640 = vmatpush2.msra.mxu0 0.0
      %3641 = vmatprep.subr.mxu0 0.0
      %3642 = vmatpush2.msra.mxu0 0.0
      %3643 = vmatprep.subr.mxu0 0.0
      %3644 = vmatpush2.msra.mxu0 0.0
      %3645 = vmatprep.mubr.f32.mxu0 0.0
      %3646 = vmatmul.mubr.f32.gmra.mxu0 %v3219
      %v3647 = vpop.f32.mrf.mxu0
      %v3648 = vadd.f32 0.0, %v3647
      %v3649 = vpop.f32.mrf.mxu0
      %v3650 = vadd.f32 0.0, %v3649
      %3651 = vmatprep.mubr.f32.mxu0 0.0
      %3652 = vmatmul.mubr.f32.gmra.mxu0 %v3222
      %v3653 = vpop.f32.mrf.mxu0
      %v3654 = vadd.f32 0.0, %v3653
      %v3655 = vpop.f32.mrf.mxu0
      %v3656 = vadd.f32 0.0, %v3655
      %3657 = vmatprep.mubr.f32.mxu0 0.0
      %3658 = vmatmul.mubr.f32.gmra.mxu0 %v3225
      %v3659 = vpop.f32.mrf.mxu0
      %v3660 = vadd.f32 0.0, %v3659
      %v3661 = vpop.f32.mrf.mxu0
      %v3662 = vadd.f32 0.0, %v3661
      %3663 = vmatprep.mubr.f32.mxu0 0.0
      %3664 = vmatmul.mubr.f32.gmra.mxu0 %v3228
      %v3665 = vpop.f32.mrf.mxu0
      %v3666 = vadd.f32 0.0, %v3665
      %v3667 = vpop.f32.mrf.mxu0
      %v3668 = vadd.f32 0.0, %v3667
      %3669 = vmatprep.mubr.f32.mxu0 0.0
      %3670 = vmatmul.mubr.f32.gmra.mxu0 %v3231
      %v3671 = vpop.f32.mrf.mxu0
      %v3672 = vadd.f32 0.0, %v3671
      %v3673 = vpop.f32.mrf.mxu0
      %v3674 = vadd.f32 0.0, %v3673
      %3675 = vmatprep.mubr.f32.mxu0 0.0
      %3676 = vmatmul.mubr.f32.gmra.mxu0 %v3234
      %v3677 = vpop.f32.mrf.mxu0
      %v3678 = vadd.f32 0.0, %v3677
      %v3679 = vpop.f32.mrf.mxu0
      %v3680 = vadd.f32 0.0, %v3679
      %3681 = vmatprep.mubr.f32.mxu0 0.0
      %3682 = vmatmul.mubr.f32.gmra.mxu0 %v3237
      %v3683 = vpop.f32.mrf.mxu0
      %v3684 = vadd.f32 0.0, %v3683
      %v3685 = vpop.f32.mrf.mxu0
      %v3686 = vadd.f32 0.0, %v3685
      %3687 = vmatprep.mubr.f32.mxu0 0.0
      %3688 = vmatmul.mubr.f32.gmra.mxu0 %v3240
      %v3689 = vpop.f32.mrf.mxu0
      %v3690 = vadd.f32 0.0, %v3689
      %v3691 = vpop.f32.mrf.mxu0
      %v3692 = vadd.f32 0.0, %v3691
      %3693 = vdwg.mxu0
      %v3694 = vadd.f32 %v2888, %v3309
      %v3695 = vadd.f32 %v2889, %v3311
      %v3696 = vadd.f32 %v2890, %v3422
      %v3697 = vadd.f32 %v2891, %v3424
      %v3698 = vadd.f32 %v2892, %v3535
      %v3699 = vadd.f32 %v2893, %v3537
      %v3700 = vadd.f32 %v2894, %v3648
      %v3701 = vadd.f32 %v2895, %v3650
      %v3702 = vadd.f32 %v2896, %v3315
      %v3703 = vadd.f32 %v2897, %v3317
      %v3704 = vadd.f32 %v2898, %v3428
      %v3705 = vadd.f32 %v2899, %v3430
      %v3706 = vadd.f32 %v2900, %v3541
      %v3707 = vadd.f32 %v2901, %v3543
      %v3708 = vadd.f32 %v2902, %v3654
      %v3709 = vadd.f32 %v2903, %v3656
      %v3710 = vadd.f32 %v2904, %v3321
      %v3711 = vadd.f32 %v2905, %v3323
      %v3712 = vadd.f32 %v2906, %v3434
      %v3713 = vadd.f32 %v2907, %v3436
      %v3714 = vadd.f32 %v2908, %v3547
      %v3715 = vadd.f32 %v2909, %v3549
      %v3716 = vadd.f32 %v2910, %v3660
      %v3717 = vadd.f32 %v2911, %v3662
      %v3718 = vadd.f32 %v2912, %v3327
      %v3719 = vadd.f32 %v2913, %v3329
      %v3720 = vadd.f32 %v2914, %v3440
      %v3721 = vadd.f32 %v2915, %v3442
      %v3722 = vadd.f32 %v2916, %v3553
      %v3723 = vadd.f32 %v2917, %v3555
      %v3724 = vadd.f32 %v2918, %v3666
      %v3725 = vadd.f32 %v2919, %v3668
      %v3726 = vadd.f32 %v2920, %v3333
      %v3727 = vadd.f32 %v2921, %v3335
      %v3728 = vadd.f32 %v2922, %v3446
      %v3729 = vadd.f32 %v2923, %v3448
      %v3730 = vadd.f32 %v2924, %v3559
      %v3731 = vadd.f32 %v2925, %v3561
      %v3732 = vadd.f32 %v2926, %v3672
      %v3733 = vadd.f32 %v2927, %v3674
      %v3734 = vadd.f32 %v2928, %v3339
      %v3735 = vadd.f32 %v2929, %v3341
      %v3736 = vadd.f32 %v2930, %v3452
      %v3737 = vadd.f32 %v2931, %v3454
      %v3738 = vadd.f32 %v2932, %v3565
      %v3739 = vadd.f32 %v2933, %v3567
      %v3740 = vadd.f32 %v2934, %v3678
      %v3741 = vadd.f32 %v2935, %v3680
      %v3742 = vadd.f32 %v2936, %v3345
      %v3743 = vadd.f32 %v2937, %v3347
      %v3744 = vadd.f32 %v2938, %v3458
      %v3745 = vadd.f32 %v2939, %v3460
      %v3746 = vadd.f32 %v2940, %v3571
      %v3747 = vadd.f32 %v2941, %v3573
      %v3748 = vadd.f32 %v2942, %v3684
      %v3749 = vadd.f32 %v2943, %v3686
      %v3750 = vadd.f32 %v2944, %v3351
      %v3751 = vadd.f32 %v2945, %v3353
      %v3752 = vadd.f32 %v2946, %v3464
      %v3753 = vadd.f32 %v2947, %v3466
      %v3754 = vadd.f32 %v2948, %v3577
      %v3755 = vadd.f32 %v2949, %v3579
      %v3756 = vadd.f32 %v2950, %v3690
      %v3757 = vadd.f32 %v2951, %v3692
      %3822 = vrot.lane.b32.xlu0 %v3694, 112
      %v3823 = vpop.permute.xlu0 %3822
      %3824 = vrot.lane.b32.xlu0 %v3695, 112
      %v3825 = vpop.permute.xlu0 %3824
      %3826 = vrot.lane.b32.xlu0 %v3696, 112
      %v3827 = vpop.permute.xlu0 %3826
      %3828 = vrot.lane.b32.xlu0 %v3697, 112
      %v3829 = vpop.permute.xlu0 %3828
      %3830 = vrot.lane.b32.xlu0 %v3698, 112
      %v3831 = vpop.permute.xlu0 %3830
      %3832 = vrot.lane.b32.xlu0 %v3699, 112
      %v3833 = vpop.permute.xlu0 %3832
      %3834 = vrot.lane.b32.xlu0 %v3700, 112
      %v3835 = vpop.permute.xlu0 %3834
      %3836 = vrot.lane.b32.xlu0 %v3701, 112
      %v3837 = vpop.permute.xlu0 %3836
      %3838 = vrot.lane.b32.xlu0 %v3702, 112
      %v3839 = vpop.permute.xlu0 %3838
      %3840 = vrot.lane.b32.xlu0 %v3703, 112
      %v3841 = vpop.permute.xlu0 %3840
      %3842 = vrot.lane.b32.xlu0 %v3704, 112
      %v3843 = vpop.permute.xlu0 %3842
      %3844 = vrot.lane.b32.xlu0 %v3705, 112
      %v3845 = vpop.permute.xlu0 %3844
      %3846 = vrot.lane.b32.xlu0 %v3706, 112
      %v3847 = vpop.permute.xlu0 %3846
      %3848 = vrot.lane.b32.xlu0 %v3707, 112
      %v3849 = vpop.permute.xlu0 %3848
      %3850 = vrot.lane.b32.xlu0 %v3708, 112
      %v3851 = vpop.permute.xlu0 %3850
      %3852 = vrot.lane.b32.xlu0 %v3709, 112
      %v3853 = vpop.permute.xlu0 %3852
      %3854 = vrot.lane.b32.xlu0 %v3710, 112
      %v3855 = vpop.permute.xlu0 %3854
      %3856 = vrot.lane.b32.xlu0 %v3711, 112
      %v3857 = vpop.permute.xlu0 %3856
      %3858 = vrot.lane.b32.xlu0 %v3712, 112
      %v3859 = vpop.permute.xlu0 %3858
      %3860 = vrot.lane.b32.xlu0 %v3713, 112
      %v3861 = vpop.permute.xlu0 %3860
      %3862 = vrot.lane.b32.xlu0 %v3714, 112
      %v3863 = vpop.permute.xlu0 %3862
      %3864 = vrot.lane.b32.xlu0 %v3715, 112
      %v3865 = vpop.permute.xlu0 %3864
      %3866 = vrot.lane.b32.xlu0 %v3716, 112
      %v3867 = vpop.permute.xlu0 %3866
      %3868 = vrot.lane.b32.xlu0 %v3717, 112
      %v3869 = vpop.permute.xlu0 %3868
      %3870 = vrot.lane.b32.xlu0 %v3718, 112
      %v3871 = vpop.permute.xlu0 %3870
      %3872 = vrot.lane.b32.xlu0 %v3719, 112
      %v3873 = vpop.permute.xlu0 %3872
      %3874 = vrot.lane.b32.xlu0 %v3720, 112
      %v3875 = vpop.permute.xlu0 %3874
      %3876 = vrot.lane.b32.xlu0 %v3721, 112
      %v3877 = vpop.permute.xlu0 %3876
      %3878 = vrot.lane.b32.xlu0 %v3722, 112
      %v3879 = vpop.permute.xlu0 %3878
      %3880 = vrot.lane.b32.xlu0 %v3723, 112
      %v3881 = vpop.permute.xlu0 %3880
      %3882 = vrot.lane.b32.xlu0 %v3724, 112
      %v3883 = vpop.permute.xlu0 %3882
      %3884 = vrot.lane.b32.xlu0 %v3725, 112
      %v3885 = vpop.permute.xlu0 %3884
      %3886 = vrot.lane.b32.xlu0 %v3726, 112
      %v3887 = vpop.permute.xlu0 %3886
      %3888 = vrot.lane.b32.xlu0 %v3727, 112
      %v3889 = vpop.permute.xlu0 %3888
      %3890 = vrot.lane.b32.xlu0 %v3728, 112
      %v3891 = vpop.permute.xlu0 %3890
      %3892 = vrot.lane.b32.xlu0 %v3729, 112
      %v3893 = vpop.permute.xlu0 %3892
      %3894 = vrot.lane.b32.xlu0 %v3730, 112
      %v3895 = vpop.permute.xlu0 %3894
      %3896 = vrot.lane.b32.xlu0 %v3731, 112
      %v3897 = vpop.permute.xlu0 %3896
      %3898 = vrot.lane.b32.xlu0 %v3732, 112
      %v3899 = vpop.permute.xlu0 %3898
      %3900 = vrot.lane.b32.xlu0 %v3733, 112
      %v3901 = vpop.permute.xlu0 %3900
      %3902 = vrot.lane.b32.xlu0 %v3734, 112
      %v3903 = vpop.permute.xlu0 %3902
      %3904 = vrot.lane.b32.xlu0 %v3735, 112
      %v3905 = vpop.permute.xlu0 %3904
      %3906 = vrot.lane.b32.xlu0 %v3736, 112
      %v3907 = vpop.permute.xlu0 %3906
      %3908 = vrot.lane.b32.xlu0 %v3737, 112
      %v3909 = vpop.permute.xlu0 %3908
      %3910 = vrot.lane.b32.xlu0 %v3738, 112
      %v3911 = vpop.permute.xlu0 %3910
      %3912 = vrot.lane.b32.xlu0 %v3739, 112
      %v3913 = vpop.permute.xlu0 %3912
      %3914 = vrot.lane.b32.xlu0 %v3740, 112
      %v3915 = vpop.permute.xlu0 %3914
      %3916 = vrot.lane.b32.xlu0 %v3741, 112
      %v3917 = vpop.permute.xlu0 %3916
      %3918 = vrot.lane.b32.xlu0 %v3742, 112
      %v3919 = vpop.permute.xlu0 %3918
      %3920 = vrot.lane.b32.xlu0 %v3743, 112
      %v3921 = vpop.permute.xlu0 %3920
      %3922 = vrot.lane.b32.xlu0 %v3744, 112
      %v3923 = vpop.permute.xlu0 %3922
      %3924 = vrot.lane.b32.xlu0 %v3745, 112
      %v3925 = vpop.permute.xlu0 %3924
      %3926 = vrot.lane.b32.xlu0 %v3746, 112
      %v3927 = vpop.permute.xlu0 %3926
      %3928 = vrot.lane.b32.xlu0 %v3747, 112
      %v3929 = vpop.permute.xlu0 %3928
      %3930 = vrot.lane.b32.xlu0 %v3748, 112
      %v3931 = vpop.permute.xlu0 %3930
      %3932 = vrot.lane.b32.xlu0 %v3749, 112
      %v3933 = vpop.permute.xlu0 %3932
      %3934 = vrot.lane.b32.xlu0 %v3750, 112
      %v3935 = vpop.permute.xlu0 %3934
      %3936 = vrot.lane.b32.xlu0 %v3751, 112
      %v3937 = vpop.permute.xlu0 %3936
      %3938 = vrot.lane.b32.xlu0 %v3752, 112
      %v3939 = vpop.permute.xlu0 %3938
      %3940 = vrot.lane.b32.xlu0 %v3753, 112
      %v3941 = vpop.permute.xlu0 %3940
      %3942 = vrot.lane.b32.xlu0 %v3754, 112
      %v3943 = vpop.permute.xlu0 %3942
      %3944 = vrot.lane.b32.xlu0 %v3755, 112
      %v3945 = vpop.permute.xlu0 %3944
      %3946 = vrot.lane.b32.xlu0 %v3756, 112
      %v3947 = vpop.permute.xlu0 %3946
      %3948 = vrot.lane.b32.xlu0 %v3757, 112
      %v3949 = vpop.permute.xlu0 %3948
      %v3950 = vsel %vm781, %v3823, %v3825
      %v3951 = vsel %vm781, %v3825, %v3827
      %v3952 = vsel %vm781, %v3827, %v3829
      %v3953 = vsel %vm781, %v3829, %v3831
      %v3954 = vsel %vm781, %v3831, %v3833
      %v3955 = vsel %vm781, %v3833, %v3835
      %v3956 = vsel %vm781, %v3835, %v3837
      %v3957 = vsel %vm781, %v3839, %v3841
      %v3958 = vsel %vm781, %v3841, %v3843
      %v3959 = vsel %vm781, %v3843, %v3845
      %v3960 = vsel %vm781, %v3845, %v3847
      %v3961 = vsel %vm781, %v3847, %v3849
      %v3962 = vsel %vm781, %v3849, %v3851
      %v3963 = vsel %vm781, %v3851, %v3853
      %v3964 = vsel %vm781, %v3855, %v3857
      %v3965 = vsel %vm781, %v3857, %v3859
      %v3966 = vsel %vm781, %v3859, %v3861
      %v3967 = vsel %vm781, %v3861, %v3863
      %v3968 = vsel %vm781, %v3863, %v3865
      %v3969 = vsel %vm781, %v3865, %v3867
      %v3970 = vsel %vm781, %v3867, %v3869
      %v3971 = vsel %vm781, %v3871, %v3873
      %v3972 = vsel %vm781, %v3873, %v3875
      %v3973 = vsel %vm781, %v3875, %v3877
      %v3974 = vsel %vm781, %v3877, %v3879
      %v3975 = vsel %vm781, %v3879, %v3881
      %v3976 = vsel %vm781, %v3881, %v3883
      %v3977 = vsel %vm781, %v3883, %v3885
      %v3978 = vsel %vm781, %v3887, %v3889
      %v3979 = vsel %vm781, %v3889, %v3891
      %v3980 = vsel %vm781, %v3891, %v3893
      %v3981 = vsel %vm781, %v3893, %v3895
      %v3982 = vsel %vm781, %v3895, %v3897
      %v3983 = vsel %vm781, %v3897, %v3899
      %v3984 = vsel %vm781, %v3899, %v3901
      %v3985 = vsel %vm781, %v3903, %v3905
      %v3986 = vsel %vm781, %v3905, %v3907
      %v3987 = vsel %vm781, %v3907, %v3909
      %v3988 = vsel %vm781, %v3909, %v3911
      %v3989 = vsel %vm781, %v3911, %v3913
      %v3990 = vsel %vm781, %v3913, %v3915
      %v3991 = vsel %vm781, %v3915, %v3917
      %v3992 = vsel %vm781, %v3919, %v3921
      %v3993 = vsel %vm781, %v3921, %v3923
      %v3994 = vsel %vm781, %v3923, %v3925
      %v3995 = vsel %vm781, %v3925, %v3927
      %v3996 = vsel %vm781, %v3927, %v3929
      %v3997 = vsel %vm781, %v3929, %v3931
      %v3998 = vsel %vm781, %v3931, %v3933
      %v3999 = vsel %vm781, %v3935, %v3937
      %v4000 = vsel %vm781, %v3937, %v3939
      %v4001 = vsel %vm781, %v3939, %v3941
      %v4002 = vsel %vm781, %v3941, %v3943
      %v4003 = vsel %vm781, %v3943, %v3945
      %v4004 = vsel %vm781, %v3945, %v3947
      %v4005 = vsel %vm781, %v3947, %v3949
      %v4070 = vsel %vm781, %v3837, 0.0
      %v4071 = vsel %vm781, %v3853, 0.0
      %v4072 = vsel %vm781, %v3869, 0.0
      %v4073 = vsel %vm781, %v3885, 0.0
      %v4074 = vsel %vm781, %v3901, 0.0
      %v4075 = vsel %vm781, %v3917, 0.0
      %v4076 = vsel %vm781, %v3933, 0.0
      %v4077 = vsel %vm781, %v3949, 0.0
      %v4078 = vmax.f32 %v3694, %v3950
      %v4079 = vmax.f32 %v3695, %v3951
      %v4080 = vmax.f32 %v3696, %v3952
      %v4081 = vmax.f32 %v3697, %v3953
      %v4082 = vmax.f32 %v3698, %v3954
      %v4083 = vmax.f32 %v3699, %v3955
      %v4084 = vmax.f32 %v3700, %v3956
      %v4085 = vmax.f32 %v3701, %v4070
      %v4086 = vmax.f32 %v3702, %v3957
      %v4087 = vmax.f32 %v3703, %v3958
      %v4088 = vmax.f32 %v3704, %v3959
      %v4089 = vmax.f32 %v3705, %v3960
      %v4090 = vmax.f32 %v3706, %v3961
      %v4091 = vmax.f32 %v3707, %v3962
      %v4092 = vmax.f32 %v3708, %v3963
      %v4093 = vmax.f32 %v3709, %v4071
      %v4094 = vmax.f32 %v3710, %v3964
      %v4095 = vmax.f32 %v3711, %v3965
      %v4096 = vmax.f32 %v3712, %v3966
      %v4097 = vmax.f32 %v3713, %v3967
      %v4098 = vmax.f32 %v3714, %v3968
      %v4099 = vmax.f32 %v3715, %v3969
      %v4100 = vmax.f32 %v3716, %v3970
      %v4101 = vmax.f32 %v3717, %v4072
      %v4102 = vmax.f32 %v3718, %v3971
      %v4103 = vmax.f32 %v3719, %v3972
      %v4104 = vmax.f32 %v3720, %v3973
      %v4105 = vmax.f32 %v3721, %v3974
      %v4106 = vmax.f32 %v3722, %v3975
      %v4107 = vmax.f32 %v3723, %v3976
      %v4108 = vmax.f32 %v3724, %v3977
      %v4109 = vmax.f32 %v3725, %v4073
      %v4110 = vmax.f32 %v3726, %v3978
      %v4111 = vmax.f32 %v3727, %v3979
      %v4112 = vmax.f32 %v3728, %v3980
      %v4113 = vmax.f32 %v3729, %v3981
      %v4114 = vmax.f32 %v3730, %v3982
      %v4115 = vmax.f32 %v3731, %v3983
      %v4116 = vmax.f32 %v3732, %v3984
      %v4117 = vmax.f32 %v3733, %v4074
      %v4118 = vmax.f32 %v3734, %v3985
      %v4119 = vmax.f32 %v3735, %v3986
      %v4120 = vmax.f32 %v3736, %v3987
      %v4121 = vmax.f32 %v3737, %v3988
      %v4122 = vmax.f32 %v3738, %v3989
      %v4123 = vmax.f32 %v3739, %v3990
      %v4124 = vmax.f32 %v3740, %v3991
      %v4125 = vmax.f32 %v3741, %v4075
      %v4126 = vmax.f32 %v3742, %v3992
      %v4127 = vmax.f32 %v3743, %v3993
      %v4128 = vmax.f32 %v3744, %v3994
      %v4129 = vmax.f32 %v3745, %v3995
      %v4130 = vmax.f32 %v3746, %v3996
      %v4131 = vmax.f32 %v3747, %v3997
      %v4132 = vmax.f32 %v3748, %v3998
      %v4133 = vmax.f32 %v3749, %v4076
      %v4134 = vmax.f32 %v3750, %v3999
      %v4135 = vmax.f32 %v3751, %v4000
      %v4136 = vmax.f32 %v3752, %v4001
      %v4137 = vmax.f32 %v3753, %v4002
      %v4138 = vmax.f32 %v3754, %v4003
      %v4139 = vmax.f32 %v3755, %v4004
      %v4140 = vmax.f32 %v3756, %v4005
      %v4141 = vmax.f32 %v3757, %v4077
      %v4142 = vld [vmem:[%s5] sm:$0xff]
      %v4143 = vld [vmem:[%s5 + $0x8] sm:$0xff]
      %v4144 = vld [vmem:[%s5 + $0x10] sm:$0xff]
      %v4145 = vld [vmem:[%s5 + $0x18] sm:$0xff]
      %v4146 = vld [vmem:[%s5 + $0x20] sm:$0xff]
      %v4147 = vld [vmem:[%s5 + $0x28] sm:$0xff]
      %v4148 = vld [vmem:[%s5 + $0x30] sm:$0xff]
      %v4149 = vld [vmem:[%s5 + $0x38] sm:$0xff]
      %v4150 = vld [vmem:[%s5 + $0x40] sm:$0xff]
      %v4151 = vld [vmem:[%s5 + $0x48] sm:$0xff]
      %v4152 = vld [vmem:[%s5 + $0x50] sm:$0xff]
      %v4153 = vld [vmem:[%s5 + $0x58] sm:$0xff]
      %v4154 = vld [vmem:[%s5 + $0x60] sm:$0xff]
      %v4155 = vld [vmem:[%s5 + $0x68] sm:$0xff]
      %v4156 = vld [vmem:[%s5 + $0x70] sm:$0xff]
      %v4157 = vld [vmem:[%s5 + $0x78] sm:$0xff]
      %s4158 = scalar_lea.vmem %s5, 128
      %v4159 = vld [vmem:[%s4158] sm:$0xff]
      %v4160 = vld [vmem:[%s4158 + $0x8] sm:$0xff]
      %v4161 = vld [vmem:[%s4158 + $0x10] sm:$0xff]
      %v4162 = vld [vmem:[%s4158 + $0x18] sm:$0xff]
      %v4163 = vld [vmem:[%s4158 + $0x20] sm:$0xff]
      %v4164 = vld [vmem:[%s4158 + $0x28] sm:$0xff]
      %v4165 = vld [vmem:[%s4158 + $0x30] sm:$0xff]
      %v4166 = vld [vmem:[%s4158 + $0x38] sm:$0xff]
      %v4167 = vld [vmem:[%s4158 + $0x40] sm:$0xff]
      %v4168 = vld [vmem:[%s4158 + $0x48] sm:$0xff]
      %v4169 = vld [vmem:[%s4158 + $0x50] sm:$0xff]
      %v4170 = vld [vmem:[%s4158 + $0x58] sm:$0xff]
      %v4171 = vld [vmem:[%s4158 + $0x60] sm:$0xff]
      %v4172 = vld [vmem:[%s4158 + $0x68] sm:$0xff]
      %v4173 = vld [vmem:[%s4158 + $0x70] sm:$0xff]
      %v4174 = vld [vmem:[%s4158 + $0x78] sm:$0xff]
      %4183 = vrot.lane.b32.xlu0 %v4078, 96
      %v4184 = vpop.permute.xlu0 %4183
      %4185 = vrot.lane.b32.xlu0 %v4086, 96
      %v4186 = vpop.permute.xlu0 %4185
      %4187 = vrot.lane.b32.xlu0 %v4094, 96
      %v4188 = vpop.permute.xlu0 %4187
      %4189 = vrot.lane.b32.xlu0 %v4102, 96
      %v4190 = vpop.permute.xlu0 %4189
      %4191 = vrot.lane.b32.xlu0 %v4110, 96
      %v4192 = vpop.permute.xlu0 %4191
      %4193 = vrot.lane.b32.xlu0 %v4118, 96
      %v4194 = vpop.permute.xlu0 %4193
      %4195 = vrot.lane.b32.xlu0 %v4126, 96
      %v4196 = vpop.permute.xlu0 %4195
      %4197 = vrot.lane.b32.xlu0 %v4134, 96
      %v4198 = vpop.permute.xlu0 %4197
      %v4208 = vsel %vm1502, %v4159, 0
      %v4211 = vsel %vm1502, %v4160, 0
      %v4214 = vsel %vm1502, %v4161, 0
      %v4217 = vsel %vm1502, %v4162, 0
      %v4220 = vsel %vm1502, %v4163, 0
      %v4223 = vsel %vm1502, %v4164, 0
      %v4226 = vsel %vm1502, %v4165, 0
      %v4229 = vsel %vm1502, %v4166, 0
      %v4232 = vsel %vm1502, %v4167, 0
      %v4235 = vsel %vm1502, %v4168, 0
      %v4238 = vsel %vm1502, %v4169, 0
      %v4241 = vsel %vm1502, %v4170, 0
      %v4244 = vsel %vm1502, %v4171, 0
      %v4247 = vsel %vm1502, %v4172, 0
      %v4250 = vsel %vm1502, %v4173, 0
      %v4253 = vsel %vm1502, %v4174, 0
      %4255 = vmatprep.subr.mxu0 0.0
      %4256 = vmatpush1.msra.mxu0 0.0
      %4257 = vmatprep.subr.mxu0 0.0
      %4258 = vmatpush1.msra.mxu0 0.0
      %4259 = vmatprep.subr.mxu0 0.0
      %4260 = vmatpush1.msra.mxu0 0.0
      %4261 = vmatprep.subr.mxu0 0.0
      %4262 = vmatpush1.msra.mxu0 0.0
      %4263 = vmatprep.subr.mxu0 0.0
      %4264 = vmatpush1.msra.mxu0 0.0
      %4265 = vmatprep.subr.mxu0 0.0
      %4266 = vmatpush1.msra.mxu0 0.0
      %4267 = vmatprep.subr.mxu0 0.0
      %4268 = vmatpush1.msra.mxu0 0.0
      %4269 = vmatprep.subr.mxu0 0.0
      %4270 = vmatpush1.msra.mxu0 0.0
      %4271 = vmatprep.subr.mxu0 0.0
      %4272 = vmatpush1.msra.mxu0 %v4198
      %4273 = vmatprep.subr.mxu0 0.0
      %4274 = vmatpush1.msra.mxu0 %v4196
      %4275 = vmatprep.subr.mxu0 0.0
      %4276 = vmatpush1.msra.mxu0 %v4194
      %4277 = vmatprep.subr.mxu0 0.0
      %4278 = vmatpush1.msra.mxu0 %v4192
      %4279 = vmatprep.subr.mxu0 0.0
      %4280 = vmatpush1.msra.mxu0 %v4190
      %4281 = vmatprep.subr.mxu0 0.0
      %4282 = vmatpush1.msra.mxu0 %v4188
      %4283 = vmatprep.subr.mxu0 0.0
      %4284 = vmatpush1.msra.mxu0 %v4186
      %4285 = vmatprep.subr.mxu0 0.0
      %4286 = vmatpush1.msra.mxu0 %v4184
      %4287 = vmatprep.subr.mxu0 0.0
      %4288 = vmatpush2.msra.mxu0 0.0
      %4289 = vmatprep.subr.mxu0 0.0
      %4290 = vmatpush2.msra.mxu0 0.0
      %4291 = vmatprep.subr.mxu0 0.0
      %4292 = vmatpush2.msra.mxu0 0.0
      %4293 = vmatprep.subr.mxu0 0.0
      %4294 = vmatpush2.msra.mxu0 0.0
      %4295 = vmatprep.subr.mxu0 0.0
      %4296 = vmatpush2.msra.mxu0 0.0
      %4297 = vmatprep.subr.mxu0 0.0
      %4298 = vmatpush2.msra.mxu0 0.0
      %4299 = vmatprep.subr.mxu0 0.0
      %4300 = vmatpush2.msra.mxu0 0.0
      %4301 = vmatprep.subr.mxu0 0.0
      %4302 = vmatpush2.msra.mxu0 0.0
      %4303 = vmatprep.subr.mxu0 0.0
      %4304 = vmatpush2.msra.mxu0 0.0
      %4305 = vmatprep.subr.mxu0 0.0
      %4306 = vmatpush2.msra.mxu0 0.0
      %4307 = vmatprep.subr.mxu0 0.0
      %4308 = vmatpush2.msra.mxu0 0.0
      %4309 = vmatprep.subr.mxu0 0.0
      %4310 = vmatpush2.msra.mxu0 0.0
      %4311 = vmatprep.subr.mxu0 0.0
      %4312 = vmatpush2.msra.mxu0 0.0
      %4313 = vmatprep.subr.mxu0 0.0
      %4314 = vmatpush2.msra.mxu0 0.0
      %4315 = vmatprep.subr.mxu0 0.0
      %4316 = vmatpush2.msra.mxu0 0.0
      %4317 = vmatprep.subr.mxu0 0.0
      %4318 = vmatpush2.msra.mxu0 0.0
      %4319 = vmatprep.mubr.f32.mxu0 0.0
      %4320 = vmatmul.mubr.f32.gmra.mxu0 %v4208
      %v4321 = vpop.f32.mrf.mxu0
      %v4322 = vadd.f32 0.0, %v4321
      %v4323 = vpop.f32.mrf.mxu0
      %4324 = vmatprep.mubr.f32.mxu0 0.0
      %4325 = vmatmul.mubr.f32.gmra.mxu0 %v4211
      %v4326 = vpop.f32.mrf.mxu0
      %v4327 = vadd.f32 0.0, %v4326
      %v4328 = vpop.f32.mrf.mxu0
      %4329 = vmatprep.mubr.f32.mxu0 0.0
      %4330 = vmatmul.mubr.f32.gmra.mxu0 %v4214
      %v4331 = vpop.f32.mrf.mxu0
      %v4332 = vadd.f32 0.0, %v4331
      %v4333 = vpop.f32.mrf.mxu0
      %4334 = vmatprep.mubr.f32.mxu0 0.0
      %4335 = vmatmul.mubr.f32.gmra.mxu0 %v4217
      %v4336 = vpop.f32.mrf.mxu0
      %v4337 = vadd.f32 0.0, %v4336
      %v4338 = vpop.f32.mrf.mxu0
      %4339 = vmatprep.mubr.f32.mxu0 0.0
      %4340 = vmatmul.mubr.f32.gmra.mxu0 %v4220
      %v4341 = vpop.f32.mrf.mxu0
      %v4342 = vadd.f32 0.0, %v4341
      %v4343 = vpop.f32.mrf.mxu0
      %4344 = vmatprep.mubr.f32.mxu0 0.0
      %4345 = vmatmul.mubr.f32.gmra.mxu0 %v4223
      %v4346 = vpop.f32.mrf.mxu0
      %v4347 = vadd.f32 0.0, %v4346
      %v4348 = vpop.f32.mrf.mxu0
      %4349 = vmatprep.mubr.f32.mxu0 0.0
      %4350 = vmatmul.mubr.f32.gmra.mxu0 %v4226
      %v4351 = vpop.f32.mrf.mxu0
      %v4352 = vadd.f32 0.0, %v4351
      %v4353 = vpop.f32.mrf.mxu0
      %4354 = vmatprep.mubr.f32.mxu0 0.0
      %4355 = vmatmul.mubr.f32.gmra.mxu0 %v4229
      %v4356 = vpop.f32.mrf.mxu0
      %v4357 = vadd.f32 0.0, %v4356
      %v4358 = vpop.f32.mrf.mxu0
      %4359 = vmatprep.mubr.f32.mxu0 0.0
      %4360 = vmatmul.mubr.f32.gmra.mxu0 %v4232
      %v4361 = vpop.f32.mrf.mxu0
      %v4362 = vadd.f32 0.0, %v4361
      %v4363 = vpop.f32.mrf.mxu0
      %4364 = vmatprep.mubr.f32.mxu0 0.0
      %4365 = vmatmul.mubr.f32.gmra.mxu0 %v4235
      %v4366 = vpop.f32.mrf.mxu0
      %v4367 = vadd.f32 0.0, %v4366
      %v4368 = vpop.f32.mrf.mxu0
      %4369 = vmatprep.mubr.f32.mxu0 0.0
      %4370 = vmatmul.mubr.f32.gmra.mxu0 %v4238
      %v4371 = vpop.f32.mrf.mxu0
      %v4372 = vadd.f32 0.0, %v4371
      %v4373 = vpop.f32.mrf.mxu0
      %4374 = vmatprep.mubr.f32.mxu0 0.0
      %4375 = vmatmul.mubr.f32.gmra.mxu0 %v4241
      %v4376 = vpop.f32.mrf.mxu0
      %v4377 = vadd.f32 0.0, %v4376
      %v4378 = vpop.f32.mrf.mxu0
      %4379 = vmatprep.mubr.f32.mxu0 0.0
      %4380 = vmatmul.mubr.f32.gmra.mxu0 %v4244
      %v4381 = vpop.f32.mrf.mxu0
      %v4382 = vadd.f32 0.0, %v4381
      %v4383 = vpop.f32.mrf.mxu0
      %4384 = vmatprep.mubr.f32.mxu0 0.0
      %4385 = vmatmul.mubr.f32.gmra.mxu0 %v4247
      %v4386 = vpop.f32.mrf.mxu0
      %v4387 = vadd.f32 0.0, %v4386
      %v4388 = vpop.f32.mrf.mxu0
      %4389 = vmatprep.mubr.f32.mxu0 0.0
      %4390 = vmatmul.mubr.f32.gmra.mxu0 %v4250
      %v4391 = vpop.f32.mrf.mxu0
      %v4392 = vadd.f32 0.0, %v4391
      %v4393 = vpop.f32.mrf.mxu0
      %4394 = vmatprep.mubr.f32.mxu0 0.0
      %4395 = vmatmul.mubr.f32.gmra.mxu0 %v4253
      %v4396 = vpop.f32.mrf.mxu0
      %v4397 = vadd.f32 0.0, %v4396
      %v4398 = vpop.f32.mrf.mxu0
      %4399 = vdwg.mxu0
      %v4401 = vsel %vm1502, %v4142, 0
      %v4404 = vsel %vm1502, %v4143, 0
      %v4407 = vsel %vm1502, %v4144, 0
      %v4410 = vsel %vm1502, %v4145, 0
      %v4413 = vsel %vm1502, %v4146, 0
      %v4416 = vsel %vm1502, %v4147, 0
      %v4419 = vsel %vm1502, %v4148, 0
      %v4422 = vsel %vm1502, %v4149, 0
      %v4425 = vsel %vm1502, %v4150, 0
      %v4428 = vsel %vm1502, %v4151, 0
      %v4431 = vsel %vm1502, %v4152, 0
      %v4434 = vsel %vm1502, %v4153, 0
      %v4437 = vsel %vm1502, %v4154, 0
      %v4440 = vsel %vm1502, %v4155, 0
      %v4443 = vsel %vm1502, %v4156, 0
      %v4446 = vsel %vm1502, %v4157, 0
      %4448 = vmatprep.subr.mxu0 0.0
      %4449 = vmatpush1.msra.mxu0 0.0
      %4450 = vmatprep.subr.mxu0 0.0
      %4451 = vmatpush1.msra.mxu0 0.0
      %4452 = vmatprep.subr.mxu0 0.0
      %4453 = vmatpush1.msra.mxu0 0.0
      %4454 = vmatprep.subr.mxu0 0.0
      %4455 = vmatpush1.msra.mxu0 0.0
      %4456 = vmatprep.subr.mxu0 0.0
      %4457 = vmatpush1.msra.mxu0 0.0
      %4458 = vmatprep.subr.mxu0 0.0
      %4459 = vmatpush1.msra.mxu0 0.0
      %4460 = vmatprep.subr.mxu0 0.0
      %4461 = vmatpush1.msra.mxu0 0.0
      %4462 = vmatprep.subr.mxu0 0.0
      %4463 = vmatpush1.msra.mxu0 0.0
      %4464 = vmatprep.subr.mxu0 0.0
      %4465 = vmatpush1.msra.mxu0 %v4134
      %4466 = vmatprep.subr.mxu0 0.0
      %4467 = vmatpush1.msra.mxu0 %v4126
      %4468 = vmatprep.subr.mxu0 0.0
      %4469 = vmatpush1.msra.mxu0 %v4118
      %4470 = vmatprep.subr.mxu0 0.0
      %4471 = vmatpush1.msra.mxu0 %v4110
      %4472 = vmatprep.subr.mxu0 0.0
      %4473 = vmatpush1.msra.mxu0 %v4102
      %4474 = vmatprep.subr.mxu0 0.0
      %4475 = vmatpush1.msra.mxu0 %v4094
      %4476 = vmatprep.subr.mxu0 0.0
      %4477 = vmatpush1.msra.mxu0 %v4086
      %4478 = vmatprep.subr.mxu0 0.0
      %4479 = vmatpush1.msra.mxu0 %v4078
      %4480 = vmatprep.subr.mxu0 0.0
      %4481 = vmatpush2.msra.mxu0 0.0
      %4482 = vmatprep.subr.mxu0 0.0
      %4483 = vmatpush2.msra.mxu0 0.0
      %4484 = vmatprep.subr.mxu0 0.0
      %4485 = vmatpush2.msra.mxu0 0.0
      %4486 = vmatprep.subr.mxu0 0.0
      %4487 = vmatpush2.msra.mxu0 0.0
      %4488 = vmatprep.subr.mxu0 0.0
      %4489 = vmatpush2.msra.mxu0 0.0
      %4490 = vmatprep.subr.mxu0 0.0
      %4491 = vmatpush2.msra.mxu0 0.0
      %4492 = vmatprep.subr.mxu0 0.0
      %4493 = vmatpush2.msra.mxu0 0.0
      %4494 = vmatprep.subr.mxu0 0.0
      %4495 = vmatpush2.msra.mxu0 0.0
      %4496 = vmatprep.subr.mxu0 0.0
      %4497 = vmatpush2.msra.mxu0 0.0
      %4498 = vmatprep.subr.mxu0 0.0
      %4499 = vmatpush2.msra.mxu0 0.0
      %4500 = vmatprep.subr.mxu0 0.0
      %4501 = vmatpush2.msra.mxu0 0.0
      %4502 = vmatprep.subr.mxu0 0.0
      %4503 = vmatpush2.msra.mxu0 0.0
      %4504 = vmatprep.subr.mxu0 0.0
      %4505 = vmatpush2.msra.mxu0 0.0
      %4506 = vmatprep.subr.mxu0 0.0
      %4507 = vmatpush2.msra.mxu0 0.0
      %4508 = vmatprep.subr.mxu0 0.0
      %4509 = vmatpush2.msra.mxu0 0.0
      %4510 = vmatprep.subr.mxu0 0.0
      %4511 = vmatpush2.msra.mxu0 0.0
      %4512 = vmatprep.mubr.f32.mxu0 0.0
      %4513 = vmatmul.mubr.f32.gmra.mxu0 %v4401
      %v4514 = vpop.f32.mrf.mxu0
      %v4515 = vadd.f32 %v4322, %v4514
      %v4516 = vpop.f32.mrf.mxu0
      %4517 = vmatprep.mubr.f32.mxu0 0.0
      %4518 = vmatmul.mubr.f32.gmra.mxu0 %v4404
      %v4519 = vpop.f32.mrf.mxu0
      %v4520 = vadd.f32 %v4327, %v4519
      %v4521 = vpop.f32.mrf.mxu0
      %4522 = vmatprep.mubr.f32.mxu0 0.0
      %4523 = vmatmul.mubr.f32.gmra.mxu0 %v4407
      %v4524 = vpop.f32.mrf.mxu0
      %v4525 = vadd.f32 %v4332, %v4524
      %v4526 = vpop.f32.mrf.mxu0
      %4527 = vmatprep.mubr.f32.mxu0 0.0
      %4528 = vmatmul.mubr.f32.gmra.mxu0 %v4410
      %v4529 = vpop.f32.mrf.mxu0
      %v4530 = vadd.f32 %v4337, %v4529
      %v4531 = vpop.f32.mrf.mxu0
      %4532 = vmatprep.mubr.f32.mxu0 0.0
      %4533 = vmatmul.mubr.f32.gmra.mxu0 %v4413
      %v4534 = vpop.f32.mrf.mxu0
      %v4535 = vadd.f32 %v4342, %v4534
      %v4536 = vpop.f32.mrf.mxu0
      %4537 = vmatprep.mubr.f32.mxu0 0.0
      %4538 = vmatmul.mubr.f32.gmra.mxu0 %v4416
      %v4539 = vpop.f32.mrf.mxu0
      %v4540 = vadd.f32 %v4347, %v4539
      %v4541 = vpop.f32.mrf.mxu0
      %4542 = vmatprep.mubr.f32.mxu0 0.0
      %4543 = vmatmul.mubr.f32.gmra.mxu0 %v4419
      %v4544 = vpop.f32.mrf.mxu0
      %v4545 = vadd.f32 %v4352, %v4544
      %v4546 = vpop.f32.mrf.mxu0
      %4547 = vmatprep.mubr.f32.mxu0 0.0
      %4548 = vmatmul.mubr.f32.gmra.mxu0 %v4422
      %v4549 = vpop.f32.mrf.mxu0
      %v4550 = vadd.f32 %v4357, %v4549
      %v4551 = vpop.f32.mrf.mxu0
      %4552 = vmatprep.mubr.f32.mxu0 0.0
      %4553 = vmatmul.mubr.f32.gmra.mxu0 %v4425
      %v4554 = vpop.f32.mrf.mxu0
      %v4555 = vadd.f32 %v4362, %v4554
      %v4556 = vpop.f32.mrf.mxu0
      %4557 = vmatprep.mubr.f32.mxu0 0.0
      %4558 = vmatmul.mubr.f32.gmra.mxu0 %v4428
      %v4559 = vpop.f32.mrf.mxu0
      %v4560 = vadd.f32 %v4367, %v4559
      %v4561 = vpop.f32.mrf.mxu0
      %4562 = vmatprep.mubr.f32.mxu0 0.0
      %4563 = vmatmul.mubr.f32.gmra.mxu0 %v4431
      %v4564 = vpop.f32.mrf.mxu0
      %v4565 = vadd.f32 %v4372, %v4564
      %v4566 = vpop.f32.mrf.mxu0
      %4567 = vmatprep.mubr.f32.mxu0 0.0
      %4568 = vmatmul.mubr.f32.gmra.mxu0 %v4434
      %v4569 = vpop.f32.mrf.mxu0
      %v4570 = vadd.f32 %v4377, %v4569
      %v4571 = vpop.f32.mrf.mxu0
      %4572 = vmatprep.mubr.f32.mxu0 0.0
      %4573 = vmatmul.mubr.f32.gmra.mxu0 %v4437
      %v4574 = vpop.f32.mrf.mxu0
      %v4575 = vadd.f32 %v4382, %v4574
      %v4576 = vpop.f32.mrf.mxu0
      %4577 = vmatprep.mubr.f32.mxu0 0.0
      %4578 = vmatmul.mubr.f32.gmra.mxu0 %v4440
      %v4579 = vpop.f32.mrf.mxu0
      %v4580 = vadd.f32 %v4387, %v4579
      %v4581 = vpop.f32.mrf.mxu0
      %4582 = vmatprep.mubr.f32.mxu0 0.0
      %4583 = vmatmul.mubr.f32.gmra.mxu0 %v4443
      %v4584 = vpop.f32.mrf.mxu0
      %v4585 = vadd.f32 %v4392, %v4584
      %v4586 = vpop.f32.mrf.mxu0
      %4587 = vmatprep.mubr.f32.mxu0 0.0
      %4588 = vmatmul.mubr.f32.gmra.mxu0 %v4446
      %v4589 = vpop.f32.mrf.mxu0
      %v4590 = vadd.f32 %v4397, %v4589
      %v4591 = vpop.f32.mrf.mxu0
      %4592 = vdwg.mxu0
      %s4593 = scalar_lea.vmem %s5, 256
      %v4594 = vld [vmem:[%s4593] sm:$0xff]
      %v4595 = vld [vmem:[%s4593 + $0x8] sm:$0xff]
      %v4596 = vld [vmem:[%s4593 + $0x10] sm:$0xff]
      %v4597 = vld [vmem:[%s4593 + $0x18] sm:$0xff]
      %v4598 = vld [vmem:[%s4593 + $0x20] sm:$0xff]
      %v4599 = vld [vmem:[%s4593 + $0x28] sm:$0xff]
      %v4600 = vld [vmem:[%s4593 + $0x30] sm:$0xff]
      %v4601 = vld [vmem:[%s4593 + $0x38] sm:$0xff]
      %v4602 = vld [vmem:[%s4593 + $0x40] sm:$0xff]
      %v4603 = vld [vmem:[%s4593 + $0x48] sm:$0xff]
      %v4604 = vld [vmem:[%s4593 + $0x50] sm:$0xff]
      %v4605 = vld [vmem:[%s4593 + $0x58] sm:$0xff]
      %v4606 = vld [vmem:[%s4593 + $0x60] sm:$0xff]
      %v4607 = vld [vmem:[%s4593 + $0x68] sm:$0xff]
      %v4608 = vld [vmem:[%s4593 + $0x70] sm:$0xff]
      %v4609 = vld [vmem:[%s4593 + $0x78] sm:$0xff]
      %4610 = vrot.lane.b32.xlu0 %v4078, 64
      %v4611 = vpop.permute.xlu0 %4610
      %4612 = vrot.lane.b32.xlu0 %v4086, 64
      %v4613 = vpop.permute.xlu0 %4612
      %4614 = vrot.lane.b32.xlu0 %v4094, 64
      %v4615 = vpop.permute.xlu0 %4614
      %4616 = vrot.lane.b32.xlu0 %v4102, 64
      %v4617 = vpop.permute.xlu0 %4616
      %4618 = vrot.lane.b32.xlu0 %v4110, 64
      %v4619 = vpop.permute.xlu0 %4618
      %4620 = vrot.lane.b32.xlu0 %v4118, 64
      %v4621 = vpop.permute.xlu0 %4620
      %4622 = vrot.lane.b32.xlu0 %v4126, 64
      %v4623 = vpop.permute.xlu0 %4622
      %4624 = vrot.lane.b32.xlu0 %v4134, 64
      %v4625 = vpop.permute.xlu0 %4624
      %v4635 = vsel %vm1502, %v4594, 0
      %v4638 = vsel %vm1502, %v4595, 0
      %v4641 = vsel %vm1502, %v4596, 0
      %v4644 = vsel %vm1502, %v4597, 0
      %v4647 = vsel %vm1502, %v4598, 0
      %v4650 = vsel %vm1502, %v4599, 0
      %v4653 = vsel %vm1502, %v4600, 0
      %v4656 = vsel %vm1502, %v4601, 0
      %v4659 = vsel %vm1502, %v4602, 0
      %v4662 = vsel %vm1502, %v4603, 0
      %v4665 = vsel %vm1502, %v4604, 0
      %v4668 = vsel %vm1502, %v4605, 0
      %v4671 = vsel %vm1502, %v4606, 0
      %v4674 = vsel %vm1502, %v4607, 0
      %v4677 = vsel %vm1502, %v4608, 0
      %v4680 = vsel %vm1502, %v4609, 0
      %4682 = vmatprep.subr.mxu0 0.0
      %4683 = vmatpush1.msra.mxu0 0.0
      %4684 = vmatprep.subr.mxu0 0.0
      %4685 = vmatpush1.msra.mxu0 0.0
      %4686 = vmatprep.subr.mxu0 0.0
      %4687 = vmatpush1.msra.mxu0 0.0
      %4688 = vmatprep.subr.mxu0 0.0
      %4689 = vmatpush1.msra.mxu0 0.0
      %4690 = vmatprep.subr.mxu0 0.0
      %4691 = vmatpush1.msra.mxu0 0.0
      %4692 = vmatprep.subr.mxu0 0.0
      %4693 = vmatpush1.msra.mxu0 0.0
      %4694 = vmatprep.subr.mxu0 0.0
      %4695 = vmatpush1.msra.mxu0 0.0
      %4696 = vmatprep.subr.mxu0 0.0
      %4697 = vmatpush1.msra.mxu0 0.0
      %4698 = vmatprep.subr.mxu0 0.0
      %4699 = vmatpush1.msra.mxu0 %v4625
      %4700 = vmatprep.subr.mxu0 0.0
      %4701 = vmatpush1.msra.mxu0 %v4623
      %4702 = vmatprep.subr.mxu0 0.0
      %4703 = vmatpush1.msra.mxu0 %v4621
      %4704 = vmatprep.subr.mxu0 0.0
      %4705 = vmatpush1.msra.mxu0 %v4619
      %4706 = vmatprep.subr.mxu0 0.0
      %4707 = vmatpush1.msra.mxu0 %v4617
      %4708 = vmatprep.subr.mxu0 0.0
      %4709 = vmatpush1.msra.mxu0 %v4615
      %4710 = vmatprep.subr.mxu0 0.0
      %4711 = vmatpush1.msra.mxu0 %v4613
      %4712 = vmatprep.subr.mxu0 0.0
      %4713 = vmatpush1.msra.mxu0 %v4611
      %4714 = vmatprep.subr.mxu0 0.0
      %4715 = vmatpush2.msra.mxu0 0.0
      %4716 = vmatprep.subr.mxu0 0.0
      %4717 = vmatpush2.msra.mxu0 0.0
      %4718 = vmatprep.subr.mxu0 0.0
      %4719 = vmatpush2.msra.mxu0 0.0
      %4720 = vmatprep.subr.mxu0 0.0
      %4721 = vmatpush2.msra.mxu0 0.0
      %4722 = vmatprep.subr.mxu0 0.0
      %4723 = vmatpush2.msra.mxu0 0.0
      %4724 = vmatprep.subr.mxu0 0.0
      %4725 = vmatpush2.msra.mxu0 0.0
      %4726 = vmatprep.subr.mxu0 0.0
      %4727 = vmatpush2.msra.mxu0 0.0
      %4728 = vmatprep.subr.mxu0 0.0
      %4729 = vmatpush2.msra.mxu0 0.0
      %4730 = vmatprep.subr.mxu0 0.0
      %4731 = vmatpush2.msra.mxu0 0.0
      %4732 = vmatprep.subr.mxu0 0.0
      %4733 = vmatpush2.msra.mxu0 0.0
      %4734 = vmatprep.subr.mxu0 0.0
      %4735 = vmatpush2.msra.mxu0 0.0
      %4736 = vmatprep.subr.mxu0 0.0
      %4737 = vmatpush2.msra.mxu0 0.0
      %4738 = vmatprep.subr.mxu0 0.0
      %4739 = vmatpush2.msra.mxu0 0.0
      %4740 = vmatprep.subr.mxu0 0.0
      %4741 = vmatpush2.msra.mxu0 0.0
      %4742 = vmatprep.subr.mxu0 0.0
      %4743 = vmatpush2.msra.mxu0 0.0
      %4744 = vmatprep.subr.mxu0 0.0
      %4745 = vmatpush2.msra.mxu0 0.0
      %4746 = vmatprep.mubr.f32.mxu0 0.0
      %4747 = vmatmul.mubr.f32.gmra.mxu0 %v4635
      %v4748 = vpop.f32.mrf.mxu0
      %v4749 = vadd.f32 0.0, %v4748
      %v4750 = vpop.f32.mrf.mxu0
      %4751 = vmatprep.mubr.f32.mxu0 0.0
      %4752 = vmatmul.mubr.f32.gmra.mxu0 %v4638
      %v4753 = vpop.f32.mrf.mxu0
      %v4754 = vadd.f32 0.0, %v4753
      %v4755 = vpop.f32.mrf.mxu0
      %4756 = vmatprep.mubr.f32.mxu0 0.0
      %4757 = vmatmul.mubr.f32.gmra.mxu0 %v4641
      %v4758 = vpop.f32.mrf.mxu0
      %v4759 = vadd.f32 0.0, %v4758
      %v4760 = vpop.f32.mrf.mxu0
      %4761 = vmatprep.mubr.f32.mxu0 0.0
      %4762 = vmatmul.mubr.f32.gmra.mxu0 %v4644
      %v4763 = vpop.f32.mrf.mxu0
      %v4764 = vadd.f32 0.0, %v4763
      %v4765 = vpop.f32.mrf.mxu0
      %4766 = vmatprep.mubr.f32.mxu0 0.0
      %4767 = vmatmul.mubr.f32.gmra.mxu0 %v4647
      %v4768 = vpop.f32.mrf.mxu0
      %v4769 = vadd.f32 0.0, %v4768
      %v4770 = vpop.f32.mrf.mxu0
      %4771 = vmatprep.mubr.f32.mxu0 0.0
      %4772 = vmatmul.mubr.f32.gmra.mxu0 %v4650
      %v4773 = vpop.f32.mrf.mxu0
      %v4774 = vadd.f32 0.0, %v4773
      %v4775 = vpop.f32.mrf.mxu0
      %4776 = vmatprep.mubr.f32.mxu0 0.0
      %4777 = vmatmul.mubr.f32.gmra.mxu0 %v4653
      %v4778 = vpop.f32.mrf.mxu0
      %v4779 = vadd.f32 0.0, %v4778
      %v4780 = vpop.f32.mrf.mxu0
      %4781 = vmatprep.mubr.f32.mxu0 0.0
      %4782 = vmatmul.mubr.f32.gmra.mxu0 %v4656
      %v4783 = vpop.f32.mrf.mxu0
      %v4784 = vadd.f32 0.0, %v4783
      %v4785 = vpop.f32.mrf.mxu0
      %4786 = vmatprep.mubr.f32.mxu0 0.0
      %4787 = vmatmul.mubr.f32.gmra.mxu0 %v4659
      %v4788 = vpop.f32.mrf.mxu0
      %v4789 = vadd.f32 0.0, %v4788
      %v4790 = vpop.f32.mrf.mxu0
      %4791 = vmatprep.mubr.f32.mxu0 0.0
      %4792 = vmatmul.mubr.f32.gmra.mxu0 %v4662
      %v4793 = vpop.f32.mrf.mxu0
      %v4794 = vadd.f32 0.0, %v4793
      %v4795 = vpop.f32.mrf.mxu0
      %4796 = vmatprep.mubr.f32.mxu0 0.0
      %4797 = vmatmul.mubr.f32.gmra.mxu0 %v4665
      %v4798 = vpop.f32.mrf.mxu0
      %v4799 = vadd.f32 0.0, %v4798
      %v4800 = vpop.f32.mrf.mxu0
      %4801 = vmatprep.mubr.f32.mxu0 0.0
      %4802 = vmatmul.mubr.f32.gmra.mxu0 %v4668
      %v4803 = vpop.f32.mrf.mxu0
      %v4804 = vadd.f32 0.0, %v4803
      %v4805 = vpop.f32.mrf.mxu0
      %4806 = vmatprep.mubr.f32.mxu0 0.0
      %4807 = vmatmul.mubr.f32.gmra.mxu0 %v4671
      %v4808 = vpop.f32.mrf.mxu0
      %v4809 = vadd.f32 0.0, %v4808
      %v4810 = vpop.f32.mrf.mxu0
      %4811 = vmatprep.mubr.f32.mxu0 0.0
      %4812 = vmatmul.mubr.f32.gmra.mxu0 %v4674
      %v4813 = vpop.f32.mrf.mxu0
      %v4814 = vadd.f32 0.0, %v4813
      %v4815 = vpop.f32.mrf.mxu0
      %4816 = vmatprep.mubr.f32.mxu0 0.0
      %4817 = vmatmul.mubr.f32.gmra.mxu0 %v4677
      %v4818 = vpop.f32.mrf.mxu0
      %v4819 = vadd.f32 0.0, %v4818
      %v4820 = vpop.f32.mrf.mxu0
      %4821 = vmatprep.mubr.f32.mxu0 0.0
      %4822 = vmatmul.mubr.f32.gmra.mxu0 %v4680
      %v4823 = vpop.f32.mrf.mxu0
      %v4824 = vadd.f32 0.0, %v4823
      %v4825 = vpop.f32.mrf.mxu0
      %4826 = vdwg.mxu0
      %v4827 = vadd.f32 %v4515, %v4749
      %v4828 = vadd.f32 %v4520, %v4754
      %v4829 = vadd.f32 %v4525, %v4759
      %v4830 = vadd.f32 %v4530, %v4764
      %v4831 = vadd.f32 %v4535, %v4769
      %v4832 = vadd.f32 %v4540, %v4774
      %v4833 = vadd.f32 %v4545, %v4779
      %v4834 = vadd.f32 %v4550, %v4784
      %v4835 = vadd.f32 %v4555, %v4789
      %v4836 = vadd.f32 %v4560, %v4794
      %v4837 = vadd.f32 %v4565, %v4799
      %v4838 = vadd.f32 %v4570, %v4804
      %v4839 = vadd.f32 %v4575, %v4809
      %v4840 = vadd.f32 %v4580, %v4814
      %v4841 = vadd.f32 %v4585, %v4819
      %v4842 = vadd.f32 %v4590, %v4824
      %s4843 = scalar_lea.vmem %s5, 384
      %v4844 = vld [vmem:[%s4843] sm:$0xff]
      %v4845 = vld [vmem:[%s4843 + $0x8] sm:$0xff]
      %v4846 = vld [vmem:[%s4843 + $0x10] sm:$0xff]
      %v4847 = vld [vmem:[%s4843 + $0x18] sm:$0xff]
      %v4848 = vld [vmem:[%s4843 + $0x20] sm:$0xff]
      %v4849 = vld [vmem:[%s4843 + $0x28] sm:$0xff]
      %v4850 = vld [vmem:[%s4843 + $0x30] sm:$0xff]
      %v4851 = vld [vmem:[%s4843 + $0x38] sm:$0xff]
      %v4852 = vld [vmem:[%s4843 + $0x40] sm:$0xff]
      %v4853 = vld [vmem:[%s4843 + $0x48] sm:$0xff]
      %v4854 = vld [vmem:[%s4843 + $0x50] sm:$0xff]
      %v4855 = vld [vmem:[%s4843 + $0x58] sm:$0xff]
      %v4856 = vld [vmem:[%s4843 + $0x60] sm:$0xff]
      %v4857 = vld [vmem:[%s4843 + $0x68] sm:$0xff]
      %v4858 = vld [vmem:[%s4843 + $0x70] sm:$0xff]
      %v4859 = vld [vmem:[%s4843 + $0x78] sm:$0xff]
      %4860 = vrot.lane.b32.xlu0 %v4078, 32
      %v4861 = vpop.permute.xlu0 %4860
      %4862 = vrot.lane.b32.xlu0 %v4086, 32
      %v4863 = vpop.permute.xlu0 %4862
      %4864 = vrot.lane.b32.xlu0 %v4094, 32
      %v4865 = vpop.permute.xlu0 %4864
      %4866 = vrot.lane.b32.xlu0 %v4102, 32
      %v4867 = vpop.permute.xlu0 %4866
      %4868 = vrot.lane.b32.xlu0 %v4110, 32
      %v4869 = vpop.permute.xlu0 %4868
      %4870 = vrot.lane.b32.xlu0 %v4118, 32
      %v4871 = vpop.permute.xlu0 %4870
      %4872 = vrot.lane.b32.xlu0 %v4126, 32
      %v4873 = vpop.permute.xlu0 %4872
      %4874 = vrot.lane.b32.xlu0 %v4134, 32
      %v4875 = vpop.permute.xlu0 %4874
      %v4885 = vsel %vm1502, %v4844, 0
      %v4888 = vsel %vm1502, %v4845, 0
      %v4891 = vsel %vm1502, %v4846, 0
      %v4894 = vsel %vm1502, %v4847, 0
      %v4897 = vsel %vm1502, %v4848, 0
      %v4900 = vsel %vm1502, %v4849, 0
      %v4903 = vsel %vm1502, %v4850, 0
      %v4906 = vsel %vm1502, %v4851, 0
      %v4909 = vsel %vm1502, %v4852, 0
      %v4912 = vsel %vm1502, %v4853, 0
      %v4915 = vsel %vm1502, %v4854, 0
      %v4918 = vsel %vm1502, %v4855, 0
      %v4921 = vsel %vm1502, %v4856, 0
      %v4924 = vsel %vm1502, %v4857, 0
      %v4927 = vsel %vm1502, %v4858, 0
      %v4930 = vsel %vm1502, %v4859, 0
      %4932 = vmatprep.subr.mxu0 0.0
      %4933 = vmatpush1.msra.mxu0 0.0
      %4934 = vmatprep.subr.mxu0 0.0
      %4935 = vmatpush1.msra.mxu0 0.0
      %4936 = vmatprep.subr.mxu0 0.0
      %4937 = vmatpush1.msra.mxu0 0.0
      %4938 = vmatprep.subr.mxu0 0.0
      %4939 = vmatpush1.msra.mxu0 0.0
      %4940 = vmatprep.subr.mxu0 0.0
      %4941 = vmatpush1.msra.mxu0 0.0
      %4942 = vmatprep.subr.mxu0 0.0
      %4943 = vmatpush1.msra.mxu0 0.0
      %4944 = vmatprep.subr.mxu0 0.0
      %4945 = vmatpush1.msra.mxu0 0.0
      %4946 = vmatprep.subr.mxu0 0.0
      %4947 = vmatpush1.msra.mxu0 0.0
      %4948 = vmatprep.subr.mxu0 0.0
      %4949 = vmatpush1.msra.mxu0 %v4875
      %4950 = vmatprep.subr.mxu0 0.0
      %4951 = vmatpush1.msra.mxu0 %v4873
      %4952 = vmatprep.subr.mxu0 0.0
      %4953 = vmatpush1.msra.mxu0 %v4871
      %4954 = vmatprep.subr.mxu0 0.0
      %4955 = vmatpush1.msra.mxu0 %v4869
      %4956 = vmatprep.subr.mxu0 0.0
      %4957 = vmatpush1.msra.mxu0 %v4867
      %4958 = vmatprep.subr.mxu0 0.0
      %4959 = vmatpush1.msra.mxu0 %v4865
      %4960 = vmatprep.subr.mxu0 0.0
      %4961 = vmatpush1.msra.mxu0 %v4863
      %4962 = vmatprep.subr.mxu0 0.0
      %4963 = vmatpush1.msra.mxu0 %v4861
      %4964 = vmatprep.subr.mxu0 0.0
      %4965 = vmatpush2.msra.mxu0 0.0
      %4966 = vmatprep.subr.mxu0 0.0
      %4967 = vmatpush2.msra.mxu0 0.0
      %4968 = vmatprep.subr.mxu0 0.0
      %4969 = vmatpush2.msra.mxu0 0.0
      %4970 = vmatprep.subr.mxu0 0.0
      %4971 = vmatpush2.msra.mxu0 0.0
      %4972 = vmatprep.subr.mxu0 0.0
      %4973 = vmatpush2.msra.mxu0 0.0
      %4974 = vmatprep.subr.mxu0 0.0
      %4975 = vmatpush2.msra.mxu0 0.0
      %4976 = vmatprep.subr.mxu0 0.0
      %4977 = vmatpush2.msra.mxu0 0.0
      %4978 = vmatprep.subr.mxu0 0.0
      %4979 = vmatpush2.msra.mxu0 0.0
      %4980 = vmatprep.subr.mxu0 0.0
      %4981 = vmatpush2.msra.mxu0 0.0
      %4982 = vmatprep.subr.mxu0 0.0
      %4983 = vmatpush2.msra.mxu0 0.0
      %4984 = vmatprep.subr.mxu0 0.0
      %4985 = vmatpush2.msra.mxu0 0.0
      %4986 = vmatprep.subr.mxu0 0.0
      %4987 = vmatpush2.msra.mxu0 0.0
      %4988 = vmatprep.subr.mxu0 0.0
      %4989 = vmatpush2.msra.mxu0 0.0
      %4990 = vmatprep.subr.mxu0 0.0
      %4991 = vmatpush2.msra.mxu0 0.0
      %4992 = vmatprep.subr.mxu0 0.0
      %4993 = vmatpush2.msra.mxu0 0.0
      %4994 = vmatprep.subr.mxu0 0.0
      %4995 = vmatpush2.msra.mxu0 0.0
      %4996 = vmatprep.mubr.f32.mxu0 0.0
      %4997 = vmatmul.mubr.f32.gmra.mxu0 %v4885
      %v4998 = vpop.f32.mrf.mxu0
      %v4999 = vadd.f32 0.0, %v4998
      %v5000 = vpop.f32.mrf.mxu0
      %5001 = vmatprep.mubr.f32.mxu0 0.0
      %5002 = vmatmul.mubr.f32.gmra.mxu0 %v4888
      %v5003 = vpop.f32.mrf.mxu0
      %v5004 = vadd.f32 0.0, %v5003
      %v5005 = vpop.f32.mrf.mxu0
      %5006 = vmatprep.mubr.f32.mxu0 0.0
      %5007 = vmatmul.mubr.f32.gmra.mxu0 %v4891
      %v5008 = vpop.f32.mrf.mxu0
      %v5009 = vadd.f32 0.0, %v5008
      %v5010 = vpop.f32.mrf.mxu0
      %5011 = vmatprep.mubr.f32.mxu0 0.0
      %5012 = vmatmul.mubr.f32.gmra.mxu0 %v4894
      %v5013 = vpop.f32.mrf.mxu0
      %v5014 = vadd.f32 0.0, %v5013
      %v5015 = vpop.f32.mrf.mxu0
      %5016 = vmatprep.mubr.f32.mxu0 0.0
      %5017 = vmatmul.mubr.f32.gmra.mxu0 %v4897
      %v5018 = vpop.f32.mrf.mxu0
      %v5019 = vadd.f32 0.0, %v5018
      %v5020 = vpop.f32.mrf.mxu0
      %5021 = vmatprep.mubr.f32.mxu0 0.0
      %5022 = vmatmul.mubr.f32.gmra.mxu0 %v4900
      %v5023 = vpop.f32.mrf.mxu0
      %v5024 = vadd.f32 0.0, %v5023
      %v5025 = vpop.f32.mrf.mxu0
      %5026 = vmatprep.mubr.f32.mxu0 0.0
      %5027 = vmatmul.mubr.f32.gmra.mxu0 %v4903
      %v5028 = vpop.f32.mrf.mxu0
      %v5029 = vadd.f32 0.0, %v5028
      %v5030 = vpop.f32.mrf.mxu0
      %5031 = vmatprep.mubr.f32.mxu0 0.0
      %5032 = vmatmul.mubr.f32.gmra.mxu0 %v4906
      %v5033 = vpop.f32.mrf.mxu0
      %v5034 = vadd.f32 0.0, %v5033
      %v5035 = vpop.f32.mrf.mxu0
      %5036 = vmatprep.mubr.f32.mxu0 0.0
      %5037 = vmatmul.mubr.f32.gmra.mxu0 %v4909
      %v5038 = vpop.f32.mrf.mxu0
      %v5039 = vadd.f32 0.0, %v5038
      %v5040 = vpop.f32.mrf.mxu0
      %5041 = vmatprep.mubr.f32.mxu0 0.0
      %5042 = vmatmul.mubr.f32.gmra.mxu0 %v4912
      %v5043 = vpop.f32.mrf.mxu0
      %v5044 = vadd.f32 0.0, %v5043
      %v5045 = vpop.f32.mrf.mxu0
      %5046 = vmatprep.mubr.f32.mxu0 0.0
      %5047 = vmatmul.mubr.f32.gmra.mxu0 %v4915
      %v5048 = vpop.f32.mrf.mxu0
      %v5049 = vadd.f32 0.0, %v5048
      %v5050 = vpop.f32.mrf.mxu0
      %5051 = vmatprep.mubr.f32.mxu0 0.0
      %5052 = vmatmul.mubr.f32.gmra.mxu0 %v4918
      %v5053 = vpop.f32.mrf.mxu0
      %v5054 = vadd.f32 0.0, %v5053
      %v5055 = vpop.f32.mrf.mxu0
      %5056 = vmatprep.mubr.f32.mxu0 0.0
      %5057 = vmatmul.mubr.f32.gmra.mxu0 %v4921
      %v5058 = vpop.f32.mrf.mxu0
      %v5059 = vadd.f32 0.0, %v5058
      %v5060 = vpop.f32.mrf.mxu0
      %5061 = vmatprep.mubr.f32.mxu0 0.0
      %5062 = vmatmul.mubr.f32.gmra.mxu0 %v4924
      %v5063 = vpop.f32.mrf.mxu0
      %v5064 = vadd.f32 0.0, %v5063
      %v5065 = vpop.f32.mrf.mxu0
      %5066 = vmatprep.mubr.f32.mxu0 0.0
      %5067 = vmatmul.mubr.f32.gmra.mxu0 %v4927
      %v5068 = vpop.f32.mrf.mxu0
      %v5069 = vadd.f32 0.0, %v5068
      %v5070 = vpop.f32.mrf.mxu0
      %5071 = vmatprep.mubr.f32.mxu0 0.0
      %5072 = vmatmul.mubr.f32.gmra.mxu0 %v4930
      %v5073 = vpop.f32.mrf.mxu0
      %v5074 = vadd.f32 0.0, %v5073
      %v5075 = vpop.f32.mrf.mxu0
      %5076 = vdwg.mxu0
      %v5077 = vadd.f32 %v4827, %v4999
      %v5078 = vadd.f32 %v4828, %v5004
      %v5079 = vadd.f32 %v4829, %v5009
      %v5080 = vadd.f32 %v4830, %v5014
      %v5081 = vadd.f32 %v4831, %v5019
      %v5082 = vadd.f32 %v4832, %v5024
      %v5083 = vadd.f32 %v4833, %v5029
      %v5084 = vadd.f32 %v4834, %v5034
      %v5085 = vadd.f32 %v4835, %v5039
      %v5086 = vadd.f32 %v4836, %v5044
      %v5087 = vadd.f32 %v4837, %v5049
      %v5088 = vadd.f32 %v4838, %v5054
      %v5089 = vadd.f32 %v4839, %v5059
      %v5090 = vadd.f32 %v4840, %v5064
      %v5091 = vadd.f32 %v4841, %v5069
      %v5092 = vadd.f32 %v4842, %v5074
      %s5093 = scalar_lea.vmem %s5, 512
      %v5094 = vld [vmem:[%s5093] sm:$0xff]
      %v5095 = vld [vmem:[%s5093 + $0x8] sm:$0xff]
      %v5096 = vld [vmem:[%s5093 + $0x10] sm:$0xff]
      %v5097 = vld [vmem:[%s5093 + $0x18] sm:$0xff]
      %v5098 = vld [vmem:[%s5093 + $0x20] sm:$0xff]
      %v5099 = vld [vmem:[%s5093 + $0x28] sm:$0xff]
      %v5100 = vld [vmem:[%s5093 + $0x30] sm:$0xff]
      %v5101 = vld [vmem:[%s5093 + $0x38] sm:$0xff]
      %v5102 = vld [vmem:[%s5093 + $0x40] sm:$0xff]
      %v5103 = vld [vmem:[%s5093 + $0x48] sm:$0xff]
      %v5104 = vld [vmem:[%s5093 + $0x50] sm:$0xff]
      %v5105 = vld [vmem:[%s5093 + $0x58] sm:$0xff]
      %v5106 = vld [vmem:[%s5093 + $0x60] sm:$0xff]
      %v5107 = vld [vmem:[%s5093 + $0x68] sm:$0xff]
      %v5108 = vld [vmem:[%s5093 + $0x70] sm:$0xff]
      %v5109 = vld [vmem:[%s5093 + $0x78] sm:$0xff]
      %v5111 = vsel %vm1502, %v5094, 0
      %v5114 = vsel %vm1502, %v5095, 0
      %v5117 = vsel %vm1502, %v5096, 0
      %v5120 = vsel %vm1502, %v5097, 0
      %v5123 = vsel %vm1502, %v5098, 0
      %v5126 = vsel %vm1502, %v5099, 0
      %v5129 = vsel %vm1502, %v5100, 0
      %v5132 = vsel %vm1502, %v5101, 0
      %v5135 = vsel %vm1502, %v5102, 0
      %v5138 = vsel %vm1502, %v5103, 0
      %v5141 = vsel %vm1502, %v5104, 0
      %v5144 = vsel %vm1502, %v5105, 0
      %v5147 = vsel %vm1502, %v5106, 0
      %v5150 = vsel %vm1502, %v5107, 0
      %v5153 = vsel %vm1502, %v5108, 0
      %v5156 = vsel %vm1502, %v5109, 0
      %5158 = vmatprep.subr.mxu0 0.0
      %5159 = vmatpush1.msra.mxu0 0.0
      %5160 = vmatprep.subr.mxu0 0.0
      %5161 = vmatpush1.msra.mxu0 0.0
      %5162 = vmatprep.subr.mxu0 0.0
      %5163 = vmatpush1.msra.mxu0 0.0
      %5164 = vmatprep.subr.mxu0 0.0
      %5165 = vmatpush1.msra.mxu0 0.0
      %5166 = vmatprep.subr.mxu0 0.0
      %5167 = vmatpush1.msra.mxu0 0.0
      %5168 = vmatprep.subr.mxu0 0.0
      %5169 = vmatpush1.msra.mxu0 0.0
      %5170 = vmatprep.subr.mxu0 0.0
      %5171 = vmatpush1.msra.mxu0 0.0
      %5172 = vmatprep.subr.mxu0 0.0
      %5173 = vmatpush1.msra.mxu0 0.0
      %5174 = vmatprep.subr.mxu0 0.0
      %5175 = vmatpush1.msra.mxu0 %v4135
      %5176 = vmatprep.subr.mxu0 0.0
      %5177 = vmatpush1.msra.mxu0 %v4127
      %5178 = vmatprep.subr.mxu0 0.0
      %5179 = vmatpush1.msra.mxu0 %v4119
      %5180 = vmatprep.subr.mxu0 0.0
      %5181 = vmatpush1.msra.mxu0 %v4111
      %5182 = vmatprep.subr.mxu0 0.0
      %5183 = vmatpush1.msra.mxu0 %v4103
      %5184 = vmatprep.subr.mxu0 0.0
      %5185 = vmatpush1.msra.mxu0 %v4095
      %5186 = vmatprep.subr.mxu0 0.0
      %5187 = vmatpush1.msra.mxu0 %v4087
      %5188 = vmatprep.subr.mxu0 0.0
      %5189 = vmatpush1.msra.mxu0 %v4079
      %5190 = vmatprep.subr.mxu0 0.0
      %5191 = vmatpush2.msra.mxu0 0.0
      %5192 = vmatprep.subr.mxu0 0.0
      %5193 = vmatpush2.msra.mxu0 0.0
      %5194 = vmatprep.subr.mxu0 0.0
      %5195 = vmatpush2.msra.mxu0 0.0
      %5196 = vmatprep.subr.mxu0 0.0
      %5197 = vmatpush2.msra.mxu0 0.0
      %5198 = vmatprep.subr.mxu0 0.0
      %5199 = vmatpush2.msra.mxu0 0.0
      %5200 = vmatprep.subr.mxu0 0.0
      %5201 = vmatpush2.msra.mxu0 0.0
      %5202 = vmatprep.subr.mxu0 0.0
      %5203 = vmatpush2.msra.mxu0 0.0
      %5204 = vmatprep.subr.mxu0 0.0
      %5205 = vmatpush2.msra.mxu0 0.0
      %5206 = vmatprep.subr.mxu0 0.0
      %5207 = vmatpush2.msra.mxu0 0.0
      %5208 = vmatprep.subr.mxu0 0.0
      %5209 = vmatpush2.msra.mxu0 0.0
      %5210 = vmatprep.subr.mxu0 0.0
      %5211 = vmatpush2.msra.mxu0 0.0
      %5212 = vmatprep.subr.mxu0 0.0
      %5213 = vmatpush2.msra.mxu0 0.0
      %5214 = vmatprep.subr.mxu0 0.0
      %5215 = vmatpush2.msra.mxu0 0.0
      %5216 = vmatprep.subr.mxu0 0.0
      %5217 = vmatpush2.msra.mxu0 0.0
      %5218 = vmatprep.subr.mxu0 0.0
      %5219 = vmatpush2.msra.mxu0 0.0
      %5220 = vmatprep.subr.mxu0 0.0
      %5221 = vmatpush2.msra.mxu0 0.0
      %5222 = vmatprep.mubr.f32.mxu0 0.0
      %5223 = vmatmul.mubr.f32.gmra.mxu0 %v5111
      %v5224 = vpop.f32.mrf.mxu0
      %v5225 = vadd.f32 0.0, %v5224
      %v5226 = vpop.f32.mrf.mxu0
      %5227 = vmatprep.mubr.f32.mxu0 0.0
      %5228 = vmatmul.mubr.f32.gmra.mxu0 %v5114
      %v5229 = vpop.f32.mrf.mxu0
      %v5230 = vadd.f32 0.0, %v5229
      %v5231 = vpop.f32.mrf.mxu0
      %5232 = vmatprep.mubr.f32.mxu0 0.0
      %5233 = vmatmul.mubr.f32.gmra.mxu0 %v5117
      %v5234 = vpop.f32.mrf.mxu0
      %v5235 = vadd.f32 0.0, %v5234
      %v5236 = vpop.f32.mrf.mxu0
      %5237 = vmatprep.mubr.f32.mxu0 0.0
      %5238 = vmatmul.mubr.f32.gmra.mxu0 %v5120
      %v5239 = vpop.f32.mrf.mxu0
      %v5240 = vadd.f32 0.0, %v5239
      %v5241 = vpop.f32.mrf.mxu0
      %5242 = vmatprep.mubr.f32.mxu0 0.0
      %5243 = vmatmul.mubr.f32.gmra.mxu0 %v5123
      %v5244 = vpop.f32.mrf.mxu0
      %v5245 = vadd.f32 0.0, %v5244
      %v5246 = vpop.f32.mrf.mxu0
      %5247 = vmatprep.mubr.f32.mxu0 0.0
      %5248 = vmatmul.mubr.f32.gmra.mxu0 %v5126
      %v5249 = vpop.f32.mrf.mxu0
      %v5250 = vadd.f32 0.0, %v5249
      %v5251 = vpop.f32.mrf.mxu0
      %5252 = vmatprep.mubr.f32.mxu0 0.0
      %5253 = vmatmul.mubr.f32.gmra.mxu0 %v5129
      %v5254 = vpop.f32.mrf.mxu0
      %v5255 = vadd.f32 0.0, %v5254
      %v5256 = vpop.f32.mrf.mxu0
      %5257 = vmatprep.mubr.f32.mxu0 0.0
      %5258 = vmatmul.mubr.f32.gmra.mxu0 %v5132
      %v5259 = vpop.f32.mrf.mxu0
      %v5260 = vadd.f32 0.0, %v5259
      %v5261 = vpop.f32.mrf.mxu0
      %5262 = vmatprep.mubr.f32.mxu0 0.0
      %5263 = vmatmul.mubr.f32.gmra.mxu0 %v5135
      %v5264 = vpop.f32.mrf.mxu0
      %v5265 = vadd.f32 0.0, %v5264
      %v5266 = vpop.f32.mrf.mxu0
      %5267 = vmatprep.mubr.f32.mxu0 0.0
      %5268 = vmatmul.mubr.f32.gmra.mxu0 %v5138
      %v5269 = vpop.f32.mrf.mxu0
      %v5270 = vadd.f32 0.0, %v5269
      %v5271 = vpop.f32.mrf.mxu0
      %5272 = vmatprep.mubr.f32.mxu0 0.0
      %5273 = vmatmul.mubr.f32.gmra.mxu0 %v5141
      %v5274 = vpop.f32.mrf.mxu0
      %v5275 = vadd.f32 0.0, %v5274
      %v5276 = vpop.f32.mrf.mxu0
      %5277 = vmatprep.mubr.f32.mxu0 0.0
      %5278 = vmatmul.mubr.f32.gmra.mxu0 %v5144
      %v5279 = vpop.f32.mrf.mxu0
      %v5280 = vadd.f32 0.0, %v5279
      %v5281 = vpop.f32.mrf.mxu0
      %5282 = vmatprep.mubr.f32.mxu0 0.0
      %5283 = vmatmul.mubr.f32.gmra.mxu0 %v5147
      %v5284 = vpop.f32.mrf.mxu0
      %v5285 = vadd.f32 0.0, %v5284
      %v5286 = vpop.f32.mrf.mxu0
      %5287 = vmatprep.mubr.f32.mxu0 0.0
      %5288 = vmatmul.mubr.f32.gmra.mxu0 %v5150
      %v5289 = vpop.f32.mrf.mxu0
      %v5290 = vadd.f32 0.0, %v5289
      %v5291 = vpop.f32.mrf.mxu0
      %5292 = vmatprep.mubr.f32.mxu0 0.0
      %5293 = vmatmul.mubr.f32.gmra.mxu0 %v5153
      %v5294 = vpop.f32.mrf.mxu0
      %v5295 = vadd.f32 0.0, %v5294
      %v5296 = vpop.f32.mrf.mxu0
      %5297 = vmatprep.mubr.f32.mxu0 0.0
      %5298 = vmatmul.mubr.f32.gmra.mxu0 %v5156
      %v5299 = vpop.f32.mrf.mxu0
      %v5300 = vadd.f32 0.0, %v5299
      %v5301 = vpop.f32.mrf.mxu0
      %5302 = vdwg.mxu0
      %v5303 = vadd.f32 %v5077, %v5225
      %v5304 = vadd.f32 %v5078, %v5230
      %v5305 = vadd.f32 %v5079, %v5235
      %v5306 = vadd.f32 %v5080, %v5240
      %v5307 = vadd.f32 %v5081, %v5245
      %v5308 = vadd.f32 %v5082, %v5250
      %v5309 = vadd.f32 %v5083, %v5255
      %v5310 = vadd.f32 %v5084, %v5260
      %v5311 = vadd.f32 %v5085, %v5265
      %v5312 = vadd.f32 %v5086, %v5270
      %v5313 = vadd.f32 %v5087, %v5275
      %v5314 = vadd.f32 %v5088, %v5280
      %v5315 = vadd.f32 %v5089, %v5285
      %v5316 = vadd.f32 %v5090, %v5290
      %v5317 = vadd.f32 %v5091, %v5295
      %v5318 = vadd.f32 %v5092, %v5300
      %s5319 = scalar_lea.vmem %s5, 640
      %v5320 = vld [vmem:[%s5319] sm:$0xff]
      %v5321 = vld [vmem:[%s5319 + $0x8] sm:$0xff]
      %v5322 = vld [vmem:[%s5319 + $0x10] sm:$0xff]
      %v5323 = vld [vmem:[%s5319 + $0x18] sm:$0xff]
      %v5324 = vld [vmem:[%s5319 + $0x20] sm:$0xff]
      %v5325 = vld [vmem:[%s5319 + $0x28] sm:$0xff]
      %v5326 = vld [vmem:[%s5319 + $0x30] sm:$0xff]
      %v5327 = vld [vmem:[%s5319 + $0x38] sm:$0xff]
      %v5328 = vld [vmem:[%s5319 + $0x40] sm:$0xff]
      %v5329 = vld [vmem:[%s5319 + $0x48] sm:$0xff]
      %v5330 = vld [vmem:[%s5319 + $0x50] sm:$0xff]
      %v5331 = vld [vmem:[%s5319 + $0x58] sm:$0xff]
      %v5332 = vld [vmem:[%s5319 + $0x60] sm:$0xff]
      %v5333 = vld [vmem:[%s5319 + $0x68] sm:$0xff]
      %v5334 = vld [vmem:[%s5319 + $0x70] sm:$0xff]
      %v5335 = vld [vmem:[%s5319 + $0x78] sm:$0xff]
      %5344 = vrot.lane.b32.xlu0 %v4079, 96
      %v5345 = vpop.permute.xlu0 %5344
      %5346 = vrot.lane.b32.xlu0 %v4087, 96
      %v5347 = vpop.permute.xlu0 %5346
      %5348 = vrot.lane.b32.xlu0 %v4095, 96
      %v5349 = vpop.permute.xlu0 %5348
      %5350 = vrot.lane.b32.xlu0 %v4103, 96
      %v5351 = vpop.permute.xlu0 %5350
      %5352 = vrot.lane.b32.xlu0 %v4111, 96
      %v5353 = vpop.permute.xlu0 %5352
      %5354 = vrot.lane.b32.xlu0 %v4119, 96
      %v5355 = vpop.permute.xlu0 %5354
      %5356 = vrot.lane.b32.xlu0 %v4127, 96
      %v5357 = vpop.permute.xlu0 %5356
      %5358 = vrot.lane.b32.xlu0 %v4135, 96
      %v5359 = vpop.permute.xlu0 %5358
      %v5369 = vsel %vm1502, %v5320, 0
      %v5372 = vsel %vm1502, %v5321, 0
      %v5375 = vsel %vm1502, %v5322, 0
      %v5378 = vsel %vm1502, %v5323, 0
      %v5381 = vsel %vm1502, %v5324, 0
      %v5384 = vsel %vm1502, %v5325, 0
      %v5387 = vsel %vm1502, %v5326, 0
      %v5390 = vsel %vm1502, %v5327, 0
      %v5393 = vsel %vm1502, %v5328, 0
      %v5396 = vsel %vm1502, %v5329, 0
      %v5399 = vsel %vm1502, %v5330, 0
      %v5402 = vsel %vm1502, %v5331, 0
      %v5405 = vsel %vm1502, %v5332, 0
      %v5408 = vsel %vm1502, %v5333, 0
      %v5411 = vsel %vm1502, %v5334, 0
      %v5414 = vsel %vm1502, %v5335, 0
      %5416 = vmatprep.subr.mxu0 0.0
      %5417 = vmatpush1.msra.mxu0 0.0
      %5418 = vmatprep.subr.mxu0 0.0
      %5419 = vmatpush1.msra.mxu0 0.0
      %5420 = vmatprep.subr.mxu0 0.0
      %5421 = vmatpush1.msra.mxu0 0.0
      %5422 = vmatprep.subr.mxu0 0.0
      %5423 = vmatpush1.msra.mxu0 0.0
      %5424 = vmatprep.subr.mxu0 0.0
      %5425 = vmatpush1.msra.mxu0 0.0
      %5426 = vmatprep.subr.mxu0 0.0
      %5427 = vmatpush1.msra.mxu0 0.0
      %5428 = vmatprep.subr.mxu0 0.0
      %5429 = vmatpush1.msra.mxu0 0.0
      %5430 = vmatprep.subr.mxu0 0.0
      %5431 = vmatpush1.msra.mxu0 0.0
      %5432 = vmatprep.subr.mxu0 0.0
      %5433 = vmatpush1.msra.mxu0 %v5359
      %5434 = vmatprep.subr.mxu0 0.0
      %5435 = vmatpush1.msra.mxu0 %v5357
      %5436 = vmatprep.subr.mxu0 0.0
      %5437 = vmatpush1.msra.mxu0 %v5355
      %5438 = vmatprep.subr.mxu0 0.0
      %5439 = vmatpush1.msra.mxu0 %v5353
      %5440 = vmatprep.subr.mxu0 0.0
      %5441 = vmatpush1.msra.mxu0 %v5351
      %5442 = vmatprep.subr.mxu0 0.0
      %5443 = vmatpush1.msra.mxu0 %v5349
      %5444 = vmatprep.subr.mxu0 0.0
      %5445 = vmatpush1.msra.mxu0 %v5347
      %5446 = vmatprep.subr.mxu0 0.0
      %5447 = vmatpush1.msra.mxu0 %v5345
      %5448 = vmatprep.subr.mxu0 0.0
      %5449 = vmatpush2.msra.mxu0 0.0
      %5450 = vmatprep.subr.mxu0 0.0
      %5451 = vmatpush2.msra.mxu0 0.0
      %5452 = vmatprep.subr.mxu0 0.0
      %5453 = vmatpush2.msra.mxu0 0.0
      %5454 = vmatprep.subr.mxu0 0.0
      %5455 = vmatpush2.msra.mxu0 0.0
      %5456 = vmatprep.subr.mxu0 0.0
      %5457 = vmatpush2.msra.mxu0 0.0
      %5458 = vmatprep.subr.mxu0 0.0
      %5459 = vmatpush2.msra.mxu0 0.0
      %5460 = vmatprep.subr.mxu0 0.0
      %5461 = vmatpush2.msra.mxu0 0.0
      %5462 = vmatprep.subr.mxu0 0.0
      %5463 = vmatpush2.msra.mxu0 0.0
      %5464 = vmatprep.subr.mxu0 0.0
      %5465 = vmatpush2.msra.mxu0 0.0
      %5466 = vmatprep.subr.mxu0 0.0
      %5467 = vmatpush2.msra.mxu0 0.0
      %5468 = vmatprep.subr.mxu0 0.0
      %5469 = vmatpush2.msra.mxu0 0.0
      %5470 = vmatprep.subr.mxu0 0.0
      %5471 = vmatpush2.msra.mxu0 0.0
      %5472 = vmatprep.subr.mxu0 0.0
      %5473 = vmatpush2.msra.mxu0 0.0
      %5474 = vmatprep.subr.mxu0 0.0
      %5475 = vmatpush2.msra.mxu0 0.0
      %5476 = vmatprep.subr.mxu0 0.0
      %5477 = vmatpush2.msra.mxu0 0.0
      %5478 = vmatprep.subr.mxu0 0.0
      %5479 = vmatpush2.msra.mxu0 0.0
      %5480 = vmatprep.mubr.f32.mxu0 0.0
      %5481 = vmatmul.mubr.f32.gmra.mxu0 %v5369
      %v5482 = vpop.f32.mrf.mxu0
      %v5483 = vadd.f32 0.0, %v5482
      %v5484 = vpop.f32.mrf.mxu0
      %5485 = vmatprep.mubr.f32.mxu0 0.0
      %5486 = vmatmul.mubr.f32.gmra.mxu0 %v5372
      %v5487 = vpop.f32.mrf.mxu0
      %v5488 = vadd.f32 0.0, %v5487
      %v5489 = vpop.f32.mrf.mxu0
      %5490 = vmatprep.mubr.f32.mxu0 0.0
      %5491 = vmatmul.mubr.f32.gmra.mxu0 %v5375
      %v5492 = vpop.f32.mrf.mxu0
      %v5493 = vadd.f32 0.0, %v5492
      %v5494 = vpop.f32.mrf.mxu0
      %5495 = vmatprep.mubr.f32.mxu0 0.0
      %5496 = vmatmul.mubr.f32.gmra.mxu0 %v5378
      %v5497 = vpop.f32.mrf.mxu0
      %v5498 = vadd.f32 0.0, %v5497
      %v5499 = vpop.f32.mrf.mxu0
      %5500 = vmatprep.mubr.f32.mxu0 0.0
      %5501 = vmatmul.mubr.f32.gmra.mxu0 %v5381
      %v5502 = vpop.f32.mrf.mxu0
      %v5503 = vadd.f32 0.0, %v5502
      %v5504 = vpop.f32.mrf.mxu0
      %5505 = vmatprep.mubr.f32.mxu0 0.0
      %5506 = vmatmul.mubr.f32.gmra.mxu0 %v5384
      %v5507 = vpop.f32.mrf.mxu0
      %v5508 = vadd.f32 0.0, %v5507
      %v5509 = vpop.f32.mrf.mxu0
      %5510 = vmatprep.mubr.f32.mxu0 0.0
      %5511 = vmatmul.mubr.f32.gmra.mxu0 %v5387
      %v5512 = vpop.f32.mrf.mxu0
      %v5513 = vadd.f32 0.0, %v5512
      %v5514 = vpop.f32.mrf.mxu0
      %5515 = vmatprep.mubr.f32.mxu0 0.0
      %5516 = vmatmul.mubr.f32.gmra.mxu0 %v5390
      %v5517 = vpop.f32.mrf.mxu0
      %v5518 = vadd.f32 0.0, %v5517
      %v5519 = vpop.f32.mrf.mxu0
      %5520 = vmatprep.mubr.f32.mxu0 0.0
      %5521 = vmatmul.mubr.f32.gmra.mxu0 %v5393
      %v5522 = vpop.f32.mrf.mxu0
      %v5523 = vadd.f32 0.0, %v5522
      %v5524 = vpop.f32.mrf.mxu0
      %5525 = vmatprep.mubr.f32.mxu0 0.0
      %5526 = vmatmul.mubr.f32.gmra.mxu0 %v5396
      %v5527 = vpop.f32.mrf.mxu0
      %v5528 = vadd.f32 0.0, %v5527
      %v5529 = vpop.f32.mrf.mxu0
      %5530 = vmatprep.mubr.f32.mxu0 0.0
      %5531 = vmatmul.mubr.f32.gmra.mxu0 %v5399
      %v5532 = vpop.f32.mrf.mxu0
      %v5533 = vadd.f32 0.0, %v5532
      %v5534 = vpop.f32.mrf.mxu0
      %5535 = vmatprep.mubr.f32.mxu0 0.0
      %5536 = vmatmul.mubr.f32.gmra.mxu0 %v5402
      %v5537 = vpop.f32.mrf.mxu0
      %v5538 = vadd.f32 0.0, %v5537
      %v5539 = vpop.f32.mrf.mxu0
      %5540 = vmatprep.mubr.f32.mxu0 0.0
      %5541 = vmatmul.mubr.f32.gmra.mxu0 %v5405
      %v5542 = vpop.f32.mrf.mxu0
      %v5543 = vadd.f32 0.0, %v5542
      %v5544 = vpop.f32.mrf.mxu0
      %5545 = vmatprep.mubr.f32.mxu0 0.0
      %5546 = vmatmul.mubr.f32.gmra.mxu0 %v5408
      %v5547 = vpop.f32.mrf.mxu0
      %v5548 = vadd.f32 0.0, %v5547
      %v5549 = vpop.f32.mrf.mxu0
      %5550 = vmatprep.mubr.f32.mxu0 0.0
      %5551 = vmatmul.mubr.f32.gmra.mxu0 %v5411
      %v5552 = vpop.f32.mrf.mxu0
      %v5553 = vadd.f32 0.0, %v5552
      %v5554 = vpop.f32.mrf.mxu0
      %5555 = vmatprep.mubr.f32.mxu0 0.0
      %5556 = vmatmul.mubr.f32.gmra.mxu0 %v5414
      %v5557 = vpop.f32.mrf.mxu0
      %v5558 = vadd.f32 0.0, %v5557
      %v5559 = vpop.f32.mrf.mxu0
      %5560 = vdwg.mxu0
      %v5561 = vadd.f32 %v5303, %v5483
      %v5562 = vadd.f32 %v5304, %v5488
      %v5563 = vadd.f32 %v5305, %v5493
      %v5564 = vadd.f32 %v5306, %v5498
      %v5565 = vadd.f32 %v5307, %v5503
      %v5566 = vadd.f32 %v5308, %v5508
      %v5567 = vadd.f32 %v5309, %v5513
      %v5568 = vadd.f32 %v5310, %v5518
      %v5569 = vadd.f32 %v5311, %v5523
      %v5570 = vadd.f32 %v5312, %v5528
      %v5571 = vadd.f32 %v5313, %v5533
      %v5572 = vadd.f32 %v5314, %v5538
      %v5573 = vadd.f32 %v5315, %v5543
      %v5574 = vadd.f32 %v5316, %v5548
      %v5575 = vadd.f32 %v5317, %v5553
      %v5576 = vadd.f32 %v5318, %v5558
      %s5577 = scalar_lea.vmem %s5, 768
      %v5578 = vld [vmem:[%s5577] sm:$0xff]
      %v5579 = vld [vmem:[%s5577 + $0x8] sm:$0xff]
      %v5580 = vld [vmem:[%s5577 + $0x10] sm:$0xff]
      %v5581 = vld [vmem:[%s5577 + $0x18] sm:$0xff]
      %v5582 = vld [vmem:[%s5577 + $0x20] sm:$0xff]
      %v5583 = vld [vmem:[%s5577 + $0x28] sm:$0xff]
      %v5584 = vld [vmem:[%s5577 + $0x30] sm:$0xff]
      %v5585 = vld [vmem:[%s5577 + $0x38] sm:$0xff]
      %v5586 = vld [vmem:[%s5577 + $0x40] sm:$0xff]
      %v5587 = vld [vmem:[%s5577 + $0x48] sm:$0xff]
      %v5588 = vld [vmem:[%s5577 + $0x50] sm:$0xff]
      %v5589 = vld [vmem:[%s5577 + $0x58] sm:$0xff]
      %v5590 = vld [vmem:[%s5577 + $0x60] sm:$0xff]
      %v5591 = vld [vmem:[%s5577 + $0x68] sm:$0xff]
      %v5592 = vld [vmem:[%s5577 + $0x70] sm:$0xff]
      %v5593 = vld [vmem:[%s5577 + $0x78] sm:$0xff]
      %5594 = vrot.lane.b32.xlu0 %v4079, 64
      %v5595 = vpop.permute.xlu0 %5594
      %5596 = vrot.lane.b32.xlu0 %v4087, 64
      %v5597 = vpop.permute.xlu0 %5596
      %5598 = vrot.lane.b32.xlu0 %v4095, 64
      %v5599 = vpop.permute.xlu0 %5598
      %5600 = vrot.lane.b32.xlu0 %v4103, 64
      %v5601 = vpop.permute.xlu0 %5600
      %5602 = vrot.lane.b32.xlu0 %v4111, 64
      %v5603 = vpop.permute.xlu0 %5602
      %5604 = vrot.lane.b32.xlu0 %v4119, 64
      %v5605 = vpop.permute.xlu0 %5604
      %5606 = vrot.lane.b32.xlu0 %v4127, 64
      %v5607 = vpop.permute.xlu0 %5606
      %5608 = vrot.lane.b32.xlu0 %v4135, 64
      %v5609 = vpop.permute.xlu0 %5608
      %v5619 = vsel %vm1502, %v5578, 0
      %v5622 = vsel %vm1502, %v5579, 0
      %v5625 = vsel %vm1502, %v5580, 0
      %v5628 = vsel %vm1502, %v5581, 0
      %v5631 = vsel %vm1502, %v5582, 0
      %v5634 = vsel %vm1502, %v5583, 0
      %v5637 = vsel %vm1502, %v5584, 0
      %v5640 = vsel %vm1502, %v5585, 0
      %v5643 = vsel %vm1502, %v5586, 0
      %v5646 = vsel %vm1502, %v5587, 0
      %v5649 = vsel %vm1502, %v5588, 0
      %v5652 = vsel %vm1502, %v5589, 0
      %v5655 = vsel %vm1502, %v5590, 0
      %v5658 = vsel %vm1502, %v5591, 0
      %v5661 = vsel %vm1502, %v5592, 0
      %v5664 = vsel %vm1502, %v5593, 0
      %5666 = vmatprep.subr.mxu0 0.0
      %5667 = vmatpush1.msra.mxu0 0.0
      %5668 = vmatprep.subr.mxu0 0.0
      %5669 = vmatpush1.msra.mxu0 0.0
      %5670 = vmatprep.subr.mxu0 0.0
      %5671 = vmatpush1.msra.mxu0 0.0
      %5672 = vmatprep.subr.mxu0 0.0
      %5673 = vmatpush1.msra.mxu0 0.0
      %5674 = vmatprep.subr.mxu0 0.0
      %5675 = vmatpush1.msra.mxu0 0.0
      %5676 = vmatprep.subr.mxu0 0.0
      %5677 = vmatpush1.msra.mxu0 0.0
      %5678 = vmatprep.subr.mxu0 0.0
      %5679 = vmatpush1.msra.mxu0 0.0
      %5680 = vmatprep.subr.mxu0 0.0
      %5681 = vmatpush1.msra.mxu0 0.0
      %5682 = vmatprep.subr.mxu0 0.0
      %5683 = vmatpush1.msra.mxu0 %v5609
      %5684 = vmatprep.subr.mxu0 0.0
      %5685 = vmatpush1.msra.mxu0 %v5607
      %5686 = vmatprep.subr.mxu0 0.0
      %5687 = vmatpush1.msra.mxu0 %v5605
      %5688 = vmatprep.subr.mxu0 0.0
      %5689 = vmatpush1.msra.mxu0 %v5603
      %5690 = vmatprep.subr.mxu0 0.0
      %5691 = vmatpush1.msra.mxu0 %v5601
      %5692 = vmatprep.subr.mxu0 0.0
      %5693 = vmatpush1.msra.mxu0 %v5599
      %5694 = vmatprep.subr.mxu0 0.0
      %5695 = vmatpush1.msra.mxu0 %v5597
      %5696 = vmatprep.subr.mxu0 0.0
      %5697 = vmatpush1.msra.mxu0 %v5595
      %5698 = vmatprep.subr.mxu0 0.0
      %5699 = vmatpush2.msra.mxu0 0.0
      %5700 = vmatprep.subr.mxu0 0.0
      %5701 = vmatpush2.msra.mxu0 0.0
      %5702 = vmatprep.subr.mxu0 0.0
      %5703 = vmatpush2.msra.mxu0 0.0
      %5704 = vmatprep.subr.mxu0 0.0
      %5705 = vmatpush2.msra.mxu0 0.0
      %5706 = vmatprep.subr.mxu0 0.0
      %5707 = vmatpush2.msra.mxu0 0.0
      %5708 = vmatprep.subr.mxu0 0.0
      %5709 = vmatpush2.msra.mxu0 0.0
      %5710 = vmatprep.subr.mxu0 0.0
      %5711 = vmatpush2.msra.mxu0 0.0
      %5712 = vmatprep.subr.mxu0 0.0
      %5713 = vmatpush2.msra.mxu0 0.0
      %5714 = vmatprep.subr.mxu0 0.0
      %5715 = vmatpush2.msra.mxu0 0.0
      %5716 = vmatprep.subr.mxu0 0.0
      %5717 = vmatpush2.msra.mxu0 0.0
      %5718 = vmatprep.subr.mxu0 0.0
      %5719 = vmatpush2.msra.mxu0 0.0
      %5720 = vmatprep.subr.mxu0 0.0
      %5721 = vmatpush2.msra.mxu0 0.0
      %5722 = vmatprep.subr.mxu0 0.0
      %5723 = vmatpush2.msra.mxu0 0.0
      %5724 = vmatprep.subr.mxu0 0.0
      %5725 = vmatpush2.msra.mxu0 0.0
      %5726 = vmatprep.subr.mxu0 0.0
      %5727 = vmatpush2.msra.mxu0 0.0
      %5728 = vmatprep.subr.mxu0 0.0
      %5729 = vmatpush2.msra.mxu0 0.0
      %5730 = vmatprep.mubr.f32.mxu0 0.0
      %5731 = vmatmul.mubr.f32.gmra.mxu0 %v5619
      %v5732 = vpop.f32.mrf.mxu0
      %v5733 = vadd.f32 0.0, %v5732
      %v5734 = vpop.f32.mrf.mxu0
      %5735 = vmatprep.mubr.f32.mxu0 0.0
      %5736 = vmatmul.mubr.f32.gmra.mxu0 %v5622
      %v5737 = vpop.f32.mrf.mxu0
      %v5738 = vadd.f32 0.0, %v5737
      %v5739 = vpop.f32.mrf.mxu0
      %5740 = vmatprep.mubr.f32.mxu0 0.0
      %5741 = vmatmul.mubr.f32.gmra.mxu0 %v5625
      %v5742 = vpop.f32.mrf.mxu0
      %v5743 = vadd.f32 0.0, %v5742
      %v5744 = vpop.f32.mrf.mxu0
      %5745 = vmatprep.mubr.f32.mxu0 0.0
      %5746 = vmatmul.mubr.f32.gmra.mxu0 %v5628
      %v5747 = vpop.f32.mrf.mxu0
      %v5748 = vadd.f32 0.0, %v5747
      %v5749 = vpop.f32.mrf.mxu0
      %5750 = vmatprep.mubr.f32.mxu0 0.0
      %5751 = vmatmul.mubr.f32.gmra.mxu0 %v5631
      %v5752 = vpop.f32.mrf.mxu0
      %v5753 = vadd.f32 0.0, %v5752
      %v5754 = vpop.f32.mrf.mxu0
      %5755 = vmatprep.mubr.f32.mxu0 0.0
      %5756 = vmatmul.mubr.f32.gmra.mxu0 %v5634
      %v5757 = vpop.f32.mrf.mxu0
      %v5758 = vadd.f32 0.0, %v5757
      %v5759 = vpop.f32.mrf.mxu0
      %5760 = vmatprep.mubr.f32.mxu0 0.0
      %5761 = vmatmul.mubr.f32.gmra.mxu0 %v5637
      %v5762 = vpop.f32.mrf.mxu0
      %v5763 = vadd.f32 0.0, %v5762
      %v5764 = vpop.f32.mrf.mxu0
      %5765 = vmatprep.mubr.f32.mxu0 0.0
      %5766 = vmatmul.mubr.f32.gmra.mxu0 %v5640
      %v5767 = vpop.f32.mrf.mxu0
      %v5768 = vadd.f32 0.0, %v5767
      %v5769 = vpop.f32.mrf.mxu0
      %5770 = vmatprep.mubr.f32.mxu0 0.0
      %5771 = vmatmul.mubr.f32.gmra.mxu0 %v5643
      %v5772 = vpop.f32.mrf.mxu0
      %v5773 = vadd.f32 0.0, %v5772
      %v5774 = vpop.f32.mrf.mxu0
      %5775 = vmatprep.mubr.f32.mxu0 0.0
      %5776 = vmatmul.mubr.f32.gmra.mxu0 %v5646
      %v5777 = vpop.f32.mrf.mxu0
      %v5778 = vadd.f32 0.0, %v5777
      %v5779 = vpop.f32.mrf.mxu0
      %5780 = vmatprep.mubr.f32.mxu0 0.0
      %5781 = vmatmul.mubr.f32.gmra.mxu0 %v5649
      %v5782 = vpop.f32.mrf.mxu0
      %v5783 = vadd.f32 0.0, %v5782
      %v5784 = vpop.f32.mrf.mxu0
      %5785 = vmatprep.mubr.f32.mxu0 0.0
      %5786 = vmatmul.mubr.f32.gmra.mxu0 %v5652
      %v5787 = vpop.f32.mrf.mxu0
      %v5788 = vadd.f32 0.0, %v5787
      %v5789 = vpop.f32.mrf.mxu0
      %5790 = vmatprep.mubr.f32.mxu0 0.0
      %5791 = vmatmul.mubr.f32.gmra.mxu0 %v5655
      %v5792 = vpop.f32.mrf.mxu0
      %v5793 = vadd.f32 0.0, %v5792
      %v5794 = vpop.f32.mrf.mxu0
      %5795 = vmatprep.mubr.f32.mxu0 0.0
      %5796 = vmatmul.mubr.f32.gmra.mxu0 %v5658
      %v5797 = vpop.f32.mrf.mxu0
      %v5798 = vadd.f32 0.0, %v5797
      %v5799 = vpop.f32.mrf.mxu0
      %5800 = vmatprep.mubr.f32.mxu0 0.0
      %5801 = vmatmul.mubr.f32.gmra.mxu0 %v5661
      %v5802 = vpop.f32.mrf.mxu0
      %v5803 = vadd.f32 0.0, %v5802
      %v5804 = vpop.f32.mrf.mxu0
      %5805 = vmatprep.mubr.f32.mxu0 0.0
      %5806 = vmatmul.mubr.f32.gmra.mxu0 %v5664
      %v5807 = vpop.f32.mrf.mxu0
      %v5808 = vadd.f32 0.0, %v5807
      %v5809 = vpop.f32.mrf.mxu0
      %5810 = vdwg.mxu0
      %v5811 = vadd.f32 %v5561, %v5733
      %v5812 = vadd.f32 %v5562, %v5738
      %v5813 = vadd.f32 %v5563, %v5743
      %v5814 = vadd.f32 %v5564, %v5748
      %v5815 = vadd.f32 %v5565, %v5753
      %v5816 = vadd.f32 %v5566, %v5758
      %v5817 = vadd.f32 %v5567, %v5763
      %v5818 = vadd.f32 %v5568, %v5768
      %v5819 = vadd.f32 %v5569, %v5773
      %v5820 = vadd.f32 %v5570, %v5778
      %v5821 = vadd.f32 %v5571, %v5783
      %v5822 = vadd.f32 %v5572, %v5788
      %v5823 = vadd.f32 %v5573, %v5793
      %v5824 = vadd.f32 %v5574, %v5798
      %v5825 = vadd.f32 %v5575, %v5803
      %v5826 = vadd.f32 %v5576, %v5808
      %s5827 = scalar_lea.vmem %s5, 896
      %v5828 = vld [vmem:[%s5827] sm:$0xff]
      %v5829 = vld [vmem:[%s5827 + $0x8] sm:$0xff]
      %v5830 = vld [vmem:[%s5827 + $0x10] sm:$0xff]
      %v5831 = vld [vmem:[%s5827 + $0x18] sm:$0xff]
      %v5832 = vld [vmem:[%s5827 + $0x20] sm:$0xff]
      %v5833 = vld [vmem:[%s5827 + $0x28] sm:$0xff]
      %v5834 = vld [vmem:[%s5827 + $0x30] sm:$0xff]
      %v5835 = vld [vmem:[%s5827 + $0x38] sm:$0xff]
      %v5836 = vld [vmem:[%s5827 + $0x40] sm:$0xff]
      %v5837 = vld [vmem:[%s5827 + $0x48] sm:$0xff]
      %v5838 = vld [vmem:[%s5827 + $0x50] sm:$0xff]
      %v5839 = vld [vmem:[%s5827 + $0x58] sm:$0xff]
      %v5840 = vld [vmem:[%s5827 + $0x60] sm:$0xff]
      %v5841 = vld [vmem:[%s5827 + $0x68] sm:$0xff]
      %v5842 = vld [vmem:[%s5827 + $0x70] sm:$0xff]
      %v5843 = vld [vmem:[%s5827 + $0x78] sm:$0xff]
      %5844 = vrot.lane.b32.xlu0 %v4079, 32
      %v5845 = vpop.permute.xlu0 %5844
      %5846 = vrot.lane.b32.xlu0 %v4087, 32
      %v5847 = vpop.permute.xlu0 %5846
      %5848 = vrot.lane.b32.xlu0 %v4095, 32
      %v5849 = vpop.permute.xlu0 %5848
      %5850 = vrot.lane.b32.xlu0 %v4103, 32
      %v5851 = vpop.permute.xlu0 %5850
      %5852 = vrot.lane.b32.xlu0 %v4111, 32
      %v5853 = vpop.permute.xlu0 %5852
      %5854 = vrot.lane.b32.xlu0 %v4119, 32
      %v5855 = vpop.permute.xlu0 %5854
      %5856 = vrot.lane.b32.xlu0 %v4127, 32
      %v5857 = vpop.permute.xlu0 %5856
      %5858 = vrot.lane.b32.xlu0 %v4135, 32
      %v5859 = vpop.permute.xlu0 %5858
      %v5869 = vsel %vm1502, %v5828, 0
      %v5872 = vsel %vm1502, %v5829, 0
      %v5875 = vsel %vm1502, %v5830, 0
      %v5878 = vsel %vm1502, %v5831, 0
      %v5881 = vsel %vm1502, %v5832, 0
      %v5884 = vsel %vm1502, %v5833, 0
      %v5887 = vsel %vm1502, %v5834, 0
      %v5890 = vsel %vm1502, %v5835, 0
      %v5893 = vsel %vm1502, %v5836, 0
      %v5896 = vsel %vm1502, %v5837, 0
      %v5899 = vsel %vm1502, %v5838, 0
      %v5902 = vsel %vm1502, %v5839, 0
      %v5905 = vsel %vm1502, %v5840, 0
      %v5908 = vsel %vm1502, %v5841, 0
      %v5911 = vsel %vm1502, %v5842, 0
      %v5914 = vsel %vm1502, %v5843, 0
      %5916 = vmatprep.subr.mxu0 0.0
      %5917 = vmatpush1.msra.mxu0 0.0
      %5918 = vmatprep.subr.mxu0 0.0
      %5919 = vmatpush1.msra.mxu0 0.0
      %5920 = vmatprep.subr.mxu0 0.0
      %5921 = vmatpush1.msra.mxu0 0.0
      %5922 = vmatprep.subr.mxu0 0.0
      %5923 = vmatpush1.msra.mxu0 0.0
      %5924 = vmatprep.subr.mxu0 0.0
      %5925 = vmatpush1.msra.mxu0 0.0
      %5926 = vmatprep.subr.mxu0 0.0
      %5927 = vmatpush1.msra.mxu0 0.0
      %5928 = vmatprep.subr.mxu0 0.0
      %5929 = vmatpush1.msra.mxu0 0.0
      %5930 = vmatprep.subr.mxu0 0.0
      %5931 = vmatpush1.msra.mxu0 0.0
      %5932 = vmatprep.subr.mxu0 0.0
      %5933 = vmatpush1.msra.mxu0 %v5859
      %5934 = vmatprep.subr.mxu0 0.0
      %5935 = vmatpush1.msra.mxu0 %v5857
      %5936 = vmatprep.subr.mxu0 0.0
      %5937 = vmatpush1.msra.mxu0 %v5855
      %5938 = vmatprep.subr.mxu0 0.0
      %5939 = vmatpush1.msra.mxu0 %v5853
      %5940 = vmatprep.subr.mxu0 0.0
      %5941 = vmatpush1.msra.mxu0 %v5851
      %5942 = vmatprep.subr.mxu0 0.0
      %5943 = vmatpush1.msra.mxu0 %v5849
      %5944 = vmatprep.subr.mxu0 0.0
      %5945 = vmatpush1.msra.mxu0 %v5847
      %5946 = vmatprep.subr.mxu0 0.0
      %5947 = vmatpush1.msra.mxu0 %v5845
      %5948 = vmatprep.subr.mxu0 0.0
      %5949 = vmatpush2.msra.mxu0 0.0
      %5950 = vmatprep.subr.mxu0 0.0
      %5951 = vmatpush2.msra.mxu0 0.0
      %5952 = vmatprep.subr.mxu0 0.0
      %5953 = vmatpush2.msra.mxu0 0.0
      %5954 = vmatprep.subr.mxu0 0.0
      %5955 = vmatpush2.msra.mxu0 0.0
      %5956 = vmatprep.subr.mxu0 0.0
      %5957 = vmatpush2.msra.mxu0 0.0
      %5958 = vmatprep.subr.mxu0 0.0
      %5959 = vmatpush2.msra.mxu0 0.0
      %5960 = vmatprep.subr.mxu0 0.0
      %5961 = vmatpush2.msra.mxu0 0.0
      %5962 = vmatprep.subr.mxu0 0.0
      %5963 = vmatpush2.msra.mxu0 0.0
      %5964 = vmatprep.subr.mxu0 0.0
      %5965 = vmatpush2.msra.mxu0 0.0
      %5966 = vmatprep.subr.mxu0 0.0
      %5967 = vmatpush2.msra.mxu0 0.0
      %5968 = vmatprep.subr.mxu0 0.0
      %5969 = vmatpush2.msra.mxu0 0.0
      %5970 = vmatprep.subr.mxu0 0.0
      %5971 = vmatpush2.msra.mxu0 0.0
      %5972 = vmatprep.subr.mxu0 0.0
      %5973 = vmatpush2.msra.mxu0 0.0
      %5974 = vmatprep.subr.mxu0 0.0
      %5975 = vmatpush2.msra.mxu0 0.0
      %5976 = vmatprep.subr.mxu0 0.0
      %5977 = vmatpush2.msra.mxu0 0.0
      %5978 = vmatprep.subr.mxu0 0.0
      %5979 = vmatpush2.msra.mxu0 0.0
      %5980 = vmatprep.mubr.f32.mxu0 0.0
      %5981 = vmatmul.mubr.f32.gmra.mxu0 %v5869
      %v5982 = vpop.f32.mrf.mxu0
      %v5983 = vadd.f32 0.0, %v5982
      %v5984 = vpop.f32.mrf.mxu0
      %5985 = vmatprep.mubr.f32.mxu0 0.0
      %5986 = vmatmul.mubr.f32.gmra.mxu0 %v5872
      %v5987 = vpop.f32.mrf.mxu0
      %v5988 = vadd.f32 0.0, %v5987
      %v5989 = vpop.f32.mrf.mxu0
      %5990 = vmatprep.mubr.f32.mxu0 0.0
      %5991 = vmatmul.mubr.f32.gmra.mxu0 %v5875
      %v5992 = vpop.f32.mrf.mxu0
      %v5993 = vadd.f32 0.0, %v5992
      %v5994 = vpop.f32.mrf.mxu0
      %5995 = vmatprep.mubr.f32.mxu0 0.0
      %5996 = vmatmul.mubr.f32.gmra.mxu0 %v5878
      %v5997 = vpop.f32.mrf.mxu0
      %v5998 = vadd.f32 0.0, %v5997
      %v5999 = vpop.f32.mrf.mxu0
      %6000 = vmatprep.mubr.f32.mxu0 0.0
      %6001 = vmatmul.mubr.f32.gmra.mxu0 %v5881
      %v6002 = vpop.f32.mrf.mxu0
      %v6003 = vadd.f32 0.0, %v6002
      %v6004 = vpop.f32.mrf.mxu0
      %6005 = vmatprep.mubr.f32.mxu0 0.0
      %6006 = vmatmul.mubr.f32.gmra.mxu0 %v5884
      %v6007 = vpop.f32.mrf.mxu0
      %v6008 = vadd.f32 0.0, %v6007
      %v6009 = vpop.f32.mrf.mxu0
      %6010 = vmatprep.mubr.f32.mxu0 0.0
      %6011 = vmatmul.mubr.f32.gmra.mxu0 %v5887
      %v6012 = vpop.f32.mrf.mxu0
      %v6013 = vadd.f32 0.0, %v6012
      %v6014 = vpop.f32.mrf.mxu0
      %6015 = vmatprep.mubr.f32.mxu0 0.0
      %6016 = vmatmul.mubr.f32.gmra.mxu0 %v5890
      %v6017 = vpop.f32.mrf.mxu0
      %v6018 = vadd.f32 0.0, %v6017
      %v6019 = vpop.f32.mrf.mxu0
      %6020 = vmatprep.mubr.f32.mxu0 0.0
      %6021 = vmatmul.mubr.f32.gmra.mxu0 %v5893
      %v6022 = vpop.f32.mrf.mxu0
      %v6023 = vadd.f32 0.0, %v6022
      %v6024 = vpop.f32.mrf.mxu0
      %6025 = vmatprep.mubr.f32.mxu0 0.0
      %6026 = vmatmul.mubr.f32.gmra.mxu0 %v5896
      %v6027 = vpop.f32.mrf.mxu0
      %v6028 = vadd.f32 0.0, %v6027
      %v6029 = vpop.f32.mrf.mxu0
      %6030 = vmatprep.mubr.f32.mxu0 0.0
      %6031 = vmatmul.mubr.f32.gmra.mxu0 %v5899
      %v6032 = vpop.f32.mrf.mxu0
      %v6033 = vadd.f32 0.0, %v6032
      %v6034 = vpop.f32.mrf.mxu0
      %6035 = vmatprep.mubr.f32.mxu0 0.0
      %6036 = vmatmul.mubr.f32.gmra.mxu0 %v5902
      %v6037 = vpop.f32.mrf.mxu0
      %v6038 = vadd.f32 0.0, %v6037
      %v6039 = vpop.f32.mrf.mxu0
      %6040 = vmatprep.mubr.f32.mxu0 0.0
      %6041 = vmatmul.mubr.f32.gmra.mxu0 %v5905
      %v6042 = vpop.f32.mrf.mxu0
      %v6043 = vadd.f32 0.0, %v6042
      %v6044 = vpop.f32.mrf.mxu0
      %6045 = vmatprep.mubr.f32.mxu0 0.0
      %6046 = vmatmul.mubr.f32.gmra.mxu0 %v5908
      %v6047 = vpop.f32.mrf.mxu0
      %v6048 = vadd.f32 0.0, %v6047
      %v6049 = vpop.f32.mrf.mxu0
      %6050 = vmatprep.mubr.f32.mxu0 0.0
      %6051 = vmatmul.mubr.f32.gmra.mxu0 %v5911
      %v6052 = vpop.f32.mrf.mxu0
      %v6053 = vadd.f32 0.0, %v6052
      %v6054 = vpop.f32.mrf.mxu0
      %6055 = vmatprep.mubr.f32.mxu0 0.0
      %6056 = vmatmul.mubr.f32.gmra.mxu0 %v5914
      %v6057 = vpop.f32.mrf.mxu0
      %v6058 = vadd.f32 0.0, %v6057
      %v6059 = vpop.f32.mrf.mxu0
      %6060 = vdwg.mxu0
      %v6061 = vadd.f32 %v5811, %v5983
      %v6062 = vadd.f32 %v5812, %v5988
      %v6063 = vadd.f32 %v5813, %v5993
      %v6064 = vadd.f32 %v5814, %v5998
      %v6065 = vadd.f32 %v5815, %v6003
      %v6066 = vadd.f32 %v5816, %v6008
      %v6067 = vadd.f32 %v5817, %v6013
      %v6068 = vadd.f32 %v5818, %v6018
      %v6069 = vadd.f32 %v5819, %v6023
      %v6070 = vadd.f32 %v5820, %v6028
      %v6071 = vadd.f32 %v5821, %v6033
      %v6072 = vadd.f32 %v5822, %v6038
      %v6073 = vadd.f32 %v5823, %v6043
      %v6074 = vadd.f32 %v5824, %v6048
      %v6075 = vadd.f32 %v5825, %v6053
      %v6076 = vadd.f32 %v5826, %v6058
      %s6077 = scalar_lea.vmem %s5, 1024
      %v6078 = vld [vmem:[%s6077] sm:$0xff]
      %v6079 = vld [vmem:[%s6077 + $0x8] sm:$0xff]
      %v6080 = vld [vmem:[%s6077 + $0x10] sm:$0xff]
      %v6081 = vld [vmem:[%s6077 + $0x18] sm:$0xff]
      %v6082 = vld [vmem:[%s6077 + $0x20] sm:$0xff]
      %v6083 = vld [vmem:[%s6077 + $0x28] sm:$0xff]
      %v6084 = vld [vmem:[%s6077 + $0x30] sm:$0xff]
      %v6085 = vld [vmem:[%s6077 + $0x38] sm:$0xff]
      %v6086 = vld [vmem:[%s6077 + $0x40] sm:$0xff]
      %v6087 = vld [vmem:[%s6077 + $0x48] sm:$0xff]
      %v6088 = vld [vmem:[%s6077 + $0x50] sm:$0xff]
      %v6089 = vld [vmem:[%s6077 + $0x58] sm:$0xff]
      %v6090 = vld [vmem:[%s6077 + $0x60] sm:$0xff]
      %v6091 = vld [vmem:[%s6077 + $0x68] sm:$0xff]
      %v6092 = vld [vmem:[%s6077 + $0x70] sm:$0xff]
      %v6093 = vld [vmem:[%s6077 + $0x78] sm:$0xff]
      %v6095 = vsel %vm1502, %v6078, 0
      %v6098 = vsel %vm1502, %v6079, 0
      %v6101 = vsel %vm1502, %v6080, 0
      %v6104 = vsel %vm1502, %v6081, 0
      %v6107 = vsel %vm1502, %v6082, 0
      %v6110 = vsel %vm1502, %v6083, 0
      %v6113 = vsel %vm1502, %v6084, 0
      %v6116 = vsel %vm1502, %v6085, 0
      %v6119 = vsel %vm1502, %v6086, 0
      %v6122 = vsel %vm1502, %v6087, 0
      %v6125 = vsel %vm1502, %v6088, 0
      %v6128 = vsel %vm1502, %v6089, 0
      %v6131 = vsel %vm1502, %v6090, 0
      %v6134 = vsel %vm1502, %v6091, 0
      %v6137 = vsel %vm1502, %v6092, 0
      %v6140 = vsel %vm1502, %v6093, 0
      %6142 = vmatprep.subr.mxu0 0.0
      %6143 = vmatpush1.msra.mxu0 0.0
      %6144 = vmatprep.subr.mxu0 0.0
      %6145 = vmatpush1.msra.mxu0 0.0
      %6146 = vmatprep.subr.mxu0 0.0
      %6147 = vmatpush1.msra.mxu0 0.0
      %6148 = vmatprep.subr.mxu0 0.0
      %6149 = vmatpush1.msra.mxu0 0.0
      %6150 = vmatprep.subr.mxu0 0.0
      %6151 = vmatpush1.msra.mxu0 0.0
      %6152 = vmatprep.subr.mxu0 0.0
      %6153 = vmatpush1.msra.mxu0 0.0
      %6154 = vmatprep.subr.mxu0 0.0
      %6155 = vmatpush1.msra.mxu0 0.0
      %6156 = vmatprep.subr.mxu0 0.0
      %6157 = vmatpush1.msra.mxu0 0.0
      %6158 = vmatprep.subr.mxu0 0.0
      %6159 = vmatpush1.msra.mxu0 %v4136
      %6160 = vmatprep.subr.mxu0 0.0
      %6161 = vmatpush1.msra.mxu0 %v4128
      %6162 = vmatprep.subr.mxu0 0.0
      %6163 = vmatpush1.msra.mxu0 %v4120
      %6164 = vmatprep.subr.mxu0 0.0
      %6165 = vmatpush1.msra.mxu0 %v4112
      %6166 = vmatprep.subr.mxu0 0.0
      %6167 = vmatpush1.msra.mxu0 %v4104
      %6168 = vmatprep.subr.mxu0 0.0
      %6169 = vmatpush1.msra.mxu0 %v4096
      %6170 = vmatprep.subr.mxu0 0.0
      %6171 = vmatpush1.msra.mxu0 %v4088
      %6172 = vmatprep.subr.mxu0 0.0
      %6173 = vmatpush1.msra.mxu0 %v4080
      %6174 = vmatprep.subr.mxu0 0.0
      %6175 = vmatpush2.msra.mxu0 0.0
      %6176 = vmatprep.subr.mxu0 0.0
      %6177 = vmatpush2.msra.mxu0 0.0
      %6178 = vmatprep.subr.mxu0 0.0
      %6179 = vmatpush2.msra.mxu0 0.0
      %6180 = vmatprep.subr.mxu0 0.0
      %6181 = vmatpush2.msra.mxu0 0.0
      %6182 = vmatprep.subr.mxu0 0.0
      %6183 = vmatpush2.msra.mxu0 0.0
      %6184 = vmatprep.subr.mxu0 0.0
      %6185 = vmatpush2.msra.mxu0 0.0
      %6186 = vmatprep.subr.mxu0 0.0
      %6187 = vmatpush2.msra.mxu0 0.0
      %6188 = vmatprep.subr.mxu0 0.0
      %6189 = vmatpush2.msra.mxu0 0.0
      %6190 = vmatprep.subr.mxu0 0.0
      %6191 = vmatpush2.msra.mxu0 0.0
      %6192 = vmatprep.subr.mxu0 0.0
      %6193 = vmatpush2.msra.mxu0 0.0
      %6194 = vmatprep.subr.mxu0 0.0
      %6195 = vmatpush2.msra.mxu0 0.0
      %6196 = vmatprep.subr.mxu0 0.0
      %6197 = vmatpush2.msra.mxu0 0.0
      %6198 = vmatprep.subr.mxu0 0.0
      %6199 = vmatpush2.msra.mxu0 0.0
      %6200 = vmatprep.subr.mxu0 0.0
      %6201 = vmatpush2.msra.mxu0 0.0
      %6202 = vmatprep.subr.mxu0 0.0
      %6203 = vmatpush2.msra.mxu0 0.0
      %6204 = vmatprep.subr.mxu0 0.0
      %6205 = vmatpush2.msra.mxu0 0.0
      %6206 = vmatprep.mubr.f32.mxu0 0.0
      %6207 = vmatmul.mubr.f32.gmra.mxu0 %v6095
      %v6208 = vpop.f32.mrf.mxu0
      %v6209 = vadd.f32 0.0, %v6208
      %v6210 = vpop.f32.mrf.mxu0
      %6211 = vmatprep.mubr.f32.mxu0 0.0
      %6212 = vmatmul.mubr.f32.gmra.mxu0 %v6098
      %v6213 = vpop.f32.mrf.mxu0
      %v6214 = vadd.f32 0.0, %v6213
      %v6215 = vpop.f32.mrf.mxu0
      %6216 = vmatprep.mubr.f32.mxu0 0.0
      %6217 = vmatmul.mubr.f32.gmra.mxu0 %v6101
      %v6218 = vpop.f32.mrf.mxu0
      %v6219 = vadd.f32 0.0, %v6218
      %v6220 = vpop.f32.mrf.mxu0
      %6221 = vmatprep.mubr.f32.mxu0 0.0
      %6222 = vmatmul.mubr.f32.gmra.mxu0 %v6104
      %v6223 = vpop.f32.mrf.mxu0
      %v6224 = vadd.f32 0.0, %v6223
      %v6225 = vpop.f32.mrf.mxu0
      %6226 = vmatprep.mubr.f32.mxu0 0.0
      %6227 = vmatmul.mubr.f32.gmra.mxu0 %v6107
      %v6228 = vpop.f32.mrf.mxu0
      %v6229 = vadd.f32 0.0, %v6228
      %v6230 = vpop.f32.mrf.mxu0
      %6231 = vmatprep.mubr.f32.mxu0 0.0
      %6232 = vmatmul.mubr.f32.gmra.mxu0 %v6110
      %v6233 = vpop.f32.mrf.mxu0
      %v6234 = vadd.f32 0.0, %v6233
      %v6235 = vpop.f32.mrf.mxu0
      %6236 = vmatprep.mubr.f32.mxu0 0.0
      %6237 = vmatmul.mubr.f32.gmra.mxu0 %v6113
      %v6238 = vpop.f32.mrf.mxu0
      %v6239 = vadd.f32 0.0, %v6238
      %v6240 = vpop.f32.mrf.mxu0
      %6241 = vmatprep.mubr.f32.mxu0 0.0
      %6242 = vmatmul.mubr.f32.gmra.mxu0 %v6116
      %v6243 = vpop.f32.mrf.mxu0
      %v6244 = vadd.f32 0.0, %v6243
      %v6245 = vpop.f32.mrf.mxu0
      %6246 = vmatprep.mubr.f32.mxu0 0.0
      %6247 = vmatmul.mubr.f32.gmra.mxu0 %v6119
      %v6248 = vpop.f32.mrf.mxu0
      %v6249 = vadd.f32 0.0, %v6248
      %v6250 = vpop.f32.mrf.mxu0
      %6251 = vmatprep.mubr.f32.mxu0 0.0
      %6252 = vmatmul.mubr.f32.gmra.mxu0 %v6122
      %v6253 = vpop.f32.mrf.mxu0
      %v6254 = vadd.f32 0.0, %v6253
      %v6255 = vpop.f32.mrf.mxu0
      %6256 = vmatprep.mubr.f32.mxu0 0.0
      %6257 = vmatmul.mubr.f32.gmra.mxu0 %v6125
      %v6258 = vpop.f32.mrf.mxu0
      %v6259 = vadd.f32 0.0, %v6258
      %v6260 = vpop.f32.mrf.mxu0
      %6261 = vmatprep.mubr.f32.mxu0 0.0
      %6262 = vmatmul.mubr.f32.gmra.mxu0 %v6128
      %v6263 = vpop.f32.mrf.mxu0
      %v6264 = vadd.f32 0.0, %v6263
      %v6265 = vpop.f32.mrf.mxu0
      %6266 = vmatprep.mubr.f32.mxu0 0.0
      %6267 = vmatmul.mubr.f32.gmra.mxu0 %v6131
      %v6268 = vpop.f32.mrf.mxu0
      %v6269 = vadd.f32 0.0, %v6268
      %v6270 = vpop.f32.mrf.mxu0
      %6271 = vmatprep.mubr.f32.mxu0 0.0
      %6272 = vmatmul.mubr.f32.gmra.mxu0 %v6134
      %v6273 = vpop.f32.mrf.mxu0
      %v6274 = vadd.f32 0.0, %v6273
      %v6275 = vpop.f32.mrf.mxu0
      %6276 = vmatprep.mubr.f32.mxu0 0.0
      %6277 = vmatmul.mubr.f32.gmra.mxu0 %v6137
      %v6278 = vpop.f32.mrf.mxu0
      %v6279 = vadd.f32 0.0, %v6278
      %v6280 = vpop.f32.mrf.mxu0
      %6281 = vmatprep.mubr.f32.mxu0 0.0
      %6282 = vmatmul.mubr.f32.gmra.mxu0 %v6140
      %v6283 = vpop.f32.mrf.mxu0
      %v6284 = vadd.f32 0.0, %v6283
      %v6285 = vpop.f32.mrf.mxu0
      %6286 = vdwg.mxu0
      %v6287 = vadd.f32 %v6061, %v6209
      %v6288 = vadd.f32 %v6062, %v6214
      %v6289 = vadd.f32 %v6063, %v6219
      %v6290 = vadd.f32 %v6064, %v6224
      %v6291 = vadd.f32 %v6065, %v6229
      %v6292 = vadd.f32 %v6066, %v6234
      %v6293 = vadd.f32 %v6067, %v6239
      %v6294 = vadd.f32 %v6068, %v6244
      %v6295 = vadd.f32 %v6069, %v6249
      %v6296 = vadd.f32 %v6070, %v6254
      %v6297 = vadd.f32 %v6071, %v6259
      %v6298 = vadd.f32 %v6072, %v6264
      %v6299 = vadd.f32 %v6073, %v6269
      %v6300 = vadd.f32 %v6074, %v6274
      %v6301 = vadd.f32 %v6075, %v6279
      %v6302 = vadd.f32 %v6076, %v6284
      %s6303 = scalar_lea.vmem %s5, 1152
      %v6304 = vld [vmem:[%s6303] sm:$0xff]
      %v6305 = vld [vmem:[%s6303 + $0x8] sm:$0xff]
      %v6306 = vld [vmem:[%s6303 + $0x10] sm:$0xff]
      %v6307 = vld [vmem:[%s6303 + $0x18] sm:$0xff]
      %v6308 = vld [vmem:[%s6303 + $0x20] sm:$0xff]
      %v6309 = vld [vmem:[%s6303 + $0x28] sm:$0xff]
      %v6310 = vld [vmem:[%s6303 + $0x30] sm:$0xff]
      %v6311 = vld [vmem:[%s6303 + $0x38] sm:$0xff]
      %v6312 = vld [vmem:[%s6303 + $0x40] sm:$0xff]
      %v6313 = vld [vmem:[%s6303 + $0x48] sm:$0xff]
      %v6314 = vld [vmem:[%s6303 + $0x50] sm:$0xff]
      %v6315 = vld [vmem:[%s6303 + $0x58] sm:$0xff]
      %v6316 = vld [vmem:[%s6303 + $0x60] sm:$0xff]
      %v6317 = vld [vmem:[%s6303 + $0x68] sm:$0xff]
      %v6318 = vld [vmem:[%s6303 + $0x70] sm:$0xff]
      %v6319 = vld [vmem:[%s6303 + $0x78] sm:$0xff]
      %6328 = vrot.lane.b32.xlu0 %v4080, 96
      %v6329 = vpop.permute.xlu0 %6328
      %6330 = vrot.lane.b32.xlu0 %v4088, 96
      %v6331 = vpop.permute.xlu0 %6330
      %6332 = vrot.lane.b32.xlu0 %v4096, 96
      %v6333 = vpop.permute.xlu0 %6332
      %6334 = vrot.lane.b32.xlu0 %v4104, 96
      %v6335 = vpop.permute.xlu0 %6334
      %6336 = vrot.lane.b32.xlu0 %v4112, 96
      %v6337 = vpop.permute.xlu0 %6336
      %6338 = vrot.lane.b32.xlu0 %v4120, 96
      %v6339 = vpop.permute.xlu0 %6338
      %6340 = vrot.lane.b32.xlu0 %v4128, 96
      %v6341 = vpop.permute.xlu0 %6340
      %6342 = vrot.lane.b32.xlu0 %v4136, 96
      %v6343 = vpop.permute.xlu0 %6342
      %v6353 = vsel %vm1502, %v6304, 0
      %v6356 = vsel %vm1502, %v6305, 0
      %v6359 = vsel %vm1502, %v6306, 0
      %v6362 = vsel %vm1502, %v6307, 0
      %v6365 = vsel %vm1502, %v6308, 0
      %v6368 = vsel %vm1502, %v6309, 0
      %v6371 = vsel %vm1502, %v6310, 0
      %v6374 = vsel %vm1502, %v6311, 0
      %v6377 = vsel %vm1502, %v6312, 0
      %v6380 = vsel %vm1502, %v6313, 0
      %v6383 = vsel %vm1502, %v6314, 0
      %v6386 = vsel %vm1502, %v6315, 0
      %v6389 = vsel %vm1502, %v6316, 0
      %v6392 = vsel %vm1502, %v6317, 0
      %v6395 = vsel %vm1502, %v6318, 0
      %v6398 = vsel %vm1502, %v6319, 0
      %6400 = vmatprep.subr.mxu0 0.0
      %6401 = vmatpush1.msra.mxu0 0.0
      %6402 = vmatprep.subr.mxu0 0.0
      %6403 = vmatpush1.msra.mxu0 0.0
      %6404 = vmatprep.subr.mxu0 0.0
      %6405 = vmatpush1.msra.mxu0 0.0
      %6406 = vmatprep.subr.mxu0 0.0
      %6407 = vmatpush1.msra.mxu0 0.0
      %6408 = vmatprep.subr.mxu0 0.0
      %6409 = vmatpush1.msra.mxu0 0.0
      %6410 = vmatprep.subr.mxu0 0.0
      %6411 = vmatpush1.msra.mxu0 0.0
      %6412 = vmatprep.subr.mxu0 0.0
      %6413 = vmatpush1.msra.mxu0 0.0
      %6414 = vmatprep.subr.mxu0 0.0
      %6415 = vmatpush1.msra.mxu0 0.0
      %6416 = vmatprep.subr.mxu0 0.0
      %6417 = vmatpush1.msra.mxu0 %v6343
      %6418 = vmatprep.subr.mxu0 0.0
      %6419 = vmatpush1.msra.mxu0 %v6341
      %6420 = vmatprep.subr.mxu0 0.0
      %6421 = vmatpush1.msra.mxu0 %v6339
      %6422 = vmatprep.subr.mxu0 0.0
      %6423 = vmatpush1.msra.mxu0 %v6337
      %6424 = vmatprep.subr.mxu0 0.0
      %6425 = vmatpush1.msra.mxu0 %v6335
      %6426 = vmatprep.subr.mxu0 0.0
      %6427 = vmatpush1.msra.mxu0 %v6333
      %6428 = vmatprep.subr.mxu0 0.0
      %6429 = vmatpush1.msra.mxu0 %v6331
      %6430 = vmatprep.subr.mxu0 0.0
      %6431 = vmatpush1.msra.mxu0 %v6329
      %6432 = vmatprep.subr.mxu0 0.0
      %6433 = vmatpush2.msra.mxu0 0.0
      %6434 = vmatprep.subr.mxu0 0.0
      %6435 = vmatpush2.msra.mxu0 0.0
      %6436 = vmatprep.subr.mxu0 0.0
      %6437 = vmatpush2.msra.mxu0 0.0
      %6438 = vmatprep.subr.mxu0 0.0
      %6439 = vmatpush2.msra.mxu0 0.0
      %6440 = vmatprep.subr.mxu0 0.0
      %6441 = vmatpush2.msra.mxu0 0.0
      %6442 = vmatprep.subr.mxu0 0.0
      %6443 = vmatpush2.msra.mxu0 0.0
      %6444 = vmatprep.subr.mxu0 0.0
      %6445 = vmatpush2.msra.mxu0 0.0
      %6446 = vmatprep.subr.mxu0 0.0
      %6447 = vmatpush2.msra.mxu0 0.0
      %6448 = vmatprep.subr.mxu0 0.0
      %6449 = vmatpush2.msra.mxu0 0.0
      %6450 = vmatprep.subr.mxu0 0.0
      %6451 = vmatpush2.msra.mxu0 0.0
      %6452 = vmatprep.subr.mxu0 0.0
      %6453 = vmatpush2.msra.mxu0 0.0
      %6454 = vmatprep.subr.mxu0 0.0
      %6455 = vmatpush2.msra.mxu0 0.0
      %6456 = vmatprep.subr.mxu0 0.0
      %6457 = vmatpush2.msra.mxu0 0.0
      %6458 = vmatprep.subr.mxu0 0.0
      %6459 = vmatpush2.msra.mxu0 0.0
      %6460 = vmatprep.subr.mxu0 0.0
      %6461 = vmatpush2.msra.mxu0 0.0
      %6462 = vmatprep.subr.mxu0 0.0
      %6463 = vmatpush2.msra.mxu0 0.0
      %6464 = vmatprep.mubr.f32.mxu0 0.0
      %6465 = vmatmul.mubr.f32.gmra.mxu0 %v6353
      %v6466 = vpop.f32.mrf.mxu0
      %v6467 = vadd.f32 0.0, %v6466
      %v6468 = vpop.f32.mrf.mxu0
      %6469 = vmatprep.mubr.f32.mxu0 0.0
      %6470 = vmatmul.mubr.f32.gmra.mxu0 %v6356
      %v6471 = vpop.f32.mrf.mxu0
      %v6472 = vadd.f32 0.0, %v6471
      %v6473 = vpop.f32.mrf.mxu0
      %6474 = vmatprep.mubr.f32.mxu0 0.0
      %6475 = vmatmul.mubr.f32.gmra.mxu0 %v6359
      %v6476 = vpop.f32.mrf.mxu0
      %v6477 = vadd.f32 0.0, %v6476
      %v6478 = vpop.f32.mrf.mxu0
      %6479 = vmatprep.mubr.f32.mxu0 0.0
      %6480 = vmatmul.mubr.f32.gmra.mxu0 %v6362
      %v6481 = vpop.f32.mrf.mxu0
      %v6482 = vadd.f32 0.0, %v6481
      %v6483 = vpop.f32.mrf.mxu0
      %6484 = vmatprep.mubr.f32.mxu0 0.0
      %6485 = vmatmul.mubr.f32.gmra.mxu0 %v6365
      %v6486 = vpop.f32.mrf.mxu0
      %v6487 = vadd.f32 0.0, %v6486
      %v6488 = vpop.f32.mrf.mxu0
      %6489 = vmatprep.mubr.f32.mxu0 0.0
      %6490 = vmatmul.mubr.f32.gmra.mxu0 %v6368
      %v6491 = vpop.f32.mrf.mxu0
      %v6492 = vadd.f32 0.0, %v6491
      %v6493 = vpop.f32.mrf.mxu0
      %6494 = vmatprep.mubr.f32.mxu0 0.0
      %6495 = vmatmul.mubr.f32.gmra.mxu0 %v6371
      %v6496 = vpop.f32.mrf.mxu0
      %v6497 = vadd.f32 0.0, %v6496
      %v6498 = vpop.f32.mrf.mxu0
      %6499 = vmatprep.mubr.f32.mxu0 0.0
      %6500 = vmatmul.mubr.f32.gmra.mxu0 %v6374
      %v6501 = vpop.f32.mrf.mxu0
      %v6502 = vadd.f32 0.0, %v6501
      %v6503 = vpop.f32.mrf.mxu0
      %6504 = vmatprep.mubr.f32.mxu0 0.0
      %6505 = vmatmul.mubr.f32.gmra.mxu0 %v6377
      %v6506 = vpop.f32.mrf.mxu0
      %v6507 = vadd.f32 0.0, %v6506
      %v6508 = vpop.f32.mrf.mxu0
      %6509 = vmatprep.mubr.f32.mxu0 0.0
      %6510 = vmatmul.mubr.f32.gmra.mxu0 %v6380
      %v6511 = vpop.f32.mrf.mxu0
      %v6512 = vadd.f32 0.0, %v6511
      %v6513 = vpop.f32.mrf.mxu0
      %6514 = vmatprep.mubr.f32.mxu0 0.0
      %6515 = vmatmul.mubr.f32.gmra.mxu0 %v6383
      %v6516 = vpop.f32.mrf.mxu0
      %v6517 = vadd.f32 0.0, %v6516
      %v6518 = vpop.f32.mrf.mxu0
      %6519 = vmatprep.mubr.f32.mxu0 0.0
      %6520 = vmatmul.mubr.f32.gmra.mxu0 %v6386
      %v6521 = vpop.f32.mrf.mxu0
      %v6522 = vadd.f32 0.0, %v6521
      %v6523 = vpop.f32.mrf.mxu0
      %6524 = vmatprep.mubr.f32.mxu0 0.0
      %6525 = vmatmul.mubr.f32.gmra.mxu0 %v6389
      %v6526 = vpop.f32.mrf.mxu0
      %v6527 = vadd.f32 0.0, %v6526
      %v6528 = vpop.f32.mrf.mxu0
      %6529 = vmatprep.mubr.f32.mxu0 0.0
      %6530 = vmatmul.mubr.f32.gmra.mxu0 %v6392
      %v6531 = vpop.f32.mrf.mxu0
      %v6532 = vadd.f32 0.0, %v6531
      %v6533 = vpop.f32.mrf.mxu0
      %6534 = vmatprep.mubr.f32.mxu0 0.0
      %6535 = vmatmul.mubr.f32.gmra.mxu0 %v6395
      %v6536 = vpop.f32.mrf.mxu0
      %v6537 = vadd.f32 0.0, %v6536
      %v6538 = vpop.f32.mrf.mxu0
      %6539 = vmatprep.mubr.f32.mxu0 0.0
      %6540 = vmatmul.mubr.f32.gmra.mxu0 %v6398
      %v6541 = vpop.f32.mrf.mxu0
      %v6542 = vadd.f32 0.0, %v6541
      %v6543 = vpop.f32.mrf.mxu0
      %6544 = vdwg.mxu0
      %v6545 = vadd.f32 %v6287, %v6467
      %v6546 = vadd.f32 %v6288, %v6472
      %v6547 = vadd.f32 %v6289, %v6477
      %v6548 = vadd.f32 %v6290, %v6482
      %v6549 = vadd.f32 %v6291, %v6487
      %v6550 = vadd.f32 %v6292, %v6492
      %v6551 = vadd.f32 %v6293, %v6497
      %v6552 = vadd.f32 %v6294, %v6502
      %v6553 = vadd.f32 %v6295, %v6507
      %v6554 = vadd.f32 %v6296, %v6512
      %v6555 = vadd.f32 %v6297, %v6517
      %v6556 = vadd.f32 %v6298, %v6522
      %v6557 = vadd.f32 %v6299, %v6527
      %v6558 = vadd.f32 %v6300, %v6532
      %v6559 = vadd.f32 %v6301, %v6537
      %v6560 = vadd.f32 %v6302, %v6542
      %s6561 = scalar_lea.vmem %s5, 1280
      %v6562 = vld [vmem:[%s6561] sm:$0xff]
      %v6563 = vld [vmem:[%s6561 + $0x8] sm:$0xff]
      %v6564 = vld [vmem:[%s6561 + $0x10] sm:$0xff]
      %v6565 = vld [vmem:[%s6561 + $0x18] sm:$0xff]
      %v6566 = vld [vmem:[%s6561 + $0x20] sm:$0xff]
      %v6567 = vld [vmem:[%s6561 + $0x28] sm:$0xff]
      %v6568 = vld [vmem:[%s6561 + $0x30] sm:$0xff]
      %v6569 = vld [vmem:[%s6561 + $0x38] sm:$0xff]
      %v6570 = vld [vmem:[%s6561 + $0x40] sm:$0xff]
      %v6571 = vld [vmem:[%s6561 + $0x48] sm:$0xff]
      %v6572 = vld [vmem:[%s6561 + $0x50] sm:$0xff]
      %v6573 = vld [vmem:[%s6561 + $0x58] sm:$0xff]
      %v6574 = vld [vmem:[%s6561 + $0x60] sm:$0xff]
      %v6575 = vld [vmem:[%s6561 + $0x68] sm:$0xff]
      %v6576 = vld [vmem:[%s6561 + $0x70] sm:$0xff]
      %v6577 = vld [vmem:[%s6561 + $0x78] sm:$0xff]
      %6578 = vrot.lane.b32.xlu0 %v4080, 64
      %v6579 = vpop.permute.xlu0 %6578
      %6580 = vrot.lane.b32.xlu0 %v4088, 64
      %v6581 = vpop.permute.xlu0 %6580
      %6582 = vrot.lane.b32.xlu0 %v4096, 64
      %v6583 = vpop.permute.xlu0 %6582
      %6584 = vrot.lane.b32.xlu0 %v4104, 64
      %v6585 = vpop.permute.xlu0 %6584
      %6586 = vrot.lane.b32.xlu0 %v4112, 64
      %v6587 = vpop.permute.xlu0 %6586
      %6588 = vrot.lane.b32.xlu0 %v4120, 64
      %v6589 = vpop.permute.xlu0 %6588
      %6590 = vrot.lane.b32.xlu0 %v4128, 64
      %v6591 = vpop.permute.xlu0 %6590
      %6592 = vrot.lane.b32.xlu0 %v4136, 64
      %v6593 = vpop.permute.xlu0 %6592
      %v6603 = vsel %vm1502, %v6562, 0
      %v6606 = vsel %vm1502, %v6563, 0
      %v6609 = vsel %vm1502, %v6564, 0
      %v6612 = vsel %vm1502, %v6565, 0
      %v6615 = vsel %vm1502, %v6566, 0
      %v6618 = vsel %vm1502, %v6567, 0
      %v6621 = vsel %vm1502, %v6568, 0
      %v6624 = vsel %vm1502, %v6569, 0
      %v6627 = vsel %vm1502, %v6570, 0
      %v6630 = vsel %vm1502, %v6571, 0
      %v6633 = vsel %vm1502, %v6572, 0
      %v6636 = vsel %vm1502, %v6573, 0
      %v6639 = vsel %vm1502, %v6574, 0
      %v6642 = vsel %vm1502, %v6575, 0
      %v6645 = vsel %vm1502, %v6576, 0
      %v6648 = vsel %vm1502, %v6577, 0
      %6650 = vmatprep.subr.mxu0 0.0
      %6651 = vmatpush1.msra.mxu0 0.0
      %6652 = vmatprep.subr.mxu0 0.0
      %6653 = vmatpush1.msra.mxu0 0.0
      %6654 = vmatprep.subr.mxu0 0.0
      %6655 = vmatpush1.msra.mxu0 0.0
      %6656 = vmatprep.subr.mxu0 0.0
      %6657 = vmatpush1.msra.mxu0 0.0
      %6658 = vmatprep.subr.mxu0 0.0
      %6659 = vmatpush1.msra.mxu0 0.0
      %6660 = vmatprep.subr.mxu0 0.0
      %6661 = vmatpush1.msra.mxu0 0.0
      %6662 = vmatprep.subr.mxu0 0.0
      %6663 = vmatpush1.msra.mxu0 0.0
      %6664 = vmatprep.subr.mxu0 0.0
      %6665 = vmatpush1.msra.mxu0 0.0
      %6666 = vmatprep.subr.mxu0 0.0
      %6667 = vmatpush1.msra.mxu0 %v6593
      %6668 = vmatprep.subr.mxu0 0.0
      %6669 = vmatpush1.msra.mxu0 %v6591
      %6670 = vmatprep.subr.mxu0 0.0
      %6671 = vmatpush1.msra.mxu0 %v6589
      %6672 = vmatprep.subr.mxu0 0.0
      %6673 = vmatpush1.msra.mxu0 %v6587
      %6674 = vmatprep.subr.mxu0 0.0
      %6675 = vmatpush1.msra.mxu0 %v6585
      %6676 = vmatprep.subr.mxu0 0.0
      %6677 = vmatpush1.msra.mxu0 %v6583
      %6678 = vmatprep.subr.mxu0 0.0
      %6679 = vmatpush1.msra.mxu0 %v6581
      %6680 = vmatprep.subr.mxu0 0.0
      %6681 = vmatpush1.msra.mxu0 %v6579
      %6682 = vmatprep.subr.mxu0 0.0
      %6683 = vmatpush2.msra.mxu0 0.0
      %6684 = vmatprep.subr.mxu0 0.0
      %6685 = vmatpush2.msra.mxu0 0.0
      %6686 = vmatprep.subr.mxu0 0.0
      %6687 = vmatpush2.msra.mxu0 0.0
      %6688 = vmatprep.subr.mxu0 0.0
      %6689 = vmatpush2.msra.mxu0 0.0
      %6690 = vmatprep.subr.mxu0 0.0
      %6691 = vmatpush2.msra.mxu0 0.0
      %6692 = vmatprep.subr.mxu0 0.0
      %6693 = vmatpush2.msra.mxu0 0.0
      %6694 = vmatprep.subr.mxu0 0.0
      %6695 = vmatpush2.msra.mxu0 0.0
      %6696 = vmatprep.subr.mxu0 0.0
      %6697 = vmatpush2.msra.mxu0 0.0
      %6698 = vmatprep.subr.mxu0 0.0
      %6699 = vmatpush2.msra.mxu0 0.0
      %6700 = vmatprep.subr.mxu0 0.0
      %6701 = vmatpush2.msra.mxu0 0.0
      %6702 = vmatprep.subr.mxu0 0.0
      %6703 = vmatpush2.msra.mxu0 0.0
      %6704 = vmatprep.subr.mxu0 0.0
      %6705 = vmatpush2.msra.mxu0 0.0
      %6706 = vmatprep.subr.mxu0 0.0
      %6707 = vmatpush2.msra.mxu0 0.0
      %6708 = vmatprep.subr.mxu0 0.0
      %6709 = vmatpush2.msra.mxu0 0.0
      %6710 = vmatprep.subr.mxu0 0.0
      %6711 = vmatpush2.msra.mxu0 0.0
      %6712 = vmatprep.subr.mxu0 0.0
      %6713 = vmatpush2.msra.mxu0 0.0
      %6714 = vmatprep.mubr.f32.mxu0 0.0
      %6715 = vmatmul.mubr.f32.gmra.mxu0 %v6603
      %v6716 = vpop.f32.mrf.mxu0
      %v6717 = vadd.f32 0.0, %v6716
      %v6718 = vpop.f32.mrf.mxu0
      %6719 = vmatprep.mubr.f32.mxu0 0.0
      %6720 = vmatmul.mubr.f32.gmra.mxu0 %v6606
      %v6721 = vpop.f32.mrf.mxu0
      %v6722 = vadd.f32 0.0, %v6721
      %v6723 = vpop.f32.mrf.mxu0
      %6724 = vmatprep.mubr.f32.mxu0 0.0
      %6725 = vmatmul.mubr.f32.gmra.mxu0 %v6609
      %v6726 = vpop.f32.mrf.mxu0
      %v6727 = vadd.f32 0.0, %v6726
      %v6728 = vpop.f32.mrf.mxu0
      %6729 = vmatprep.mubr.f32.mxu0 0.0
      %6730 = vmatmul.mubr.f32.gmra.mxu0 %v6612
      %v6731 = vpop.f32.mrf.mxu0
      %v6732 = vadd.f32 0.0, %v6731
      %v6733 = vpop.f32.mrf.mxu0
      %6734 = vmatprep.mubr.f32.mxu0 0.0
      %6735 = vmatmul.mubr.f32.gmra.mxu0 %v6615
      %v6736 = vpop.f32.mrf.mxu0
      %v6737 = vadd.f32 0.0, %v6736
      %v6738 = vpop.f32.mrf.mxu0
      %6739 = vmatprep.mubr.f32.mxu0 0.0
      %6740 = vmatmul.mubr.f32.gmra.mxu0 %v6618
      %v6741 = vpop.f32.mrf.mxu0
      %v6742 = vadd.f32 0.0, %v6741
      %v6743 = vpop.f32.mrf.mxu0
      %6744 = vmatprep.mubr.f32.mxu0 0.0
      %6745 = vmatmul.mubr.f32.gmra.mxu0 %v6621
      %v6746 = vpop.f32.mrf.mxu0
      %v6747 = vadd.f32 0.0, %v6746
      %v6748 = vpop.f32.mrf.mxu0
      %6749 = vmatprep.mubr.f32.mxu0 0.0
      %6750 = vmatmul.mubr.f32.gmra.mxu0 %v6624
      %v6751 = vpop.f32.mrf.mxu0
      %v6752 = vadd.f32 0.0, %v6751
      %v6753 = vpop.f32.mrf.mxu0
      %6754 = vmatprep.mubr.f32.mxu0 0.0
      %6755 = vmatmul.mubr.f32.gmra.mxu0 %v6627
      %v6756 = vpop.f32.mrf.mxu0
      %v6757 = vadd.f32 0.0, %v6756
      %v6758 = vpop.f32.mrf.mxu0
      %6759 = vmatprep.mubr.f32.mxu0 0.0
      %6760 = vmatmul.mubr.f32.gmra.mxu0 %v6630
      %v6761 = vpop.f32.mrf.mxu0
      %v6762 = vadd.f32 0.0, %v6761
      %v6763 = vpop.f32.mrf.mxu0
      %6764 = vmatprep.mubr.f32.mxu0 0.0
      %6765 = vmatmul.mubr.f32.gmra.mxu0 %v6633
      %v6766 = vpop.f32.mrf.mxu0
      %v6767 = vadd.f32 0.0, %v6766
      %v6768 = vpop.f32.mrf.mxu0
      %6769 = vmatprep.mubr.f32.mxu0 0.0
      %6770 = vmatmul.mubr.f32.gmra.mxu0 %v6636
      %v6771 = vpop.f32.mrf.mxu0
      %v6772 = vadd.f32 0.0, %v6771
      %v6773 = vpop.f32.mrf.mxu0
      %6774 = vmatprep.mubr.f32.mxu0 0.0
      %6775 = vmatmul.mubr.f32.gmra.mxu0 %v6639
      %v6776 = vpop.f32.mrf.mxu0
      %v6777 = vadd.f32 0.0, %v6776
      %v6778 = vpop.f32.mrf.mxu0
      %6779 = vmatprep.mubr.f32.mxu0 0.0
      %6780 = vmatmul.mubr.f32.gmra.mxu0 %v6642
      %v6781 = vpop.f32.mrf.mxu0
      %v6782 = vadd.f32 0.0, %v6781
      %v6783 = vpop.f32.mrf.mxu0
      %6784 = vmatprep.mubr.f32.mxu0 0.0
      %6785 = vmatmul.mubr.f32.gmra.mxu0 %v6645
      %v6786 = vpop.f32.mrf.mxu0
      %v6787 = vadd.f32 0.0, %v6786
      %v6788 = vpop.f32.mrf.mxu0
      %6789 = vmatprep.mubr.f32.mxu0 0.0
      %6790 = vmatmul.mubr.f32.gmra.mxu0 %v6648
      %v6791 = vpop.f32.mrf.mxu0
      %v6792 = vadd.f32 0.0, %v6791
      %v6793 = vpop.f32.mrf.mxu0
      %6794 = vdwg.mxu0
      %v6795 = vadd.f32 %v6545, %v6717
      %v6796 = vadd.f32 %v6546, %v6722
      %v6797 = vadd.f32 %v6547, %v6727
      %v6798 = vadd.f32 %v6548, %v6732
      %v6799 = vadd.f32 %v6549, %v6737
      %v6800 = vadd.f32 %v6550, %v6742
      %v6801 = vadd.f32 %v6551, %v6747
      %v6802 = vadd.f32 %v6552, %v6752
      %v6803 = vadd.f32 %v6553, %v6757
      %v6804 = vadd.f32 %v6554, %v6762
      %v6805 = vadd.f32 %v6555, %v6767
      %v6806 = vadd.f32 %v6556, %v6772
      %v6807 = vadd.f32 %v6557, %v6777
      %v6808 = vadd.f32 %v6558, %v6782
      %v6809 = vadd.f32 %v6559, %v6787
      %v6810 = vadd.f32 %v6560, %v6792
      %s6811 = scalar_lea.vmem %s5, 1408
      %v6812 = vld [vmem:[%s6811] sm:$0xff]
      %v6813 = vld [vmem:[%s6811 + $0x8] sm:$0xff]
      %v6814 = vld [vmem:[%s6811 + $0x10] sm:$0xff]
      %v6815 = vld [vmem:[%s6811 + $0x18] sm:$0xff]
      %v6816 = vld [vmem:[%s6811 + $0x20] sm:$0xff]
      %v6817 = vld [vmem:[%s6811 + $0x28] sm:$0xff]
      %v6818 = vld [vmem:[%s6811 + $0x30] sm:$0xff]
      %v6819 = vld [vmem:[%s6811 + $0x38] sm:$0xff]
      %v6820 = vld [vmem:[%s6811 + $0x40] sm:$0xff]
      %v6821 = vld [vmem:[%s6811 + $0x48] sm:$0xff]
      %v6822 = vld [vmem:[%s6811 + $0x50] sm:$0xff]
      %v6823 = vld [vmem:[%s6811 + $0x58] sm:$0xff]
      %v6824 = vld [vmem:[%s6811 + $0x60] sm:$0xff]
      %v6825 = vld [vmem:[%s6811 + $0x68] sm:$0xff]
      %v6826 = vld [vmem:[%s6811 + $0x70] sm:$0xff]
      %v6827 = vld [vmem:[%s6811 + $0x78] sm:$0xff]
      %6828 = vrot.lane.b32.xlu0 %v4080, 32
      %v6829 = vpop.permute.xlu0 %6828
      %6830 = vrot.lane.b32.xlu0 %v4088, 32
      %v6831 = vpop.permute.xlu0 %6830
      %6832 = vrot.lane.b32.xlu0 %v4096, 32
      %v6833 = vpop.permute.xlu0 %6832
      %6834 = vrot.lane.b32.xlu0 %v4104, 32
      %v6835 = vpop.permute.xlu0 %6834
      %6836 = vrot.lane.b32.xlu0 %v4112, 32
      %v6837 = vpop.permute.xlu0 %6836
      %6838 = vrot.lane.b32.xlu0 %v4120, 32
      %v6839 = vpop.permute.xlu0 %6838
      %6840 = vrot.lane.b32.xlu0 %v4128, 32
      %v6841 = vpop.permute.xlu0 %6840
      %6842 = vrot.lane.b32.xlu0 %v4136, 32
      %v6843 = vpop.permute.xlu0 %6842
      %v6853 = vsel %vm1502, %v6812, 0
      %v6856 = vsel %vm1502, %v6813, 0
      %v6859 = vsel %vm1502, %v6814, 0
      %v6862 = vsel %vm1502, %v6815, 0
      %v6865 = vsel %vm1502, %v6816, 0
      %v6868 = vsel %vm1502, %v6817, 0
      %v6871 = vsel %vm1502, %v6818, 0
      %v6874 = vsel %vm1502, %v6819, 0
      %v6877 = vsel %vm1502, %v6820, 0
      %v6880 = vsel %vm1502, %v6821, 0
      %v6883 = vsel %vm1502, %v6822, 0
      %v6886 = vsel %vm1502, %v6823, 0
      %v6889 = vsel %vm1502, %v6824, 0
      %v6892 = vsel %vm1502, %v6825, 0
      %v6895 = vsel %vm1502, %v6826, 0
      %v6898 = vsel %vm1502, %v6827, 0
      %6900 = vmatprep.subr.mxu0 0.0
      %6901 = vmatpush1.msra.mxu0 0.0
      %6902 = vmatprep.subr.mxu0 0.0
      %6903 = vmatpush1.msra.mxu0 0.0
      %6904 = vmatprep.subr.mxu0 0.0
      %6905 = vmatpush1.msra.mxu0 0.0
      %6906 = vmatprep.subr.mxu0 0.0
      %6907 = vmatpush1.msra.mxu0 0.0
      %6908 = vmatprep.subr.mxu0 0.0
      %6909 = vmatpush1.msra.mxu0 0.0
      %6910 = vmatprep.subr.mxu0 0.0
      %6911 = vmatpush1.msra.mxu0 0.0
      %6912 = vmatprep.subr.mxu0 0.0
      %6913 = vmatpush1.msra.mxu0 0.0
      %6914 = vmatprep.subr.mxu0 0.0
      %6915 = vmatpush1.msra.mxu0 0.0
      %6916 = vmatprep.subr.mxu0 0.0
      %6917 = vmatpush1.msra.mxu0 %v6843
      %6918 = vmatprep.subr.mxu0 0.0
      %6919 = vmatpush1.msra.mxu0 %v6841
      %6920 = vmatprep.subr.mxu0 0.0
      %6921 = vmatpush1.msra.mxu0 %v6839
      %6922 = vmatprep.subr.mxu0 0.0
      %6923 = vmatpush1.msra.mxu0 %v6837
      %6924 = vmatprep.subr.mxu0 0.0
      %6925 = vmatpush1.msra.mxu0 %v6835
      %6926 = vmatprep.subr.mxu0 0.0
      %6927 = vmatpush1.msra.mxu0 %v6833
      %6928 = vmatprep.subr.mxu0 0.0
      %6929 = vmatpush1.msra.mxu0 %v6831
      %6930 = vmatprep.subr.mxu0 0.0
      %6931 = vmatpush1.msra.mxu0 %v6829
      %6932 = vmatprep.subr.mxu0 0.0
      %6933 = vmatpush2.msra.mxu0 0.0
      %6934 = vmatprep.subr.mxu0 0.0
      %6935 = vmatpush2.msra.mxu0 0.0
      %6936 = vmatprep.subr.mxu0 0.0
      %6937 = vmatpush2.msra.mxu0 0.0
      %6938 = vmatprep.subr.mxu0 0.0
      %6939 = vmatpush2.msra.mxu0 0.0
      %6940 = vmatprep.subr.mxu0 0.0
      %6941 = vmatpush2.msra.mxu0 0.0
      %6942 = vmatprep.subr.mxu0 0.0
      %6943 = vmatpush2.msra.mxu0 0.0
      %6944 = vmatprep.subr.mxu0 0.0
      %6945 = vmatpush2.msra.mxu0 0.0
      %6946 = vmatprep.subr.mxu0 0.0
      %6947 = vmatpush2.msra.mxu0 0.0
      %6948 = vmatprep.subr.mxu0 0.0
      %6949 = vmatpush2.msra.mxu0 0.0
      %6950 = vmatprep.subr.mxu0 0.0
      %6951 = vmatpush2.msra.mxu0 0.0
      %6952 = vmatprep.subr.mxu0 0.0
      %6953 = vmatpush2.msra.mxu0 0.0
      %6954 = vmatprep.subr.mxu0 0.0
      %6955 = vmatpush2.msra.mxu0 0.0
      %6956 = vmatprep.subr.mxu0 0.0
      %6957 = vmatpush2.msra.mxu0 0.0
      %6958 = vmatprep.subr.mxu0 0.0
      %6959 = vmatpush2.msra.mxu0 0.0
      %6960 = vmatprep.subr.mxu0 0.0
      %6961 = vmatpush2.msra.mxu0 0.0
      %6962 = vmatprep.subr.mxu0 0.0
      %6963 = vmatpush2.msra.mxu0 0.0
      %6964 = vmatprep.mubr.f32.mxu0 0.0
      %6965 = vmatmul.mubr.f32.gmra.mxu0 %v6853
      %v6966 = vpop.f32.mrf.mxu0
      %v6967 = vadd.f32 0.0, %v6966
      %v6968 = vpop.f32.mrf.mxu0
      %6969 = vmatprep.mubr.f32.mxu0 0.0
      %6970 = vmatmul.mubr.f32.gmra.mxu0 %v6856
      %v6971 = vpop.f32.mrf.mxu0
      %v6972 = vadd.f32 0.0, %v6971
      %v6973 = vpop.f32.mrf.mxu0
      %6974 = vmatprep.mubr.f32.mxu0 0.0
      %6975 = vmatmul.mubr.f32.gmra.mxu0 %v6859
      %v6976 = vpop.f32.mrf.mxu0
      %v6977 = vadd.f32 0.0, %v6976
      %v6978 = vpop.f32.mrf.mxu0
      %6979 = vmatprep.mubr.f32.mxu0 0.0
      %6980 = vmatmul.mubr.f32.gmra.mxu0 %v6862
      %v6981 = vpop.f32.mrf.mxu0
      %v6982 = vadd.f32 0.0, %v6981
      %v6983 = vpop.f32.mrf.mxu0
      %6984 = vmatprep.mubr.f32.mxu0 0.0
      %6985 = vmatmul.mubr.f32.gmra.mxu0 %v6865
      %v6986 = vpop.f32.mrf.mxu0
      %v6987 = vadd.f32 0.0, %v6986
      %v6988 = vpop.f32.mrf.mxu0
      %6989 = vmatprep.mubr.f32.mxu0 0.0
      %6990 = vmatmul.mubr.f32.gmra.mxu0 %v6868
      %v6991 = vpop.f32.mrf.mxu0
      %v6992 = vadd.f32 0.0, %v6991
      %v6993 = vpop.f32.mrf.mxu0
      %6994 = vmatprep.mubr.f32.mxu0 0.0
      %6995 = vmatmul.mubr.f32.gmra.mxu0 %v6871
      %v6996 = vpop.f32.mrf.mxu0
      %v6997 = vadd.f32 0.0, %v6996
      %v6998 = vpop.f32.mrf.mxu0
      %6999 = vmatprep.mubr.f32.mxu0 0.0
      %7000 = vmatmul.mubr.f32.gmra.mxu0 %v6874
      %v7001 = vpop.f32.mrf.mxu0
      %v7002 = vadd.f32 0.0, %v7001
      %v7003 = vpop.f32.mrf.mxu0
      %7004 = vmatprep.mubr.f32.mxu0 0.0
      %7005 = vmatmul.mubr.f32.gmra.mxu0 %v6877
      %v7006 = vpop.f32.mrf.mxu0
      %v7007 = vadd.f32 0.0, %v7006
      %v7008 = vpop.f32.mrf.mxu0
      %7009 = vmatprep.mubr.f32.mxu0 0.0
      %7010 = vmatmul.mubr.f32.gmra.mxu0 %v6880
      %v7011 = vpop.f32.mrf.mxu0
      %v7012 = vadd.f32 0.0, %v7011
      %v7013 = vpop.f32.mrf.mxu0
      %7014 = vmatprep.mubr.f32.mxu0 0.0
      %7015 = vmatmul.mubr.f32.gmra.mxu0 %v6883
      %v7016 = vpop.f32.mrf.mxu0
      %v7017 = vadd.f32 0.0, %v7016
      %v7018 = vpop.f32.mrf.mxu0
      %7019 = vmatprep.mubr.f32.mxu0 0.0
      %7020 = vmatmul.mubr.f32.gmra.mxu0 %v6886
      %v7021 = vpop.f32.mrf.mxu0
      %v7022 = vadd.f32 0.0, %v7021
      %v7023 = vpop.f32.mrf.mxu0
      %7024 = vmatprep.mubr.f32.mxu0 0.0
      %7025 = vmatmul.mubr.f32.gmra.mxu0 %v6889
      %v7026 = vpop.f32.mrf.mxu0
      %v7027 = vadd.f32 0.0, %v7026
      %v7028 = vpop.f32.mrf.mxu0
      %7029 = vmatprep.mubr.f32.mxu0 0.0
      %7030 = vmatmul.mubr.f32.gmra.mxu0 %v6892
      %v7031 = vpop.f32.mrf.mxu0
      %v7032 = vadd.f32 0.0, %v7031
      %v7033 = vpop.f32.mrf.mxu0
      %7034 = vmatprep.mubr.f32.mxu0 0.0
      %7035 = vmatmul.mubr.f32.gmra.mxu0 %v6895
      %v7036 = vpop.f32.mrf.mxu0
      %v7037 = vadd.f32 0.0, %v7036
      %v7038 = vpop.f32.mrf.mxu0
      %7039 = vmatprep.mubr.f32.mxu0 0.0
      %7040 = vmatmul.mubr.f32.gmra.mxu0 %v6898
      %v7041 = vpop.f32.mrf.mxu0
      %v7042 = vadd.f32 0.0, %v7041
      %v7043 = vpop.f32.mrf.mxu0
      %7044 = vdwg.mxu0
      %v7045 = vadd.f32 %v6795, %v6967
      %v7046 = vadd.f32 %v6796, %v6972
      %v7047 = vadd.f32 %v6797, %v6977
      %v7048 = vadd.f32 %v6798, %v6982
      %v7049 = vadd.f32 %v6799, %v6987
      %v7050 = vadd.f32 %v6800, %v6992
      %v7051 = vadd.f32 %v6801, %v6997
      %v7052 = vadd.f32 %v6802, %v7002
      %v7053 = vadd.f32 %v6803, %v7007
      %v7054 = vadd.f32 %v6804, %v7012
      %v7055 = vadd.f32 %v6805, %v7017
      %v7056 = vadd.f32 %v6806, %v7022
      %v7057 = vadd.f32 %v6807, %v7027
      %v7058 = vadd.f32 %v6808, %v7032
      %v7059 = vadd.f32 %v6809, %v7037
      %v7060 = vadd.f32 %v6810, %v7042
      %s7061 = scalar_lea.vmem %s5, 1536
      %v7062 = vld [vmem:[%s7061] sm:$0xff]
      %v7063 = vld [vmem:[%s7061 + $0x8] sm:$0xff]
      %v7064 = vld [vmem:[%s7061 + $0x10] sm:$0xff]
      %v7065 = vld [vmem:[%s7061 + $0x18] sm:$0xff]
      %v7066 = vld [vmem:[%s7061 + $0x20] sm:$0xff]
      %v7067 = vld [vmem:[%s7061 + $0x28] sm:$0xff]
      %v7068 = vld [vmem:[%s7061 + $0x30] sm:$0xff]
      %v7069 = vld [vmem:[%s7061 + $0x38] sm:$0xff]
      %v7070 = vld [vmem:[%s7061 + $0x40] sm:$0xff]
      %v7071 = vld [vmem:[%s7061 + $0x48] sm:$0xff]
      %v7072 = vld [vmem:[%s7061 + $0x50] sm:$0xff]
      %v7073 = vld [vmem:[%s7061 + $0x58] sm:$0xff]
      %v7074 = vld [vmem:[%s7061 + $0x60] sm:$0xff]
      %v7075 = vld [vmem:[%s7061 + $0x68] sm:$0xff]
      %v7076 = vld [vmem:[%s7061 + $0x70] sm:$0xff]
      %v7077 = vld [vmem:[%s7061 + $0x78] sm:$0xff]
      %v7079 = vsel %vm1502, %v7062, 0
      %v7082 = vsel %vm1502, %v7063, 0
      %v7085 = vsel %vm1502, %v7064, 0
      %v7088 = vsel %vm1502, %v7065, 0
      %v7091 = vsel %vm1502, %v7066, 0
      %v7094 = vsel %vm1502, %v7067, 0
      %v7097 = vsel %vm1502, %v7068, 0
      %v7100 = vsel %vm1502, %v7069, 0
      %v7103 = vsel %vm1502, %v7070, 0
      %v7106 = vsel %vm1502, %v7071, 0
      %v7109 = vsel %vm1502, %v7072, 0
      %v7112 = vsel %vm1502, %v7073, 0
      %v7115 = vsel %vm1502, %v7074, 0
      %v7118 = vsel %vm1502, %v7075, 0
      %v7121 = vsel %vm1502, %v7076, 0
      %v7124 = vsel %vm1502, %v7077, 0
      %7126 = vmatprep.subr.mxu0 0.0
      %7127 = vmatpush1.msra.mxu0 0.0
      %7128 = vmatprep.subr.mxu0 0.0
      %7129 = vmatpush1.msra.mxu0 0.0
      %7130 = vmatprep.subr.mxu0 0.0
      %7131 = vmatpush1.msra.mxu0 0.0
      %7132 = vmatprep.subr.mxu0 0.0
      %7133 = vmatpush1.msra.mxu0 0.0
      %7134 = vmatprep.subr.mxu0 0.0
      %7135 = vmatpush1.msra.mxu0 0.0
      %7136 = vmatprep.subr.mxu0 0.0
      %7137 = vmatpush1.msra.mxu0 0.0
      %7138 = vmatprep.subr.mxu0 0.0
      %7139 = vmatpush1.msra.mxu0 0.0
      %7140 = vmatprep.subr.mxu0 0.0
      %7141 = vmatpush1.msra.mxu0 0.0
      %7142 = vmatprep.subr.mxu0 0.0
      %7143 = vmatpush1.msra.mxu0 %v4137
      %7144 = vmatprep.subr.mxu0 0.0
      %7145 = vmatpush1.msra.mxu0 %v4129
      %7146 = vmatprep.subr.mxu0 0.0
      %7147 = vmatpush1.msra.mxu0 %v4121
      %7148 = vmatprep.subr.mxu0 0.0
      %7149 = vmatpush1.msra.mxu0 %v4113
      %7150 = vmatprep.subr.mxu0 0.0
      %7151 = vmatpush1.msra.mxu0 %v4105
      %7152 = vmatprep.subr.mxu0 0.0
      %7153 = vmatpush1.msra.mxu0 %v4097
      %7154 = vmatprep.subr.mxu0 0.0
      %7155 = vmatpush1.msra.mxu0 %v4089
      %7156 = vmatprep.subr.mxu0 0.0
      %7157 = vmatpush1.msra.mxu0 %v4081
      %7158 = vmatprep.subr.mxu0 0.0
      %7159 = vmatpush2.msra.mxu0 0.0
      %7160 = vmatprep.subr.mxu0 0.0
      %7161 = vmatpush2.msra.mxu0 0.0
      %7162 = vmatprep.subr.mxu0 0.0
      %7163 = vmatpush2.msra.mxu0 0.0
      %7164 = vmatprep.subr.mxu0 0.0
      %7165 = vmatpush2.msra.mxu0 0.0
      %7166 = vmatprep.subr.mxu0 0.0
      %7167 = vmatpush2.msra.mxu0 0.0
      %7168 = vmatprep.subr.mxu0 0.0
      %7169 = vmatpush2.msra.mxu0 0.0
      %7170 = vmatprep.subr.mxu0 0.0
      %7171 = vmatpush2.msra.mxu0 0.0
      %7172 = vmatprep.subr.mxu0 0.0
      %7173 = vmatpush2.msra.mxu0 0.0
      %7174 = vmatprep.subr.mxu0 0.0
      %7175 = vmatpush2.msra.mxu0 0.0
      %7176 = vmatprep.subr.mxu0 0.0
      %7177 = vmatpush2.msra.mxu0 0.0
      %7178 = vmatprep.subr.mxu0 0.0
      %7179 = vmatpush2.msra.mxu0 0.0
      %7180 = vmatprep.subr.mxu0 0.0
      %7181 = vmatpush2.msra.mxu0 0.0
      %7182 = vmatprep.subr.mxu0 0.0
      %7183 = vmatpush2.msra.mxu0 0.0
      %7184 = vmatprep.subr.mxu0 0.0
      %7185 = vmatpush2.msra.mxu0 0.0
      %7186 = vmatprep.subr.mxu0 0.0
      %7187 = vmatpush2.msra.mxu0 0.0
      %7188 = vmatprep.subr.mxu0 0.0
      %7189 = vmatpush2.msra.mxu0 0.0
      %7190 = vmatprep.mubr.f32.mxu0 0.0
      %7191 = vmatmul.mubr.f32.gmra.mxu0 %v7079
      %v7192 = vpop.f32.mrf.mxu0
      %v7193 = vadd.f32 0.0, %v7192
      %v7194 = vpop.f32.mrf.mxu0
      %7195 = vmatprep.mubr.f32.mxu0 0.0
      %7196 = vmatmul.mubr.f32.gmra.mxu0 %v7082
      %v7197 = vpop.f32.mrf.mxu0
      %v7198 = vadd.f32 0.0, %v7197
      %v7199 = vpop.f32.mrf.mxu0
      %7200 = vmatprep.mubr.f32.mxu0 0.0
      %7201 = vmatmul.mubr.f32.gmra.mxu0 %v7085
      %v7202 = vpop.f32.mrf.mxu0
      %v7203 = vadd.f32 0.0, %v7202
      %v7204 = vpop.f32.mrf.mxu0
      %7205 = vmatprep.mubr.f32.mxu0 0.0
      %7206 = vmatmul.mubr.f32.gmra.mxu0 %v7088
      %v7207 = vpop.f32.mrf.mxu0
      %v7208 = vadd.f32 0.0, %v7207
      %v7209 = vpop.f32.mrf.mxu0
      %7210 = vmatprep.mubr.f32.mxu0 0.0
      %7211 = vmatmul.mubr.f32.gmra.mxu0 %v7091
      %v7212 = vpop.f32.mrf.mxu0
      %v7213 = vadd.f32 0.0, %v7212
      %v7214 = vpop.f32.mrf.mxu0
      %7215 = vmatprep.mubr.f32.mxu0 0.0
      %7216 = vmatmul.mubr.f32.gmra.mxu0 %v7094
      %v7217 = vpop.f32.mrf.mxu0
      %v7218 = vadd.f32 0.0, %v7217
      %v7219 = vpop.f32.mrf.mxu0
      %7220 = vmatprep.mubr.f32.mxu0 0.0
      %7221 = vmatmul.mubr.f32.gmra.mxu0 %v7097
      %v7222 = vpop.f32.mrf.mxu0
      %v7223 = vadd.f32 0.0, %v7222
      %v7224 = vpop.f32.mrf.mxu0
      %7225 = vmatprep.mubr.f32.mxu0 0.0
      %7226 = vmatmul.mubr.f32.gmra.mxu0 %v7100
      %v7227 = vpop.f32.mrf.mxu0
      %v7228 = vadd.f32 0.0, %v7227
      %v7229 = vpop.f32.mrf.mxu0
      %7230 = vmatprep.mubr.f32.mxu0 0.0
      %7231 = vmatmul.mubr.f32.gmra.mxu0 %v7103
      %v7232 = vpop.f32.mrf.mxu0
      %v7233 = vadd.f32 0.0, %v7232
      %v7234 = vpop.f32.mrf.mxu0
      %7235 = vmatprep.mubr.f32.mxu0 0.0
      %7236 = vmatmul.mubr.f32.gmra.mxu0 %v7106
      %v7237 = vpop.f32.mrf.mxu0
      %v7238 = vadd.f32 0.0, %v7237
      %v7239 = vpop.f32.mrf.mxu0
      %7240 = vmatprep.mubr.f32.mxu0 0.0
      %7241 = vmatmul.mubr.f32.gmra.mxu0 %v7109
      %v7242 = vpop.f32.mrf.mxu0
      %v7243 = vadd.f32 0.0, %v7242
      %v7244 = vpop.f32.mrf.mxu0
      %7245 = vmatprep.mubr.f32.mxu0 0.0
      %7246 = vmatmul.mubr.f32.gmra.mxu0 %v7112
      %v7247 = vpop.f32.mrf.mxu0
      %v7248 = vadd.f32 0.0, %v7247
      %v7249 = vpop.f32.mrf.mxu0
      %7250 = vmatprep.mubr.f32.mxu0 0.0
      %7251 = vmatmul.mubr.f32.gmra.mxu0 %v7115
      %v7252 = vpop.f32.mrf.mxu0
      %v7253 = vadd.f32 0.0, %v7252
      %v7254 = vpop.f32.mrf.mxu0
      %7255 = vmatprep.mubr.f32.mxu0 0.0
      %7256 = vmatmul.mubr.f32.gmra.mxu0 %v7118
      %v7257 = vpop.f32.mrf.mxu0
      %v7258 = vadd.f32 0.0, %v7257
      %v7259 = vpop.f32.mrf.mxu0
      %7260 = vmatprep.mubr.f32.mxu0 0.0
      %7261 = vmatmul.mubr.f32.gmra.mxu0 %v7121
      %v7262 = vpop.f32.mrf.mxu0
      %v7263 = vadd.f32 0.0, %v7262
      %v7264 = vpop.f32.mrf.mxu0
      %7265 = vmatprep.mubr.f32.mxu0 0.0
      %7266 = vmatmul.mubr.f32.gmra.mxu0 %v7124
      %v7267 = vpop.f32.mrf.mxu0
      %v7268 = vadd.f32 0.0, %v7267
      %v7269 = vpop.f32.mrf.mxu0
      %7270 = vdwg.mxu0
      %v7271 = vadd.f32 %v7045, %v7193
      %v7272 = vadd.f32 %v7046, %v7198
      %v7273 = vadd.f32 %v7047, %v7203
      %v7274 = vadd.f32 %v7048, %v7208
      %v7275 = vadd.f32 %v7049, %v7213
      %v7276 = vadd.f32 %v7050, %v7218
      %v7277 = vadd.f32 %v7051, %v7223
      %v7278 = vadd.f32 %v7052, %v7228
      %v7279 = vadd.f32 %v7053, %v7233
      %v7280 = vadd.f32 %v7054, %v7238
      %v7281 = vadd.f32 %v7055, %v7243
      %v7282 = vadd.f32 %v7056, %v7248
      %v7283 = vadd.f32 %v7057, %v7253
      %v7284 = vadd.f32 %v7058, %v7258
      %v7285 = vadd.f32 %v7059, %v7263
      %v7286 = vadd.f32 %v7060, %v7268
      %s7287 = scalar_lea.vmem %s5, 1664
      %v7288 = vld [vmem:[%s7287] sm:$0xff]
      %v7289 = vld [vmem:[%s7287 + $0x8] sm:$0xff]
      %v7290 = vld [vmem:[%s7287 + $0x10] sm:$0xff]
      %v7291 = vld [vmem:[%s7287 + $0x18] sm:$0xff]
      %v7292 = vld [vmem:[%s7287 + $0x20] sm:$0xff]
      %v7293 = vld [vmem:[%s7287 + $0x28] sm:$0xff]
      %v7294 = vld [vmem:[%s7287 + $0x30] sm:$0xff]
      %v7295 = vld [vmem:[%s7287 + $0x38] sm:$0xff]
      %v7296 = vld [vmem:[%s7287 + $0x40] sm:$0xff]
      %v7297 = vld [vmem:[%s7287 + $0x48] sm:$0xff]
      %v7298 = vld [vmem:[%s7287 + $0x50] sm:$0xff]
      %v7299 = vld [vmem:[%s7287 + $0x58] sm:$0xff]
      %v7300 = vld [vmem:[%s7287 + $0x60] sm:$0xff]
      %v7301 = vld [vmem:[%s7287 + $0x68] sm:$0xff]
      %v7302 = vld [vmem:[%s7287 + $0x70] sm:$0xff]
      %v7303 = vld [vmem:[%s7287 + $0x78] sm:$0xff]
      %7312 = vrot.lane.b32.xlu0 %v4081, 96
      %v7313 = vpop.permute.xlu0 %7312
      %7314 = vrot.lane.b32.xlu0 %v4089, 96
      %v7315 = vpop.permute.xlu0 %7314
      %7316 = vrot.lane.b32.xlu0 %v4097, 96
      %v7317 = vpop.permute.xlu0 %7316
      %7318 = vrot.lane.b32.xlu0 %v4105, 96
      %v7319 = vpop.permute.xlu0 %7318
      %7320 = vrot.lane.b32.xlu0 %v4113, 96
      %v7321 = vpop.permute.xlu0 %7320
      %7322 = vrot.lane.b32.xlu0 %v4121, 96
      %v7323 = vpop.permute.xlu0 %7322
      %7324 = vrot.lane.b32.xlu0 %v4129, 96
      %v7325 = vpop.permute.xlu0 %7324
      %7326 = vrot.lane.b32.xlu0 %v4137, 96
      %v7327 = vpop.permute.xlu0 %7326
      %v7337 = vsel %vm1502, %v7288, 0
      %v7340 = vsel %vm1502, %v7289, 0
      %v7343 = vsel %vm1502, %v7290, 0
      %v7346 = vsel %vm1502, %v7291, 0
      %v7349 = vsel %vm1502, %v7292, 0
      %v7352 = vsel %vm1502, %v7293, 0
      %v7355 = vsel %vm1502, %v7294, 0
      %v7358 = vsel %vm1502, %v7295, 0
      %v7361 = vsel %vm1502, %v7296, 0
      %v7364 = vsel %vm1502, %v7297, 0
      %v7367 = vsel %vm1502, %v7298, 0
      %v7370 = vsel %vm1502, %v7299, 0
      %v7373 = vsel %vm1502, %v7300, 0
      %v7376 = vsel %vm1502, %v7301, 0
      %v7379 = vsel %vm1502, %v7302, 0
      %v7382 = vsel %vm1502, %v7303, 0
      %7384 = vmatprep.subr.mxu0 0.0
      %7385 = vmatpush1.msra.mxu0 0.0
      %7386 = vmatprep.subr.mxu0 0.0
      %7387 = vmatpush1.msra.mxu0 0.0
      %7388 = vmatprep.subr.mxu0 0.0
      %7389 = vmatpush1.msra.mxu0 0.0
      %7390 = vmatprep.subr.mxu0 0.0
      %7391 = vmatpush1.msra.mxu0 0.0
      %7392 = vmatprep.subr.mxu0 0.0
      %7393 = vmatpush1.msra.mxu0 0.0
      %7394 = vmatprep.subr.mxu0 0.0
      %7395 = vmatpush1.msra.mxu0 0.0
      %7396 = vmatprep.subr.mxu0 0.0
      %7397 = vmatpush1.msra.mxu0 0.0
      %7398 = vmatprep.subr.mxu0 0.0
      %7399 = vmatpush1.msra.mxu0 0.0
      %7400 = vmatprep.subr.mxu0 0.0
      %7401 = vmatpush1.msra.mxu0 %v7327
      %7402 = vmatprep.subr.mxu0 0.0
      %7403 = vmatpush1.msra.mxu0 %v7325
      %7404 = vmatprep.subr.mxu0 0.0
      %7405 = vmatpush1.msra.mxu0 %v7323
      %7406 = vmatprep.subr.mxu0 0.0
      %7407 = vmatpush1.msra.mxu0 %v7321
      %7408 = vmatprep.subr.mxu0 0.0
      %7409 = vmatpush1.msra.mxu0 %v7319
      %7410 = vmatprep.subr.mxu0 0.0
      %7411 = vmatpush1.msra.mxu0 %v7317
      %7412 = vmatprep.subr.mxu0 0.0
      %7413 = vmatpush1.msra.mxu0 %v7315
      %7414 = vmatprep.subr.mxu0 0.0
      %7415 = vmatpush1.msra.mxu0 %v7313
      %7416 = vmatprep.subr.mxu0 0.0
      %7417 = vmatpush2.msra.mxu0 0.0
      %7418 = vmatprep.subr.mxu0 0.0
      %7419 = vmatpush2.msra.mxu0 0.0
      %7420 = vmatprep.subr.mxu0 0.0
      %7421 = vmatpush2.msra.mxu0 0.0
      %7422 = vmatprep.subr.mxu0 0.0
      %7423 = vmatpush2.msra.mxu0 0.0
      %7424 = vmatprep.subr.mxu0 0.0
      %7425 = vmatpush2.msra.mxu0 0.0
      %7426 = vmatprep.subr.mxu0 0.0
      %7427 = vmatpush2.msra.mxu0 0.0
      %7428 = vmatprep.subr.mxu0 0.0
      %7429 = vmatpush2.msra.mxu0 0.0
      %7430 = vmatprep.subr.mxu0 0.0
      %7431 = vmatpush2.msra.mxu0 0.0
      %7432 = vmatprep.subr.mxu0 0.0
      %7433 = vmatpush2.msra.mxu0 0.0
      %7434 = vmatprep.subr.mxu0 0.0
      %7435 = vmatpush2.msra.mxu0 0.0
      %7436 = vmatprep.subr.mxu0 0.0
      %7437 = vmatpush2.msra.mxu0 0.0
      %7438 = vmatprep.subr.mxu0 0.0
      %7439 = vmatpush2.msra.mxu0 0.0
      %7440 = vmatprep.subr.mxu0 0.0
      %7441 = vmatpush2.msra.mxu0 0.0
      %7442 = vmatprep.subr.mxu0 0.0
      %7443 = vmatpush2.msra.mxu0 0.0
      %7444 = vmatprep.subr.mxu0 0.0
      %7445 = vmatpush2.msra.mxu0 0.0
      %7446 = vmatprep.subr.mxu0 0.0
      %7447 = vmatpush2.msra.mxu0 0.0
      %7448 = vmatprep.mubr.f32.mxu0 0.0
      %7449 = vmatmul.mubr.f32.gmra.mxu0 %v7337
      %v7450 = vpop.f32.mrf.mxu0
      %v7451 = vadd.f32 0.0, %v7450
      %v7452 = vpop.f32.mrf.mxu0
      %7453 = vmatprep.mubr.f32.mxu0 0.0
      %7454 = vmatmul.mubr.f32.gmra.mxu0 %v7340
      %v7455 = vpop.f32.mrf.mxu0
      %v7456 = vadd.f32 0.0, %v7455
      %v7457 = vpop.f32.mrf.mxu0
      %7458 = vmatprep.mubr.f32.mxu0 0.0
      %7459 = vmatmul.mubr.f32.gmra.mxu0 %v7343
      %v7460 = vpop.f32.mrf.mxu0
      %v7461 = vadd.f32 0.0, %v7460
      %v7462 = vpop.f32.mrf.mxu0
      %7463 = vmatprep.mubr.f32.mxu0 0.0
      %7464 = vmatmul.mubr.f32.gmra.mxu0 %v7346
      %v7465 = vpop.f32.mrf.mxu0
      %v7466 = vadd.f32 0.0, %v7465
      %v7467 = vpop.f32.mrf.mxu0
      %7468 = vmatprep.mubr.f32.mxu0 0.0
      %7469 = vmatmul.mubr.f32.gmra.mxu0 %v7349
      %v7470 = vpop.f32.mrf.mxu0
      %v7471 = vadd.f32 0.0, %v7470
      %v7472 = vpop.f32.mrf.mxu0
      %7473 = vmatprep.mubr.f32.mxu0 0.0
      %7474 = vmatmul.mubr.f32.gmra.mxu0 %v7352
      %v7475 = vpop.f32.mrf.mxu0
      %v7476 = vadd.f32 0.0, %v7475
      %v7477 = vpop.f32.mrf.mxu0
      %7478 = vmatprep.mubr.f32.mxu0 0.0
      %7479 = vmatmul.mubr.f32.gmra.mxu0 %v7355
      %v7480 = vpop.f32.mrf.mxu0
      %v7481 = vadd.f32 0.0, %v7480
      %v7482 = vpop.f32.mrf.mxu0
      %7483 = vmatprep.mubr.f32.mxu0 0.0
      %7484 = vmatmul.mubr.f32.gmra.mxu0 %v7358
      %v7485 = vpop.f32.mrf.mxu0
      %v7486 = vadd.f32 0.0, %v7485
      %v7487 = vpop.f32.mrf.mxu0
      %7488 = vmatprep.mubr.f32.mxu0 0.0
      %7489 = vmatmul.mubr.f32.gmra.mxu0 %v7361
      %v7490 = vpop.f32.mrf.mxu0
      %v7491 = vadd.f32 0.0, %v7490
      %v7492 = vpop.f32.mrf.mxu0
      %7493 = vmatprep.mubr.f32.mxu0 0.0
      %7494 = vmatmul.mubr.f32.gmra.mxu0 %v7364
      %v7495 = vpop.f32.mrf.mxu0
      %v7496 = vadd.f32 0.0, %v7495
      %v7497 = vpop.f32.mrf.mxu0
      %7498 = vmatprep.mubr.f32.mxu0 0.0
      %7499 = vmatmul.mubr.f32.gmra.mxu0 %v7367
      %v7500 = vpop.f32.mrf.mxu0
      %v7501 = vadd.f32 0.0, %v7500
      %v7502 = vpop.f32.mrf.mxu0
      %7503 = vmatprep.mubr.f32.mxu0 0.0
      %7504 = vmatmul.mubr.f32.gmra.mxu0 %v7370
      %v7505 = vpop.f32.mrf.mxu0
      %v7506 = vadd.f32 0.0, %v7505
      %v7507 = vpop.f32.mrf.mxu0
      %7508 = vmatprep.mubr.f32.mxu0 0.0
      %7509 = vmatmul.mubr.f32.gmra.mxu0 %v7373
      %v7510 = vpop.f32.mrf.mxu0
      %v7511 = vadd.f32 0.0, %v7510
      %v7512 = vpop.f32.mrf.mxu0
      %7513 = vmatprep.mubr.f32.mxu0 0.0
      %7514 = vmatmul.mubr.f32.gmra.mxu0 %v7376
      %v7515 = vpop.f32.mrf.mxu0
      %v7516 = vadd.f32 0.0, %v7515
      %v7517 = vpop.f32.mrf.mxu0
      %7518 = vmatprep.mubr.f32.mxu0 0.0
      %7519 = vmatmul.mubr.f32.gmra.mxu0 %v7379
      %v7520 = vpop.f32.mrf.mxu0
      %v7521 = vadd.f32 0.0, %v7520
      %v7522 = vpop.f32.mrf.mxu0
      %7523 = vmatprep.mubr.f32.mxu0 0.0
      %7524 = vmatmul.mubr.f32.gmra.mxu0 %v7382
      %v7525 = vpop.f32.mrf.mxu0
      %v7526 = vadd.f32 0.0, %v7525
      %v7527 = vpop.f32.mrf.mxu0
      %7528 = vdwg.mxu0
      %v7529 = vadd.f32 %v7271, %v7451
      %v7530 = vadd.f32 %v7272, %v7456
      %v7531 = vadd.f32 %v7273, %v7461
      %v7532 = vadd.f32 %v7274, %v7466
      %v7533 = vadd.f32 %v7275, %v7471
      %v7534 = vadd.f32 %v7276, %v7476
      %v7535 = vadd.f32 %v7277, %v7481
      %v7536 = vadd.f32 %v7278, %v7486
      %v7537 = vadd.f32 %v7279, %v7491
      %v7538 = vadd.f32 %v7280, %v7496
      %v7539 = vadd.f32 %v7281, %v7501
      %v7540 = vadd.f32 %v7282, %v7506
      %v7541 = vadd.f32 %v7283, %v7511
      %v7542 = vadd.f32 %v7284, %v7516
      %v7543 = vadd.f32 %v7285, %v7521
      %v7544 = vadd.f32 %v7286, %v7526
      %s7545 = scalar_lea.vmem %s5, 1792
      %v7546 = vld [vmem:[%s7545] sm:$0xff]
      %v7547 = vld [vmem:[%s7545 + $0x8] sm:$0xff]
      %v7548 = vld [vmem:[%s7545 + $0x10] sm:$0xff]
      %v7549 = vld [vmem:[%s7545 + $0x18] sm:$0xff]
      %v7550 = vld [vmem:[%s7545 + $0x20] sm:$0xff]
      %v7551 = vld [vmem:[%s7545 + $0x28] sm:$0xff]
      %v7552 = vld [vmem:[%s7545 + $0x30] sm:$0xff]
      %v7553 = vld [vmem:[%s7545 + $0x38] sm:$0xff]
      %v7554 = vld [vmem:[%s7545 + $0x40] sm:$0xff]
      %v7555 = vld [vmem:[%s7545 + $0x48] sm:$0xff]
      %v7556 = vld [vmem:[%s7545 + $0x50] sm:$0xff]
      %v7557 = vld [vmem:[%s7545 + $0x58] sm:$0xff]
      %v7558 = vld [vmem:[%s7545 + $0x60] sm:$0xff]
      %v7559 = vld [vmem:[%s7545 + $0x68] sm:$0xff]
      %v7560 = vld [vmem:[%s7545 + $0x70] sm:$0xff]
      %v7561 = vld [vmem:[%s7545 + $0x78] sm:$0xff]
      %7562 = vrot.lane.b32.xlu0 %v4081, 64
      %v7563 = vpop.permute.xlu0 %7562
      %7564 = vrot.lane.b32.xlu0 %v4089, 64
      %v7565 = vpop.permute.xlu0 %7564
      %7566 = vrot.lane.b32.xlu0 %v4097, 64
      %v7567 = vpop.permute.xlu0 %7566
      %7568 = vrot.lane.b32.xlu0 %v4105, 64
      %v7569 = vpop.permute.xlu0 %7568
      %7570 = vrot.lane.b32.xlu0 %v4113, 64
      %v7571 = vpop.permute.xlu0 %7570
      %7572 = vrot.lane.b32.xlu0 %v4121, 64
      %v7573 = vpop.permute.xlu0 %7572
      %7574 = vrot.lane.b32.xlu0 %v4129, 64
      %v7575 = vpop.permute.xlu0 %7574
      %7576 = vrot.lane.b32.xlu0 %v4137, 64
      %v7577 = vpop.permute.xlu0 %7576
      %v7587 = vsel %vm1502, %v7546, 0
      %v7590 = vsel %vm1502, %v7547, 0
      %v7593 = vsel %vm1502, %v7548, 0
      %v7596 = vsel %vm1502, %v7549, 0
      %v7599 = vsel %vm1502, %v7550, 0
      %v7602 = vsel %vm1502, %v7551, 0
      %v7605 = vsel %vm1502, %v7552, 0
      %v7608 = vsel %vm1502, %v7553, 0
      %v7611 = vsel %vm1502, %v7554, 0
      %v7614 = vsel %vm1502, %v7555, 0
      %v7617 = vsel %vm1502, %v7556, 0
      %v7620 = vsel %vm1502, %v7557, 0
      %v7623 = vsel %vm1502, %v7558, 0
      %v7626 = vsel %vm1502, %v7559, 0
      %v7629 = vsel %vm1502, %v7560, 0
      %v7632 = vsel %vm1502, %v7561, 0
      %7634 = vmatprep.subr.mxu0 0.0
      %7635 = vmatpush1.msra.mxu0 0.0
      %7636 = vmatprep.subr.mxu0 0.0
      %7637 = vmatpush1.msra.mxu0 0.0
      %7638 = vmatprep.subr.mxu0 0.0
      %7639 = vmatpush1.msra.mxu0 0.0
      %7640 = vmatprep.subr.mxu0 0.0
      %7641 = vmatpush1.msra.mxu0 0.0
      %7642 = vmatprep.subr.mxu0 0.0
      %7643 = vmatpush1.msra.mxu0 0.0
      %7644 = vmatprep.subr.mxu0 0.0
      %7645 = vmatpush1.msra.mxu0 0.0
      %7646 = vmatprep.subr.mxu0 0.0
      %7647 = vmatpush1.msra.mxu0 0.0
      %7648 = vmatprep.subr.mxu0 0.0
      %7649 = vmatpush1.msra.mxu0 0.0
      %7650 = vmatprep.subr.mxu0 0.0
      %7651 = vmatpush1.msra.mxu0 %v7577
      %7652 = vmatprep.subr.mxu0 0.0
      %7653 = vmatpush1.msra.mxu0 %v7575
      %7654 = vmatprep.subr.mxu0 0.0
      %7655 = vmatpush1.msra.mxu0 %v7573
      %7656 = vmatprep.subr.mxu0 0.0
      %7657 = vmatpush1.msra.mxu0 %v7571
      %7658 = vmatprep.subr.mxu0 0.0
      %7659 = vmatpush1.msra.mxu0 %v7569
      %7660 = vmatprep.subr.mxu0 0.0
      %7661 = vmatpush1.msra.mxu0 %v7567
      %7662 = vmatprep.subr.mxu0 0.0
      %7663 = vmatpush1.msra.mxu0 %v7565
      %7664 = vmatprep.subr.mxu0 0.0
      %7665 = vmatpush1.msra.mxu0 %v7563
      %7666 = vmatprep.subr.mxu0 0.0
      %7667 = vmatpush2.msra.mxu0 0.0
      %7668 = vmatprep.subr.mxu0 0.0
      %7669 = vmatpush2.msra.mxu0 0.0
      %7670 = vmatprep.subr.mxu0 0.0
      %7671 = vmatpush2.msra.mxu0 0.0
      %7672 = vmatprep.subr.mxu0 0.0
      %7673 = vmatpush2.msra.mxu0 0.0
      %7674 = vmatprep.subr.mxu0 0.0
      %7675 = vmatpush2.msra.mxu0 0.0
      %7676 = vmatprep.subr.mxu0 0.0
      %7677 = vmatpush2.msra.mxu0 0.0
      %7678 = vmatprep.subr.mxu0 0.0
      %7679 = vmatpush2.msra.mxu0 0.0
      %7680 = vmatprep.subr.mxu0 0.0
      %7681 = vmatpush2.msra.mxu0 0.0
      %7682 = vmatprep.subr.mxu0 0.0
      %7683 = vmatpush2.msra.mxu0 0.0
      %7684 = vmatprep.subr.mxu0 0.0
      %7685 = vmatpush2.msra.mxu0 0.0
      %7686 = vmatprep.subr.mxu0 0.0
      %7687 = vmatpush2.msra.mxu0 0.0
      %7688 = vmatprep.subr.mxu0 0.0
      %7689 = vmatpush2.msra.mxu0 0.0
      %7690 = vmatprep.subr.mxu0 0.0
      %7691 = vmatpush2.msra.mxu0 0.0
      %7692 = vmatprep.subr.mxu0 0.0
      %7693 = vmatpush2.msra.mxu0 0.0
      %7694 = vmatprep.subr.mxu0 0.0
      %7695 = vmatpush2.msra.mxu0 0.0
      %7696 = vmatprep.subr.mxu0 0.0
      %7697 = vmatpush2.msra.mxu0 0.0
      %7698 = vmatprep.mubr.f32.mxu0 0.0
      %7699 = vmatmul.mubr.f32.gmra.mxu0 %v7587
      %v7700 = vpop.f32.mrf.mxu0
      %v7701 = vadd.f32 0.0, %v7700
      %v7702 = vpop.f32.mrf.mxu0
      %7703 = vmatprep.mubr.f32.mxu0 0.0
      %7704 = vmatmul.mubr.f32.gmra.mxu0 %v7590
      %v7705 = vpop.f32.mrf.mxu0
      %v7706 = vadd.f32 0.0, %v7705
      %v7707 = vpop.f32.mrf.mxu0
      %7708 = vmatprep.mubr.f32.mxu0 0.0
      %7709 = vmatmul.mubr.f32.gmra.mxu0 %v7593
      %v7710 = vpop.f32.mrf.mxu0
      %v7711 = vadd.f32 0.0, %v7710
      %v7712 = vpop.f32.mrf.mxu0
      %7713 = vmatprep.mubr.f32.mxu0 0.0
      %7714 = vmatmul.mubr.f32.gmra.mxu0 %v7596
      %v7715 = vpop.f32.mrf.mxu0
      %v7716 = vadd.f32 0.0, %v7715
      %v7717 = vpop.f32.mrf.mxu0
      %7718 = vmatprep.mubr.f32.mxu0 0.0
      %7719 = vmatmul.mubr.f32.gmra.mxu0 %v7599
      %v7720 = vpop.f32.mrf.mxu0
      %v7721 = vadd.f32 0.0, %v7720
      %v7722 = vpop.f32.mrf.mxu0
      %7723 = vmatprep.mubr.f32.mxu0 0.0
      %7724 = vmatmul.mubr.f32.gmra.mxu0 %v7602
      %v7725 = vpop.f32.mrf.mxu0
      %v7726 = vadd.f32 0.0, %v7725
      %v7727 = vpop.f32.mrf.mxu0
      %7728 = vmatprep.mubr.f32.mxu0 0.0
      %7729 = vmatmul.mubr.f32.gmra.mxu0 %v7605
      %v7730 = vpop.f32.mrf.mxu0
      %v7731 = vadd.f32 0.0, %v7730
      %v7732 = vpop.f32.mrf.mxu0
      %7733 = vmatprep.mubr.f32.mxu0 0.0
      %7734 = vmatmul.mubr.f32.gmra.mxu0 %v7608
      %v7735 = vpop.f32.mrf.mxu0
      %v7736 = vadd.f32 0.0, %v7735
      %v7737 = vpop.f32.mrf.mxu0
      %7738 = vmatprep.mubr.f32.mxu0 0.0
      %7739 = vmatmul.mubr.f32.gmra.mxu0 %v7611
      %v7740 = vpop.f32.mrf.mxu0
      %v7741 = vadd.f32 0.0, %v7740
      %v7742 = vpop.f32.mrf.mxu0
      %7743 = vmatprep.mubr.f32.mxu0 0.0
      %7744 = vmatmul.mubr.f32.gmra.mxu0 %v7614
      %v7745 = vpop.f32.mrf.mxu0
      %v7746 = vadd.f32 0.0, %v7745
      %v7747 = vpop.f32.mrf.mxu0
      %7748 = vmatprep.mubr.f32.mxu0 0.0
      %7749 = vmatmul.mubr.f32.gmra.mxu0 %v7617
      %v7750 = vpop.f32.mrf.mxu0
      %v7751 = vadd.f32 0.0, %v7750
      %v7752 = vpop.f32.mrf.mxu0
      %7753 = vmatprep.mubr.f32.mxu0 0.0
      %7754 = vmatmul.mubr.f32.gmra.mxu0 %v7620
      %v7755 = vpop.f32.mrf.mxu0
      %v7756 = vadd.f32 0.0, %v7755
      %v7757 = vpop.f32.mrf.mxu0
      %7758 = vmatprep.mubr.f32.mxu0 0.0
      %7759 = vmatmul.mubr.f32.gmra.mxu0 %v7623
      %v7760 = vpop.f32.mrf.mxu0
      %v7761 = vadd.f32 0.0, %v7760
      %v7762 = vpop.f32.mrf.mxu0
      %7763 = vmatprep.mubr.f32.mxu0 0.0
      %7764 = vmatmul.mubr.f32.gmra.mxu0 %v7626
      %v7765 = vpop.f32.mrf.mxu0
      %v7766 = vadd.f32 0.0, %v7765
      %v7767 = vpop.f32.mrf.mxu0
      %7768 = vmatprep.mubr.f32.mxu0 0.0
      %7769 = vmatmul.mubr.f32.gmra.mxu0 %v7629
      %v7770 = vpop.f32.mrf.mxu0
      %v7771 = vadd.f32 0.0, %v7770
      %v7772 = vpop.f32.mrf.mxu0
      %7773 = vmatprep.mubr.f32.mxu0 0.0
      %7774 = vmatmul.mubr.f32.gmra.mxu0 %v7632
      %v7775 = vpop.f32.mrf.mxu0
      %v7776 = vadd.f32 0.0, %v7775
      %v7777 = vpop.f32.mrf.mxu0
      %7778 = vdwg.mxu0
      %v7779 = vadd.f32 %v7529, %v7701
      %v7780 = vadd.f32 %v7530, %v7706
      %v7781 = vadd.f32 %v7531, %v7711
      %v7782 = vadd.f32 %v7532, %v7716
      %v7783 = vadd.f32 %v7533, %v7721
      %v7784 = vadd.f32 %v7534, %v7726
      %v7785 = vadd.f32 %v7535, %v7731
      %v7786 = vadd.f32 %v7536, %v7736
      %v7787 = vadd.f32 %v7537, %v7741
      %v7788 = vadd.f32 %v7538, %v7746
      %v7789 = vadd.f32 %v7539, %v7751
      %v7790 = vadd.f32 %v7540, %v7756
      %v7791 = vadd.f32 %v7541, %v7761
      %v7792 = vadd.f32 %v7542, %v7766
      %v7793 = vadd.f32 %v7543, %v7771
      %v7794 = vadd.f32 %v7544, %v7776
      %s7795 = scalar_lea.vmem %s5, 1920
      %v7796 = vld [vmem:[%s7795] sm:$0xff]
      %v7797 = vld [vmem:[%s7795 + $0x8] sm:$0xff]
      %v7798 = vld [vmem:[%s7795 + $0x10] sm:$0xff]
      %v7799 = vld [vmem:[%s7795 + $0x18] sm:$0xff]
      %v7800 = vld [vmem:[%s7795 + $0x20] sm:$0xff]
      %v7801 = vld [vmem:[%s7795 + $0x28] sm:$0xff]
      %v7802 = vld [vmem:[%s7795 + $0x30] sm:$0xff]
      %v7803 = vld [vmem:[%s7795 + $0x38] sm:$0xff]
      %v7804 = vld [vmem:[%s7795 + $0x40] sm:$0xff]
      %v7805 = vld [vmem:[%s7795 + $0x48] sm:$0xff]
      %v7806 = vld [vmem:[%s7795 + $0x50] sm:$0xff]
      %v7807 = vld [vmem:[%s7795 + $0x58] sm:$0xff]
      %v7808 = vld [vmem:[%s7795 + $0x60] sm:$0xff]
      %v7809 = vld [vmem:[%s7795 + $0x68] sm:$0xff]
      %v7810 = vld [vmem:[%s7795 + $0x70] sm:$0xff]
      %v7811 = vld [vmem:[%s7795 + $0x78] sm:$0xff]
      %7812 = vrot.lane.b32.xlu0 %v4081, 32
      %v7813 = vpop.permute.xlu0 %7812
      %7814 = vrot.lane.b32.xlu0 %v4089, 32
      %v7815 = vpop.permute.xlu0 %7814
      %7816 = vrot.lane.b32.xlu0 %v4097, 32
      %v7817 = vpop.permute.xlu0 %7816
      %7818 = vrot.lane.b32.xlu0 %v4105, 32
      %v7819 = vpop.permute.xlu0 %7818
      %7820 = vrot.lane.b32.xlu0 %v4113, 32
      %v7821 = vpop.permute.xlu0 %7820
      %7822 = vrot.lane.b32.xlu0 %v4121, 32
      %v7823 = vpop.permute.xlu0 %7822
      %7824 = vrot.lane.b32.xlu0 %v4129, 32
      %v7825 = vpop.permute.xlu0 %7824
      %7826 = vrot.lane.b32.xlu0 %v4137, 32
      %v7827 = vpop.permute.xlu0 %7826
      %v7837 = vsel %vm1502, %v7796, 0
      %v7840 = vsel %vm1502, %v7797, 0
      %v7843 = vsel %vm1502, %v7798, 0
      %v7846 = vsel %vm1502, %v7799, 0
      %v7849 = vsel %vm1502, %v7800, 0
      %v7852 = vsel %vm1502, %v7801, 0
      %v7855 = vsel %vm1502, %v7802, 0
      %v7858 = vsel %vm1502, %v7803, 0
      %v7861 = vsel %vm1502, %v7804, 0
      %v7864 = vsel %vm1502, %v7805, 0
      %v7867 = vsel %vm1502, %v7806, 0
      %v7870 = vsel %vm1502, %v7807, 0
      %v7873 = vsel %vm1502, %v7808, 0
      %v7876 = vsel %vm1502, %v7809, 0
      %v7879 = vsel %vm1502, %v7810, 0
      %v7882 = vsel %vm1502, %v7811, 0
      %7884 = vmatprep.subr.mxu0 0.0
      %7885 = vmatpush1.msra.mxu0 0.0
      %7886 = vmatprep.subr.mxu0 0.0
      %7887 = vmatpush1.msra.mxu0 0.0
      %7888 = vmatprep.subr.mxu0 0.0
      %7889 = vmatpush1.msra.mxu0 0.0
      %7890 = vmatprep.subr.mxu0 0.0
      %7891 = vmatpush1.msra.mxu0 0.0
      %7892 = vmatprep.subr.mxu0 0.0
      %7893 = vmatpush1.msra.mxu0 0.0
      %7894 = vmatprep.subr.mxu0 0.0
      %7895 = vmatpush1.msra.mxu0 0.0
      %7896 = vmatprep.subr.mxu0 0.0
      %7897 = vmatpush1.msra.mxu0 0.0
      %7898 = vmatprep.subr.mxu0 0.0
      %7899 = vmatpush1.msra.mxu0 0.0
      %7900 = vmatprep.subr.mxu0 0.0
      %7901 = vmatpush1.msra.mxu0 %v7827
      %7902 = vmatprep.subr.mxu0 0.0
      %7903 = vmatpush1.msra.mxu0 %v7825
      %7904 = vmatprep.subr.mxu0 0.0
      %7905 = vmatpush1.msra.mxu0 %v7823
      %7906 = vmatprep.subr.mxu0 0.0
      %7907 = vmatpush1.msra.mxu0 %v7821
      %7908 = vmatprep.subr.mxu0 0.0
      %7909 = vmatpush1.msra.mxu0 %v7819
      %7910 = vmatprep.subr.mxu0 0.0
      %7911 = vmatpush1.msra.mxu0 %v7817
      %7912 = vmatprep.subr.mxu0 0.0
      %7913 = vmatpush1.msra.mxu0 %v7815
      %7914 = vmatprep.subr.mxu0 0.0
      %7915 = vmatpush1.msra.mxu0 %v7813
      %7916 = vmatprep.subr.mxu0 0.0
      %7917 = vmatpush2.msra.mxu0 0.0
      %7918 = vmatprep.subr.mxu0 0.0
      %7919 = vmatpush2.msra.mxu0 0.0
      %7920 = vmatprep.subr.mxu0 0.0
      %7921 = vmatpush2.msra.mxu0 0.0
      %7922 = vmatprep.subr.mxu0 0.0
      %7923 = vmatpush2.msra.mxu0 0.0
      %7924 = vmatprep.subr.mxu0 0.0
      %7925 = vmatpush2.msra.mxu0 0.0
      %7926 = vmatprep.subr.mxu0 0.0
      %7927 = vmatpush2.msra.mxu0 0.0
      %7928 = vmatprep.subr.mxu0 0.0
      %7929 = vmatpush2.msra.mxu0 0.0
      %7930 = vmatprep.subr.mxu0 0.0
      %7931 = vmatpush2.msra.mxu0 0.0
      %7932 = vmatprep.subr.mxu0 0.0
      %7933 = vmatpush2.msra.mxu0 0.0
      %7934 = vmatprep.subr.mxu0 0.0
      %7935 = vmatpush2.msra.mxu0 0.0
      %7936 = vmatprep.subr.mxu0 0.0
      %7937 = vmatpush2.msra.mxu0 0.0
      %7938 = vmatprep.subr.mxu0 0.0
      %7939 = vmatpush2.msra.mxu0 0.0
      %7940 = vmatprep.subr.mxu0 0.0
      %7941 = vmatpush2.msra.mxu0 0.0
      %7942 = vmatprep.subr.mxu0 0.0
      %7943 = vmatpush2.msra.mxu0 0.0
      %7944 = vmatprep.subr.mxu0 0.0
      %7945 = vmatpush2.msra.mxu0 0.0
      %7946 = vmatprep.subr.mxu0 0.0
      %7947 = vmatpush2.msra.mxu0 0.0
      %7948 = vmatprep.mubr.f32.mxu0 0.0
      %7949 = vmatmul.mubr.f32.gmra.mxu0 %v7837
      %v7950 = vpop.f32.mrf.mxu0
      %v7951 = vadd.f32 0.0, %v7950
      %v7952 = vpop.f32.mrf.mxu0
      %7953 = vmatprep.mubr.f32.mxu0 0.0
      %7954 = vmatmul.mubr.f32.gmra.mxu0 %v7840
      %v7955 = vpop.f32.mrf.mxu0
      %v7956 = vadd.f32 0.0, %v7955
      %v7957 = vpop.f32.mrf.mxu0
      %7958 = vmatprep.mubr.f32.mxu0 0.0
      %7959 = vmatmul.mubr.f32.gmra.mxu0 %v7843
      %v7960 = vpop.f32.mrf.mxu0
      %v7961 = vadd.f32 0.0, %v7960
      %v7962 = vpop.f32.mrf.mxu0
      %7963 = vmatprep.mubr.f32.mxu0 0.0
      %7964 = vmatmul.mubr.f32.gmra.mxu0 %v7846
      %v7965 = vpop.f32.mrf.mxu0
      %v7966 = vadd.f32 0.0, %v7965
      %v7967 = vpop.f32.mrf.mxu0
      %7968 = vmatprep.mubr.f32.mxu0 0.0
      %7969 = vmatmul.mubr.f32.gmra.mxu0 %v7849
      %v7970 = vpop.f32.mrf.mxu0
      %v7971 = vadd.f32 0.0, %v7970
      %v7972 = vpop.f32.mrf.mxu0
      %7973 = vmatprep.mubr.f32.mxu0 0.0
      %7974 = vmatmul.mubr.f32.gmra.mxu0 %v7852
      %v7975 = vpop.f32.mrf.mxu0
      %v7976 = vadd.f32 0.0, %v7975
      %v7977 = vpop.f32.mrf.mxu0
      %7978 = vmatprep.mubr.f32.mxu0 0.0
      %7979 = vmatmul.mubr.f32.gmra.mxu0 %v7855
      %v7980 = vpop.f32.mrf.mxu0
      %v7981 = vadd.f32 0.0, %v7980
      %v7982 = vpop.f32.mrf.mxu0
      %7983 = vmatprep.mubr.f32.mxu0 0.0
      %7984 = vmatmul.mubr.f32.gmra.mxu0 %v7858
      %v7985 = vpop.f32.mrf.mxu0
      %v7986 = vadd.f32 0.0, %v7985
      %v7987 = vpop.f32.mrf.mxu0
      %7988 = vmatprep.mubr.f32.mxu0 0.0
      %7989 = vmatmul.mubr.f32.gmra.mxu0 %v7861
      %v7990 = vpop.f32.mrf.mxu0
      %v7991 = vadd.f32 0.0, %v7990
      %v7992 = vpop.f32.mrf.mxu0
      %7993 = vmatprep.mubr.f32.mxu0 0.0
      %7994 = vmatmul.mubr.f32.gmra.mxu0 %v7864
      %v7995 = vpop.f32.mrf.mxu0
      %v7996 = vadd.f32 0.0, %v7995
      %v7997 = vpop.f32.mrf.mxu0
      %7998 = vmatprep.mubr.f32.mxu0 0.0
      %7999 = vmatmul.mubr.f32.gmra.mxu0 %v7867
      %v8000 = vpop.f32.mrf.mxu0
      %v8001 = vadd.f32 0.0, %v8000
      %v8002 = vpop.f32.mrf.mxu0
      %8003 = vmatprep.mubr.f32.mxu0 0.0
      %8004 = vmatmul.mubr.f32.gmra.mxu0 %v7870
      %v8005 = vpop.f32.mrf.mxu0
      %v8006 = vadd.f32 0.0, %v8005
      %v8007 = vpop.f32.mrf.mxu0
      %8008 = vmatprep.mubr.f32.mxu0 0.0
      %8009 = vmatmul.mubr.f32.gmra.mxu0 %v7873
      %v8010 = vpop.f32.mrf.mxu0
      %v8011 = vadd.f32 0.0, %v8010
      %v8012 = vpop.f32.mrf.mxu0
      %8013 = vmatprep.mubr.f32.mxu0 0.0
      %8014 = vmatmul.mubr.f32.gmra.mxu0 %v7876
      %v8015 = vpop.f32.mrf.mxu0
      %v8016 = vadd.f32 0.0, %v8015
      %v8017 = vpop.f32.mrf.mxu0
      %8018 = vmatprep.mubr.f32.mxu0 0.0
      %8019 = vmatmul.mubr.f32.gmra.mxu0 %v7879
      %v8020 = vpop.f32.mrf.mxu0
      %v8021 = vadd.f32 0.0, %v8020
      %v8022 = vpop.f32.mrf.mxu0
      %8023 = vmatprep.mubr.f32.mxu0 0.0
      %8024 = vmatmul.mubr.f32.gmra.mxu0 %v7882
      %v8025 = vpop.f32.mrf.mxu0
      %v8026 = vadd.f32 0.0, %v8025
      %v8027 = vpop.f32.mrf.mxu0
      %8028 = vdwg.mxu0
      %v8029 = vadd.f32 %v7779, %v7951
      %v8030 = vadd.f32 %v7780, %v7956
      %v8031 = vadd.f32 %v7781, %v7961
      %v8032 = vadd.f32 %v7782, %v7966
      %v8033 = vadd.f32 %v7783, %v7971
      %v8034 = vadd.f32 %v7784, %v7976
      %v8035 = vadd.f32 %v7785, %v7981
      %v8036 = vadd.f32 %v7786, %v7986
      %v8037 = vadd.f32 %v7787, %v7991
      %v8038 = vadd.f32 %v7788, %v7996
      %v8039 = vadd.f32 %v7789, %v8001
      %v8040 = vadd.f32 %v7790, %v8006
      %v8041 = vadd.f32 %v7791, %v8011
      %v8042 = vadd.f32 %v7792, %v8016
      %v8043 = vadd.f32 %v7793, %v8021
      %v8044 = vadd.f32 %v7794, %v8026
      %s8045 = scalar_lea.vmem %s5, 2048
      %v8046 = vld [vmem:[%s8045] sm:$0xff]
      %v8047 = vld [vmem:[%s8045 + $0x8] sm:$0xff]
      %v8048 = vld [vmem:[%s8045 + $0x10] sm:$0xff]
      %v8049 = vld [vmem:[%s8045 + $0x18] sm:$0xff]
      %v8050 = vld [vmem:[%s8045 + $0x20] sm:$0xff]
      %v8051 = vld [vmem:[%s8045 + $0x28] sm:$0xff]
      %v8052 = vld [vmem:[%s8045 + $0x30] sm:$0xff]
      %v8053 = vld [vmem:[%s8045 + $0x38] sm:$0xff]
      %v8054 = vld [vmem:[%s8045 + $0x40] sm:$0xff]
      %v8055 = vld [vmem:[%s8045 + $0x48] sm:$0xff]
      %v8056 = vld [vmem:[%s8045 + $0x50] sm:$0xff]
      %v8057 = vld [vmem:[%s8045 + $0x58] sm:$0xff]
      %v8058 = vld [vmem:[%s8045 + $0x60] sm:$0xff]
      %v8059 = vld [vmem:[%s8045 + $0x68] sm:$0xff]
      %v8060 = vld [vmem:[%s8045 + $0x70] sm:$0xff]
      %v8061 = vld [vmem:[%s8045 + $0x78] sm:$0xff]
      %v8063 = vsel %vm1502, %v8046, 0
      %v8066 = vsel %vm1502, %v8047, 0
      %v8069 = vsel %vm1502, %v8048, 0
      %v8072 = vsel %vm1502, %v8049, 0
      %v8075 = vsel %vm1502, %v8050, 0
      %v8078 = vsel %vm1502, %v8051, 0
      %v8081 = vsel %vm1502, %v8052, 0
      %v8084 = vsel %vm1502, %v8053, 0
      %v8087 = vsel %vm1502, %v8054, 0
      %v8090 = vsel %vm1502, %v8055, 0
      %v8093 = vsel %vm1502, %v8056, 0
      %v8096 = vsel %vm1502, %v8057, 0
      %v8099 = vsel %vm1502, %v8058, 0
      %v8102 = vsel %vm1502, %v8059, 0
      %v8105 = vsel %vm1502, %v8060, 0
      %v8108 = vsel %vm1502, %v8061, 0
      %8110 = vmatprep.subr.mxu0 0.0
      %8111 = vmatpush1.msra.mxu0 0.0
      %8112 = vmatprep.subr.mxu0 0.0
      %8113 = vmatpush1.msra.mxu0 0.0
      %8114 = vmatprep.subr.mxu0 0.0
      %8115 = vmatpush1.msra.mxu0 0.0
      %8116 = vmatprep.subr.mxu0 0.0
      %8117 = vmatpush1.msra.mxu0 0.0
      %8118 = vmatprep.subr.mxu0 0.0
      %8119 = vmatpush1.msra.mxu0 0.0
      %8120 = vmatprep.subr.mxu0 0.0
      %8121 = vmatpush1.msra.mxu0 0.0
      %8122 = vmatprep.subr.mxu0 0.0
      %8123 = vmatpush1.msra.mxu0 0.0
      %8124 = vmatprep.subr.mxu0 0.0
      %8125 = vmatpush1.msra.mxu0 0.0
      %8126 = vmatprep.subr.mxu0 0.0
      %8127 = vmatpush1.msra.mxu0 %v4138
      %8128 = vmatprep.subr.mxu0 0.0
      %8129 = vmatpush1.msra.mxu0 %v4130
      %8130 = vmatprep.subr.mxu0 0.0
      %8131 = vmatpush1.msra.mxu0 %v4122
      %8132 = vmatprep.subr.mxu0 0.0
      %8133 = vmatpush1.msra.mxu0 %v4114
      %8134 = vmatprep.subr.mxu0 0.0
      %8135 = vmatpush1.msra.mxu0 %v4106
      %8136 = vmatprep.subr.mxu0 0.0
      %8137 = vmatpush1.msra.mxu0 %v4098
      %8138 = vmatprep.subr.mxu0 0.0
      %8139 = vmatpush1.msra.mxu0 %v4090
      %8140 = vmatprep.subr.mxu0 0.0
      %8141 = vmatpush1.msra.mxu0 %v4082
      %8142 = vmatprep.subr.mxu0 0.0
      %8143 = vmatpush2.msra.mxu0 0.0
      %8144 = vmatprep.subr.mxu0 0.0
      %8145 = vmatpush2.msra.mxu0 0.0
      %8146 = vmatprep.subr.mxu0 0.0
      %8147 = vmatpush2.msra.mxu0 0.0
      %8148 = vmatprep.subr.mxu0 0.0
      %8149 = vmatpush2.msra.mxu0 0.0
      %8150 = vmatprep.subr.mxu0 0.0
      %8151 = vmatpush2.msra.mxu0 0.0
      %8152 = vmatprep.subr.mxu0 0.0
      %8153 = vmatpush2.msra.mxu0 0.0
      %8154 = vmatprep.subr.mxu0 0.0
      %8155 = vmatpush2.msra.mxu0 0.0
      %8156 = vmatprep.subr.mxu0 0.0
      %8157 = vmatpush2.msra.mxu0 0.0
      %8158 = vmatprep.subr.mxu0 0.0
      %8159 = vmatpush2.msra.mxu0 0.0
      %8160 = vmatprep.subr.mxu0 0.0
      %8161 = vmatpush2.msra.mxu0 0.0
      %8162 = vmatprep.subr.mxu0 0.0
      %8163 = vmatpush2.msra.mxu0 0.0
      %8164 = vmatprep.subr.mxu0 0.0
      %8165 = vmatpush2.msra.mxu0 0.0
      %8166 = vmatprep.subr.mxu0 0.0
      %8167 = vmatpush2.msra.mxu0 0.0
      %8168 = vmatprep.subr.mxu0 0.0
      %8169 = vmatpush2.msra.mxu0 0.0
      %8170 = vmatprep.subr.mxu0 0.0
      %8171 = vmatpush2.msra.mxu0 0.0
      %8172 = vmatprep.subr.mxu0 0.0
      %8173 = vmatpush2.msra.mxu0 0.0
      %8174 = vmatprep.mubr.f32.mxu0 0.0
      %8175 = vmatmul.mubr.f32.gmra.mxu0 %v8063
      %v8176 = vpop.f32.mrf.mxu0
      %v8177 = vadd.f32 0.0, %v8176
      %v8178 = vpop.f32.mrf.mxu0
      %8179 = vmatprep.mubr.f32.mxu0 0.0
      %8180 = vmatmul.mubr.f32.gmra.mxu0 %v8066
      %v8181 = vpop.f32.mrf.mxu0
      %v8182 = vadd.f32 0.0, %v8181
      %v8183 = vpop.f32.mrf.mxu0
      %8184 = vmatprep.mubr.f32.mxu0 0.0
      %8185 = vmatmul.mubr.f32.gmra.mxu0 %v8069
      %v8186 = vpop.f32.mrf.mxu0
      %v8187 = vadd.f32 0.0, %v8186
      %v8188 = vpop.f32.mrf.mxu0
      %8189 = vmatprep.mubr.f32.mxu0 0.0
      %8190 = vmatmul.mubr.f32.gmra.mxu0 %v8072
      %v8191 = vpop.f32.mrf.mxu0
      %v8192 = vadd.f32 0.0, %v8191
      %v8193 = vpop.f32.mrf.mxu0
      %8194 = vmatprep.mubr.f32.mxu0 0.0
      %8195 = vmatmul.mubr.f32.gmra.mxu0 %v8075
      %v8196 = vpop.f32.mrf.mxu0
      %v8197 = vadd.f32 0.0, %v8196
      %v8198 = vpop.f32.mrf.mxu0
      %8199 = vmatprep.mubr.f32.mxu0 0.0
      %8200 = vmatmul.mubr.f32.gmra.mxu0 %v8078
      %v8201 = vpop.f32.mrf.mxu0
      %v8202 = vadd.f32 0.0, %v8201
      %v8203 = vpop.f32.mrf.mxu0
      %8204 = vmatprep.mubr.f32.mxu0 0.0
      %8205 = vmatmul.mubr.f32.gmra.mxu0 %v8081
      %v8206 = vpop.f32.mrf.mxu0
      %v8207 = vadd.f32 0.0, %v8206
      %v8208 = vpop.f32.mrf.mxu0
      %8209 = vmatprep.mubr.f32.mxu0 0.0
      %8210 = vmatmul.mubr.f32.gmra.mxu0 %v8084
      %v8211 = vpop.f32.mrf.mxu0
      %v8212 = vadd.f32 0.0, %v8211
      %v8213 = vpop.f32.mrf.mxu0
      %8214 = vmatprep.mubr.f32.mxu0 0.0
      %8215 = vmatmul.mubr.f32.gmra.mxu0 %v8087
      %v8216 = vpop.f32.mrf.mxu0
      %v8217 = vadd.f32 0.0, %v8216
      %v8218 = vpop.f32.mrf.mxu0
      %8219 = vmatprep.mubr.f32.mxu0 0.0
      %8220 = vmatmul.mubr.f32.gmra.mxu0 %v8090
      %v8221 = vpop.f32.mrf.mxu0
      %v8222 = vadd.f32 0.0, %v8221
      %v8223 = vpop.f32.mrf.mxu0
      %8224 = vmatprep.mubr.f32.mxu0 0.0
      %8225 = vmatmul.mubr.f32.gmra.mxu0 %v8093
      %v8226 = vpop.f32.mrf.mxu0
      %v8227 = vadd.f32 0.0, %v8226
      %v8228 = vpop.f32.mrf.mxu0
      %8229 = vmatprep.mubr.f32.mxu0 0.0
      %8230 = vmatmul.mubr.f32.gmra.mxu0 %v8096
      %v8231 = vpop.f32.mrf.mxu0
      %v8232 = vadd.f32 0.0, %v8231
      %v8233 = vpop.f32.mrf.mxu0
      %8234 = vmatprep.mubr.f32.mxu0 0.0
      %8235 = vmatmul.mubr.f32.gmra.mxu0 %v8099
      %v8236 = vpop.f32.mrf.mxu0
      %v8237 = vadd.f32 0.0, %v8236
      %v8238 = vpop.f32.mrf.mxu0
      %8239 = vmatprep.mubr.f32.mxu0 0.0
      %8240 = vmatmul.mubr.f32.gmra.mxu0 %v8102
      %v8241 = vpop.f32.mrf.mxu0
      %v8242 = vadd.f32 0.0, %v8241
      %v8243 = vpop.f32.mrf.mxu0
      %8244 = vmatprep.mubr.f32.mxu0 0.0
      %8245 = vmatmul.mubr.f32.gmra.mxu0 %v8105
      %v8246 = vpop.f32.mrf.mxu0
      %v8247 = vadd.f32 0.0, %v8246
      %v8248 = vpop.f32.mrf.mxu0
      %8249 = vmatprep.mubr.f32.mxu0 0.0
      %8250 = vmatmul.mubr.f32.gmra.mxu0 %v8108
      %v8251 = vpop.f32.mrf.mxu0
      %v8252 = vadd.f32 0.0, %v8251
      %v8253 = vpop.f32.mrf.mxu0
      %8254 = vdwg.mxu0
      %v8255 = vadd.f32 %v8029, %v8177
      %v8256 = vadd.f32 %v8030, %v8182
      %v8257 = vadd.f32 %v8031, %v8187
      %v8258 = vadd.f32 %v8032, %v8192
      %v8259 = vadd.f32 %v8033, %v8197
      %v8260 = vadd.f32 %v8034, %v8202
      %v8261 = vadd.f32 %v8035, %v8207
      %v8262 = vadd.f32 %v8036, %v8212
      %v8263 = vadd.f32 %v8037, %v8217
      %v8264 = vadd.f32 %v8038, %v8222
      %v8265 = vadd.f32 %v8039, %v8227
      %v8266 = vadd.f32 %v8040, %v8232
      %v8267 = vadd.f32 %v8041, %v8237
      %v8268 = vadd.f32 %v8042, %v8242
      %v8269 = vadd.f32 %v8043, %v8247
      %v8270 = vadd.f32 %v8044, %v8252
      %s8271 = scalar_lea.vmem %s5, 2176
      %v8272 = vld [vmem:[%s8271] sm:$0xff]
      %v8273 = vld [vmem:[%s8271 + $0x8] sm:$0xff]
      %v8274 = vld [vmem:[%s8271 + $0x10] sm:$0xff]
      %v8275 = vld [vmem:[%s8271 + $0x18] sm:$0xff]
      %v8276 = vld [vmem:[%s8271 + $0x20] sm:$0xff]
      %v8277 = vld [vmem:[%s8271 + $0x28] sm:$0xff]
      %v8278 = vld [vmem:[%s8271 + $0x30] sm:$0xff]
      %v8279 = vld [vmem:[%s8271 + $0x38] sm:$0xff]
      %v8280 = vld [vmem:[%s8271 + $0x40] sm:$0xff]
      %v8281 = vld [vmem:[%s8271 + $0x48] sm:$0xff]
      %v8282 = vld [vmem:[%s8271 + $0x50] sm:$0xff]
      %v8283 = vld [vmem:[%s8271 + $0x58] sm:$0xff]
      %v8284 = vld [vmem:[%s8271 + $0x60] sm:$0xff]
      %v8285 = vld [vmem:[%s8271 + $0x68] sm:$0xff]
      %v8286 = vld [vmem:[%s8271 + $0x70] sm:$0xff]
      %v8287 = vld [vmem:[%s8271 + $0x78] sm:$0xff]
      %8296 = vrot.lane.b32.xlu0 %v4082, 96
      %v8297 = vpop.permute.xlu0 %8296
      %8298 = vrot.lane.b32.xlu0 %v4090, 96
      %v8299 = vpop.permute.xlu0 %8298
      %8300 = vrot.lane.b32.xlu0 %v4098, 96
      %v8301 = vpop.permute.xlu0 %8300
      %8302 = vrot.lane.b32.xlu0 %v4106, 96
      %v8303 = vpop.permute.xlu0 %8302
      %8304 = vrot.lane.b32.xlu0 %v4114, 96
      %v8305 = vpop.permute.xlu0 %8304
      %8306 = vrot.lane.b32.xlu0 %v4122, 96
      %v8307 = vpop.permute.xlu0 %8306
      %8308 = vrot.lane.b32.xlu0 %v4130, 96
      %v8309 = vpop.permute.xlu0 %8308
      %8310 = vrot.lane.b32.xlu0 %v4138, 96
      %v8311 = vpop.permute.xlu0 %8310
      %v8321 = vsel %vm1502, %v8272, 0
      %v8324 = vsel %vm1502, %v8273, 0
      %v8327 = vsel %vm1502, %v8274, 0
      %v8330 = vsel %vm1502, %v8275, 0
      %v8333 = vsel %vm1502, %v8276, 0
      %v8336 = vsel %vm1502, %v8277, 0
      %v8339 = vsel %vm1502, %v8278, 0
      %v8342 = vsel %vm1502, %v8279, 0
      %v8345 = vsel %vm1502, %v8280, 0
      %v8348 = vsel %vm1502, %v8281, 0
      %v8351 = vsel %vm1502, %v8282, 0
      %v8354 = vsel %vm1502, %v8283, 0
      %v8357 = vsel %vm1502, %v8284, 0
      %v8360 = vsel %vm1502, %v8285, 0
      %v8363 = vsel %vm1502, %v8286, 0
      %v8366 = vsel %vm1502, %v8287, 0
      %8368 = vmatprep.subr.mxu0 0.0
      %8369 = vmatpush1.msra.mxu0 0.0
      %8370 = vmatprep.subr.mxu0 0.0
      %8371 = vmatpush1.msra.mxu0 0.0
      %8372 = vmatprep.subr.mxu0 0.0
      %8373 = vmatpush1.msra.mxu0 0.0
      %8374 = vmatprep.subr.mxu0 0.0
      %8375 = vmatpush1.msra.mxu0 0.0
      %8376 = vmatprep.subr.mxu0 0.0
      %8377 = vmatpush1.msra.mxu0 0.0
      %8378 = vmatprep.subr.mxu0 0.0
      %8379 = vmatpush1.msra.mxu0 0.0
      %8380 = vmatprep.subr.mxu0 0.0
      %8381 = vmatpush1.msra.mxu0 0.0
      %8382 = vmatprep.subr.mxu0 0.0
      %8383 = vmatpush1.msra.mxu0 0.0
      %8384 = vmatprep.subr.mxu0 0.0
      %8385 = vmatpush1.msra.mxu0 %v8311
      %8386 = vmatprep.subr.mxu0 0.0
      %8387 = vmatpush1.msra.mxu0 %v8309
      %8388 = vmatprep.subr.mxu0 0.0
      %8389 = vmatpush1.msra.mxu0 %v8307
      %8390 = vmatprep.subr.mxu0 0.0
      %8391 = vmatpush1.msra.mxu0 %v8305
      %8392 = vmatprep.subr.mxu0 0.0
      %8393 = vmatpush1.msra.mxu0 %v8303
      %8394 = vmatprep.subr.mxu0 0.0
      %8395 = vmatpush1.msra.mxu0 %v8301
      %8396 = vmatprep.subr.mxu0 0.0
      %8397 = vmatpush1.msra.mxu0 %v8299
      %8398 = vmatprep.subr.mxu0 0.0
      %8399 = vmatpush1.msra.mxu0 %v8297
      %8400 = vmatprep.subr.mxu0 0.0
      %8401 = vmatpush2.msra.mxu0 0.0
      %8402 = vmatprep.subr.mxu0 0.0
      %8403 = vmatpush2.msra.mxu0 0.0
      %8404 = vmatprep.subr.mxu0 0.0
      %8405 = vmatpush2.msra.mxu0 0.0
      %8406 = vmatprep.subr.mxu0 0.0
      %8407 = vmatpush2.msra.mxu0 0.0
      %8408 = vmatprep.subr.mxu0 0.0
      %8409 = vmatpush2.msra.mxu0 0.0
      %8410 = vmatprep.subr.mxu0 0.0
      %8411 = vmatpush2.msra.mxu0 0.0
      %8412 = vmatprep.subr.mxu0 0.0
      %8413 = vmatpush2.msra.mxu0 0.0
      %8414 = vmatprep.subr.mxu0 0.0
      %8415 = vmatpush2.msra.mxu0 0.0
      %8416 = vmatprep.subr.mxu0 0.0
      %8417 = vmatpush2.msra.mxu0 0.0
      %8418 = vmatprep.subr.mxu0 0.0
      %8419 = vmatpush2.msra.mxu0 0.0
      %8420 = vmatprep.subr.mxu0 0.0
      %8421 = vmatpush2.msra.mxu0 0.0
      %8422 = vmatprep.subr.mxu0 0.0
      %8423 = vmatpush2.msra.mxu0 0.0
      %8424 = vmatprep.subr.mxu0 0.0
      %8425 = vmatpush2.msra.mxu0 0.0
      %8426 = vmatprep.subr.mxu0 0.0
      %8427 = vmatpush2.msra.mxu0 0.0
      %8428 = vmatprep.subr.mxu0 0.0
      %8429 = vmatpush2.msra.mxu0 0.0
      %8430 = vmatprep.subr.mxu0 0.0
      %8431 = vmatpush2.msra.mxu0 0.0
      %8432 = vmatprep.mubr.f32.mxu0 0.0
      %8433 = vmatmul.mubr.f32.gmra.mxu0 %v8321
      %v8434 = vpop.f32.mrf.mxu0
      %v8435 = vadd.f32 0.0, %v8434
      %v8436 = vpop.f32.mrf.mxu0
      %8437 = vmatprep.mubr.f32.mxu0 0.0
      %8438 = vmatmul.mubr.f32.gmra.mxu0 %v8324
      %v8439 = vpop.f32.mrf.mxu0
      %v8440 = vadd.f32 0.0, %v8439
      %v8441 = vpop.f32.mrf.mxu0
      %8442 = vmatprep.mubr.f32.mxu0 0.0
      %8443 = vmatmul.mubr.f32.gmra.mxu0 %v8327
      %v8444 = vpop.f32.mrf.mxu0
      %v8445 = vadd.f32 0.0, %v8444
      %v8446 = vpop.f32.mrf.mxu0
      %8447 = vmatprep.mubr.f32.mxu0 0.0
      %8448 = vmatmul.mubr.f32.gmra.mxu0 %v8330
      %v8449 = vpop.f32.mrf.mxu0
      %v8450 = vadd.f32 0.0, %v8449
      %v8451 = vpop.f32.mrf.mxu0
      %8452 = vmatprep.mubr.f32.mxu0 0.0
      %8453 = vmatmul.mubr.f32.gmra.mxu0 %v8333
      %v8454 = vpop.f32.mrf.mxu0
      %v8455 = vadd.f32 0.0, %v8454
      %v8456 = vpop.f32.mrf.mxu0
      %8457 = vmatprep.mubr.f32.mxu0 0.0
      %8458 = vmatmul.mubr.f32.gmra.mxu0 %v8336
      %v8459 = vpop.f32.mrf.mxu0
      %v8460 = vadd.f32 0.0, %v8459
      %v8461 = vpop.f32.mrf.mxu0
      %8462 = vmatprep.mubr.f32.mxu0 0.0
      %8463 = vmatmul.mubr.f32.gmra.mxu0 %v8339
      %v8464 = vpop.f32.mrf.mxu0
      %v8465 = vadd.f32 0.0, %v8464
      %v8466 = vpop.f32.mrf.mxu0
      %8467 = vmatprep.mubr.f32.mxu0 0.0
      %8468 = vmatmul.mubr.f32.gmra.mxu0 %v8342
      %v8469 = vpop.f32.mrf.mxu0
      %v8470 = vadd.f32 0.0, %v8469
      %v8471 = vpop.f32.mrf.mxu0
      %8472 = vmatprep.mubr.f32.mxu0 0.0
      %8473 = vmatmul.mubr.f32.gmra.mxu0 %v8345
      %v8474 = vpop.f32.mrf.mxu0
      %v8475 = vadd.f32 0.0, %v8474
      %v8476 = vpop.f32.mrf.mxu0
      %8477 = vmatprep.mubr.f32.mxu0 0.0
      %8478 = vmatmul.mubr.f32.gmra.mxu0 %v8348
      %v8479 = vpop.f32.mrf.mxu0
      %v8480 = vadd.f32 0.0, %v8479
      %v8481 = vpop.f32.mrf.mxu0
      %8482 = vmatprep.mubr.f32.mxu0 0.0
      %8483 = vmatmul.mubr.f32.gmra.mxu0 %v8351
      %v8484 = vpop.f32.mrf.mxu0
      %v8485 = vadd.f32 0.0, %v8484
      %v8486 = vpop.f32.mrf.mxu0
      %8487 = vmatprep.mubr.f32.mxu0 0.0
      %8488 = vmatmul.mubr.f32.gmra.mxu0 %v8354
      %v8489 = vpop.f32.mrf.mxu0
      %v8490 = vadd.f32 0.0, %v8489
      %v8491 = vpop.f32.mrf.mxu0
      %8492 = vmatprep.mubr.f32.mxu0 0.0
      %8493 = vmatmul.mubr.f32.gmra.mxu0 %v8357
      %v8494 = vpop.f32.mrf.mxu0
      %v8495 = vadd.f32 0.0, %v8494
      %v8496 = vpop.f32.mrf.mxu0
      %8497 = vmatprep.mubr.f32.mxu0 0.0
      %8498 = vmatmul.mubr.f32.gmra.mxu0 %v8360
      %v8499 = vpop.f32.mrf.mxu0
      %v8500 = vadd.f32 0.0, %v8499
      %v8501 = vpop.f32.mrf.mxu0
      %8502 = vmatprep.mubr.f32.mxu0 0.0
      %8503 = vmatmul.mubr.f32.gmra.mxu0 %v8363
      %v8504 = vpop.f32.mrf.mxu0
      %v8505 = vadd.f32 0.0, %v8504
      %v8506 = vpop.f32.mrf.mxu0
      %8507 = vmatprep.mubr.f32.mxu0 0.0
      %8508 = vmatmul.mubr.f32.gmra.mxu0 %v8366
      %v8509 = vpop.f32.mrf.mxu0
      %v8510 = vadd.f32 0.0, %v8509
      %v8511 = vpop.f32.mrf.mxu0
      %8512 = vdwg.mxu0
      %v8513 = vadd.f32 %v8255, %v8435
      %v8514 = vadd.f32 %v8256, %v8440
      %v8515 = vadd.f32 %v8257, %v8445
      %v8516 = vadd.f32 %v8258, %v8450
      %v8517 = vadd.f32 %v8259, %v8455
      %v8518 = vadd.f32 %v8260, %v8460
      %v8519 = vadd.f32 %v8261, %v8465
      %v8520 = vadd.f32 %v8262, %v8470
      %v8521 = vadd.f32 %v8263, %v8475
      %v8522 = vadd.f32 %v8264, %v8480
      %v8523 = vadd.f32 %v8265, %v8485
      %v8524 = vadd.f32 %v8266, %v8490
      %v8525 = vadd.f32 %v8267, %v8495
      %v8526 = vadd.f32 %v8268, %v8500
      %v8527 = vadd.f32 %v8269, %v8505
      %v8528 = vadd.f32 %v8270, %v8510
      %s8529 = scalar_lea.vmem %s5, 2304
      %v8530 = vld [vmem:[%s8529] sm:$0xff]
      %v8531 = vld [vmem:[%s8529 + $0x8] sm:$0xff]
      %v8532 = vld [vmem:[%s8529 + $0x10] sm:$0xff]
      %v8533 = vld [vmem:[%s8529 + $0x18] sm:$0xff]
      %v8534 = vld [vmem:[%s8529 + $0x20] sm:$0xff]
      %v8535 = vld [vmem:[%s8529 + $0x28] sm:$0xff]
      %v8536 = vld [vmem:[%s8529 + $0x30] sm:$0xff]
      %v8537 = vld [vmem:[%s8529 + $0x38] sm:$0xff]
      %v8538 = vld [vmem:[%s8529 + $0x40] sm:$0xff]
      %v8539 = vld [vmem:[%s8529 + $0x48] sm:$0xff]
      %v8540 = vld [vmem:[%s8529 + $0x50] sm:$0xff]
      %v8541 = vld [vmem:[%s8529 + $0x58] sm:$0xff]
      %v8542 = vld [vmem:[%s8529 + $0x60] sm:$0xff]
      %v8543 = vld [vmem:[%s8529 + $0x68] sm:$0xff]
      %v8544 = vld [vmem:[%s8529 + $0x70] sm:$0xff]
      %v8545 = vld [vmem:[%s8529 + $0x78] sm:$0xff]
      %8546 = vrot.lane.b32.xlu0 %v4082, 64
      %v8547 = vpop.permute.xlu0 %8546
      %8548 = vrot.lane.b32.xlu0 %v4090, 64
      %v8549 = vpop.permute.xlu0 %8548
      %8550 = vrot.lane.b32.xlu0 %v4098, 64
      %v8551 = vpop.permute.xlu0 %8550
      %8552 = vrot.lane.b32.xlu0 %v4106, 64
      %v8553 = vpop.permute.xlu0 %8552
      %8554 = vrot.lane.b32.xlu0 %v4114, 64
      %v8555 = vpop.permute.xlu0 %8554
      %8556 = vrot.lane.b32.xlu0 %v4122, 64
      %v8557 = vpop.permute.xlu0 %8556
      %8558 = vrot.lane.b32.xlu0 %v4130, 64
      %v8559 = vpop.permute.xlu0 %8558
      %8560 = vrot.lane.b32.xlu0 %v4138, 64
      %v8561 = vpop.permute.xlu0 %8560
      %v8571 = vsel %vm1502, %v8530, 0
      %v8574 = vsel %vm1502, %v8531, 0
      %v8577 = vsel %vm1502, %v8532, 0
      %v8580 = vsel %vm1502, %v8533, 0
      %v8583 = vsel %vm1502, %v8534, 0
      %v8586 = vsel %vm1502, %v8535, 0
      %v8589 = vsel %vm1502, %v8536, 0
      %v8592 = vsel %vm1502, %v8537, 0
      %v8595 = vsel %vm1502, %v8538, 0
      %v8598 = vsel %vm1502, %v8539, 0
      %v8601 = vsel %vm1502, %v8540, 0
      %v8604 = vsel %vm1502, %v8541, 0
      %v8607 = vsel %vm1502, %v8542, 0
      %v8610 = vsel %vm1502, %v8543, 0
      %v8613 = vsel %vm1502, %v8544, 0
      %v8616 = vsel %vm1502, %v8545, 0
      %8618 = vmatprep.subr.mxu0 0.0
      %8619 = vmatpush1.msra.mxu0 0.0
      %8620 = vmatprep.subr.mxu0 0.0
      %8621 = vmatpush1.msra.mxu0 0.0
      %8622 = vmatprep.subr.mxu0 0.0
      %8623 = vmatpush1.msra.mxu0 0.0
      %8624 = vmatprep.subr.mxu0 0.0
      %8625 = vmatpush1.msra.mxu0 0.0
      %8626 = vmatprep.subr.mxu0 0.0
      %8627 = vmatpush1.msra.mxu0 0.0
      %8628 = vmatprep.subr.mxu0 0.0
      %8629 = vmatpush1.msra.mxu0 0.0
      %8630 = vmatprep.subr.mxu0 0.0
      %8631 = vmatpush1.msra.mxu0 0.0
      %8632 = vmatprep.subr.mxu0 0.0
      %8633 = vmatpush1.msra.mxu0 0.0
      %8634 = vmatprep.subr.mxu0 0.0
      %8635 = vmatpush1.msra.mxu0 %v8561
      %8636 = vmatprep.subr.mxu0 0.0
      %8637 = vmatpush1.msra.mxu0 %v8559
      %8638 = vmatprep.subr.mxu0 0.0
      %8639 = vmatpush1.msra.mxu0 %v8557
      %8640 = vmatprep.subr.mxu0 0.0
      %8641 = vmatpush1.msra.mxu0 %v8555
      %8642 = vmatprep.subr.mxu0 0.0
      %8643 = vmatpush1.msra.mxu0 %v8553
      %8644 = vmatprep.subr.mxu0 0.0
      %8645 = vmatpush1.msra.mxu0 %v8551
      %8646 = vmatprep.subr.mxu0 0.0
      %8647 = vmatpush1.msra.mxu0 %v8549
      %8648 = vmatprep.subr.mxu0 0.0
      %8649 = vmatpush1.msra.mxu0 %v8547
      %8650 = vmatprep.subr.mxu0 0.0
      %8651 = vmatpush2.msra.mxu0 0.0
      %8652 = vmatprep.subr.mxu0 0.0
      %8653 = vmatpush2.msra.mxu0 0.0
      %8654 = vmatprep.subr.mxu0 0.0
      %8655 = vmatpush2.msra.mxu0 0.0
      %8656 = vmatprep.subr.mxu0 0.0
      %8657 = vmatpush2.msra.mxu0 0.0
      %8658 = vmatprep.subr.mxu0 0.0
      %8659 = vmatpush2.msra.mxu0 0.0
      %8660 = vmatprep.subr.mxu0 0.0
      %8661 = vmatpush2.msra.mxu0 0.0
      %8662 = vmatprep.subr.mxu0 0.0
      %8663 = vmatpush2.msra.mxu0 0.0
      %8664 = vmatprep.subr.mxu0 0.0
      %8665 = vmatpush2.msra.mxu0 0.0
      %8666 = vmatprep.subr.mxu0 0.0
      %8667 = vmatpush2.msra.mxu0 0.0
      %8668 = vmatprep.subr.mxu0 0.0
      %8669 = vmatpush2.msra.mxu0 0.0
      %8670 = vmatprep.subr.mxu0 0.0
      %8671 = vmatpush2.msra.mxu0 0.0
      %8672 = vmatprep.subr.mxu0 0.0
      %8673 = vmatpush2.msra.mxu0 0.0
      %8674 = vmatprep.subr.mxu0 0.0
      %8675 = vmatpush2.msra.mxu0 0.0
      %8676 = vmatprep.subr.mxu0 0.0
      %8677 = vmatpush2.msra.mxu0 0.0
      %8678 = vmatprep.subr.mxu0 0.0
      %8679 = vmatpush2.msra.mxu0 0.0
      %8680 = vmatprep.subr.mxu0 0.0
      %8681 = vmatpush2.msra.mxu0 0.0
      %8682 = vmatprep.mubr.f32.mxu0 0.0
      %8683 = vmatmul.mubr.f32.gmra.mxu0 %v8571
      %v8684 = vpop.f32.mrf.mxu0
      %v8685 = vadd.f32 0.0, %v8684
      %v8686 = vpop.f32.mrf.mxu0
      %8687 = vmatprep.mubr.f32.mxu0 0.0
      %8688 = vmatmul.mubr.f32.gmra.mxu0 %v8574
      %v8689 = vpop.f32.mrf.mxu0
      %v8690 = vadd.f32 0.0, %v8689
      %v8691 = vpop.f32.mrf.mxu0
      %8692 = vmatprep.mubr.f32.mxu0 0.0
      %8693 = vmatmul.mubr.f32.gmra.mxu0 %v8577
      %v8694 = vpop.f32.mrf.mxu0
      %v8695 = vadd.f32 0.0, %v8694
      %v8696 = vpop.f32.mrf.mxu0
      %8697 = vmatprep.mubr.f32.mxu0 0.0
      %8698 = vmatmul.mubr.f32.gmra.mxu0 %v8580
      %v8699 = vpop.f32.mrf.mxu0
      %v8700 = vadd.f32 0.0, %v8699
      %v8701 = vpop.f32.mrf.mxu0
      %8702 = vmatprep.mubr.f32.mxu0 0.0
      %8703 = vmatmul.mubr.f32.gmra.mxu0 %v8583
      %v8704 = vpop.f32.mrf.mxu0
      %v8705 = vadd.f32 0.0, %v8704
      %v8706 = vpop.f32.mrf.mxu0
      %8707 = vmatprep.mubr.f32.mxu0 0.0
      %8708 = vmatmul.mubr.f32.gmra.mxu0 %v8586
      %v8709 = vpop.f32.mrf.mxu0
      %v8710 = vadd.f32 0.0, %v8709
      %v8711 = vpop.f32.mrf.mxu0
      %8712 = vmatprep.mubr.f32.mxu0 0.0
      %8713 = vmatmul.mubr.f32.gmra.mxu0 %v8589
      %v8714 = vpop.f32.mrf.mxu0
      %v8715 = vadd.f32 0.0, %v8714
      %v8716 = vpop.f32.mrf.mxu0
      %8717 = vmatprep.mubr.f32.mxu0 0.0
      %8718 = vmatmul.mubr.f32.gmra.mxu0 %v8592
      %v8719 = vpop.f32.mrf.mxu0
      %v8720 = vadd.f32 0.0, %v8719
      %v8721 = vpop.f32.mrf.mxu0
      %8722 = vmatprep.mubr.f32.mxu0 0.0
      %8723 = vmatmul.mubr.f32.gmra.mxu0 %v8595
      %v8724 = vpop.f32.mrf.mxu0
      %v8725 = vadd.f32 0.0, %v8724
      %v8726 = vpop.f32.mrf.mxu0
      %8727 = vmatprep.mubr.f32.mxu0 0.0
      %8728 = vmatmul.mubr.f32.gmra.mxu0 %v8598
      %v8729 = vpop.f32.mrf.mxu0
      %v8730 = vadd.f32 0.0, %v8729
      %v8731 = vpop.f32.mrf.mxu0
      %8732 = vmatprep.mubr.f32.mxu0 0.0
      %8733 = vmatmul.mubr.f32.gmra.mxu0 %v8601
      %v8734 = vpop.f32.mrf.mxu0
      %v8735 = vadd.f32 0.0, %v8734
      %v8736 = vpop.f32.mrf.mxu0
      %8737 = vmatprep.mubr.f32.mxu0 0.0
      %8738 = vmatmul.mubr.f32.gmra.mxu0 %v8604
      %v8739 = vpop.f32.mrf.mxu0
      %v8740 = vadd.f32 0.0, %v8739
      %v8741 = vpop.f32.mrf.mxu0
      %8742 = vmatprep.mubr.f32.mxu0 0.0
      %8743 = vmatmul.mubr.f32.gmra.mxu0 %v8607
      %v8744 = vpop.f32.mrf.mxu0
      %v8745 = vadd.f32 0.0, %v8744
      %v8746 = vpop.f32.mrf.mxu0
      %8747 = vmatprep.mubr.f32.mxu0 0.0
      %8748 = vmatmul.mubr.f32.gmra.mxu0 %v8610
      %v8749 = vpop.f32.mrf.mxu0
      %v8750 = vadd.f32 0.0, %v8749
      %v8751 = vpop.f32.mrf.mxu0
      %8752 = vmatprep.mubr.f32.mxu0 0.0
      %8753 = vmatmul.mubr.f32.gmra.mxu0 %v8613
      %v8754 = vpop.f32.mrf.mxu0
      %v8755 = vadd.f32 0.0, %v8754
      %v8756 = vpop.f32.mrf.mxu0
      %8757 = vmatprep.mubr.f32.mxu0 0.0
      %8758 = vmatmul.mubr.f32.gmra.mxu0 %v8616
      %v8759 = vpop.f32.mrf.mxu0
      %v8760 = vadd.f32 0.0, %v8759
      %v8761 = vpop.f32.mrf.mxu0
      %8762 = vdwg.mxu0
      %v8763 = vadd.f32 %v8513, %v8685
      %v8764 = vadd.f32 %v8514, %v8690
      %v8765 = vadd.f32 %v8515, %v8695
      %v8766 = vadd.f32 %v8516, %v8700
      %v8767 = vadd.f32 %v8517, %v8705
      %v8768 = vadd.f32 %v8518, %v8710
      %v8769 = vadd.f32 %v8519, %v8715
      %v8770 = vadd.f32 %v8520, %v8720
      %v8771 = vadd.f32 %v8521, %v8725
      %v8772 = vadd.f32 %v8522, %v8730
      %v8773 = vadd.f32 %v8523, %v8735
      %v8774 = vadd.f32 %v8524, %v8740
      %v8775 = vadd.f32 %v8525, %v8745
      %v8776 = vadd.f32 %v8526, %v8750
      %v8777 = vadd.f32 %v8527, %v8755
      %v8778 = vadd.f32 %v8528, %v8760
      %s8779 = scalar_lea.vmem %s5, 2432
      %v8780 = vld [vmem:[%s8779] sm:$0xff]
      %v8781 = vld [vmem:[%s8779 + $0x8] sm:$0xff]
      %v8782 = vld [vmem:[%s8779 + $0x10] sm:$0xff]
      %v8783 = vld [vmem:[%s8779 + $0x18] sm:$0xff]
      %v8784 = vld [vmem:[%s8779 + $0x20] sm:$0xff]
      %v8785 = vld [vmem:[%s8779 + $0x28] sm:$0xff]
      %v8786 = vld [vmem:[%s8779 + $0x30] sm:$0xff]
      %v8787 = vld [vmem:[%s8779 + $0x38] sm:$0xff]
      %v8788 = vld [vmem:[%s8779 + $0x40] sm:$0xff]
      %v8789 = vld [vmem:[%s8779 + $0x48] sm:$0xff]
      %v8790 = vld [vmem:[%s8779 + $0x50] sm:$0xff]
      %v8791 = vld [vmem:[%s8779 + $0x58] sm:$0xff]
      %v8792 = vld [vmem:[%s8779 + $0x60] sm:$0xff]
      %v8793 = vld [vmem:[%s8779 + $0x68] sm:$0xff]
      %v8794 = vld [vmem:[%s8779 + $0x70] sm:$0xff]
      %v8795 = vld [vmem:[%s8779 + $0x78] sm:$0xff]
      %8796 = vrot.lane.b32.xlu0 %v4082, 32
      %v8797 = vpop.permute.xlu0 %8796
      %8798 = vrot.lane.b32.xlu0 %v4090, 32
      %v8799 = vpop.permute.xlu0 %8798
      %8800 = vrot.lane.b32.xlu0 %v4098, 32
      %v8801 = vpop.permute.xlu0 %8800
      %8802 = vrot.lane.b32.xlu0 %v4106, 32
      %v8803 = vpop.permute.xlu0 %8802
      %8804 = vrot.lane.b32.xlu0 %v4114, 32
      %v8805 = vpop.permute.xlu0 %8804
      %8806 = vrot.lane.b32.xlu0 %v4122, 32
      %v8807 = vpop.permute.xlu0 %8806
      %8808 = vrot.lane.b32.xlu0 %v4130, 32
      %v8809 = vpop.permute.xlu0 %8808
      %8810 = vrot.lane.b32.xlu0 %v4138, 32
      %v8811 = vpop.permute.xlu0 %8810
      %v8821 = vsel %vm1502, %v8780, 0
      %v8824 = vsel %vm1502, %v8781, 0
      %v8827 = vsel %vm1502, %v8782, 0
      %v8830 = vsel %vm1502, %v8783, 0
      %v8833 = vsel %vm1502, %v8784, 0
      %v8836 = vsel %vm1502, %v8785, 0
      %v8839 = vsel %vm1502, %v8786, 0
      %v8842 = vsel %vm1502, %v8787, 0
      %v8845 = vsel %vm1502, %v8788, 0
      %v8848 = vsel %vm1502, %v8789, 0
      %v8851 = vsel %vm1502, %v8790, 0
      %v8854 = vsel %vm1502, %v8791, 0
      %v8857 = vsel %vm1502, %v8792, 0
      %v8860 = vsel %vm1502, %v8793, 0
      %v8863 = vsel %vm1502, %v8794, 0
      %v8866 = vsel %vm1502, %v8795, 0
      %8868 = vmatprep.subr.mxu0 0.0
      %8869 = vmatpush1.msra.mxu0 0.0
      %8870 = vmatprep.subr.mxu0 0.0
      %8871 = vmatpush1.msra.mxu0 0.0
      %8872 = vmatprep.subr.mxu0 0.0
      %8873 = vmatpush1.msra.mxu0 0.0
      %8874 = vmatprep.subr.mxu0 0.0
      %8875 = vmatpush1.msra.mxu0 0.0
      %8876 = vmatprep.subr.mxu0 0.0
      %8877 = vmatpush1.msra.mxu0 0.0
      %8878 = vmatprep.subr.mxu0 0.0
      %8879 = vmatpush1.msra.mxu0 0.0
      %8880 = vmatprep.subr.mxu0 0.0
      %8881 = vmatpush1.msra.mxu0 0.0
      %8882 = vmatprep.subr.mxu0 0.0
      %8883 = vmatpush1.msra.mxu0 0.0
      %8884 = vmatprep.subr.mxu0 0.0
      %8885 = vmatpush1.msra.mxu0 %v8811
      %8886 = vmatprep.subr.mxu0 0.0
      %8887 = vmatpush1.msra.mxu0 %v8809
      %8888 = vmatprep.subr.mxu0 0.0
      %8889 = vmatpush1.msra.mxu0 %v8807
      %8890 = vmatprep.subr.mxu0 0.0
      %8891 = vmatpush1.msra.mxu0 %v8805
      %8892 = vmatprep.subr.mxu0 0.0
      %8893 = vmatpush1.msra.mxu0 %v8803
      %8894 = vmatprep.subr.mxu0 0.0
      %8895 = vmatpush1.msra.mxu0 %v8801
      %8896 = vmatprep.subr.mxu0 0.0
      %8897 = vmatpush1.msra.mxu0 %v8799
      %8898 = vmatprep.subr.mxu0 0.0
      %8899 = vmatpush1.msra.mxu0 %v8797
      %8900 = vmatprep.subr.mxu0 0.0
      %8901 = vmatpush2.msra.mxu0 0.0
      %8902 = vmatprep.subr.mxu0 0.0
      %8903 = vmatpush2.msra.mxu0 0.0
      %8904 = vmatprep.subr.mxu0 0.0
      %8905 = vmatpush2.msra.mxu0 0.0
      %8906 = vmatprep.subr.mxu0 0.0
      %8907 = vmatpush2.msra.mxu0 0.0
      %8908 = vmatprep.subr.mxu0 0.0
      %8909 = vmatpush2.msra.mxu0 0.0
      %8910 = vmatprep.subr.mxu0 0.0
      %8911 = vmatpush2.msra.mxu0 0.0
      %8912 = vmatprep.subr.mxu0 0.0
      %8913 = vmatpush2.msra.mxu0 0.0
      %8914 = vmatprep.subr.mxu0 0.0
      %8915 = vmatpush2.msra.mxu0 0.0
      %8916 = vmatprep.subr.mxu0 0.0
      %8917 = vmatpush2.msra.mxu0 0.0
      %8918 = vmatprep.subr.mxu0 0.0
      %8919 = vmatpush2.msra.mxu0 0.0
      %8920 = vmatprep.subr.mxu0 0.0
      %8921 = vmatpush2.msra.mxu0 0.0
      %8922 = vmatprep.subr.mxu0 0.0
      %8923 = vmatpush2.msra.mxu0 0.0
      %8924 = vmatprep.subr.mxu0 0.0
      %8925 = vmatpush2.msra.mxu0 0.0
      %8926 = vmatprep.subr.mxu0 0.0
      %8927 = vmatpush2.msra.mxu0 0.0
      %8928 = vmatprep.subr.mxu0 0.0
      %8929 = vmatpush2.msra.mxu0 0.0
      %8930 = vmatprep.subr.mxu0 0.0
      %8931 = vmatpush2.msra.mxu0 0.0
      %8932 = vmatprep.mubr.f32.mxu0 0.0
      %8933 = vmatmul.mubr.f32.gmra.mxu0 %v8821
      %v8934 = vpop.f32.mrf.mxu0
      %v8935 = vadd.f32 0.0, %v8934
      %v8936 = vpop.f32.mrf.mxu0
      %8937 = vmatprep.mubr.f32.mxu0 0.0
      %8938 = vmatmul.mubr.f32.gmra.mxu0 %v8824
      %v8939 = vpop.f32.mrf.mxu0
      %v8940 = vadd.f32 0.0, %v8939
      %v8941 = vpop.f32.mrf.mxu0
      %8942 = vmatprep.mubr.f32.mxu0 0.0
      %8943 = vmatmul.mubr.f32.gmra.mxu0 %v8827
      %v8944 = vpop.f32.mrf.mxu0
      %v8945 = vadd.f32 0.0, %v8944
      %v8946 = vpop.f32.mrf.mxu0
      %8947 = vmatprep.mubr.f32.mxu0 0.0
      %8948 = vmatmul.mubr.f32.gmra.mxu0 %v8830
      %v8949 = vpop.f32.mrf.mxu0
      %v8950 = vadd.f32 0.0, %v8949
      %v8951 = vpop.f32.mrf.mxu0
      %8952 = vmatprep.mubr.f32.mxu0 0.0
      %8953 = vmatmul.mubr.f32.gmra.mxu0 %v8833
      %v8954 = vpop.f32.mrf.mxu0
      %v8955 = vadd.f32 0.0, %v8954
      %v8956 = vpop.f32.mrf.mxu0
      %8957 = vmatprep.mubr.f32.mxu0 0.0
      %8958 = vmatmul.mubr.f32.gmra.mxu0 %v8836
      %v8959 = vpop.f32.mrf.mxu0
      %v8960 = vadd.f32 0.0, %v8959
      %v8961 = vpop.f32.mrf.mxu0
      %8962 = vmatprep.mubr.f32.mxu0 0.0
      %8963 = vmatmul.mubr.f32.gmra.mxu0 %v8839
      %v8964 = vpop.f32.mrf.mxu0
      %v8965 = vadd.f32 0.0, %v8964
      %v8966 = vpop.f32.mrf.mxu0
      %8967 = vmatprep.mubr.f32.mxu0 0.0
      %8968 = vmatmul.mubr.f32.gmra.mxu0 %v8842
      %v8969 = vpop.f32.mrf.mxu0
      %v8970 = vadd.f32 0.0, %v8969
      %v8971 = vpop.f32.mrf.mxu0
      %8972 = vmatprep.mubr.f32.mxu0 0.0
      %8973 = vmatmul.mubr.f32.gmra.mxu0 %v8845
      %v8974 = vpop.f32.mrf.mxu0
      %v8975 = vadd.f32 0.0, %v8974
      %v8976 = vpop.f32.mrf.mxu0
      %8977 = vmatprep.mubr.f32.mxu0 0.0
      %8978 = vmatmul.mubr.f32.gmra.mxu0 %v8848
      %v8979 = vpop.f32.mrf.mxu0
      %v8980 = vadd.f32 0.0, %v8979
      %v8981 = vpop.f32.mrf.mxu0
      %8982 = vmatprep.mubr.f32.mxu0 0.0
      %8983 = vmatmul.mubr.f32.gmra.mxu0 %v8851
      %v8984 = vpop.f32.mrf.mxu0
      %v8985 = vadd.f32 0.0, %v8984
      %v8986 = vpop.f32.mrf.mxu0
      %8987 = vmatprep.mubr.f32.mxu0 0.0
      %8988 = vmatmul.mubr.f32.gmra.mxu0 %v8854
      %v8989 = vpop.f32.mrf.mxu0
      %v8990 = vadd.f32 0.0, %v8989
      %v8991 = vpop.f32.mrf.mxu0
      %8992 = vmatprep.mubr.f32.mxu0 0.0
      %8993 = vmatmul.mubr.f32.gmra.mxu0 %v8857
      %v8994 = vpop.f32.mrf.mxu0
      %v8995 = vadd.f32 0.0, %v8994
      %v8996 = vpop.f32.mrf.mxu0
      %8997 = vmatprep.mubr.f32.mxu0 0.0
      %8998 = vmatmul.mubr.f32.gmra.mxu0 %v8860
      %v8999 = vpop.f32.mrf.mxu0
      %v9000 = vadd.f32 0.0, %v8999
      %v9001 = vpop.f32.mrf.mxu0
      %9002 = vmatprep.mubr.f32.mxu0 0.0
      %9003 = vmatmul.mubr.f32.gmra.mxu0 %v8863
      %v9004 = vpop.f32.mrf.mxu0
      %v9005 = vadd.f32 0.0, %v9004
      %v9006 = vpop.f32.mrf.mxu0
      %9007 = vmatprep.mubr.f32.mxu0 0.0
      %9008 = vmatmul.mubr.f32.gmra.mxu0 %v8866
      %v9009 = vpop.f32.mrf.mxu0
      %v9010 = vadd.f32 0.0, %v9009
      %v9011 = vpop.f32.mrf.mxu0
      %9012 = vdwg.mxu0
      %v9013 = vadd.f32 %v8763, %v8935
      %v9014 = vadd.f32 %v8764, %v8940
      %v9015 = vadd.f32 %v8765, %v8945
      %v9016 = vadd.f32 %v8766, %v8950
      %v9017 = vadd.f32 %v8767, %v8955
      %v9018 = vadd.f32 %v8768, %v8960
      %v9019 = vadd.f32 %v8769, %v8965
      %v9020 = vadd.f32 %v8770, %v8970
      %v9021 = vadd.f32 %v8771, %v8975
      %v9022 = vadd.f32 %v8772, %v8980
      %v9023 = vadd.f32 %v8773, %v8985
      %v9024 = vadd.f32 %v8774, %v8990
      %v9025 = vadd.f32 %v8775, %v8995
      %v9026 = vadd.f32 %v8776, %v9000
      %v9027 = vadd.f32 %v8777, %v9005
      %v9028 = vadd.f32 %v8778, %v9010
      %s9029 = scalar_lea.vmem %s5, 2560
      %v9030 = vld [vmem:[%s9029] sm:$0xff]
      %v9031 = vld [vmem:[%s9029 + $0x8] sm:$0xff]
      %v9032 = vld [vmem:[%s9029 + $0x10] sm:$0xff]
      %v9033 = vld [vmem:[%s9029 + $0x18] sm:$0xff]
      %v9034 = vld [vmem:[%s9029 + $0x20] sm:$0xff]
      %v9035 = vld [vmem:[%s9029 + $0x28] sm:$0xff]
      %v9036 = vld [vmem:[%s9029 + $0x30] sm:$0xff]
      %v9037 = vld [vmem:[%s9029 + $0x38] sm:$0xff]
      %v9038 = vld [vmem:[%s9029 + $0x40] sm:$0xff]
      %v9039 = vld [vmem:[%s9029 + $0x48] sm:$0xff]
      %v9040 = vld [vmem:[%s9029 + $0x50] sm:$0xff]
      %v9041 = vld [vmem:[%s9029 + $0x58] sm:$0xff]
      %v9042 = vld [vmem:[%s9029 + $0x60] sm:$0xff]
      %v9043 = vld [vmem:[%s9029 + $0x68] sm:$0xff]
      %v9044 = vld [vmem:[%s9029 + $0x70] sm:$0xff]
      %v9045 = vld [vmem:[%s9029 + $0x78] sm:$0xff]
      %v9047 = vsel %vm1502, %v9030, 0
      %v9050 = vsel %vm1502, %v9031, 0
      %v9053 = vsel %vm1502, %v9032, 0
      %v9056 = vsel %vm1502, %v9033, 0
      %v9059 = vsel %vm1502, %v9034, 0
      %v9062 = vsel %vm1502, %v9035, 0
      %v9065 = vsel %vm1502, %v9036, 0
      %v9068 = vsel %vm1502, %v9037, 0
      %v9071 = vsel %vm1502, %v9038, 0
      %v9074 = vsel %vm1502, %v9039, 0
      %v9077 = vsel %vm1502, %v9040, 0
      %v9080 = vsel %vm1502, %v9041, 0
      %v9083 = vsel %vm1502, %v9042, 0
      %v9086 = vsel %vm1502, %v9043, 0
      %v9089 = vsel %vm1502, %v9044, 0
      %v9092 = vsel %vm1502, %v9045, 0
      %9094 = vmatprep.subr.mxu0 0.0
      %9095 = vmatpush1.msra.mxu0 0.0
      %9096 = vmatprep.subr.mxu0 0.0
      %9097 = vmatpush1.msra.mxu0 0.0
      %9098 = vmatprep.subr.mxu0 0.0
      %9099 = vmatpush1.msra.mxu0 0.0
      %9100 = vmatprep.subr.mxu0 0.0
      %9101 = vmatpush1.msra.mxu0 0.0
      %9102 = vmatprep.subr.mxu0 0.0
      %9103 = vmatpush1.msra.mxu0 0.0
      %9104 = vmatprep.subr.mxu0 0.0
      %9105 = vmatpush1.msra.mxu0 0.0
      %9106 = vmatprep.subr.mxu0 0.0
      %9107 = vmatpush1.msra.mxu0 0.0
      %9108 = vmatprep.subr.mxu0 0.0
      %9109 = vmatpush1.msra.mxu0 0.0
      %9110 = vmatprep.subr.mxu0 0.0
      %9111 = vmatpush1.msra.mxu0 %v4139
      %9112 = vmatprep.subr.mxu0 0.0
      %9113 = vmatpush1.msra.mxu0 %v4131
      %9114 = vmatprep.subr.mxu0 0.0
      %9115 = vmatpush1.msra.mxu0 %v4123
      %9116 = vmatprep.subr.mxu0 0.0
      %9117 = vmatpush1.msra.mxu0 %v4115
      %9118 = vmatprep.subr.mxu0 0.0
      %9119 = vmatpush1.msra.mxu0 %v4107
      %9120 = vmatprep.subr.mxu0 0.0
      %9121 = vmatpush1.msra.mxu0 %v4099
      %9122 = vmatprep.subr.mxu0 0.0
      %9123 = vmatpush1.msra.mxu0 %v4091
      %9124 = vmatprep.subr.mxu0 0.0
      %9125 = vmatpush1.msra.mxu0 %v4083
      %9126 = vmatprep.subr.mxu0 0.0
      %9127 = vmatpush2.msra.mxu0 0.0
      %9128 = vmatprep.subr.mxu0 0.0
      %9129 = vmatpush2.msra.mxu0 0.0
      %9130 = vmatprep.subr.mxu0 0.0
      %9131 = vmatpush2.msra.mxu0 0.0
      %9132 = vmatprep.subr.mxu0 0.0
      %9133 = vmatpush2.msra.mxu0 0.0
      %9134 = vmatprep.subr.mxu0 0.0
      %9135 = vmatpush2.msra.mxu0 0.0
      %9136 = vmatprep.subr.mxu0 0.0
      %9137 = vmatpush2.msra.mxu0 0.0
      %9138 = vmatprep.subr.mxu0 0.0
      %9139 = vmatpush2.msra.mxu0 0.0
      %9140 = vmatprep.subr.mxu0 0.0
      %9141 = vmatpush2.msra.mxu0 0.0
      %9142 = vmatprep.subr.mxu0 0.0
      %9143 = vmatpush2.msra.mxu0 0.0
      %9144 = vmatprep.subr.mxu0 0.0
      %9145 = vmatpush2.msra.mxu0 0.0
      %9146 = vmatprep.subr.mxu0 0.0
      %9147 = vmatpush2.msra.mxu0 0.0
      %9148 = vmatprep.subr.mxu0 0.0
      %9149 = vmatpush2.msra.mxu0 0.0
      %9150 = vmatprep.subr.mxu0 0.0
      %9151 = vmatpush2.msra.mxu0 0.0
      %9152 = vmatprep.subr.mxu0 0.0
      %9153 = vmatpush2.msra.mxu0 0.0
      %9154 = vmatprep.subr.mxu0 0.0
      %9155 = vmatpush2.msra.mxu0 0.0
      %9156 = vmatprep.subr.mxu0 0.0
      %9157 = vmatpush2.msra.mxu0 0.0
      %9158 = vmatprep.mubr.f32.mxu0 0.0
      %9159 = vmatmul.mubr.f32.gmra.mxu0 %v9047
      %v9160 = vpop.f32.mrf.mxu0
      %v9161 = vadd.f32 0.0, %v9160
      %v9162 = vpop.f32.mrf.mxu0
      %9163 = vmatprep.mubr.f32.mxu0 0.0
      %9164 = vmatmul.mubr.f32.gmra.mxu0 %v9050
      %v9165 = vpop.f32.mrf.mxu0
      %v9166 = vadd.f32 0.0, %v9165
      %v9167 = vpop.f32.mrf.mxu0
      %9168 = vmatprep.mubr.f32.mxu0 0.0
      %9169 = vmatmul.mubr.f32.gmra.mxu0 %v9053
      %v9170 = vpop.f32.mrf.mxu0
      %v9171 = vadd.f32 0.0, %v9170
      %v9172 = vpop.f32.mrf.mxu0
      %9173 = vmatprep.mubr.f32.mxu0 0.0
      %9174 = vmatmul.mubr.f32.gmra.mxu0 %v9056
      %v9175 = vpop.f32.mrf.mxu0
      %v9176 = vadd.f32 0.0, %v9175
      %v9177 = vpop.f32.mrf.mxu0
      %9178 = vmatprep.mubr.f32.mxu0 0.0
      %9179 = vmatmul.mubr.f32.gmra.mxu0 %v9059
      %v9180 = vpop.f32.mrf.mxu0
      %v9181 = vadd.f32 0.0, %v9180
      %v9182 = vpop.f32.mrf.mxu0
      %9183 = vmatprep.mubr.f32.mxu0 0.0
      %9184 = vmatmul.mubr.f32.gmra.mxu0 %v9062
      %v9185 = vpop.f32.mrf.mxu0
      %v9186 = vadd.f32 0.0, %v9185
      %v9187 = vpop.f32.mrf.mxu0
      %9188 = vmatprep.mubr.f32.mxu0 0.0
      %9189 = vmatmul.mubr.f32.gmra.mxu0 %v9065
      %v9190 = vpop.f32.mrf.mxu0
      %v9191 = vadd.f32 0.0, %v9190
      %v9192 = vpop.f32.mrf.mxu0
      %9193 = vmatprep.mubr.f32.mxu0 0.0
      %9194 = vmatmul.mubr.f32.gmra.mxu0 %v9068
      %v9195 = vpop.f32.mrf.mxu0
      %v9196 = vadd.f32 0.0, %v9195
      %v9197 = vpop.f32.mrf.mxu0
      %9198 = vmatprep.mubr.f32.mxu0 0.0
      %9199 = vmatmul.mubr.f32.gmra.mxu0 %v9071
      %v9200 = vpop.f32.mrf.mxu0
      %v9201 = vadd.f32 0.0, %v9200
      %v9202 = vpop.f32.mrf.mxu0
      %9203 = vmatprep.mubr.f32.mxu0 0.0
      %9204 = vmatmul.mubr.f32.gmra.mxu0 %v9074
      %v9205 = vpop.f32.mrf.mxu0
      %v9206 = vadd.f32 0.0, %v9205
      %v9207 = vpop.f32.mrf.mxu0
      %9208 = vmatprep.mubr.f32.mxu0 0.0
      %9209 = vmatmul.mubr.f32.gmra.mxu0 %v9077
      %v9210 = vpop.f32.mrf.mxu0
      %v9211 = vadd.f32 0.0, %v9210
      %v9212 = vpop.f32.mrf.mxu0
      %9213 = vmatprep.mubr.f32.mxu0 0.0
      %9214 = vmatmul.mubr.f32.gmra.mxu0 %v9080
      %v9215 = vpop.f32.mrf.mxu0
      %v9216 = vadd.f32 0.0, %v9215
      %v9217 = vpop.f32.mrf.mxu0
      %9218 = vmatprep.mubr.f32.mxu0 0.0
      %9219 = vmatmul.mubr.f32.gmra.mxu0 %v9083
      %v9220 = vpop.f32.mrf.mxu0
      %v9221 = vadd.f32 0.0, %v9220
      %v9222 = vpop.f32.mrf.mxu0
      %9223 = vmatprep.mubr.f32.mxu0 0.0
      %9224 = vmatmul.mubr.f32.gmra.mxu0 %v9086
      %v9225 = vpop.f32.mrf.mxu0
      %v9226 = vadd.f32 0.0, %v9225
      %v9227 = vpop.f32.mrf.mxu0
      %9228 = vmatprep.mubr.f32.mxu0 0.0
      %9229 = vmatmul.mubr.f32.gmra.mxu0 %v9089
      %v9230 = vpop.f32.mrf.mxu0
      %v9231 = vadd.f32 0.0, %v9230
      %v9232 = vpop.f32.mrf.mxu0
      %9233 = vmatprep.mubr.f32.mxu0 0.0
      %9234 = vmatmul.mubr.f32.gmra.mxu0 %v9092
      %v9235 = vpop.f32.mrf.mxu0
      %v9236 = vadd.f32 0.0, %v9235
      %v9237 = vpop.f32.mrf.mxu0
      %9238 = vdwg.mxu0
      %v9239 = vadd.f32 %v9013, %v9161
      %v9240 = vadd.f32 %v9014, %v9166
      %v9241 = vadd.f32 %v9015, %v9171
      %v9242 = vadd.f32 %v9016, %v9176
      %v9243 = vadd.f32 %v9017, %v9181
      %v9244 = vadd.f32 %v9018, %v9186
      %v9245 = vadd.f32 %v9019, %v9191
      %v9246 = vadd.f32 %v9020, %v9196
      %v9247 = vadd.f32 %v9021, %v9201
      %v9248 = vadd.f32 %v9022, %v9206
      %v9249 = vadd.f32 %v9023, %v9211
      %v9250 = vadd.f32 %v9024, %v9216
      %v9251 = vadd.f32 %v9025, %v9221
      %v9252 = vadd.f32 %v9026, %v9226
      %v9253 = vadd.f32 %v9027, %v9231
      %v9254 = vadd.f32 %v9028, %v9236
      %s9255 = scalar_lea.vmem %s5, 2688
      %v9256 = vld [vmem:[%s9255] sm:$0xff]
      %v9257 = vld [vmem:[%s9255 + $0x8] sm:$0xff]
      %v9258 = vld [vmem:[%s9255 + $0x10] sm:$0xff]
      %v9259 = vld [vmem:[%s9255 + $0x18] sm:$0xff]
      %v9260 = vld [vmem:[%s9255 + $0x20] sm:$0xff]
      %v9261 = vld [vmem:[%s9255 + $0x28] sm:$0xff]
      %v9262 = vld [vmem:[%s9255 + $0x30] sm:$0xff]
      %v9263 = vld [vmem:[%s9255 + $0x38] sm:$0xff]
      %v9264 = vld [vmem:[%s9255 + $0x40] sm:$0xff]
      %v9265 = vld [vmem:[%s9255 + $0x48] sm:$0xff]
      %v9266 = vld [vmem:[%s9255 + $0x50] sm:$0xff]
      %v9267 = vld [vmem:[%s9255 + $0x58] sm:$0xff]
      %v9268 = vld [vmem:[%s9255 + $0x60] sm:$0xff]
      %v9269 = vld [vmem:[%s9255 + $0x68] sm:$0xff]
      %v9270 = vld [vmem:[%s9255 + $0x70] sm:$0xff]
      %v9271 = vld [vmem:[%s9255 + $0x78] sm:$0xff]
      %9280 = vrot.lane.b32.xlu0 %v4083, 96
      %v9281 = vpop.permute.xlu0 %9280
      %9282 = vrot.lane.b32.xlu0 %v4091, 96
      %v9283 = vpop.permute.xlu0 %9282
      %9284 = vrot.lane.b32.xlu0 %v4099, 96
      %v9285 = vpop.permute.xlu0 %9284
      %9286 = vrot.lane.b32.xlu0 %v4107, 96
      %v9287 = vpop.permute.xlu0 %9286
      %9288 = vrot.lane.b32.xlu0 %v4115, 96
      %v9289 = vpop.permute.xlu0 %9288
      %9290 = vrot.lane.b32.xlu0 %v4123, 96
      %v9291 = vpop.permute.xlu0 %9290
      %9292 = vrot.lane.b32.xlu0 %v4131, 96
      %v9293 = vpop.permute.xlu0 %9292
      %9294 = vrot.lane.b32.xlu0 %v4139, 96
      %v9295 = vpop.permute.xlu0 %9294
      %v9305 = vsel %vm1502, %v9256, 0
      %v9308 = vsel %vm1502, %v9257, 0
      %v9311 = vsel %vm1502, %v9258, 0
      %v9314 = vsel %vm1502, %v9259, 0
      %v9317 = vsel %vm1502, %v9260, 0
      %v9320 = vsel %vm1502, %v9261, 0
      %v9323 = vsel %vm1502, %v9262, 0
      %v9326 = vsel %vm1502, %v9263, 0
      %v9329 = vsel %vm1502, %v9264, 0
      %v9332 = vsel %vm1502, %v9265, 0
      %v9335 = vsel %vm1502, %v9266, 0
      %v9338 = vsel %vm1502, %v9267, 0
      %v9341 = vsel %vm1502, %v9268, 0
      %v9344 = vsel %vm1502, %v9269, 0
      %v9347 = vsel %vm1502, %v9270, 0
      %v9350 = vsel %vm1502, %v9271, 0
      %9352 = vmatprep.subr.mxu0 0.0
      %9353 = vmatpush1.msra.mxu0 0.0
      %9354 = vmatprep.subr.mxu0 0.0
      %9355 = vmatpush1.msra.mxu0 0.0
      %9356 = vmatprep.subr.mxu0 0.0
      %9357 = vmatpush1.msra.mxu0 0.0
      %9358 = vmatprep.subr.mxu0 0.0
      %9359 = vmatpush1.msra.mxu0 0.0
      %9360 = vmatprep.subr.mxu0 0.0
      %9361 = vmatpush1.msra.mxu0 0.0
      %9362 = vmatprep.subr.mxu0 0.0
      %9363 = vmatpush1.msra.mxu0 0.0
      %9364 = vmatprep.subr.mxu0 0.0
      %9365 = vmatpush1.msra.mxu0 0.0
      %9366 = vmatprep.subr.mxu0 0.0
      %9367 = vmatpush1.msra.mxu0 0.0
      %9368 = vmatprep.subr.mxu0 0.0
      %9369 = vmatpush1.msra.mxu0 %v9295
      %9370 = vmatprep.subr.mxu0 0.0
      %9371 = vmatpush1.msra.mxu0 %v9293
      %9372 = vmatprep.subr.mxu0 0.0
      %9373 = vmatpush1.msra.mxu0 %v9291
      %9374 = vmatprep.subr.mxu0 0.0
      %9375 = vmatpush1.msra.mxu0 %v9289
      %9376 = vmatprep.subr.mxu0 0.0
      %9377 = vmatpush1.msra.mxu0 %v9287
      %9378 = vmatprep.subr.mxu0 0.0
      %9379 = vmatpush1.msra.mxu0 %v9285
      %9380 = vmatprep.subr.mxu0 0.0
      %9381 = vmatpush1.msra.mxu0 %v9283
      %9382 = vmatprep.subr.mxu0 0.0
      %9383 = vmatpush1.msra.mxu0 %v9281
      %9384 = vmatprep.subr.mxu0 0.0
      %9385 = vmatpush2.msra.mxu0 0.0
      %9386 = vmatprep.subr.mxu0 0.0
      %9387 = vmatpush2.msra.mxu0 0.0
      %9388 = vmatprep.subr.mxu0 0.0
      %9389 = vmatpush2.msra.mxu0 0.0
      %9390 = vmatprep.subr.mxu0 0.0
      %9391 = vmatpush2.msra.mxu0 0.0
      %9392 = vmatprep.subr.mxu0 0.0
      %9393 = vmatpush2.msra.mxu0 0.0
      %9394 = vmatprep.subr.mxu0 0.0
      %9395 = vmatpush2.msra.mxu0 0.0
      %9396 = vmatprep.subr.mxu0 0.0
      %9397 = vmatpush2.msra.mxu0 0.0
      %9398 = vmatprep.subr.mxu0 0.0
      %9399 = vmatpush2.msra.mxu0 0.0
      %9400 = vmatprep.subr.mxu0 0.0
      %9401 = vmatpush2.msra.mxu0 0.0
      %9402 = vmatprep.subr.mxu0 0.0
      %9403 = vmatpush2.msra.mxu0 0.0
      %9404 = vmatprep.subr.mxu0 0.0
      %9405 = vmatpush2.msra.mxu0 0.0
      %9406 = vmatprep.subr.mxu0 0.0
      %9407 = vmatpush2.msra.mxu0 0.0
      %9408 = vmatprep.subr.mxu0 0.0
      %9409 = vmatpush2.msra.mxu0 0.0
      %9410 = vmatprep.subr.mxu0 0.0
      %9411 = vmatpush2.msra.mxu0 0.0
      %9412 = vmatprep.subr.mxu0 0.0
      %9413 = vmatpush2.msra.mxu0 0.0
      %9414 = vmatprep.subr.mxu0 0.0
      %9415 = vmatpush2.msra.mxu0 0.0
      %9416 = vmatprep.mubr.f32.mxu0 0.0
      %9417 = vmatmul.mubr.f32.gmra.mxu0 %v9305
      %v9418 = vpop.f32.mrf.mxu0
      %v9419 = vadd.f32 0.0, %v9418
      %v9420 = vpop.f32.mrf.mxu0
      %9421 = vmatprep.mubr.f32.mxu0 0.0
      %9422 = vmatmul.mubr.f32.gmra.mxu0 %v9308
      %v9423 = vpop.f32.mrf.mxu0
      %v9424 = vadd.f32 0.0, %v9423
      %v9425 = vpop.f32.mrf.mxu0
      %9426 = vmatprep.mubr.f32.mxu0 0.0
      %9427 = vmatmul.mubr.f32.gmra.mxu0 %v9311
      %v9428 = vpop.f32.mrf.mxu0
      %v9429 = vadd.f32 0.0, %v9428
      %v9430 = vpop.f32.mrf.mxu0
      %9431 = vmatprep.mubr.f32.mxu0 0.0
      %9432 = vmatmul.mubr.f32.gmra.mxu0 %v9314
      %v9433 = vpop.f32.mrf.mxu0
      %v9434 = vadd.f32 0.0, %v9433
      %v9435 = vpop.f32.mrf.mxu0
      %9436 = vmatprep.mubr.f32.mxu0 0.0
      %9437 = vmatmul.mubr.f32.gmra.mxu0 %v9317
      %v9438 = vpop.f32.mrf.mxu0
      %v9439 = vadd.f32 0.0, %v9438
      %v9440 = vpop.f32.mrf.mxu0
      %9441 = vmatprep.mubr.f32.mxu0 0.0
      %9442 = vmatmul.mubr.f32.gmra.mxu0 %v9320
      %v9443 = vpop.f32.mrf.mxu0
      %v9444 = vadd.f32 0.0, %v9443
      %v9445 = vpop.f32.mrf.mxu0
      %9446 = vmatprep.mubr.f32.mxu0 0.0
      %9447 = vmatmul.mubr.f32.gmra.mxu0 %v9323
      %v9448 = vpop.f32.mrf.mxu0
      %v9449 = vadd.f32 0.0, %v9448
      %v9450 = vpop.f32.mrf.mxu0
      %9451 = vmatprep.mubr.f32.mxu0 0.0
      %9452 = vmatmul.mubr.f32.gmra.mxu0 %v9326
      %v9453 = vpop.f32.mrf.mxu0
      %v9454 = vadd.f32 0.0, %v9453
      %v9455 = vpop.f32.mrf.mxu0
      %9456 = vmatprep.mubr.f32.mxu0 0.0
      %9457 = vmatmul.mubr.f32.gmra.mxu0 %v9329
      %v9458 = vpop.f32.mrf.mxu0
      %v9459 = vadd.f32 0.0, %v9458
      %v9460 = vpop.f32.mrf.mxu0
      %9461 = vmatprep.mubr.f32.mxu0 0.0
      %9462 = vmatmul.mubr.f32.gmra.mxu0 %v9332
      %v9463 = vpop.f32.mrf.mxu0
      %v9464 = vadd.f32 0.0, %v9463
      %v9465 = vpop.f32.mrf.mxu0
      %9466 = vmatprep.mubr.f32.mxu0 0.0
      %9467 = vmatmul.mubr.f32.gmra.mxu0 %v9335
      %v9468 = vpop.f32.mrf.mxu0
      %v9469 = vadd.f32 0.0, %v9468
      %v9470 = vpop.f32.mrf.mxu0
      %9471 = vmatprep.mubr.f32.mxu0 0.0
      %9472 = vmatmul.mubr.f32.gmra.mxu0 %v9338
      %v9473 = vpop.f32.mrf.mxu0
      %v9474 = vadd.f32 0.0, %v9473
      %v9475 = vpop.f32.mrf.mxu0
      %9476 = vmatprep.mubr.f32.mxu0 0.0
      %9477 = vmatmul.mubr.f32.gmra.mxu0 %v9341
      %v9478 = vpop.f32.mrf.mxu0
      %v9479 = vadd.f32 0.0, %v9478
      %v9480 = vpop.f32.mrf.mxu0
      %9481 = vmatprep.mubr.f32.mxu0 0.0
      %9482 = vmatmul.mubr.f32.gmra.mxu0 %v9344
      %v9483 = vpop.f32.mrf.mxu0
      %v9484 = vadd.f32 0.0, %v9483
      %v9485 = vpop.f32.mrf.mxu0
      %9486 = vmatprep.mubr.f32.mxu0 0.0
      %9487 = vmatmul.mubr.f32.gmra.mxu0 %v9347
      %v9488 = vpop.f32.mrf.mxu0
      %v9489 = vadd.f32 0.0, %v9488
      %v9490 = vpop.f32.mrf.mxu0
      %9491 = vmatprep.mubr.f32.mxu0 0.0
      %9492 = vmatmul.mubr.f32.gmra.mxu0 %v9350
      %v9493 = vpop.f32.mrf.mxu0
      %v9494 = vadd.f32 0.0, %v9493
      %v9495 = vpop.f32.mrf.mxu0
      %9496 = vdwg.mxu0
      %v9497 = vadd.f32 %v9239, %v9419
      %v9498 = vadd.f32 %v9240, %v9424
      %v9499 = vadd.f32 %v9241, %v9429
      %v9500 = vadd.f32 %v9242, %v9434
      %v9501 = vadd.f32 %v9243, %v9439
      %v9502 = vadd.f32 %v9244, %v9444
      %v9503 = vadd.f32 %v9245, %v9449
      %v9504 = vadd.f32 %v9246, %v9454
      %v9505 = vadd.f32 %v9247, %v9459
      %v9506 = vadd.f32 %v9248, %v9464
      %v9507 = vadd.f32 %v9249, %v9469
      %v9508 = vadd.f32 %v9250, %v9474
      %v9509 = vadd.f32 %v9251, %v9479
      %v9510 = vadd.f32 %v9252, %v9484
      %v9511 = vadd.f32 %v9253, %v9489
      %v9512 = vadd.f32 %v9254, %v9494
      %s9513 = scalar_lea.vmem %s5, 2816
      %v9514 = vld [vmem:[%s9513] sm:$0xff]
      %v9515 = vld [vmem:[%s9513 + $0x8] sm:$0xff]
      %v9516 = vld [vmem:[%s9513 + $0x10] sm:$0xff]
      %v9517 = vld [vmem:[%s9513 + $0x18] sm:$0xff]
      %v9518 = vld [vmem:[%s9513 + $0x20] sm:$0xff]
      %v9519 = vld [vmem:[%s9513 + $0x28] sm:$0xff]
      %v9520 = vld [vmem:[%s9513 + $0x30] sm:$0xff]
      %v9521 = vld [vmem:[%s9513 + $0x38] sm:$0xff]
      %v9522 = vld [vmem:[%s9513 + $0x40] sm:$0xff]
      %v9523 = vld [vmem:[%s9513 + $0x48] sm:$0xff]
      %v9524 = vld [vmem:[%s9513 + $0x50] sm:$0xff]
      %v9525 = vld [vmem:[%s9513 + $0x58] sm:$0xff]
      %v9526 = vld [vmem:[%s9513 + $0x60] sm:$0xff]
      %v9527 = vld [vmem:[%s9513 + $0x68] sm:$0xff]
      %v9528 = vld [vmem:[%s9513 + $0x70] sm:$0xff]
      %v9529 = vld [vmem:[%s9513 + $0x78] sm:$0xff]
      %9530 = vrot.lane.b32.xlu0 %v4083, 64
      %v9531 = vpop.permute.xlu0 %9530
      %9532 = vrot.lane.b32.xlu0 %v4091, 64
      %v9533 = vpop.permute.xlu0 %9532
      %9534 = vrot.lane.b32.xlu0 %v4099, 64
      %v9535 = vpop.permute.xlu0 %9534
      %9536 = vrot.lane.b32.xlu0 %v4107, 64
      %v9537 = vpop.permute.xlu0 %9536
      %9538 = vrot.lane.b32.xlu0 %v4115, 64
      %v9539 = vpop.permute.xlu0 %9538
      %9540 = vrot.lane.b32.xlu0 %v4123, 64
      %v9541 = vpop.permute.xlu0 %9540
      %9542 = vrot.lane.b32.xlu0 %v4131, 64
      %v9543 = vpop.permute.xlu0 %9542
      %9544 = vrot.lane.b32.xlu0 %v4139, 64
      %v9545 = vpop.permute.xlu0 %9544
      %v9555 = vsel %vm1502, %v9514, 0
      %v9558 = vsel %vm1502, %v9515, 0
      %v9561 = vsel %vm1502, %v9516, 0
      %v9564 = vsel %vm1502, %v9517, 0
      %v9567 = vsel %vm1502, %v9518, 0
      %v9570 = vsel %vm1502, %v9519, 0
      %v9573 = vsel %vm1502, %v9520, 0
      %v9576 = vsel %vm1502, %v9521, 0
      %v9579 = vsel %vm1502, %v9522, 0
      %v9582 = vsel %vm1502, %v9523, 0
      %v9585 = vsel %vm1502, %v9524, 0
      %v9588 = vsel %vm1502, %v9525, 0
      %v9591 = vsel %vm1502, %v9526, 0
      %v9594 = vsel %vm1502, %v9527, 0
      %v9597 = vsel %vm1502, %v9528, 0
      %v9600 = vsel %vm1502, %v9529, 0
      %9602 = vmatprep.subr.mxu0 0.0
      %9603 = vmatpush1.msra.mxu0 0.0
      %9604 = vmatprep.subr.mxu0 0.0
      %9605 = vmatpush1.msra.mxu0 0.0
      %9606 = vmatprep.subr.mxu0 0.0
      %9607 = vmatpush1.msra.mxu0 0.0
      %9608 = vmatprep.subr.mxu0 0.0
      %9609 = vmatpush1.msra.mxu0 0.0
      %9610 = vmatprep.subr.mxu0 0.0
      %9611 = vmatpush1.msra.mxu0 0.0
      %9612 = vmatprep.subr.mxu0 0.0
      %9613 = vmatpush1.msra.mxu0 0.0
      %9614 = vmatprep.subr.mxu0 0.0
      %9615 = vmatpush1.msra.mxu0 0.0
      %9616 = vmatprep.subr.mxu0 0.0
      %9617 = vmatpush1.msra.mxu0 0.0
      %9618 = vmatprep.subr.mxu0 0.0
      %9619 = vmatpush1.msra.mxu0 %v9545
      %9620 = vmatprep.subr.mxu0 0.0
      %9621 = vmatpush1.msra.mxu0 %v9543
      %9622 = vmatprep.subr.mxu0 0.0
      %9623 = vmatpush1.msra.mxu0 %v9541
      %9624 = vmatprep.subr.mxu0 0.0
      %9625 = vmatpush1.msra.mxu0 %v9539
      %9626 = vmatprep.subr.mxu0 0.0
      %9627 = vmatpush1.msra.mxu0 %v9537
      %9628 = vmatprep.subr.mxu0 0.0
      %9629 = vmatpush1.msra.mxu0 %v9535
      %9630 = vmatprep.subr.mxu0 0.0
      %9631 = vmatpush1.msra.mxu0 %v9533
      %9632 = vmatprep.subr.mxu0 0.0
      %9633 = vmatpush1.msra.mxu0 %v9531
      %9634 = vmatprep.subr.mxu0 0.0
      %9635 = vmatpush2.msra.mxu0 0.0
      %9636 = vmatprep.subr.mxu0 0.0
      %9637 = vmatpush2.msra.mxu0 0.0
      %9638 = vmatprep.subr.mxu0 0.0
      %9639 = vmatpush2.msra.mxu0 0.0
      %9640 = vmatprep.subr.mxu0 0.0
      %9641 = vmatpush2.msra.mxu0 0.0
      %9642 = vmatprep.subr.mxu0 0.0
      %9643 = vmatpush2.msra.mxu0 0.0
      %9644 = vmatprep.subr.mxu0 0.0
      %9645 = vmatpush2.msra.mxu0 0.0
      %9646 = vmatprep.subr.mxu0 0.0
      %9647 = vmatpush2.msra.mxu0 0.0
      %9648 = vmatprep.subr.mxu0 0.0
      %9649 = vmatpush2.msra.mxu0 0.0
      %9650 = vmatprep.subr.mxu0 0.0
      %9651 = vmatpush2.msra.mxu0 0.0
      %9652 = vmatprep.subr.mxu0 0.0
      %9653 = vmatpush2.msra.mxu0 0.0
      %9654 = vmatprep.subr.mxu0 0.0
      %9655 = vmatpush2.msra.mxu0 0.0
      %9656 = vmatprep.subr.mxu0 0.0
      %9657 = vmatpush2.msra.mxu0 0.0
      %9658 = vmatprep.subr.mxu0 0.0
      %9659 = vmatpush2.msra.mxu0 0.0
      %9660 = vmatprep.subr.mxu0 0.0
      %9661 = vmatpush2.msra.mxu0 0.0
      %9662 = vmatprep.subr.mxu0 0.0
      %9663 = vmatpush2.msra.mxu0 0.0
      %9664 = vmatprep.subr.mxu0 0.0
      %9665 = vmatpush2.msra.mxu0 0.0
      %9666 = vmatprep.mubr.f32.mxu0 0.0
      %9667 = vmatmul.mubr.f32.gmra.mxu0 %v9555
      %v9668 = vpop.f32.mrf.mxu0
      %v9669 = vadd.f32 0.0, %v9668
      %v9670 = vpop.f32.mrf.mxu0
      %9671 = vmatprep.mubr.f32.mxu0 0.0
      %9672 = vmatmul.mubr.f32.gmra.mxu0 %v9558
      %v9673 = vpop.f32.mrf.mxu0
      %v9674 = vadd.f32 0.0, %v9673
      %v9675 = vpop.f32.mrf.mxu0
      %9676 = vmatprep.mubr.f32.mxu0 0.0
      %9677 = vmatmul.mubr.f32.gmra.mxu0 %v9561
      %v9678 = vpop.f32.mrf.mxu0
      %v9679 = vadd.f32 0.0, %v9678
      %v9680 = vpop.f32.mrf.mxu0
      %9681 = vmatprep.mubr.f32.mxu0 0.0
      %9682 = vmatmul.mubr.f32.gmra.mxu0 %v9564
      %v9683 = vpop.f32.mrf.mxu0
      %v9684 = vadd.f32 0.0, %v9683
      %v9685 = vpop.f32.mrf.mxu0
      %9686 = vmatprep.mubr.f32.mxu0 0.0
      %9687 = vmatmul.mubr.f32.gmra.mxu0 %v9567
      %v9688 = vpop.f32.mrf.mxu0
      %v9689 = vadd.f32 0.0, %v9688
      %v9690 = vpop.f32.mrf.mxu0
      %9691 = vmatprep.mubr.f32.mxu0 0.0
      %9692 = vmatmul.mubr.f32.gmra.mxu0 %v9570
      %v9693 = vpop.f32.mrf.mxu0
      %v9694 = vadd.f32 0.0, %v9693
      %v9695 = vpop.f32.mrf.mxu0
      %9696 = vmatprep.mubr.f32.mxu0 0.0
      %9697 = vmatmul.mubr.f32.gmra.mxu0 %v9573
      %v9698 = vpop.f32.mrf.mxu0
      %v9699 = vadd.f32 0.0, %v9698
      %v9700 = vpop.f32.mrf.mxu0
      %9701 = vmatprep.mubr.f32.mxu0 0.0
      %9702 = vmatmul.mubr.f32.gmra.mxu0 %v9576
      %v9703 = vpop.f32.mrf.mxu0
      %v9704 = vadd.f32 0.0, %v9703
      %v9705 = vpop.f32.mrf.mxu0
      %9706 = vmatprep.mubr.f32.mxu0 0.0
      %9707 = vmatmul.mubr.f32.gmra.mxu0 %v9579
      %v9708 = vpop.f32.mrf.mxu0
      %v9709 = vadd.f32 0.0, %v9708
      %v9710 = vpop.f32.mrf.mxu0
      %9711 = vmatprep.mubr.f32.mxu0 0.0
      %9712 = vmatmul.mubr.f32.gmra.mxu0 %v9582
      %v9713 = vpop.f32.mrf.mxu0
      %v9714 = vadd.f32 0.0, %v9713
      %v9715 = vpop.f32.mrf.mxu0
      %9716 = vmatprep.mubr.f32.mxu0 0.0
      %9717 = vmatmul.mubr.f32.gmra.mxu0 %v9585
      %v9718 = vpop.f32.mrf.mxu0
      %v9719 = vadd.f32 0.0, %v9718
      %v9720 = vpop.f32.mrf.mxu0
      %9721 = vmatprep.mubr.f32.mxu0 0.0
      %9722 = vmatmul.mubr.f32.gmra.mxu0 %v9588
      %v9723 = vpop.f32.mrf.mxu0
      %v9724 = vadd.f32 0.0, %v9723
      %v9725 = vpop.f32.mrf.mxu0
      %9726 = vmatprep.mubr.f32.mxu0 0.0
      %9727 = vmatmul.mubr.f32.gmra.mxu0 %v9591
      %v9728 = vpop.f32.mrf.mxu0
      %v9729 = vadd.f32 0.0, %v9728
      %v9730 = vpop.f32.mrf.mxu0
      %9731 = vmatprep.mubr.f32.mxu0 0.0
      %9732 = vmatmul.mubr.f32.gmra.mxu0 %v9594
      %v9733 = vpop.f32.mrf.mxu0
      %v9734 = vadd.f32 0.0, %v9733
      %v9735 = vpop.f32.mrf.mxu0
      %9736 = vmatprep.mubr.f32.mxu0 0.0
      %9737 = vmatmul.mubr.f32.gmra.mxu0 %v9597
      %v9738 = vpop.f32.mrf.mxu0
      %v9739 = vadd.f32 0.0, %v9738
      %v9740 = vpop.f32.mrf.mxu0
      %9741 = vmatprep.mubr.f32.mxu0 0.0
      %9742 = vmatmul.mubr.f32.gmra.mxu0 %v9600
      %v9743 = vpop.f32.mrf.mxu0
      %v9744 = vadd.f32 0.0, %v9743
      %v9745 = vpop.f32.mrf.mxu0
      %9746 = vdwg.mxu0
      %v9747 = vadd.f32 %v9497, %v9669
      %v9748 = vadd.f32 %v9498, %v9674
      %v9749 = vadd.f32 %v9499, %v9679
      %v9750 = vadd.f32 %v9500, %v9684
      %v9751 = vadd.f32 %v9501, %v9689
      %v9752 = vadd.f32 %v9502, %v9694
      %v9753 = vadd.f32 %v9503, %v9699
      %v9754 = vadd.f32 %v9504, %v9704
      %v9755 = vadd.f32 %v9505, %v9709
      %v9756 = vadd.f32 %v9506, %v9714
      %v9757 = vadd.f32 %v9507, %v9719
      %v9758 = vadd.f32 %v9508, %v9724
      %v9759 = vadd.f32 %v9509, %v9729
      %v9760 = vadd.f32 %v9510, %v9734
      %v9761 = vadd.f32 %v9511, %v9739
      %v9762 = vadd.f32 %v9512, %v9744
      %s9763 = scalar_lea.vmem %s5, 2944
      %v9764 = vld [vmem:[%s9763] sm:$0xff]
      %v9765 = vld [vmem:[%s9763 + $0x8] sm:$0xff]
      %v9766 = vld [vmem:[%s9763 + $0x10] sm:$0xff]
      %v9767 = vld [vmem:[%s9763 + $0x18] sm:$0xff]
      %v9768 = vld [vmem:[%s9763 + $0x20] sm:$0xff]
      %v9769 = vld [vmem:[%s9763 + $0x28] sm:$0xff]
      %v9770 = vld [vmem:[%s9763 + $0x30] sm:$0xff]
      %v9771 = vld [vmem:[%s9763 + $0x38] sm:$0xff]
      %v9772 = vld [vmem:[%s9763 + $0x40] sm:$0xff]
      %v9773 = vld [vmem:[%s9763 + $0x48] sm:$0xff]
      %v9774 = vld [vmem:[%s9763 + $0x50] sm:$0xff]
      %v9775 = vld [vmem:[%s9763 + $0x58] sm:$0xff]
      %v9776 = vld [vmem:[%s9763 + $0x60] sm:$0xff]
      %v9777 = vld [vmem:[%s9763 + $0x68] sm:$0xff]
      %v9778 = vld [vmem:[%s9763 + $0x70] sm:$0xff]
      %v9779 = vld [vmem:[%s9763 + $0x78] sm:$0xff]
      %9780 = vrot.lane.b32.xlu0 %v4083, 32
      %v9781 = vpop.permute.xlu0 %9780
      %9782 = vrot.lane.b32.xlu0 %v4091, 32
      %v9783 = vpop.permute.xlu0 %9782
      %9784 = vrot.lane.b32.xlu0 %v4099, 32
      %v9785 = vpop.permute.xlu0 %9784
      %9786 = vrot.lane.b32.xlu0 %v4107, 32
      %v9787 = vpop.permute.xlu0 %9786
      %9788 = vrot.lane.b32.xlu0 %v4115, 32
      %v9789 = vpop.permute.xlu0 %9788
      %9790 = vrot.lane.b32.xlu0 %v4123, 32
      %v9791 = vpop.permute.xlu0 %9790
      %9792 = vrot.lane.b32.xlu0 %v4131, 32
      %v9793 = vpop.permute.xlu0 %9792
      %9794 = vrot.lane.b32.xlu0 %v4139, 32
      %v9795 = vpop.permute.xlu0 %9794
      %v9805 = vsel %vm1502, %v9764, 0
      %v9808 = vsel %vm1502, %v9765, 0
      %v9811 = vsel %vm1502, %v9766, 0
      %v9814 = vsel %vm1502, %v9767, 0
      %v9817 = vsel %vm1502, %v9768, 0
      %v9820 = vsel %vm1502, %v9769, 0
      %v9823 = vsel %vm1502, %v9770, 0
      %v9826 = vsel %vm1502, %v9771, 0
      %v9829 = vsel %vm1502, %v9772, 0
      %v9832 = vsel %vm1502, %v9773, 0
      %v9835 = vsel %vm1502, %v9774, 0
      %v9838 = vsel %vm1502, %v9775, 0
      %v9841 = vsel %vm1502, %v9776, 0
      %v9844 = vsel %vm1502, %v9777, 0
      %v9847 = vsel %vm1502, %v9778, 0
      %v9850 = vsel %vm1502, %v9779, 0
      %9852 = vmatprep.subr.mxu0 0.0
      %9853 = vmatpush1.msra.mxu0 0.0
      %9854 = vmatprep.subr.mxu0 0.0
      %9855 = vmatpush1.msra.mxu0 0.0
      %9856 = vmatprep.subr.mxu0 0.0
      %9857 = vmatpush1.msra.mxu0 0.0
      %9858 = vmatprep.subr.mxu0 0.0
      %9859 = vmatpush1.msra.mxu0 0.0
      %9860 = vmatprep.subr.mxu0 0.0
      %9861 = vmatpush1.msra.mxu0 0.0
      %9862 = vmatprep.subr.mxu0 0.0
      %9863 = vmatpush1.msra.mxu0 0.0
      %9864 = vmatprep.subr.mxu0 0.0
      %9865 = vmatpush1.msra.mxu0 0.0
      %9866 = vmatprep.subr.mxu0 0.0
      %9867 = vmatpush1.msra.mxu0 0.0
      %9868 = vmatprep.subr.mxu0 0.0
      %9869 = vmatpush1.msra.mxu0 %v9795
      %9870 = vmatprep.subr.mxu0 0.0
      %9871 = vmatpush1.msra.mxu0 %v9793
      %9872 = vmatprep.subr.mxu0 0.0
      %9873 = vmatpush1.msra.mxu0 %v9791
      %9874 = vmatprep.subr.mxu0 0.0
      %9875 = vmatpush1.msra.mxu0 %v9789
      %9876 = vmatprep.subr.mxu0 0.0
      %9877 = vmatpush1.msra.mxu0 %v9787
      %9878 = vmatprep.subr.mxu0 0.0
      %9879 = vmatpush1.msra.mxu0 %v9785
      %9880 = vmatprep.subr.mxu0 0.0
      %9881 = vmatpush1.msra.mxu0 %v9783
      %9882 = vmatprep.subr.mxu0 0.0
      %9883 = vmatpush1.msra.mxu0 %v9781
      %9884 = vmatprep.subr.mxu0 0.0
      %9885 = vmatpush2.msra.mxu0 0.0
      %9886 = vmatprep.subr.mxu0 0.0
      %9887 = vmatpush2.msra.mxu0 0.0
      %9888 = vmatprep.subr.mxu0 0.0
      %9889 = vmatpush2.msra.mxu0 0.0
      %9890 = vmatprep.subr.mxu0 0.0
      %9891 = vmatpush2.msra.mxu0 0.0
      %9892 = vmatprep.subr.mxu0 0.0
      %9893 = vmatpush2.msra.mxu0 0.0
      %9894 = vmatprep.subr.mxu0 0.0
      %9895 = vmatpush2.msra.mxu0 0.0
      %9896 = vmatprep.subr.mxu0 0.0
      %9897 = vmatpush2.msra.mxu0 0.0
      %9898 = vmatprep.subr.mxu0 0.0
      %9899 = vmatpush2.msra.mxu0 0.0
      %9900 = vmatprep.subr.mxu0 0.0
      %9901 = vmatpush2.msra.mxu0 0.0
      %9902 = vmatprep.subr.mxu0 0.0
      %9903 = vmatpush2.msra.mxu0 0.0
      %9904 = vmatprep.subr.mxu0 0.0
      %9905 = vmatpush2.msra.mxu0 0.0
      %9906 = vmatprep.subr.mxu0 0.0
      %9907 = vmatpush2.msra.mxu0 0.0
      %9908 = vmatprep.subr.mxu0 0.0
      %9909 = vmatpush2.msra.mxu0 0.0
      %9910 = vmatprep.subr.mxu0 0.0
      %9911 = vmatpush2.msra.mxu0 0.0
      %9912 = vmatprep.subr.mxu0 0.0
      %9913 = vmatpush2.msra.mxu0 0.0
      %9914 = vmatprep.subr.mxu0 0.0
      %9915 = vmatpush2.msra.mxu0 0.0
      %9916 = vmatprep.mubr.f32.mxu0 0.0
      %9917 = vmatmul.mubr.f32.gmra.mxu0 %v9805
      %v9918 = vpop.f32.mrf.mxu0
      %v9919 = vadd.f32 0.0, %v9918
      %v9920 = vpop.f32.mrf.mxu0
      %9921 = vmatprep.mubr.f32.mxu0 0.0
      %9922 = vmatmul.mubr.f32.gmra.mxu0 %v9808
      %v9923 = vpop.f32.mrf.mxu0
      %v9924 = vadd.f32 0.0, %v9923
      %v9925 = vpop.f32.mrf.mxu0
      %9926 = vmatprep.mubr.f32.mxu0 0.0
      %9927 = vmatmul.mubr.f32.gmra.mxu0 %v9811
      %v9928 = vpop.f32.mrf.mxu0
      %v9929 = vadd.f32 0.0, %v9928
      %v9930 = vpop.f32.mrf.mxu0
      %9931 = vmatprep.mubr.f32.mxu0 0.0
      %9932 = vmatmul.mubr.f32.gmra.mxu0 %v9814
      %v9933 = vpop.f32.mrf.mxu0
      %v9934 = vadd.f32 0.0, %v9933
      %v9935 = vpop.f32.mrf.mxu0
      %9936 = vmatprep.mubr.f32.mxu0 0.0
      %9937 = vmatmul.mubr.f32.gmra.mxu0 %v9817
      %v9938 = vpop.f32.mrf.mxu0
      %v9939 = vadd.f32 0.0, %v9938
      %v9940 = vpop.f32.mrf.mxu0
      %9941 = vmatprep.mubr.f32.mxu0 0.0
      %9942 = vmatmul.mubr.f32.gmra.mxu0 %v9820
      %v9943 = vpop.f32.mrf.mxu0
      %v9944 = vadd.f32 0.0, %v9943
      %v9945 = vpop.f32.mrf.mxu0
      %9946 = vmatprep.mubr.f32.mxu0 0.0
      %9947 = vmatmul.mubr.f32.gmra.mxu0 %v9823
      %v9948 = vpop.f32.mrf.mxu0
      %v9949 = vadd.f32 0.0, %v9948
      %v9950 = vpop.f32.mrf.mxu0
      %9951 = vmatprep.mubr.f32.mxu0 0.0
      %9952 = vmatmul.mubr.f32.gmra.mxu0 %v9826
      %v9953 = vpop.f32.mrf.mxu0
      %v9954 = vadd.f32 0.0, %v9953
      %v9955 = vpop.f32.mrf.mxu0
      %9956 = vmatprep.mubr.f32.mxu0 0.0
      %9957 = vmatmul.mubr.f32.gmra.mxu0 %v9829
      %v9958 = vpop.f32.mrf.mxu0
      %v9959 = vadd.f32 0.0, %v9958
      %v9960 = vpop.f32.mrf.mxu0
      %9961 = vmatprep.mubr.f32.mxu0 0.0
      %9962 = vmatmul.mubr.f32.gmra.mxu0 %v9832
      %v9963 = vpop.f32.mrf.mxu0
      %v9964 = vadd.f32 0.0, %v9963
      %v9965 = vpop.f32.mrf.mxu0
      %9966 = vmatprep.mubr.f32.mxu0 0.0
      %9967 = vmatmul.mubr.f32.gmra.mxu0 %v9835
      %v9968 = vpop.f32.mrf.mxu0
      %v9969 = vadd.f32 0.0, %v9968
      %v9970 = vpop.f32.mrf.mxu0
      %9971 = vmatprep.mubr.f32.mxu0 0.0
      %9972 = vmatmul.mubr.f32.gmra.mxu0 %v9838
      %v9973 = vpop.f32.mrf.mxu0
      %v9974 = vadd.f32 0.0, %v9973
      %v9975 = vpop.f32.mrf.mxu0
      %9976 = vmatprep.mubr.f32.mxu0 0.0
      %9977 = vmatmul.mubr.f32.gmra.mxu0 %v9841
      %v9978 = vpop.f32.mrf.mxu0
      %v9979 = vadd.f32 0.0, %v9978
      %v9980 = vpop.f32.mrf.mxu0
      %9981 = vmatprep.mubr.f32.mxu0 0.0
      %9982 = vmatmul.mubr.f32.gmra.mxu0 %v9844
      %v9983 = vpop.f32.mrf.mxu0
      %v9984 = vadd.f32 0.0, %v9983
      %v9985 = vpop.f32.mrf.mxu0
      %9986 = vmatprep.mubr.f32.mxu0 0.0
      %9987 = vmatmul.mubr.f32.gmra.mxu0 %v9847
      %v9988 = vpop.f32.mrf.mxu0
      %v9989 = vadd.f32 0.0, %v9988
      %v9990 = vpop.f32.mrf.mxu0
      %9991 = vmatprep.mubr.f32.mxu0 0.0
      %9992 = vmatmul.mubr.f32.gmra.mxu0 %v9850
      %v9993 = vpop.f32.mrf.mxu0
      %v9994 = vadd.f32 0.0, %v9993
      %v9995 = vpop.f32.mrf.mxu0
      %9996 = vdwg.mxu0
      %v9997 = vadd.f32 %v9747, %v9919
      %v9998 = vadd.f32 %v9748, %v9924
      %v9999 = vadd.f32 %v9749, %v9929
      %v10000 = vadd.f32 %v9750, %v9934
      %v10001 = vadd.f32 %v9751, %v9939
      %v10002 = vadd.f32 %v9752, %v9944
      %v10003 = vadd.f32 %v9753, %v9949
      %v10004 = vadd.f32 %v9754, %v9954
      %v10005 = vadd.f32 %v9755, %v9959
      %v10006 = vadd.f32 %v9756, %v9964
      %v10007 = vadd.f32 %v9757, %v9969
      %v10008 = vadd.f32 %v9758, %v9974
      %v10009 = vadd.f32 %v9759, %v9979
      %v10010 = vadd.f32 %v9760, %v9984
      %v10011 = vadd.f32 %v9761, %v9989
      %v10012 = vadd.f32 %v9762, %v9994
      %s10013 = scalar_lea.vmem %s5, 3072
      %v10014 = vld [vmem:[%s10013] sm:$0xff]
      %v10015 = vld [vmem:[%s10013 + $0x8] sm:$0xff]
      %v10016 = vld [vmem:[%s10013 + $0x10] sm:$0xff]
      %v10017 = vld [vmem:[%s10013 + $0x18] sm:$0xff]
      %v10018 = vld [vmem:[%s10013 + $0x20] sm:$0xff]
      %v10019 = vld [vmem:[%s10013 + $0x28] sm:$0xff]
      %v10020 = vld [vmem:[%s10013 + $0x30] sm:$0xff]
      %v10021 = vld [vmem:[%s10013 + $0x38] sm:$0xff]
      %v10022 = vld [vmem:[%s10013 + $0x40] sm:$0xff]
      %v10023 = vld [vmem:[%s10013 + $0x48] sm:$0xff]
      %v10024 = vld [vmem:[%s10013 + $0x50] sm:$0xff]
      %v10025 = vld [vmem:[%s10013 + $0x58] sm:$0xff]
      %v10026 = vld [vmem:[%s10013 + $0x60] sm:$0xff]
      %v10027 = vld [vmem:[%s10013 + $0x68] sm:$0xff]
      %v10028 = vld [vmem:[%s10013 + $0x70] sm:$0xff]
      %v10029 = vld [vmem:[%s10013 + $0x78] sm:$0xff]
      %v10031 = vsel %vm1502, %v10014, 0
      %v10034 = vsel %vm1502, %v10015, 0
      %v10037 = vsel %vm1502, %v10016, 0
      %v10040 = vsel %vm1502, %v10017, 0
      %v10043 = vsel %vm1502, %v10018, 0
      %v10046 = vsel %vm1502, %v10019, 0
      %v10049 = vsel %vm1502, %v10020, 0
      %v10052 = vsel %vm1502, %v10021, 0
      %v10055 = vsel %vm1502, %v10022, 0
      %v10058 = vsel %vm1502, %v10023, 0
      %v10061 = vsel %vm1502, %v10024, 0
      %v10064 = vsel %vm1502, %v10025, 0
      %v10067 = vsel %vm1502, %v10026, 0
      %v10070 = vsel %vm1502, %v10027, 0
      %v10073 = vsel %vm1502, %v10028, 0
      %v10076 = vsel %vm1502, %v10029, 0
      %10078 = vmatprep.subr.mxu0 0.0
      %10079 = vmatpush1.msra.mxu0 0.0
      %10080 = vmatprep.subr.mxu0 0.0
      %10081 = vmatpush1.msra.mxu0 0.0
      %10082 = vmatprep.subr.mxu0 0.0
      %10083 = vmatpush1.msra.mxu0 0.0
      %10084 = vmatprep.subr.mxu0 0.0
      %10085 = vmatpush1.msra.mxu0 0.0
      %10086 = vmatprep.subr.mxu0 0.0
      %10087 = vmatpush1.msra.mxu0 0.0
      %10088 = vmatprep.subr.mxu0 0.0
      %10089 = vmatpush1.msra.mxu0 0.0
      %10090 = vmatprep.subr.mxu0 0.0
      %10091 = vmatpush1.msra.mxu0 0.0
      %10092 = vmatprep.subr.mxu0 0.0
      %10093 = vmatpush1.msra.mxu0 0.0
      %10094 = vmatprep.subr.mxu0 0.0
      %10095 = vmatpush1.msra.mxu0 %v4140
      %10096 = vmatprep.subr.mxu0 0.0
      %10097 = vmatpush1.msra.mxu0 %v4132
      %10098 = vmatprep.subr.mxu0 0.0
      %10099 = vmatpush1.msra.mxu0 %v4124
      %10100 = vmatprep.subr.mxu0 0.0
      %10101 = vmatpush1.msra.mxu0 %v4116
      %10102 = vmatprep.subr.mxu0 0.0
      %10103 = vmatpush1.msra.mxu0 %v4108
      %10104 = vmatprep.subr.mxu0 0.0
      %10105 = vmatpush1.msra.mxu0 %v4100
      %10106 = vmatprep.subr.mxu0 0.0
      %10107 = vmatpush1.msra.mxu0 %v4092
      %10108 = vmatprep.subr.mxu0 0.0
      %10109 = vmatpush1.msra.mxu0 %v4084
      %10110 = vmatprep.subr.mxu0 0.0
      %10111 = vmatpush2.msra.mxu0 0.0
      %10112 = vmatprep.subr.mxu0 0.0
      %10113 = vmatpush2.msra.mxu0 0.0
      %10114 = vmatprep.subr.mxu0 0.0
      %10115 = vmatpush2.msra.mxu0 0.0
      %10116 = vmatprep.subr.mxu0 0.0
      %10117 = vmatpush2.msra.mxu0 0.0
      %10118 = vmatprep.subr.mxu0 0.0
      %10119 = vmatpush2.msra.mxu0 0.0
      %10120 = vmatprep.subr.mxu0 0.0
      %10121 = vmatpush2.msra.mxu0 0.0
      %10122 = vmatprep.subr.mxu0 0.0
      %10123 = vmatpush2.msra.mxu0 0.0
      %10124 = vmatprep.subr.mxu0 0.0
      %10125 = vmatpush2.msra.mxu0 0.0
      %10126 = vmatprep.subr.mxu0 0.0
      %10127 = vmatpush2.msra.mxu0 0.0
      %10128 = vmatprep.subr.mxu0 0.0
      %10129 = vmatpush2.msra.mxu0 0.0
      %10130 = vmatprep.subr.mxu0 0.0
      %10131 = vmatpush2.msra.mxu0 0.0
      %10132 = vmatprep.subr.mxu0 0.0
      %10133 = vmatpush2.msra.mxu0 0.0
      %10134 = vmatprep.subr.mxu0 0.0
      %10135 = vmatpush2.msra.mxu0 0.0
      %10136 = vmatprep.subr.mxu0 0.0
      %10137 = vmatpush2.msra.mxu0 0.0
      %10138 = vmatprep.subr.mxu0 0.0
      %10139 = vmatpush2.msra.mxu0 0.0
      %10140 = vmatprep.subr.mxu0 0.0
      %10141 = vmatpush2.msra.mxu0 0.0
      %10142 = vmatprep.mubr.f32.mxu0 0.0
      %10143 = vmatmul.mubr.f32.gmra.mxu0 %v10031
      %v10144 = vpop.f32.mrf.mxu0
      %v10145 = vadd.f32 0.0, %v10144
      %v10146 = vpop.f32.mrf.mxu0
      %10147 = vmatprep.mubr.f32.mxu0 0.0
      %10148 = vmatmul.mubr.f32.gmra.mxu0 %v10034
      %v10149 = vpop.f32.mrf.mxu0
      %v10150 = vadd.f32 0.0, %v10149
      %v10151 = vpop.f32.mrf.mxu0
      %10152 = vmatprep.mubr.f32.mxu0 0.0
      %10153 = vmatmul.mubr.f32.gmra.mxu0 %v10037
      %v10154 = vpop.f32.mrf.mxu0
      %v10155 = vadd.f32 0.0, %v10154
      %v10156 = vpop.f32.mrf.mxu0
      %10157 = vmatprep.mubr.f32.mxu0 0.0
      %10158 = vmatmul.mubr.f32.gmra.mxu0 %v10040
      %v10159 = vpop.f32.mrf.mxu0
      %v10160 = vadd.f32 0.0, %v10159
      %v10161 = vpop.f32.mrf.mxu0
      %10162 = vmatprep.mubr.f32.mxu0 0.0
      %10163 = vmatmul.mubr.f32.gmra.mxu0 %v10043
      %v10164 = vpop.f32.mrf.mxu0
      %v10165 = vadd.f32 0.0, %v10164
      %v10166 = vpop.f32.mrf.mxu0
      %10167 = vmatprep.mubr.f32.mxu0 0.0
      %10168 = vmatmul.mubr.f32.gmra.mxu0 %v10046
      %v10169 = vpop.f32.mrf.mxu0
      %v10170 = vadd.f32 0.0, %v10169
      %v10171 = vpop.f32.mrf.mxu0
      %10172 = vmatprep.mubr.f32.mxu0 0.0
      %10173 = vmatmul.mubr.f32.gmra.mxu0 %v10049
      %v10174 = vpop.f32.mrf.mxu0
      %v10175 = vadd.f32 0.0, %v10174
      %v10176 = vpop.f32.mrf.mxu0
      %10177 = vmatprep.mubr.f32.mxu0 0.0
      %10178 = vmatmul.mubr.f32.gmra.mxu0 %v10052
      %v10179 = vpop.f32.mrf.mxu0
      %v10180 = vadd.f32 0.0, %v10179
      %v10181 = vpop.f32.mrf.mxu0
      %10182 = vmatprep.mubr.f32.mxu0 0.0
      %10183 = vmatmul.mubr.f32.gmra.mxu0 %v10055
      %v10184 = vpop.f32.mrf.mxu0
      %v10185 = vadd.f32 0.0, %v10184
      %v10186 = vpop.f32.mrf.mxu0
      %10187 = vmatprep.mubr.f32.mxu0 0.0
      %10188 = vmatmul.mubr.f32.gmra.mxu0 %v10058
      %v10189 = vpop.f32.mrf.mxu0
      %v10190 = vadd.f32 0.0, %v10189
      %v10191 = vpop.f32.mrf.mxu0
      %10192 = vmatprep.mubr.f32.mxu0 0.0
      %10193 = vmatmul.mubr.f32.gmra.mxu0 %v10061
      %v10194 = vpop.f32.mrf.mxu0
      %v10195 = vadd.f32 0.0, %v10194
      %v10196 = vpop.f32.mrf.mxu0
      %10197 = vmatprep.mubr.f32.mxu0 0.0
      %10198 = vmatmul.mubr.f32.gmra.mxu0 %v10064
      %v10199 = vpop.f32.mrf.mxu0
      %v10200 = vadd.f32 0.0, %v10199
      %v10201 = vpop.f32.mrf.mxu0
      %10202 = vmatprep.mubr.f32.mxu0 0.0
      %10203 = vmatmul.mubr.f32.gmra.mxu0 %v10067
      %v10204 = vpop.f32.mrf.mxu0
      %v10205 = vadd.f32 0.0, %v10204
      %v10206 = vpop.f32.mrf.mxu0
      %10207 = vmatprep.mubr.f32.mxu0 0.0
      %10208 = vmatmul.mubr.f32.gmra.mxu0 %v10070
      %v10209 = vpop.f32.mrf.mxu0
      %v10210 = vadd.f32 0.0, %v10209
      %v10211 = vpop.f32.mrf.mxu0
      %10212 = vmatprep.mubr.f32.mxu0 0.0
      %10213 = vmatmul.mubr.f32.gmra.mxu0 %v10073
      %v10214 = vpop.f32.mrf.mxu0
      %v10215 = vadd.f32 0.0, %v10214
      %v10216 = vpop.f32.mrf.mxu0
      %10217 = vmatprep.mubr.f32.mxu0 0.0
      %10218 = vmatmul.mubr.f32.gmra.mxu0 %v10076
      %v10219 = vpop.f32.mrf.mxu0
      %v10220 = vadd.f32 0.0, %v10219
      %v10221 = vpop.f32.mrf.mxu0
      %10222 = vdwg.mxu0
      %v10223 = vadd.f32 %v9997, %v10145
      %v10224 = vadd.f32 %v9998, %v10150
      %v10225 = vadd.f32 %v9999, %v10155
      %v10226 = vadd.f32 %v10000, %v10160
      %v10227 = vadd.f32 %v10001, %v10165
      %v10228 = vadd.f32 %v10002, %v10170
      %v10229 = vadd.f32 %v10003, %v10175
      %v10230 = vadd.f32 %v10004, %v10180
      %v10231 = vadd.f32 %v10005, %v10185
      %v10232 = vadd.f32 %v10006, %v10190
      %v10233 = vadd.f32 %v10007, %v10195
      %v10234 = vadd.f32 %v10008, %v10200
      %v10235 = vadd.f32 %v10009, %v10205
      %v10236 = vadd.f32 %v10010, %v10210
      %v10237 = vadd.f32 %v10011, %v10215
      %v10238 = vadd.f32 %v10012, %v10220
      %s10239 = scalar_lea.vmem %s5, 3200
      %v10240 = vld [vmem:[%s10239] sm:$0xff]
      %v10241 = vld [vmem:[%s10239 + $0x8] sm:$0xff]
      %v10242 = vld [vmem:[%s10239 + $0x10] sm:$0xff]
      %v10243 = vld [vmem:[%s10239 + $0x18] sm:$0xff]
      %v10244 = vld [vmem:[%s10239 + $0x20] sm:$0xff]
      %v10245 = vld [vmem:[%s10239 + $0x28] sm:$0xff]
      %v10246 = vld [vmem:[%s10239 + $0x30] sm:$0xff]
      %v10247 = vld [vmem:[%s10239 + $0x38] sm:$0xff]
      %v10248 = vld [vmem:[%s10239 + $0x40] sm:$0xff]
      %v10249 = vld [vmem:[%s10239 + $0x48] sm:$0xff]
      %v10250 = vld [vmem:[%s10239 + $0x50] sm:$0xff]
      %v10251 = vld [vmem:[%s10239 + $0x58] sm:$0xff]
      %v10252 = vld [vmem:[%s10239 + $0x60] sm:$0xff]
      %v10253 = vld [vmem:[%s10239 + $0x68] sm:$0xff]
      %v10254 = vld [vmem:[%s10239 + $0x70] sm:$0xff]
      %v10255 = vld [vmem:[%s10239 + $0x78] sm:$0xff]
      %10264 = vrot.lane.b32.xlu0 %v4084, 96
      %v10265 = vpop.permute.xlu0 %10264
      %10266 = vrot.lane.b32.xlu0 %v4092, 96
      %v10267 = vpop.permute.xlu0 %10266
      %10268 = vrot.lane.b32.xlu0 %v4100, 96
      %v10269 = vpop.permute.xlu0 %10268
      %10270 = vrot.lane.b32.xlu0 %v4108, 96
      %v10271 = vpop.permute.xlu0 %10270
      %10272 = vrot.lane.b32.xlu0 %v4116, 96
      %v10273 = vpop.permute.xlu0 %10272
      %10274 = vrot.lane.b32.xlu0 %v4124, 96
      %v10275 = vpop.permute.xlu0 %10274
      %10276 = vrot.lane.b32.xlu0 %v4132, 96
      %v10277 = vpop.permute.xlu0 %10276
      %10278 = vrot.lane.b32.xlu0 %v4140, 96
      %v10279 = vpop.permute.xlu0 %10278
      %v10289 = vsel %vm1502, %v10240, 0
      %v10292 = vsel %vm1502, %v10241, 0
      %v10295 = vsel %vm1502, %v10242, 0
      %v10298 = vsel %vm1502, %v10243, 0
      %v10301 = vsel %vm1502, %v10244, 0
      %v10304 = vsel %vm1502, %v10245, 0
      %v10307 = vsel %vm1502, %v10246, 0
      %v10310 = vsel %vm1502, %v10247, 0
      %v10313 = vsel %vm1502, %v10248, 0
      %v10316 = vsel %vm1502, %v10249, 0
      %v10319 = vsel %vm1502, %v10250, 0
      %v10322 = vsel %vm1502, %v10251, 0
      %v10325 = vsel %vm1502, %v10252, 0
      %v10328 = vsel %vm1502, %v10253, 0
      %v10331 = vsel %vm1502, %v10254, 0
      %v10334 = vsel %vm1502, %v10255, 0
      %10336 = vmatprep.subr.mxu0 0.0
      %10337 = vmatpush1.msra.mxu0 0.0
      %10338 = vmatprep.subr.mxu0 0.0
      %10339 = vmatpush1.msra.mxu0 0.0
      %10340 = vmatprep.subr.mxu0 0.0
      %10341 = vmatpush1.msra.mxu0 0.0
      %10342 = vmatprep.subr.mxu0 0.0
      %10343 = vmatpush1.msra.mxu0 0.0
      %10344 = vmatprep.subr.mxu0 0.0
      %10345 = vmatpush1.msra.mxu0 0.0
      %10346 = vmatprep.subr.mxu0 0.0
      %10347 = vmatpush1.msra.mxu0 0.0
      %10348 = vmatprep.subr.mxu0 0.0
      %10349 = vmatpush1.msra.mxu0 0.0
      %10350 = vmatprep.subr.mxu0 0.0
      %10351 = vmatpush1.msra.mxu0 0.0
      %10352 = vmatprep.subr.mxu0 0.0
      %10353 = vmatpush1.msra.mxu0 %v10279
      %10354 = vmatprep.subr.mxu0 0.0
      %10355 = vmatpush1.msra.mxu0 %v10277
      %10356 = vmatprep.subr.mxu0 0.0
      %10357 = vmatpush1.msra.mxu0 %v10275
      %10358 = vmatprep.subr.mxu0 0.0
      %10359 = vmatpush1.msra.mxu0 %v10273
      %10360 = vmatprep.subr.mxu0 0.0
      %10361 = vmatpush1.msra.mxu0 %v10271
      %10362 = vmatprep.subr.mxu0 0.0
      %10363 = vmatpush1.msra.mxu0 %v10269
      %10364 = vmatprep.subr.mxu0 0.0
      %10365 = vmatpush1.msra.mxu0 %v10267
      %10366 = vmatprep.subr.mxu0 0.0
      %10367 = vmatpush1.msra.mxu0 %v10265
      %10368 = vmatprep.subr.mxu0 0.0
      %10369 = vmatpush2.msra.mxu0 0.0
      %10370 = vmatprep.subr.mxu0 0.0
      %10371 = vmatpush2.msra.mxu0 0.0
      %10372 = vmatprep.subr.mxu0 0.0
      %10373 = vmatpush2.msra.mxu0 0.0
      %10374 = vmatprep.subr.mxu0 0.0
      %10375 = vmatpush2.msra.mxu0 0.0
      %10376 = vmatprep.subr.mxu0 0.0
      %10377 = vmatpush2.msra.mxu0 0.0
      %10378 = vmatprep.subr.mxu0 0.0
      %10379 = vmatpush2.msra.mxu0 0.0
      %10380 = vmatprep.subr.mxu0 0.0
      %10381 = vmatpush2.msra.mxu0 0.0
      %10382 = vmatprep.subr.mxu0 0.0
      %10383 = vmatpush2.msra.mxu0 0.0
      %10384 = vmatprep.subr.mxu0 0.0
      %10385 = vmatpush2.msra.mxu0 0.0
      %10386 = vmatprep.subr.mxu0 0.0
      %10387 = vmatpush2.msra.mxu0 0.0
      %10388 = vmatprep.subr.mxu0 0.0
      %10389 = vmatpush2.msra.mxu0 0.0
      %10390 = vmatprep.subr.mxu0 0.0
      %10391 = vmatpush2.msra.mxu0 0.0
      %10392 = vmatprep.subr.mxu0 0.0
      %10393 = vmatpush2.msra.mxu0 0.0
      %10394 = vmatprep.subr.mxu0 0.0
      %10395 = vmatpush2.msra.mxu0 0.0
      %10396 = vmatprep.subr.mxu0 0.0
      %10397 = vmatpush2.msra.mxu0 0.0
      %10398 = vmatprep.subr.mxu0 0.0
      %10399 = vmatpush2.msra.mxu0 0.0
      %10400 = vmatprep.mubr.f32.mxu0 0.0
      %10401 = vmatmul.mubr.f32.gmra.mxu0 %v10289
      %v10402 = vpop.f32.mrf.mxu0
      %v10403 = vadd.f32 0.0, %v10402
      %v10404 = vpop.f32.mrf.mxu0
      %10405 = vmatprep.mubr.f32.mxu0 0.0
      %10406 = vmatmul.mubr.f32.gmra.mxu0 %v10292
      %v10407 = vpop.f32.mrf.mxu0
      %v10408 = vadd.f32 0.0, %v10407
      %v10409 = vpop.f32.mrf.mxu0
      %10410 = vmatprep.mubr.f32.mxu0 0.0
      %10411 = vmatmul.mubr.f32.gmra.mxu0 %v10295
      %v10412 = vpop.f32.mrf.mxu0
      %v10413 = vadd.f32 0.0, %v10412
      %v10414 = vpop.f32.mrf.mxu0
      %10415 = vmatprep.mubr.f32.mxu0 0.0
      %10416 = vmatmul.mubr.f32.gmra.mxu0 %v10298
      %v10417 = vpop.f32.mrf.mxu0
      %v10418 = vadd.f32 0.0, %v10417
      %v10419 = vpop.f32.mrf.mxu0
      %10420 = vmatprep.mubr.f32.mxu0 0.0
      %10421 = vmatmul.mubr.f32.gmra.mxu0 %v10301
      %v10422 = vpop.f32.mrf.mxu0
      %v10423 = vadd.f32 0.0, %v10422
      %v10424 = vpop.f32.mrf.mxu0
      %10425 = vmatprep.mubr.f32.mxu0 0.0
      %10426 = vmatmul.mubr.f32.gmra.mxu0 %v10304
      %v10427 = vpop.f32.mrf.mxu0
      %v10428 = vadd.f32 0.0, %v10427
      %v10429 = vpop.f32.mrf.mxu0
      %10430 = vmatprep.mubr.f32.mxu0 0.0
      %10431 = vmatmul.mubr.f32.gmra.mxu0 %v10307
      %v10432 = vpop.f32.mrf.mxu0
      %v10433 = vadd.f32 0.0, %v10432
      %v10434 = vpop.f32.mrf.mxu0
      %10435 = vmatprep.mubr.f32.mxu0 0.0
      %10436 = vmatmul.mubr.f32.gmra.mxu0 %v10310
      %v10437 = vpop.f32.mrf.mxu0
      %v10438 = vadd.f32 0.0, %v10437
      %v10439 = vpop.f32.mrf.mxu0
      %10440 = vmatprep.mubr.f32.mxu0 0.0
      %10441 = vmatmul.mubr.f32.gmra.mxu0 %v10313
      %v10442 = vpop.f32.mrf.mxu0
      %v10443 = vadd.f32 0.0, %v10442
      %v10444 = vpop.f32.mrf.mxu0
      %10445 = vmatprep.mubr.f32.mxu0 0.0
      %10446 = vmatmul.mubr.f32.gmra.mxu0 %v10316
      %v10447 = vpop.f32.mrf.mxu0
      %v10448 = vadd.f32 0.0, %v10447
      %v10449 = vpop.f32.mrf.mxu0
      %10450 = vmatprep.mubr.f32.mxu0 0.0
      %10451 = vmatmul.mubr.f32.gmra.mxu0 %v10319
      %v10452 = vpop.f32.mrf.mxu0
      %v10453 = vadd.f32 0.0, %v10452
      %v10454 = vpop.f32.mrf.mxu0
      %10455 = vmatprep.mubr.f32.mxu0 0.0
      %10456 = vmatmul.mubr.f32.gmra.mxu0 %v10322
      %v10457 = vpop.f32.mrf.mxu0
      %v10458 = vadd.f32 0.0, %v10457
      %v10459 = vpop.f32.mrf.mxu0
      %10460 = vmatprep.mubr.f32.mxu0 0.0
      %10461 = vmatmul.mubr.f32.gmra.mxu0 %v10325
      %v10462 = vpop.f32.mrf.mxu0
      %v10463 = vadd.f32 0.0, %v10462
      %v10464 = vpop.f32.mrf.mxu0
      %10465 = vmatprep.mubr.f32.mxu0 0.0
      %10466 = vmatmul.mubr.f32.gmra.mxu0 %v10328
      %v10467 = vpop.f32.mrf.mxu0
      %v10468 = vadd.f32 0.0, %v10467
      %v10469 = vpop.f32.mrf.mxu0
      %10470 = vmatprep.mubr.f32.mxu0 0.0
      %10471 = vmatmul.mubr.f32.gmra.mxu0 %v10331
      %v10472 = vpop.f32.mrf.mxu0
      %v10473 = vadd.f32 0.0, %v10472
      %v10474 = vpop.f32.mrf.mxu0
      %10475 = vmatprep.mubr.f32.mxu0 0.0
      %10476 = vmatmul.mubr.f32.gmra.mxu0 %v10334
      %v10477 = vpop.f32.mrf.mxu0
      %v10478 = vadd.f32 0.0, %v10477
      %v10479 = vpop.f32.mrf.mxu0
      %10480 = vdwg.mxu0
      %v10481 = vadd.f32 %v10223, %v10403
      %v10482 = vadd.f32 %v10224, %v10408
      %v10483 = vadd.f32 %v10225, %v10413
      %v10484 = vadd.f32 %v10226, %v10418
      %v10485 = vadd.f32 %v10227, %v10423
      %v10486 = vadd.f32 %v10228, %v10428
      %v10487 = vadd.f32 %v10229, %v10433
      %v10488 = vadd.f32 %v10230, %v10438
      %v10489 = vadd.f32 %v10231, %v10443
      %v10490 = vadd.f32 %v10232, %v10448
      %v10491 = vadd.f32 %v10233, %v10453
      %v10492 = vadd.f32 %v10234, %v10458
      %v10493 = vadd.f32 %v10235, %v10463
      %v10494 = vadd.f32 %v10236, %v10468
      %v10495 = vadd.f32 %v10237, %v10473
      %v10496 = vadd.f32 %v10238, %v10478
      %s10497 = scalar_lea.vmem %s5, 3328
      %v10498 = vld [vmem:[%s10497] sm:$0xff]
      %v10499 = vld [vmem:[%s10497 + $0x8] sm:$0xff]
      %v10500 = vld [vmem:[%s10497 + $0x10] sm:$0xff]
      %v10501 = vld [vmem:[%s10497 + $0x18] sm:$0xff]
      %v10502 = vld [vmem:[%s10497 + $0x20] sm:$0xff]
      %v10503 = vld [vmem:[%s10497 + $0x28] sm:$0xff]
      %v10504 = vld [vmem:[%s10497 + $0x30] sm:$0xff]
      %v10505 = vld [vmem:[%s10497 + $0x38] sm:$0xff]
      %v10506 = vld [vmem:[%s10497 + $0x40] sm:$0xff]
      %v10507 = vld [vmem:[%s10497 + $0x48] sm:$0xff]
      %v10508 = vld [vmem:[%s10497 + $0x50] sm:$0xff]
      %v10509 = vld [vmem:[%s10497 + $0x58] sm:$0xff]
      %v10510 = vld [vmem:[%s10497 + $0x60] sm:$0xff]
      %v10511 = vld [vmem:[%s10497 + $0x68] sm:$0xff]
      %v10512 = vld [vmem:[%s10497 + $0x70] sm:$0xff]
      %v10513 = vld [vmem:[%s10497 + $0x78] sm:$0xff]
      %10514 = vrot.lane.b32.xlu0 %v4084, 64
      %v10515 = vpop.permute.xlu0 %10514
      %10516 = vrot.lane.b32.xlu0 %v4092, 64
      %v10517 = vpop.permute.xlu0 %10516
      %10518 = vrot.lane.b32.xlu0 %v4100, 64
      %v10519 = vpop.permute.xlu0 %10518
      %10520 = vrot.lane.b32.xlu0 %v4108, 64
      %v10521 = vpop.permute.xlu0 %10520
      %10522 = vrot.lane.b32.xlu0 %v4116, 64
      %v10523 = vpop.permute.xlu0 %10522
      %10524 = vrot.lane.b32.xlu0 %v4124, 64
      %v10525 = vpop.permute.xlu0 %10524
      %10526 = vrot.lane.b32.xlu0 %v4132, 64
      %v10527 = vpop.permute.xlu0 %10526
      %10528 = vrot.lane.b32.xlu0 %v4140, 64
      %v10529 = vpop.permute.xlu0 %10528
      %v10539 = vsel %vm1502, %v10498, 0
      %v10542 = vsel %vm1502, %v10499, 0
      %v10545 = vsel %vm1502, %v10500, 0
      %v10548 = vsel %vm1502, %v10501, 0
      %v10551 = vsel %vm1502, %v10502, 0
      %v10554 = vsel %vm1502, %v10503, 0
      %v10557 = vsel %vm1502, %v10504, 0
      %v10560 = vsel %vm1502, %v10505, 0
      %v10563 = vsel %vm1502, %v10506, 0
      %v10566 = vsel %vm1502, %v10507, 0
      %v10569 = vsel %vm1502, %v10508, 0
      %v10572 = vsel %vm1502, %v10509, 0
      %v10575 = vsel %vm1502, %v10510, 0
      %v10578 = vsel %vm1502, %v10511, 0
      %v10581 = vsel %vm1502, %v10512, 0
      %v10584 = vsel %vm1502, %v10513, 0
      %10586 = vmatprep.subr.mxu0 0.0
      %10587 = vmatpush1.msra.mxu0 0.0
      %10588 = vmatprep.subr.mxu0 0.0
      %10589 = vmatpush1.msra.mxu0 0.0
      %10590 = vmatprep.subr.mxu0 0.0
      %10591 = vmatpush1.msra.mxu0 0.0
      %10592 = vmatprep.subr.mxu0 0.0
      %10593 = vmatpush1.msra.mxu0 0.0
      %10594 = vmatprep.subr.mxu0 0.0
      %10595 = vmatpush1.msra.mxu0 0.0
      %10596 = vmatprep.subr.mxu0 0.0
      %10597 = vmatpush1.msra.mxu0 0.0
      %10598 = vmatprep.subr.mxu0 0.0
      %10599 = vmatpush1.msra.mxu0 0.0
      %10600 = vmatprep.subr.mxu0 0.0
      %10601 = vmatpush1.msra.mxu0 0.0
      %10602 = vmatprep.subr.mxu0 0.0
      %10603 = vmatpush1.msra.mxu0 %v10529
      %10604 = vmatprep.subr.mxu0 0.0
      %10605 = vmatpush1.msra.mxu0 %v10527
      %10606 = vmatprep.subr.mxu0 0.0
      %10607 = vmatpush1.msra.mxu0 %v10525
      %10608 = vmatprep.subr.mxu0 0.0
      %10609 = vmatpush1.msra.mxu0 %v10523
      %10610 = vmatprep.subr.mxu0 0.0
      %10611 = vmatpush1.msra.mxu0 %v10521
      %10612 = vmatprep.subr.mxu0 0.0
      %10613 = vmatpush1.msra.mxu0 %v10519
      %10614 = vmatprep.subr.mxu0 0.0
      %10615 = vmatpush1.msra.mxu0 %v10517
      %10616 = vmatprep.subr.mxu0 0.0
      %10617 = vmatpush1.msra.mxu0 %v10515
      %10618 = vmatprep.subr.mxu0 0.0
      %10619 = vmatpush2.msra.mxu0 0.0
      %10620 = vmatprep.subr.mxu0 0.0
      %10621 = vmatpush2.msra.mxu0 0.0
      %10622 = vmatprep.subr.mxu0 0.0
      %10623 = vmatpush2.msra.mxu0 0.0
      %10624 = vmatprep.subr.mxu0 0.0
      %10625 = vmatpush2.msra.mxu0 0.0
      %10626 = vmatprep.subr.mxu0 0.0
      %10627 = vmatpush2.msra.mxu0 0.0
      %10628 = vmatprep.subr.mxu0 0.0
      %10629 = vmatpush2.msra.mxu0 0.0
      %10630 = vmatprep.subr.mxu0 0.0
      %10631 = vmatpush2.msra.mxu0 0.0
      %10632 = vmatprep.subr.mxu0 0.0
      %10633 = vmatpush2.msra.mxu0 0.0
      %10634 = vmatprep.subr.mxu0 0.0
      %10635 = vmatpush2.msra.mxu0 0.0
      %10636 = vmatprep.subr.mxu0 0.0
      %10637 = vmatpush2.msra.mxu0 0.0
      %10638 = vmatprep.subr.mxu0 0.0
      %10639 = vmatpush2.msra.mxu0 0.0
      %10640 = vmatprep.subr.mxu0 0.0
      %10641 = vmatpush2.msra.mxu0 0.0
      %10642 = vmatprep.subr.mxu0 0.0
      %10643 = vmatpush2.msra.mxu0 0.0
      %10644 = vmatprep.subr.mxu0 0.0
      %10645 = vmatpush2.msra.mxu0 0.0
      %10646 = vmatprep.subr.mxu0 0.0
      %10647 = vmatpush2.msra.mxu0 0.0
      %10648 = vmatprep.subr.mxu0 0.0
      %10649 = vmatpush2.msra.mxu0 0.0
      %10650 = vmatprep.mubr.f32.mxu0 0.0
      %10651 = vmatmul.mubr.f32.gmra.mxu0 %v10539
      %v10652 = vpop.f32.mrf.mxu0
      %v10653 = vadd.f32 0.0, %v10652
      %v10654 = vpop.f32.mrf.mxu0
      %10655 = vmatprep.mubr.f32.mxu0 0.0
      %10656 = vmatmul.mubr.f32.gmra.mxu0 %v10542
      %v10657 = vpop.f32.mrf.mxu0
      %v10658 = vadd.f32 0.0, %v10657
      %v10659 = vpop.f32.mrf.mxu0
      %10660 = vmatprep.mubr.f32.mxu0 0.0
      %10661 = vmatmul.mubr.f32.gmra.mxu0 %v10545
      %v10662 = vpop.f32.mrf.mxu0
      %v10663 = vadd.f32 0.0, %v10662
      %v10664 = vpop.f32.mrf.mxu0
      %10665 = vmatprep.mubr.f32.mxu0 0.0
      %10666 = vmatmul.mubr.f32.gmra.mxu0 %v10548
      %v10667 = vpop.f32.mrf.mxu0
      %v10668 = vadd.f32 0.0, %v10667
      %v10669 = vpop.f32.mrf.mxu0
      %10670 = vmatprep.mubr.f32.mxu0 0.0
      %10671 = vmatmul.mubr.f32.gmra.mxu0 %v10551
      %v10672 = vpop.f32.mrf.mxu0
      %v10673 = vadd.f32 0.0, %v10672
      %v10674 = vpop.f32.mrf.mxu0
      %10675 = vmatprep.mubr.f32.mxu0 0.0
      %10676 = vmatmul.mubr.f32.gmra.mxu0 %v10554
      %v10677 = vpop.f32.mrf.mxu0
      %v10678 = vadd.f32 0.0, %v10677
      %v10679 = vpop.f32.mrf.mxu0
      %10680 = vmatprep.mubr.f32.mxu0 0.0
      %10681 = vmatmul.mubr.f32.gmra.mxu0 %v10557
      %v10682 = vpop.f32.mrf.mxu0
      %v10683 = vadd.f32 0.0, %v10682
      %v10684 = vpop.f32.mrf.mxu0
      %10685 = vmatprep.mubr.f32.mxu0 0.0
      %10686 = vmatmul.mubr.f32.gmra.mxu0 %v10560
      %v10687 = vpop.f32.mrf.mxu0
      %v10688 = vadd.f32 0.0, %v10687
      %v10689 = vpop.f32.mrf.mxu0
      %10690 = vmatprep.mubr.f32.mxu0 0.0
      %10691 = vmatmul.mubr.f32.gmra.mxu0 %v10563
      %v10692 = vpop.f32.mrf.mxu0
      %v10693 = vadd.f32 0.0, %v10692
      %v10694 = vpop.f32.mrf.mxu0
      %10695 = vmatprep.mubr.f32.mxu0 0.0
      %10696 = vmatmul.mubr.f32.gmra.mxu0 %v10566
      %v10697 = vpop.f32.mrf.mxu0
      %v10698 = vadd.f32 0.0, %v10697
      %v10699 = vpop.f32.mrf.mxu0
      %10700 = vmatprep.mubr.f32.mxu0 0.0
      %10701 = vmatmul.mubr.f32.gmra.mxu0 %v10569
      %v10702 = vpop.f32.mrf.mxu0
      %v10703 = vadd.f32 0.0, %v10702
      %v10704 = vpop.f32.mrf.mxu0
      %10705 = vmatprep.mubr.f32.mxu0 0.0
      %10706 = vmatmul.mubr.f32.gmra.mxu0 %v10572
      %v10707 = vpop.f32.mrf.mxu0
      %v10708 = vadd.f32 0.0, %v10707
      %v10709 = vpop.f32.mrf.mxu0
      %10710 = vmatprep.mubr.f32.mxu0 0.0
      %10711 = vmatmul.mubr.f32.gmra.mxu0 %v10575
      %v10712 = vpop.f32.mrf.mxu0
      %v10713 = vadd.f32 0.0, %v10712
      %v10714 = vpop.f32.mrf.mxu0
      %10715 = vmatprep.mubr.f32.mxu0 0.0
      %10716 = vmatmul.mubr.f32.gmra.mxu0 %v10578
      %v10717 = vpop.f32.mrf.mxu0
      %v10718 = vadd.f32 0.0, %v10717
      %v10719 = vpop.f32.mrf.mxu0
      %10720 = vmatprep.mubr.f32.mxu0 0.0
      %10721 = vmatmul.mubr.f32.gmra.mxu0 %v10581
      %v10722 = vpop.f32.mrf.mxu0
      %v10723 = vadd.f32 0.0, %v10722
      %v10724 = vpop.f32.mrf.mxu0
      %10725 = vmatprep.mubr.f32.mxu0 0.0
      %10726 = vmatmul.mubr.f32.gmra.mxu0 %v10584
      %v10727 = vpop.f32.mrf.mxu0
      %v10728 = vadd.f32 0.0, %v10727
      %v10729 = vpop.f32.mrf.mxu0
      %10730 = vdwg.mxu0
      %v10731 = vadd.f32 %v10481, %v10653
      %v10732 = vadd.f32 %v10482, %v10658
      %v10733 = vadd.f32 %v10483, %v10663
      %v10734 = vadd.f32 %v10484, %v10668
      %v10735 = vadd.f32 %v10485, %v10673
      %v10736 = vadd.f32 %v10486, %v10678
      %v10737 = vadd.f32 %v10487, %v10683
      %v10738 = vadd.f32 %v10488, %v10688
      %v10739 = vadd.f32 %v10489, %v10693
      %v10740 = vadd.f32 %v10490, %v10698
      %v10741 = vadd.f32 %v10491, %v10703
      %v10742 = vadd.f32 %v10492, %v10708
      %v10743 = vadd.f32 %v10493, %v10713
      %v10744 = vadd.f32 %v10494, %v10718
      %v10745 = vadd.f32 %v10495, %v10723
      %v10746 = vadd.f32 %v10496, %v10728
      %s10747 = scalar_lea.vmem %s5, 3456
      %v10748 = vld [vmem:[%s10747] sm:$0xff]
      %v10749 = vld [vmem:[%s10747 + $0x8] sm:$0xff]
      %v10750 = vld [vmem:[%s10747 + $0x10] sm:$0xff]
      %v10751 = vld [vmem:[%s10747 + $0x18] sm:$0xff]
      %v10752 = vld [vmem:[%s10747 + $0x20] sm:$0xff]
      %v10753 = vld [vmem:[%s10747 + $0x28] sm:$0xff]
      %v10754 = vld [vmem:[%s10747 + $0x30] sm:$0xff]
      %v10755 = vld [vmem:[%s10747 + $0x38] sm:$0xff]
      %v10756 = vld [vmem:[%s10747 + $0x40] sm:$0xff]
      %v10757 = vld [vmem:[%s10747 + $0x48] sm:$0xff]
      %v10758 = vld [vmem:[%s10747 + $0x50] sm:$0xff]
      %v10759 = vld [vmem:[%s10747 + $0x58] sm:$0xff]
      %v10760 = vld [vmem:[%s10747 + $0x60] sm:$0xff]
      %v10761 = vld [vmem:[%s10747 + $0x68] sm:$0xff]
      %v10762 = vld [vmem:[%s10747 + $0x70] sm:$0xff]
      %v10763 = vld [vmem:[%s10747 + $0x78] sm:$0xff]
      %10764 = vrot.lane.b32.xlu0 %v4084, 32
      %v10765 = vpop.permute.xlu0 %10764
      %10766 = vrot.lane.b32.xlu0 %v4092, 32
      %v10767 = vpop.permute.xlu0 %10766
      %10768 = vrot.lane.b32.xlu0 %v4100, 32
      %v10769 = vpop.permute.xlu0 %10768
      %10770 = vrot.lane.b32.xlu0 %v4108, 32
      %v10771 = vpop.permute.xlu0 %10770
      %10772 = vrot.lane.b32.xlu0 %v4116, 32
      %v10773 = vpop.permute.xlu0 %10772
      %10774 = vrot.lane.b32.xlu0 %v4124, 32
      %v10775 = vpop.permute.xlu0 %10774
      %10776 = vrot.lane.b32.xlu0 %v4132, 32
      %v10777 = vpop.permute.xlu0 %10776
      %10778 = vrot.lane.b32.xlu0 %v4140, 32
      %v10779 = vpop.permute.xlu0 %10778
      %v10789 = vsel %vm1502, %v10748, 0
      %v10792 = vsel %vm1502, %v10749, 0
      %v10795 = vsel %vm1502, %v10750, 0
      %v10798 = vsel %vm1502, %v10751, 0
      %v10801 = vsel %vm1502, %v10752, 0
      %v10804 = vsel %vm1502, %v10753, 0
      %v10807 = vsel %vm1502, %v10754, 0
      %v10810 = vsel %vm1502, %v10755, 0
      %v10813 = vsel %vm1502, %v10756, 0
      %v10816 = vsel %vm1502, %v10757, 0
      %v10819 = vsel %vm1502, %v10758, 0
      %v10822 = vsel %vm1502, %v10759, 0
      %v10825 = vsel %vm1502, %v10760, 0
      %v10828 = vsel %vm1502, %v10761, 0
      %v10831 = vsel %vm1502, %v10762, 0
      %v10834 = vsel %vm1502, %v10763, 0
      %10836 = vmatprep.subr.mxu0 0.0
      %10837 = vmatpush1.msra.mxu0 0.0
      %10838 = vmatprep.subr.mxu0 0.0
      %10839 = vmatpush1.msra.mxu0 0.0
      %10840 = vmatprep.subr.mxu0 0.0
      %10841 = vmatpush1.msra.mxu0 0.0
      %10842 = vmatprep.subr.mxu0 0.0
      %10843 = vmatpush1.msra.mxu0 0.0
      %10844 = vmatprep.subr.mxu0 0.0
      %10845 = vmatpush1.msra.mxu0 0.0
      %10846 = vmatprep.subr.mxu0 0.0
      %10847 = vmatpush1.msra.mxu0 0.0
      %10848 = vmatprep.subr.mxu0 0.0
      %10849 = vmatpush1.msra.mxu0 0.0
      %10850 = vmatprep.subr.mxu0 0.0
      %10851 = vmatpush1.msra.mxu0 0.0
      %10852 = vmatprep.subr.mxu0 0.0
      %10853 = vmatpush1.msra.mxu0 %v10779
      %10854 = vmatprep.subr.mxu0 0.0
      %10855 = vmatpush1.msra.mxu0 %v10777
      %10856 = vmatprep.subr.mxu0 0.0
      %10857 = vmatpush1.msra.mxu0 %v10775
      %10858 = vmatprep.subr.mxu0 0.0
      %10859 = vmatpush1.msra.mxu0 %v10773
      %10860 = vmatprep.subr.mxu0 0.0
      %10861 = vmatpush1.msra.mxu0 %v10771
      %10862 = vmatprep.subr.mxu0 0.0
      %10863 = vmatpush1.msra.mxu0 %v10769
      %10864 = vmatprep.subr.mxu0 0.0
      %10865 = vmatpush1.msra.mxu0 %v10767
      %10866 = vmatprep.subr.mxu0 0.0
      %10867 = vmatpush1.msra.mxu0 %v10765
      %10868 = vmatprep.subr.mxu0 0.0
      %10869 = vmatpush2.msra.mxu0 0.0
      %10870 = vmatprep.subr.mxu0 0.0
      %10871 = vmatpush2.msra.mxu0 0.0
      %10872 = vmatprep.subr.mxu0 0.0
      %10873 = vmatpush2.msra.mxu0 0.0
      %10874 = vmatprep.subr.mxu0 0.0
      %10875 = vmatpush2.msra.mxu0 0.0
      %10876 = vmatprep.subr.mxu0 0.0
      %10877 = vmatpush2.msra.mxu0 0.0
      %10878 = vmatprep.subr.mxu0 0.0
      %10879 = vmatpush2.msra.mxu0 0.0
      %10880 = vmatprep.subr.mxu0 0.0
      %10881 = vmatpush2.msra.mxu0 0.0
      %10882 = vmatprep.subr.mxu0 0.0
      %10883 = vmatpush2.msra.mxu0 0.0
      %10884 = vmatprep.subr.mxu0 0.0
      %10885 = vmatpush2.msra.mxu0 0.0
      %10886 = vmatprep.subr.mxu0 0.0
      %10887 = vmatpush2.msra.mxu0 0.0
      %10888 = vmatprep.subr.mxu0 0.0
      %10889 = vmatpush2.msra.mxu0 0.0
      %10890 = vmatprep.subr.mxu0 0.0
      %10891 = vmatpush2.msra.mxu0 0.0
      %10892 = vmatprep.subr.mxu0 0.0
      %10893 = vmatpush2.msra.mxu0 0.0
      %10894 = vmatprep.subr.mxu0 0.0
      %10895 = vmatpush2.msra.mxu0 0.0
      %10896 = vmatprep.subr.mxu0 0.0
      %10897 = vmatpush2.msra.mxu0 0.0
      %10898 = vmatprep.subr.mxu0 0.0
      %10899 = vmatpush2.msra.mxu0 0.0
      %10900 = vmatprep.mubr.f32.mxu0 0.0
      %10901 = vmatmul.mubr.f32.gmra.mxu0 %v10789
      %v10902 = vpop.f32.mrf.mxu0
      %v10903 = vadd.f32 0.0, %v10902
      %v10904 = vpop.f32.mrf.mxu0
      %10905 = vmatprep.mubr.f32.mxu0 0.0
      %10906 = vmatmul.mubr.f32.gmra.mxu0 %v10792
      %v10907 = vpop.f32.mrf.mxu0
      %v10908 = vadd.f32 0.0, %v10907
      %v10909 = vpop.f32.mrf.mxu0
      %10910 = vmatprep.mubr.f32.mxu0 0.0
      %10911 = vmatmul.mubr.f32.gmra.mxu0 %v10795
      %v10912 = vpop.f32.mrf.mxu0
      %v10913 = vadd.f32 0.0, %v10912
      %v10914 = vpop.f32.mrf.mxu0
      %10915 = vmatprep.mubr.f32.mxu0 0.0
      %10916 = vmatmul.mubr.f32.gmra.mxu0 %v10798
      %v10917 = vpop.f32.mrf.mxu0
      %v10918 = vadd.f32 0.0, %v10917
      %v10919 = vpop.f32.mrf.mxu0
      %10920 = vmatprep.mubr.f32.mxu0 0.0
      %10921 = vmatmul.mubr.f32.gmra.mxu0 %v10801
      %v10922 = vpop.f32.mrf.mxu0
      %v10923 = vadd.f32 0.0, %v10922
      %v10924 = vpop.f32.mrf.mxu0
      %10925 = vmatprep.mubr.f32.mxu0 0.0
      %10926 = vmatmul.mubr.f32.gmra.mxu0 %v10804
      %v10927 = vpop.f32.mrf.mxu0
      %v10928 = vadd.f32 0.0, %v10927
      %v10929 = vpop.f32.mrf.mxu0
      %10930 = vmatprep.mubr.f32.mxu0 0.0
      %10931 = vmatmul.mubr.f32.gmra.mxu0 %v10807
      %v10932 = vpop.f32.mrf.mxu0
      %v10933 = vadd.f32 0.0, %v10932
      %v10934 = vpop.f32.mrf.mxu0
      %10935 = vmatprep.mubr.f32.mxu0 0.0
      %10936 = vmatmul.mubr.f32.gmra.mxu0 %v10810
      %v10937 = vpop.f32.mrf.mxu0
      %v10938 = vadd.f32 0.0, %v10937
      %v10939 = vpop.f32.mrf.mxu0
      %10940 = vmatprep.mubr.f32.mxu0 0.0
      %10941 = vmatmul.mubr.f32.gmra.mxu0 %v10813
      %v10942 = vpop.f32.mrf.mxu0
      %v10943 = vadd.f32 0.0, %v10942
      %v10944 = vpop.f32.mrf.mxu0
      %10945 = vmatprep.mubr.f32.mxu0 0.0
      %10946 = vmatmul.mubr.f32.gmra.mxu0 %v10816
      %v10947 = vpop.f32.mrf.mxu0
      %v10948 = vadd.f32 0.0, %v10947
      %v10949 = vpop.f32.mrf.mxu0
      %10950 = vmatprep.mubr.f32.mxu0 0.0
      %10951 = vmatmul.mubr.f32.gmra.mxu0 %v10819
      %v10952 = vpop.f32.mrf.mxu0
      %v10953 = vadd.f32 0.0, %v10952
      %v10954 = vpop.f32.mrf.mxu0
      %10955 = vmatprep.mubr.f32.mxu0 0.0
      %10956 = vmatmul.mubr.f32.gmra.mxu0 %v10822
      %v10957 = vpop.f32.mrf.mxu0
      %v10958 = vadd.f32 0.0, %v10957
      %v10959 = vpop.f32.mrf.mxu0
      %10960 = vmatprep.mubr.f32.mxu0 0.0
      %10961 = vmatmul.mubr.f32.gmra.mxu0 %v10825
      %v10962 = vpop.f32.mrf.mxu0
      %v10963 = vadd.f32 0.0, %v10962
      %v10964 = vpop.f32.mrf.mxu0
      %10965 = vmatprep.mubr.f32.mxu0 0.0
      %10966 = vmatmul.mubr.f32.gmra.mxu0 %v10828
      %v10967 = vpop.f32.mrf.mxu0
      %v10968 = vadd.f32 0.0, %v10967
      %v10969 = vpop.f32.mrf.mxu0
      %10970 = vmatprep.mubr.f32.mxu0 0.0
      %10971 = vmatmul.mubr.f32.gmra.mxu0 %v10831
      %v10972 = vpop.f32.mrf.mxu0
      %v10973 = vadd.f32 0.0, %v10972
      %v10974 = vpop.f32.mrf.mxu0
      %10975 = vmatprep.mubr.f32.mxu0 0.0
      %10976 = vmatmul.mubr.f32.gmra.mxu0 %v10834
      %v10977 = vpop.f32.mrf.mxu0
      %v10978 = vadd.f32 0.0, %v10977
      %v10979 = vpop.f32.mrf.mxu0
      %10980 = vdwg.mxu0
      %v10981 = vadd.f32 %v10731, %v10903
      %v10982 = vadd.f32 %v10732, %v10908
      %v10983 = vadd.f32 %v10733, %v10913
      %v10984 = vadd.f32 %v10734, %v10918
      %v10985 = vadd.f32 %v10735, %v10923
      %v10986 = vadd.f32 %v10736, %v10928
      %v10987 = vadd.f32 %v10737, %v10933
      %v10988 = vadd.f32 %v10738, %v10938
      %v10989 = vadd.f32 %v10739, %v10943
      %v10990 = vadd.f32 %v10740, %v10948
      %v10991 = vadd.f32 %v10741, %v10953
      %v10992 = vadd.f32 %v10742, %v10958
      %v10993 = vadd.f32 %v10743, %v10963
      %v10994 = vadd.f32 %v10744, %v10968
      %v10995 = vadd.f32 %v10745, %v10973
      %v10996 = vadd.f32 %v10746, %v10978
      %s10997 = scalar_lea.vmem %s5, 3584
      %v10998 = vld [vmem:[%s10997] sm:$0xff]
      %v10999 = vld [vmem:[%s10997 + $0x8] sm:$0xff]
      %v11000 = vld [vmem:[%s10997 + $0x10] sm:$0xff]
      %v11001 = vld [vmem:[%s10997 + $0x18] sm:$0xff]
      %v11002 = vld [vmem:[%s10997 + $0x20] sm:$0xff]
      %v11003 = vld [vmem:[%s10997 + $0x28] sm:$0xff]
      %v11004 = vld [vmem:[%s10997 + $0x30] sm:$0xff]
      %v11005 = vld [vmem:[%s10997 + $0x38] sm:$0xff]
      %v11006 = vld [vmem:[%s10997 + $0x40] sm:$0xff]
      %v11007 = vld [vmem:[%s10997 + $0x48] sm:$0xff]
      %v11008 = vld [vmem:[%s10997 + $0x50] sm:$0xff]
      %v11009 = vld [vmem:[%s10997 + $0x58] sm:$0xff]
      %v11010 = vld [vmem:[%s10997 + $0x60] sm:$0xff]
      %v11011 = vld [vmem:[%s10997 + $0x68] sm:$0xff]
      %v11012 = vld [vmem:[%s10997 + $0x70] sm:$0xff]
      %v11013 = vld [vmem:[%s10997 + $0x78] sm:$0xff]
      %v11015 = vsel %vm1502, %v10998, 0
      %v11018 = vsel %vm1502, %v10999, 0
      %v11021 = vsel %vm1502, %v11000, 0
      %v11024 = vsel %vm1502, %v11001, 0
      %v11027 = vsel %vm1502, %v11002, 0
      %v11030 = vsel %vm1502, %v11003, 0
      %v11033 = vsel %vm1502, %v11004, 0
      %v11036 = vsel %vm1502, %v11005, 0
      %v11039 = vsel %vm1502, %v11006, 0
      %v11042 = vsel %vm1502, %v11007, 0
      %v11045 = vsel %vm1502, %v11008, 0
      %v11048 = vsel %vm1502, %v11009, 0
      %v11051 = vsel %vm1502, %v11010, 0
      %v11054 = vsel %vm1502, %v11011, 0
      %v11057 = vsel %vm1502, %v11012, 0
      %v11060 = vsel %vm1502, %v11013, 0
      %11062 = vmatprep.subr.mxu0 0.0
      %11063 = vmatpush1.msra.mxu0 0.0
      %11064 = vmatprep.subr.mxu0 0.0
      %11065 = vmatpush1.msra.mxu0 0.0
      %11066 = vmatprep.subr.mxu0 0.0
      %11067 = vmatpush1.msra.mxu0 0.0
      %11068 = vmatprep.subr.mxu0 0.0
      %11069 = vmatpush1.msra.mxu0 0.0
      %11070 = vmatprep.subr.mxu0 0.0
      %11071 = vmatpush1.msra.mxu0 0.0
      %11072 = vmatprep.subr.mxu0 0.0
      %11073 = vmatpush1.msra.mxu0 0.0
      %11074 = vmatprep.subr.mxu0 0.0
      %11075 = vmatpush1.msra.mxu0 0.0
      %11076 = vmatprep.subr.mxu0 0.0
      %11077 = vmatpush1.msra.mxu0 0.0
      %11078 = vmatprep.subr.mxu0 0.0
      %11079 = vmatpush1.msra.mxu0 %v4141
      %11080 = vmatprep.subr.mxu0 0.0
      %11081 = vmatpush1.msra.mxu0 %v4133
      %11082 = vmatprep.subr.mxu0 0.0
      %11083 = vmatpush1.msra.mxu0 %v4125
      %11084 = vmatprep.subr.mxu0 0.0
      %11085 = vmatpush1.msra.mxu0 %v4117
      %11086 = vmatprep.subr.mxu0 0.0
      %11087 = vmatpush1.msra.mxu0 %v4109
      %11088 = vmatprep.subr.mxu0 0.0
      %11089 = vmatpush1.msra.mxu0 %v4101
      %11090 = vmatprep.subr.mxu0 0.0
      %11091 = vmatpush1.msra.mxu0 %v4093
      %11092 = vmatprep.subr.mxu0 0.0
      %11093 = vmatpush1.msra.mxu0 %v4085
      %11094 = vmatprep.subr.mxu0 0.0
      %11095 = vmatpush2.msra.mxu0 0.0
      %11096 = vmatprep.subr.mxu0 0.0
      %11097 = vmatpush2.msra.mxu0 0.0
      %11098 = vmatprep.subr.mxu0 0.0
      %11099 = vmatpush2.msra.mxu0 0.0
      %11100 = vmatprep.subr.mxu0 0.0
      %11101 = vmatpush2.msra.mxu0 0.0
      %11102 = vmatprep.subr.mxu0 0.0
      %11103 = vmatpush2.msra.mxu0 0.0
      %11104 = vmatprep.subr.mxu0 0.0
      %11105 = vmatpush2.msra.mxu0 0.0
      %11106 = vmatprep.subr.mxu0 0.0
      %11107 = vmatpush2.msra.mxu0 0.0
      %11108 = vmatprep.subr.mxu0 0.0
      %11109 = vmatpush2.msra.mxu0 0.0
      %11110 = vmatprep.subr.mxu0 0.0
      %11111 = vmatpush2.msra.mxu0 0.0
      %11112 = vmatprep.subr.mxu0 0.0
      %11113 = vmatpush2.msra.mxu0 0.0
      %11114 = vmatprep.subr.mxu0 0.0
      %11115 = vmatpush2.msra.mxu0 0.0
      %11116 = vmatprep.subr.mxu0 0.0
      %11117 = vmatpush2.msra.mxu0 0.0
      %11118 = vmatprep.subr.mxu0 0.0
      %11119 = vmatpush2.msra.mxu0 0.0
      %11120 = vmatprep.subr.mxu0 0.0
      %11121 = vmatpush2.msra.mxu0 0.0
      %11122 = vmatprep.subr.mxu0 0.0
      %11123 = vmatpush2.msra.mxu0 0.0
      %11124 = vmatprep.subr.mxu0 0.0
      %11125 = vmatpush2.msra.mxu0 0.0
      %11126 = vmatprep.mubr.f32.mxu0 0.0
      %11127 = vmatmul.mubr.f32.gmra.mxu0 %v11015
      %v11128 = vpop.f32.mrf.mxu0
      %v11129 = vadd.f32 0.0, %v11128
      %v11130 = vpop.f32.mrf.mxu0
      %11131 = vmatprep.mubr.f32.mxu0 0.0
      %11132 = vmatmul.mubr.f32.gmra.mxu0 %v11018
      %v11133 = vpop.f32.mrf.mxu0
      %v11134 = vadd.f32 0.0, %v11133
      %v11135 = vpop.f32.mrf.mxu0
      %11136 = vmatprep.mubr.f32.mxu0 0.0
      %11137 = vmatmul.mubr.f32.gmra.mxu0 %v11021
      %v11138 = vpop.f32.mrf.mxu0
      %v11139 = vadd.f32 0.0, %v11138
      %v11140 = vpop.f32.mrf.mxu0
      %11141 = vmatprep.mubr.f32.mxu0 0.0
      %11142 = vmatmul.mubr.f32.gmra.mxu0 %v11024
      %v11143 = vpop.f32.mrf.mxu0
      %v11144 = vadd.f32 0.0, %v11143
      %v11145 = vpop.f32.mrf.mxu0
      %11146 = vmatprep.mubr.f32.mxu0 0.0
      %11147 = vmatmul.mubr.f32.gmra.mxu0 %v11027
      %v11148 = vpop.f32.mrf.mxu0
      %v11149 = vadd.f32 0.0, %v11148
      %v11150 = vpop.f32.mrf.mxu0
      %11151 = vmatprep.mubr.f32.mxu0 0.0
      %11152 = vmatmul.mubr.f32.gmra.mxu0 %v11030
      %v11153 = vpop.f32.mrf.mxu0
      %v11154 = vadd.f32 0.0, %v11153
      %v11155 = vpop.f32.mrf.mxu0
      %11156 = vmatprep.mubr.f32.mxu0 0.0
      %11157 = vmatmul.mubr.f32.gmra.mxu0 %v11033
      %v11158 = vpop.f32.mrf.mxu0
      %v11159 = vadd.f32 0.0, %v11158
      %v11160 = vpop.f32.mrf.mxu0
      %11161 = vmatprep.mubr.f32.mxu0 0.0
      %11162 = vmatmul.mubr.f32.gmra.mxu0 %v11036
      %v11163 = vpop.f32.mrf.mxu0
      %v11164 = vadd.f32 0.0, %v11163
      %v11165 = vpop.f32.mrf.mxu0
      %11166 = vmatprep.mubr.f32.mxu0 0.0
      %11167 = vmatmul.mubr.f32.gmra.mxu0 %v11039
      %v11168 = vpop.f32.mrf.mxu0
      %v11169 = vadd.f32 0.0, %v11168
      %v11170 = vpop.f32.mrf.mxu0
      %11171 = vmatprep.mubr.f32.mxu0 0.0
      %11172 = vmatmul.mubr.f32.gmra.mxu0 %v11042
      %v11173 = vpop.f32.mrf.mxu0
      %v11174 = vadd.f32 0.0, %v11173
      %v11175 = vpop.f32.mrf.mxu0
      %11176 = vmatprep.mubr.f32.mxu0 0.0
      %11177 = vmatmul.mubr.f32.gmra.mxu0 %v11045
      %v11178 = vpop.f32.mrf.mxu0
      %v11179 = vadd.f32 0.0, %v11178
      %v11180 = vpop.f32.mrf.mxu0
      %11181 = vmatprep.mubr.f32.mxu0 0.0
      %11182 = vmatmul.mubr.f32.gmra.mxu0 %v11048
      %v11183 = vpop.f32.mrf.mxu0
      %v11184 = vadd.f32 0.0, %v11183
      %v11185 = vpop.f32.mrf.mxu0
      %11186 = vmatprep.mubr.f32.mxu0 0.0
      %11187 = vmatmul.mubr.f32.gmra.mxu0 %v11051
      %v11188 = vpop.f32.mrf.mxu0
      %v11189 = vadd.f32 0.0, %v11188
      %v11190 = vpop.f32.mrf.mxu0
      %11191 = vmatprep.mubr.f32.mxu0 0.0
      %11192 = vmatmul.mubr.f32.gmra.mxu0 %v11054
      %v11193 = vpop.f32.mrf.mxu0
      %v11194 = vadd.f32 0.0, %v11193
      %v11195 = vpop.f32.mrf.mxu0
      %11196 = vmatprep.mubr.f32.mxu0 0.0
      %11197 = vmatmul.mubr.f32.gmra.mxu0 %v11057
      %v11198 = vpop.f32.mrf.mxu0
      %v11199 = vadd.f32 0.0, %v11198
      %v11200 = vpop.f32.mrf.mxu0
      %11201 = vmatprep.mubr.f32.mxu0 0.0
      %11202 = vmatmul.mubr.f32.gmra.mxu0 %v11060
      %v11203 = vpop.f32.mrf.mxu0
      %v11204 = vadd.f32 0.0, %v11203
      %v11205 = vpop.f32.mrf.mxu0
      %11206 = vdwg.mxu0
      %v11207 = vadd.f32 %v10981, %v11129
      %v11208 = vadd.f32 %v10982, %v11134
      %v11209 = vadd.f32 %v10983, %v11139
      %v11210 = vadd.f32 %v10984, %v11144
      %v11211 = vadd.f32 %v10985, %v11149
      %v11212 = vadd.f32 %v10986, %v11154
      %v11213 = vadd.f32 %v10987, %v11159
      %v11214 = vadd.f32 %v10988, %v11164
      %v11215 = vadd.f32 %v10989, %v11169
      %v11216 = vadd.f32 %v10990, %v11174
      %v11217 = vadd.f32 %v10991, %v11179
      %v11218 = vadd.f32 %v10992, %v11184
      %v11219 = vadd.f32 %v10993, %v11189
      %v11220 = vadd.f32 %v10994, %v11194
      %v11221 = vadd.f32 %v10995, %v11199
      %v11222 = vadd.f32 %v10996, %v11204
      %s11223 = scalar_lea.vmem %s5, 3712
      %v11224 = vld [vmem:[%s11223] sm:$0xff]
      %v11225 = vld [vmem:[%s11223 + $0x8] sm:$0xff]
      %v11226 = vld [vmem:[%s11223 + $0x10] sm:$0xff]
      %v11227 = vld [vmem:[%s11223 + $0x18] sm:$0xff]
      %v11228 = vld [vmem:[%s11223 + $0x20] sm:$0xff]
      %v11229 = vld [vmem:[%s11223 + $0x28] sm:$0xff]
      %v11230 = vld [vmem:[%s11223 + $0x30] sm:$0xff]
      %v11231 = vld [vmem:[%s11223 + $0x38] sm:$0xff]
      %v11232 = vld [vmem:[%s11223 + $0x40] sm:$0xff]
      %v11233 = vld [vmem:[%s11223 + $0x48] sm:$0xff]
      %v11234 = vld [vmem:[%s11223 + $0x50] sm:$0xff]
      %v11235 = vld [vmem:[%s11223 + $0x58] sm:$0xff]
      %v11236 = vld [vmem:[%s11223 + $0x60] sm:$0xff]
      %v11237 = vld [vmem:[%s11223 + $0x68] sm:$0xff]
      %v11238 = vld [vmem:[%s11223 + $0x70] sm:$0xff]
      %v11239 = vld [vmem:[%s11223 + $0x78] sm:$0xff]
      %11248 = vrot.lane.b32.xlu0 %v4085, 96
      %v11249 = vpop.permute.xlu0 %11248
      %11250 = vrot.lane.b32.xlu0 %v4093, 96
      %v11251 = vpop.permute.xlu0 %11250
      %11252 = vrot.lane.b32.xlu0 %v4101, 96
      %v11253 = vpop.permute.xlu0 %11252
      %11254 = vrot.lane.b32.xlu0 %v4109, 96
      %v11255 = vpop.permute.xlu0 %11254
      %11256 = vrot.lane.b32.xlu0 %v4117, 96
      %v11257 = vpop.permute.xlu0 %11256
      %11258 = vrot.lane.b32.xlu0 %v4125, 96
      %v11259 = vpop.permute.xlu0 %11258
      %11260 = vrot.lane.b32.xlu0 %v4133, 96
      %v11261 = vpop.permute.xlu0 %11260
      %11262 = vrot.lane.b32.xlu0 %v4141, 96
      %v11263 = vpop.permute.xlu0 %11262
      %v11273 = vsel %vm1502, %v11224, 0
      %v11276 = vsel %vm1502, %v11225, 0
      %v11279 = vsel %vm1502, %v11226, 0
      %v11282 = vsel %vm1502, %v11227, 0
      %v11285 = vsel %vm1502, %v11228, 0
      %v11288 = vsel %vm1502, %v11229, 0
      %v11291 = vsel %vm1502, %v11230, 0
      %v11294 = vsel %vm1502, %v11231, 0
      %v11297 = vsel %vm1502, %v11232, 0
      %v11300 = vsel %vm1502, %v11233, 0
      %v11303 = vsel %vm1502, %v11234, 0
      %v11306 = vsel %vm1502, %v11235, 0
      %v11309 = vsel %vm1502, %v11236, 0
      %v11312 = vsel %vm1502, %v11237, 0
      %v11315 = vsel %vm1502, %v11238, 0
      %v11318 = vsel %vm1502, %v11239, 0
      %11320 = vmatprep.subr.mxu0 0.0
      %11321 = vmatpush1.msra.mxu0 0.0
      %11322 = vmatprep.subr.mxu0 0.0
      %11323 = vmatpush1.msra.mxu0 0.0
      %11324 = vmatprep.subr.mxu0 0.0
      %11325 = vmatpush1.msra.mxu0 0.0
      %11326 = vmatprep.subr.mxu0 0.0
      %11327 = vmatpush1.msra.mxu0 0.0
      %11328 = vmatprep.subr.mxu0 0.0
      %11329 = vmatpush1.msra.mxu0 0.0
      %11330 = vmatprep.subr.mxu0 0.0
      %11331 = vmatpush1.msra.mxu0 0.0
      %11332 = vmatprep.subr.mxu0 0.0
      %11333 = vmatpush1.msra.mxu0 0.0
      %11334 = vmatprep.subr.mxu0 0.0
      %11335 = vmatpush1.msra.mxu0 0.0
      %11336 = vmatprep.subr.mxu0 0.0
      %11337 = vmatpush1.msra.mxu0 %v11263
      %11338 = vmatprep.subr.mxu0 0.0
      %11339 = vmatpush1.msra.mxu0 %v11261
      %11340 = vmatprep.subr.mxu0 0.0
      %11341 = vmatpush1.msra.mxu0 %v11259
      %11342 = vmatprep.subr.mxu0 0.0
      %11343 = vmatpush1.msra.mxu0 %v11257
      %11344 = vmatprep.subr.mxu0 0.0
      %11345 = vmatpush1.msra.mxu0 %v11255
      %11346 = vmatprep.subr.mxu0 0.0
      %11347 = vmatpush1.msra.mxu0 %v11253
      %11348 = vmatprep.subr.mxu0 0.0
      %11349 = vmatpush1.msra.mxu0 %v11251
      %11350 = vmatprep.subr.mxu0 0.0
      %11351 = vmatpush1.msra.mxu0 %v11249
      %11352 = vmatprep.subr.mxu0 0.0
      %11353 = vmatpush2.msra.mxu0 0.0
      %11354 = vmatprep.subr.mxu0 0.0
      %11355 = vmatpush2.msra.mxu0 0.0
      %11356 = vmatprep.subr.mxu0 0.0
      %11357 = vmatpush2.msra.mxu0 0.0
      %11358 = vmatprep.subr.mxu0 0.0
      %11359 = vmatpush2.msra.mxu0 0.0
      %11360 = vmatprep.subr.mxu0 0.0
      %11361 = vmatpush2.msra.mxu0 0.0
      %11362 = vmatprep.subr.mxu0 0.0
      %11363 = vmatpush2.msra.mxu0 0.0
      %11364 = vmatprep.subr.mxu0 0.0
      %11365 = vmatpush2.msra.mxu0 0.0
      %11366 = vmatprep.subr.mxu0 0.0
      %11367 = vmatpush2.msra.mxu0 0.0
      %11368 = vmatprep.subr.mxu0 0.0
      %11369 = vmatpush2.msra.mxu0 0.0
      %11370 = vmatprep.subr.mxu0 0.0
      %11371 = vmatpush2.msra.mxu0 0.0
      %11372 = vmatprep.subr.mxu0 0.0
      %11373 = vmatpush2.msra.mxu0 0.0
      %11374 = vmatprep.subr.mxu0 0.0
      %11375 = vmatpush2.msra.mxu0 0.0
      %11376 = vmatprep.subr.mxu0 0.0
      %11377 = vmatpush2.msra.mxu0 0.0
      %11378 = vmatprep.subr.mxu0 0.0
      %11379 = vmatpush2.msra.mxu0 0.0
      %11380 = vmatprep.subr.mxu0 0.0
      %11381 = vmatpush2.msra.mxu0 0.0
      %11382 = vmatprep.subr.mxu0 0.0
      %11383 = vmatpush2.msra.mxu0 0.0
      %11384 = vmatprep.mubr.f32.mxu0 0.0
      %11385 = vmatmul.mubr.f32.gmra.mxu0 %v11273
      %v11386 = vpop.f32.mrf.mxu0
      %v11387 = vadd.f32 0.0, %v11386
      %v11388 = vpop.f32.mrf.mxu0
      %11389 = vmatprep.mubr.f32.mxu0 0.0
      %11390 = vmatmul.mubr.f32.gmra.mxu0 %v11276
      %v11391 = vpop.f32.mrf.mxu0
      %v11392 = vadd.f32 0.0, %v11391
      %v11393 = vpop.f32.mrf.mxu0
      %11394 = vmatprep.mubr.f32.mxu0 0.0
      %11395 = vmatmul.mubr.f32.gmra.mxu0 %v11279
      %v11396 = vpop.f32.mrf.mxu0
      %v11397 = vadd.f32 0.0, %v11396
      %v11398 = vpop.f32.mrf.mxu0
      %11399 = vmatprep.mubr.f32.mxu0 0.0
      %11400 = vmatmul.mubr.f32.gmra.mxu0 %v11282
      %v11401 = vpop.f32.mrf.mxu0
      %v11402 = vadd.f32 0.0, %v11401
      %v11403 = vpop.f32.mrf.mxu0
      %11404 = vmatprep.mubr.f32.mxu0 0.0
      %11405 = vmatmul.mubr.f32.gmra.mxu0 %v11285
      %v11406 = vpop.f32.mrf.mxu0
      %v11407 = vadd.f32 0.0, %v11406
      %v11408 = vpop.f32.mrf.mxu0
      %11409 = vmatprep.mubr.f32.mxu0 0.0
      %11410 = vmatmul.mubr.f32.gmra.mxu0 %v11288
      %v11411 = vpop.f32.mrf.mxu0
      %v11412 = vadd.f32 0.0, %v11411
      %v11413 = vpop.f32.mrf.mxu0
      %11414 = vmatprep.mubr.f32.mxu0 0.0
      %11415 = vmatmul.mubr.f32.gmra.mxu0 %v11291
      %v11416 = vpop.f32.mrf.mxu0
      %v11417 = vadd.f32 0.0, %v11416
      %v11418 = vpop.f32.mrf.mxu0
      %11419 = vmatprep.mubr.f32.mxu0 0.0
      %11420 = vmatmul.mubr.f32.gmra.mxu0 %v11294
      %v11421 = vpop.f32.mrf.mxu0
      %v11422 = vadd.f32 0.0, %v11421
      %v11423 = vpop.f32.mrf.mxu0
      %11424 = vmatprep.mubr.f32.mxu0 0.0
      %11425 = vmatmul.mubr.f32.gmra.mxu0 %v11297
      %v11426 = vpop.f32.mrf.mxu0
      %v11427 = vadd.f32 0.0, %v11426
      %v11428 = vpop.f32.mrf.mxu0
      %11429 = vmatprep.mubr.f32.mxu0 0.0
      %11430 = vmatmul.mubr.f32.gmra.mxu0 %v11300
      %v11431 = vpop.f32.mrf.mxu0
      %v11432 = vadd.f32 0.0, %v11431
      %v11433 = vpop.f32.mrf.mxu0
      %11434 = vmatprep.mubr.f32.mxu0 0.0
      %11435 = vmatmul.mubr.f32.gmra.mxu0 %v11303
      %v11436 = vpop.f32.mrf.mxu0
      %v11437 = vadd.f32 0.0, %v11436
      %v11438 = vpop.f32.mrf.mxu0
      %11439 = vmatprep.mubr.f32.mxu0 0.0
      %11440 = vmatmul.mubr.f32.gmra.mxu0 %v11306
      %v11441 = vpop.f32.mrf.mxu0
      %v11442 = vadd.f32 0.0, %v11441
      %v11443 = vpop.f32.mrf.mxu0
      %11444 = vmatprep.mubr.f32.mxu0 0.0
      %11445 = vmatmul.mubr.f32.gmra.mxu0 %v11309
      %v11446 = vpop.f32.mrf.mxu0
      %v11447 = vadd.f32 0.0, %v11446
      %v11448 = vpop.f32.mrf.mxu0
      %11449 = vmatprep.mubr.f32.mxu0 0.0
      %11450 = vmatmul.mubr.f32.gmra.mxu0 %v11312
      %v11451 = vpop.f32.mrf.mxu0
      %v11452 = vadd.f32 0.0, %v11451
      %v11453 = vpop.f32.mrf.mxu0
      %11454 = vmatprep.mubr.f32.mxu0 0.0
      %11455 = vmatmul.mubr.f32.gmra.mxu0 %v11315
      %v11456 = vpop.f32.mrf.mxu0
      %v11457 = vadd.f32 0.0, %v11456
      %v11458 = vpop.f32.mrf.mxu0
      %11459 = vmatprep.mubr.f32.mxu0 0.0
      %11460 = vmatmul.mubr.f32.gmra.mxu0 %v11318
      %v11461 = vpop.f32.mrf.mxu0
      %v11462 = vadd.f32 0.0, %v11461
      %v11463 = vpop.f32.mrf.mxu0
      %11464 = vdwg.mxu0
      %v11465 = vadd.f32 %v11207, %v11387
      %v11466 = vadd.f32 %v11208, %v11392
      %v11467 = vadd.f32 %v11209, %v11397
      %v11468 = vadd.f32 %v11210, %v11402
      %v11469 = vadd.f32 %v11211, %v11407
      %v11470 = vadd.f32 %v11212, %v11412
      %v11471 = vadd.f32 %v11213, %v11417
      %v11472 = vadd.f32 %v11214, %v11422
      %v11473 = vadd.f32 %v11215, %v11427
      %v11474 = vadd.f32 %v11216, %v11432
      %v11475 = vadd.f32 %v11217, %v11437
      %v11476 = vadd.f32 %v11218, %v11442
      %v11477 = vadd.f32 %v11219, %v11447
      %v11478 = vadd.f32 %v11220, %v11452
      %v11479 = vadd.f32 %v11221, %v11457
      %v11480 = vadd.f32 %v11222, %v11462
      %v11481 = vld [vmem:[%s6] sm:$0xff]
      %v11482 = vld [vmem:[%s6 + $0x8] sm:$0xff]
      %v11483 = vld [vmem:[%s6 + $0x10] sm:$0xff]
      %v11484 = vld [vmem:[%s6 + $0x18] sm:$0xff]
      %v11485 = vld [vmem:[%s6 + $0x20] sm:$0xff]
      %v11486 = vld [vmem:[%s6 + $0x28] sm:$0xff]
      %v11487 = vld [vmem:[%s6 + $0x30] sm:$0xff]
      %v11488 = vld [vmem:[%s6 + $0x38] sm:$0xff]
      %v11489 = vld [vmem:[%s6 + $0x40] sm:$0xff]
      %v11490 = vld [vmem:[%s6 + $0x48] sm:$0xff]
      %v11491 = vld [vmem:[%s6 + $0x50] sm:$0xff]
      %v11492 = vld [vmem:[%s6 + $0x58] sm:$0xff]
      %v11493 = vld [vmem:[%s6 + $0x60] sm:$0xff]
      %v11494 = vld [vmem:[%s6 + $0x68] sm:$0xff]
      %v11495 = vld [vmem:[%s6 + $0x70] sm:$0xff]
      %v11496 = vld [vmem:[%s6 + $0x78] sm:$0xff]
      %11498 = vset.pattern.permute.xlu0 0
      %11499 = vperm.xlu0 %11498, %v11481
      %v11500 = vpop.permute.xlu0 %11499
      %11503 = vset.pattern.permute.xlu0 0
      %11504 = vperm.xlu0 %11503, %v11482
      %v11505 = vpop.permute.xlu0 %11504
      %11508 = vset.pattern.permute.xlu0 0
      %11509 = vperm.xlu0 %11508, %v11483
      %v11510 = vpop.permute.xlu0 %11509
      %11513 = vset.pattern.permute.xlu0 0
      %11514 = vperm.xlu0 %11513, %v11484
      %v11515 = vpop.permute.xlu0 %11514
      %11518 = vset.pattern.permute.xlu0 0
      %11519 = vperm.xlu0 %11518, %v11485
      %v11520 = vpop.permute.xlu0 %11519
      %11523 = vset.pattern.permute.xlu0 0
      %11524 = vperm.xlu0 %11523, %v11486
      %v11525 = vpop.permute.xlu0 %11524
      %11528 = vset.pattern.permute.xlu0 0
      %11529 = vperm.xlu0 %11528, %v11487
      %v11530 = vpop.permute.xlu0 %11529
      %11533 = vset.pattern.permute.xlu0 0
      %11534 = vperm.xlu0 %11533, %v11488
      %v11535 = vpop.permute.xlu0 %11534
      %11538 = vset.pattern.permute.xlu0 0
      %11539 = vperm.xlu0 %11538, %v11489
      %v11540 = vpop.permute.xlu0 %11539
      %11543 = vset.pattern.permute.xlu0 0
      %11544 = vperm.xlu0 %11543, %v11490
      %v11545 = vpop.permute.xlu0 %11544
      %11548 = vset.pattern.permute.xlu0 0
      %11549 = vperm.xlu0 %11548, %v11491
      %v11550 = vpop.permute.xlu0 %11549
      %11553 = vset.pattern.permute.xlu0 0
      %11554 = vperm.xlu0 %11553, %v11492
      %v11555 = vpop.permute.xlu0 %11554
      %11558 = vset.pattern.permute.xlu0 0
      %11559 = vperm.xlu0 %11558, %v11493
      %v11560 = vpop.permute.xlu0 %11559
      %11563 = vset.pattern.permute.xlu0 0
      %11564 = vperm.xlu0 %11563, %v11494
      %v11565 = vpop.permute.xlu0 %11564
      %11568 = vset.pattern.permute.xlu0 0
      %11569 = vperm.xlu0 %11568, %v11495
      %v11570 = vpop.permute.xlu0 %11569
      %11573 = vset.pattern.permute.xlu0 0
      %11574 = vperm.xlu0 %11573, %v11496
      %v11575 = vpop.permute.xlu0 %11574
      %v11577 = vadd.f32 %v11465, %v11500
      %v11578 = vadd.f32 %v11466, %v11505
      %v11579 = vadd.f32 %v11467, %v11510
      %v11580 = vadd.f32 %v11468, %v11515
      %v11581 = vadd.f32 %v11469, %v11520
      %v11582 = vadd.f32 %v11470, %v11525
      %v11583 = vadd.f32 %v11471, %v11530
      %v11584 = vadd.f32 %v11472, %v11535
      %v11585 = vadd.f32 %v11473, %v11540
      %v11586 = vadd.f32 %v11474, %v11545
      %v11587 = vadd.f32 %v11475, %v11550
      %v11588 = vadd.f32 %v11476, %v11555
      %v11589 = vadd.f32 %v11477, %v11560
      %v11590 = vadd.f32 %v11478, %v11565
      %v11591 = vadd.f32 %v11479, %v11570
      %v11592 = vadd.f32 %v11480, %v11575
      %v11593 = vld [vmem:[%s7] sm:$0x1]
      %v11594 = vld [vmem:[#allocation2] sm:$0x1]
      %11596 = vset.pattern.permute.xlu0 0
      %11597 = vperm.xlu0 %11596, %v11594
      %v11598 = vpop.permute.xlu0 %11597
      %v11600 = vlaneseq
      %v11601 = vshrl.u32 %v11600, 7
      %v11602 = vsub.s32 0, %v11601
      %v11603 = vrot.slane %v11598, %v11602
      %11604 = vmatprep.subr.mxu0 0.0
      %11605 = vmatpush1.msra.mxu0 %v11592
      %11606 = vmatprep.subr.mxu0 0.0
      %11607 = vmatpush1.msra.mxu0 %v11591
      %11608 = vmatprep.subr.mxu0 0.0
      %11609 = vmatpush1.msra.mxu0 %v11590
      %11610 = vmatprep.subr.mxu0 0.0
      %11611 = vmatpush1.msra.mxu0 %v11589
      %11612 = vmatprep.subr.mxu0 0.0
      %11613 = vmatpush1.msra.mxu0 %v11588
      %11614 = vmatprep.subr.mxu0 0.0
      %11615 = vmatpush1.msra.mxu0 %v11587
      %11616 = vmatprep.subr.mxu0 0.0
      %11617 = vmatpush1.msra.mxu0 %v11586
      %11618 = vmatprep.subr.mxu0 0.0
      %11619 = vmatpush1.msra.mxu0 %v11585
      %11620 = vmatprep.subr.mxu0 0.0
      %11621 = vmatpush1.msra.mxu0 %v11584
      %11622 = vmatprep.subr.mxu0 0.0
      %11623 = vmatpush1.msra.mxu0 %v11583
      %11624 = vmatprep.subr.mxu0 0.0
      %11625 = vmatpush1.msra.mxu0 %v11582
      %11626 = vmatprep.subr.mxu0 0.0
      %11627 = vmatpush1.msra.mxu0 %v11581
      %11628 = vmatprep.subr.mxu0 0.0
      %11629 = vmatpush1.msra.mxu0 %v11580
      %11630 = vmatprep.subr.mxu0 0.0
      %11631 = vmatpush1.msra.mxu0 %v11579
      %11632 = vmatprep.subr.mxu0 0.0
      %11633 = vmatpush1.msra.mxu0 %v11578
      %11634 = vmatprep.subr.mxu0 0.0
      %11635 = vmatpush1.msra.mxu0 %v11577
      %11636 = vmatprep.subr.mxu0 0.0
      %11637 = vmatpush2.msra.mxu0 0.0
      %11638 = vmatprep.subr.mxu0 0.0
      %11639 = vmatpush2.msra.mxu0 0.0
      %11640 = vmatprep.subr.mxu0 0.0
      %11641 = vmatpush2.msra.mxu0 0.0
      %11642 = vmatprep.subr.mxu0 0.0
      %11643 = vmatpush2.msra.mxu0 0.0
      %11644 = vmatprep.subr.mxu0 0.0
      %11645 = vmatpush2.msra.mxu0 0.0
      %11646 = vmatprep.subr.mxu0 0.0
      %11647 = vmatpush2.msra.mxu0 0.0
      %11648 = vmatprep.subr.mxu0 0.0
      %11649 = vmatpush2.msra.mxu0 0.0
      %11650 = vmatprep.subr.mxu0 0.0
      %11651 = vmatpush2.msra.mxu0 0.0
      %11652 = vmatprep.subr.mxu0 0.0
      %11653 = vmatpush2.msra.mxu0 0.0
      %11654 = vmatprep.subr.mxu0 0.0
      %11655 = vmatpush2.msra.mxu0 0.0
      %11656 = vmatprep.subr.mxu0 0.0
      %11657 = vmatpush2.msra.mxu0 0.0
      %11658 = vmatprep.subr.mxu0 0.0
      %11659 = vmatpush2.msra.mxu0 0.0
      %11660 = vmatprep.subr.mxu0 0.0
      %11661 = vmatpush2.msra.mxu0 0.0
      %11662 = vmatprep.subr.mxu0 0.0
      %11663 = vmatpush2.msra.mxu0 0.0
      %11664 = vmatprep.subr.mxu0 0.0
      %11665 = vmatpush2.msra.mxu0 0.0
      %11666 = vmatprep.subr.mxu0 0.0
      %11667 = vmatpush2.msra.mxu0 0.0
      %11668 = vmatprep.mubr.f32.mxu0 0.0
      %11669 = vmatmul.mubr.f32.gmra.mxu0 %v11593
      %v11670 = vpop.f32.mrf.mxu0
      %v11671 = vadd.f32 %v11603, %v11670
      %v11672 = vpop.f32.mrf.mxu0
      %11673 = vdwg.mxu0
      %v11674 = vmax.f32 %v11671, 0.0
      %v11675 = vld [vmem:[#allocation3] sm:$0x1]
      %11677 = vset.pattern.permute.xlu0 0
      %11678 = vperm.xlu0 %11677, %v11675
      %v11679 = vpop.permute.xlu0 %11678
      %v11681 = vlaneseq
      %v11682 = vshrl.u32 %v11681, 7
      %v11683 = vsub.s32 0, %v11682
      %v11684 = vrot.slane %v11679, %v11683
      %v11685 = vmul.f32 %v11674, %v11684
      %v11686 = vld [vmem:[#allocation4] sm:$0x1]
      %11688 = vset.pattern.permute.xlu0 0
      %11689 = vperm.xlu0 %11688, %v11686
      %v11690 = vpop.permute.xlu0 %11689
      %v11692 = vlaneseq
      %v11693 = vshrl.u32 %v11692, 7
      %v11694 = vsub.s32 0, %v11693
      %v11695 = vrot.slane %v11690, %v11694
      %v11696 = vadd.f32 %v11685, %v11695
      %vm11697 = vcmask 57344
      %11698 = vst.msk [vmem:[%s385] sm:$0x1] %vm11697, %v11696
      %p11699 = scmp.lt.s32.totalorder %s28, 1
      %s11700 = scalar_select %p11699, %s28, 1
      %s11701 = scalar_lea.vmem %s11, %s11700
      // Predicated region
      $region65: #{cnn_forward.1} parent=63 // pred_check
        %p11702 = pneg %p282
      $region66: #{cnn_forward.1} parent=63 // pred_check_branch
        %11704 = sbr.rel (%p11702) target = $region68
      $region67: #{cnn_forward.1} parent=63 // pred_region
        _
      $region68: #{cnn_forward.1} parent=63 // pred_fallthru
        _
    $region64: #{cnn_forward.1} parent=5 // pred_fallthru
      _
    %p11705 = scmp.le.s32.totalorder 2, %s23
    // Predicated region
    $region69: #{cnn_forward.1} parent=5 // pred_check
      %p11706 = pneg %p11705
    $region70: #{cnn_forward.1} parent=5 // pred_check_branch
      %11708 = sbr.rel (%p11706) target = $region72
    $region71: #{cnn_forward.1} parent=5 // pred_region
      %s11709 = ssub.s32 %s23, 2
      // Predicated region
      $region73: #{cnn_forward.1} parent=71 // pred_check
        %p11710 = pneg %p288
      $region74: #{cnn_forward.1} parent=71 // pred_check_branch
        %11712 = sbr.rel (%p11710) target = $region76
      $region75: #{cnn_forward.1} parent=71 // pred_region
        %p11713 = scmp.lt.s32.totalorder %s29, 1
        %s11714 = scalar_select %p11713, %s29, 1
        %s11715 = scalar_lea.vmem %s11, %s11714
      $region76: #{cnn_forward.1} parent=71 // pred_fallthru
        _
    $region72: #{cnn_forward.1} parent=5 // pred_fallthru
      _
  $region6: #{cnn_forward.1} parent=0 // loop_footer
    %s27 = sadd.s32 1, %s23
  $region7: #{cnn_forward.1} parent=0 // loop_footer_branch
    %22 = sbr.rel target = $region3
  $region8: #{cnn_forward.1} parent=0 // loop_exit
    _

</llo_original>
